<compile_context>
chip_gen: v5e
topology: v5e:2x2
jax: 0.10.0
libtpu: 0.0.40
codegen_flags: <defaults>
</compile_context>

<pallas_src>
import functools

import jax
import jax.numpy as jnp
from jax import lax
from jax.experimental import pallas as pl
from jax.experimental.pallas import tpu as pltpu

_LN_EPS = 1e-5


# --------------------------------------------------------------------------
# in-kernel helpers (plain traced functions)
# --------------------------------------------------------------------------
def _layernorm(x, gamma, beta, eps=_LN_EPS):
    x = x.astype(jnp.float32)
    mean = jnp.mean(x, axis=-1, keepdims=True)
    xc = x - mean
    var = jnp.mean(xc * xc, axis=-1, keepdims=True)
    return xc * lax.rsqrt(var + eps) * gamma + beta


def _mm(x, w):
    """MXU matmul: cast activations to the weight dtype (bf16), accumulate f32."""
    return jnp.dot(x.astype(w.dtype), w, preferred_element_type=jnp.float32)


# --------------------------------------------------------------------------
# Pallas kernels
# --------------------------------------------------------------------------
def _embed_kernel(x_ref, w_ref, b_ref, pe_ref, g_ref, beta_ref, o_ref):
    """Fused (Linear / Conv1d k=1) + bias + positional encoding + LayerNorm."""
    x = x_ref[...].astype(jnp.float32)                     # (Bb, T, K)
    Bb, T, K = x.shape
    E = w_ref.shape[-1]
    if K == 1:
        # degenerate contraction (feature_expansion Linear(1, E)): VPU broadcast
        emb = x * w_ref[...].astype(jnp.float32)           # (Bb,T,1)*(1,E)->(Bb,T,E)
    else:
        emb = _mm(x.reshape(Bb * T, K), w_ref[...]).reshape(Bb, T, E)
    emb = emb + b_ref[...] + pe_ref[...]                   # bias + positional enc.
    o_ref[...] = _layernorm(emb, g_ref[...], beta_ref[...]).astype(o_ref.dtype)


def _encoder_stack_kernel(x_ref, wqkv_ref, bqkv_ref, wo_ref, bo_ref,
                          ln1g_ref, ln1b_ref, w1_ref, b1_ref,
                          w2_ref, b2_ref, ln2g_ref, ln2b_ref,
                          o_ref, *, num_heads):
    """Whole post-norm TransformerEncoder layer stack; grid axis 1 = layer."""
    layer = pl.program_id(1)

    # The output block doubles as the running activation: load the input once,
    # keep intermediate activations resident in VMEM across the layer axis.
    @pl.when(layer == 0)
    def _():
        o_ref[...] = x_ref[...]

    Bb, T, E = o_ref.shape
    dh = E // num_heads
    scale = 1.0 / float(dh) ** 0.5

    h = o_ref[...].astype(jnp.float32)                     # (Bb, T, E)
    h2 = h.reshape(Bb * T, E)

    # ---- fused QKV projection (one (E,3E) matmul) -------------------------
    qkv = _mm(h2, wqkv_ref[0]) + bqkv_ref[0]               # (Bb*T, 3E) f32
    q = qkv[:, :E].reshape(Bb, T, E).astype(jnp.bfloat16)
    k = qkv[:, E:2 * E].reshape(Bb, T, E).astype(jnp.bfloat16)
    v = qkv[:, 2 * E:].reshape(Bb, T, E).astype(jnp.bfloat16)

    # ---- multi-head self attention -----------------------------------------
    # Heads are handled with lane masks on full-width (E) contractions so the
    # matmuls stay lane-dense and no head split/merge relayouts are needed.
    lane = lax.broadcasted_iota(jnp.int32, (1, 1, E), 2)
    attn = jnp.zeros((Bb, T, E), jnp.float32)
    for hd in range(num_heads):
        m = ((lane >= hd * dh) & (lane < (hd + 1) * dh)).astype(jnp.bfloat16)
        s = jnp.einsum("bte,bse->bts", q * m, k,
                       preferred_element_type=jnp.float32) * scale
        s = s - jnp.max(s, axis=-1, keepdims=True)
        p = jnp.exp(s)
        p = p * pl.reciprocal(jnp.sum(p, axis=-1, keepdims=True), approx=True)
        attn = attn + jnp.einsum("bts,bse->bte", p.astype(jnp.bfloat16), v * m,
                                 preferred_element_type=jnp.float32)

    attn2 = _mm(attn.reshape(Bb * T, E), wo_ref[0]) + bo_ref[0]

    # ---- post-norm residual blocks (residual add fused into LN) -----------
    y = _layernorm(h2 + attn2, ln1g_ref[0], ln1b_ref[0])
    ff = jnp.maximum(_mm(y, w1_ref[0]) + b1_ref[0], 0.0)
    ff = _mm(ff, w2_ref[0]) + b2_ref[0]
    z = _layernorm(y + ff, ln2g_ref[0], ln2b_ref[0])

    o_ref[...] = z.reshape(Bb, T, E).astype(o_ref.dtype)


def _head_kernel(feat_ref, ctx_ref, cg_ref, cb_ref,
                 w1_ref, b1_ref, g1_ref, be1_ref,
                 w2_ref, b2_ref, g2_ref, be2_ref,
                 w3_ref, b3_ref, o_ref):
    """context LayerNorm + concat + fc1/LN/ReLU + fc2/LN/ReLU + fc3, fused."""
    feat = feat_ref[...].astype(jnp.float32)               # (M, E)
    ctx = _layernorm(ctx_ref[...], cg_ref[...], cb_ref[...])
    E = feat.shape[-1]
    # concat([feat, ctx]) @ W1  ==  feat @ W1[:E] + ctx @ W1[E:]
    w1 = w1_ref[...]
    h = _mm(feat, w1[:E]) + _mm(ctx, w1[E:]) + b1_ref[...]
    h = jnp.maximum(_layernorm(h, g1_ref[...], be1_ref[...]), 0.0)
    h = _mm(h, w2_ref[...]) + b2_ref[...]
    h = jnp.maximum(_layernorm(h, g2_ref[...], be2_ref[...]), 0.0)
    o_ref[...] = (_mm(h, w3_ref[...]) + b3_ref[...]).astype(o_ref.dtype)


# --------------------------------------------------------------------------
# Pallas wrappers
# --------------------------------------------------------------------------
def pallas_embed(x, w, b, pe, gamma, beta):
    Bb, T, _ = x.shape
    E = w.shape[-1]
    return pl.pallas_call(
        _embed_kernel,
        out_shape=jax.ShapeDtypeStruct((Bb, T, E), jnp.float32),
    )(x.astype(jnp.float32), w, b, pe, gamma, beta)


def pallas_encoder_stack(x, enc, *, num_heads):
    """x: (Bb, T, E) -> (Bb, T, E); enc holds per-layer stacked weights (L, ...)."""
    Bb, T, E = x.shape
    L = enc["wqkv"].shape[0]
    F = enc["w1"].shape[-1]

    act_map = lambda b, l: (b, 0, 0)   # activation block fixed across layer axis
    lyr_map = lambda b, l: (l, 0, 0)   # slice this layer's weights

    in_specs = [
        pl.BlockSpec((Bb, T, E), act_map),
        pl.BlockSpec((1, E, 3 * E), lyr_map),
        pl.BlockSpec((1, 1, 3 * E), lyr_map),
        pl.BlockSpec((1, E, E), lyr_map),
        pl.BlockSpec((1, 1, E), lyr_map),
        pl.BlockSpec((1, 1, E), lyr_map),
        pl.BlockSpec((1, 1, E), lyr_map),
        pl.BlockSpec((1, E, F), lyr_map),
        pl.BlockSpec((1, 1, F), lyr_map),
        pl.BlockSpec((1, F, E), lyr_map),
        pl.BlockSpec((1, 1, E), lyr_map),
        pl.BlockSpec((1, 1, E), lyr_map),
        pl.BlockSpec((1, 1, E), lyr_map),
    ]
    # NOTE: at production shapes, split the batch axis into >1 "parallel" blocks
    # (feeds both v7x TensorCores) and set vmem_limit_bytes explicitly.
    return pl.pallas_call(
        functools.partial(_encoder_stack_kernel, num_heads=num_heads),
        out_shape=jax.ShapeDtypeStruct((Bb, T, E), jnp.float32),
        grid=(1, L),                               # (batch blocks, layers)
        in_specs=in_specs,
        out_specs=pl.BlockSpec((Bb, T, E), act_map),
        compiler_params=pltpu.CompilerParams(
            dimension_semantics=("parallel", "arbitrary")),
    )(x, enc["wqkv"], enc["bqkv"], enc["wo"], enc["bo"],
      enc["ln1_g"], enc["ln1_b"], enc["w1"], enc["b1"],
      enc["w2"], enc["b2"], enc["ln2_g"], enc["ln2_b"])


def pallas_head(feat, ctx, p):
    M = feat.shape[0]
    return pl.pallas_call(
        _head_kernel,
        out_shape=jax.ShapeDtypeStruct((M, 1), jnp.float32),
    )(feat, ctx, p["ctx_ln_g"], p["ctx_ln_b"],
      p["fc1_w"], p["fc1_b"], p["fcln1_g"], p["fcln1_b"],
      p["fc2_w"], p["fc2_b"], p["fcln2_g"], p["fcln2_b"],
      p["fc3_w"], p["fc3_b"])


# --------------------------------------------------------------------------
# Model forward (mirrors the PyTorch module, inference / dropout = identity)
# --------------------------------------------------------------------------
def forward(x, params, *, num_heads, num_channels, num_layers):
    """x: (B, T, C) float32 -> predictions (B, C)."""
    B, T, C = x.shape
    E = params["pe"].shape[-1]
    assert params["enc"]["wqkv"].shape[0] == num_layers

    # channel_expansion (Conv1d k=1; the PyTorch permutes are layout-only)
    # fused with + positional encoding + self.layer_norm.
    h = pallas_embed(x, params["conv_w"], params["conv_b"], params["pe"],
                     params["ln_g"], params["ln_b"])                    # (B,T,E)

    # context encoder stack (context_layer_norm is deferred to the head kernel,
    # because only t = T-1 of the context is ever consumed).
    ctx = pallas_encoder_stack(h, params["enc"], num_heads=num_heads)   # (B,T,E)

    # per-channel branch, batched over all channels at once.
    # NOTE: faithful to the PyTorch code -- original_x[:, i, :] indexes
    # *embedding* dims of the normed embedding (assumes num_channels <= N_embed).
    ch = jnp.swapaxes(h, 1, 2)[:, :num_channels, :]                     # (B,C,T)
    ch = ch.reshape(B * num_channels, T, 1)
    feat = pallas_embed(ch, params["fe_w"], params["fe_b"], params["pe"],
                        params["ln_g"], params["ln_b"])                 # (B*C,T,E)
    feat = pallas_encoder_stack(feat, params["enc"], num_heads=num_heads)

    # prediction head: fc layers act per-timestep and only t = T-1 is used,
    # so slice to the last timestep before the head (T x less work, identical).
    feat_last = feat[:, -1, :]                                          # (B*C,E)
    ctx_last = jnp.broadcast_to(ctx[:, -1, :][:, None, :],
                                (B, num_channels, E)).reshape(B * num_channels, E)
    out = pallas_head(feat_last, ctx_last, params)                      # (B*C,1)
    return out.reshape(B, num_channels)


# --------------------------------------------------------------------------
# Deterministic parameter init + positional encoding
# --------------------------------------------------------------------------
def positional_encoding(T, E):
    pos = jnp.arange(T, dtype=jnp.float32)[:, None]
    div = jnp.exp(jnp.arange(0, E, 2, dtype=jnp.float32) * (-jnp.log(10000.0) / E))
    ang = pos * div
    pe = jnp.zeros((T, E), jnp.float32)
    pe = pe.at[:, 0::2].set(jnp.sin(ang))
    pe = pe.at[:, 1::2].set(jnp.cos(ang))
    return pe


def init_params(key, C, T, E, H, L):
    ffn = 4 * E
    keys = iter(jax.random.split(key, 16))

    def w(shape, scale=0.05):
        return (scale * jax.random.normal(next(keys), shape)).astype(jnp.float32)

    zeros = lambda s: jnp.zeros(s, jnp.float32)
    ones = lambda s: jnp.ones(s, jnp.float32)
    bf = lambda a: a.astype(jnp.bfloat16)                      # matmul weights
    tile_l = lambda a: jnp.tile(a[None], (L,) + (1,) * a.ndim)  # stack over layers

    # One encoder-layer parameter set, tiled over layers and shared by both
    # encoders (matches nn.TransformerEncoder deep-copying one initialized
    # layer).  The kernel supports arbitrary per-layer weights via the L axis.
    wqkv = jnp.concatenate([w((E, E)), w((E, E)), w((E, E))], axis=1)   # (E,3E)
    enc = dict(
        wqkv=bf(tile_l(wqkv)),            bqkv=tile_l(zeros((1, 3 * E))),
        wo=bf(tile_l(w((E, E)))),         bo=tile_l(zeros((1, E))),
        ln1_g=tile_l(ones((1, E))),       ln1_b=tile_l(zeros((1, E))),
        w1=bf(tile_l(w((E, ffn)))),       b1=tile_l(zeros((1, ffn))),
        w2=bf(tile_l(w((ffn, E)))),       b2=tile_l(zeros((1, E))),
        ln2_g=tile_l(ones((1, E))),       ln2_b=tile_l(zeros((1, E))),
    )
    return dict(
        pe=positional_encoding(T, E),
        conv_w=bf(w((C, E))), conv_b=zeros((1, E)),      # Conv1d(C, E, 1)
        fe_w=w((1, E)), fe_b=zeros((1, E)),              # Linear(1, E) (VPU path, f32)
        ln_g=ones((1, E)), ln_b=zeros((1, E)),           # self.layer_norm
        ctx_ln_g=ones((1, E)), ctx_ln_b=zeros((1, E)),   # self.context_layer_norm
        enc=enc,
        fc1_w=bf(w((2 * E, 2 * E))), fc1_b=zeros((1, 2 * E)),
        fcln1_g=ones((1, 2 * E)), fcln1_b=zeros((1, 2 * E)),
        fc2_w=bf(w((2 * E, E))), fc2_b=zeros((1, E)),
        fcln2_g=ones((1, E)), fcln2_b=zeros((1, E)),
        fc3_w=bf(w((E, 1))), fc3_b=zeros((1, 1)),
    )


# --------------------------------------------------------------------------
if __name__ == "__main__":
    B, T, C, E, H, L = 2, 8, 4, 32, 4, 2   # batch, window_size-1, channels, N_embed, heads, layers
    key = jax.random.PRNGKey(0)
    kx, kp = jax.random.split(key)
    x = jax.random.normal(kx, (B, T, C), dtype=jnp.float32)
    params = init_params(kp, C, T, E, H, L)

    fwd = jax.jit(functools.partial(forward, num_heads=H, num_channels=C, num_layers=L))
    out = fwd(x, params)
    jax.block_until_ready(out)
    assert out.shape == (B, C), out.shape
    assert out.dtype == jnp.float32
    assert bool(jnp.all(jnp.isfinite(out)))
    print("KERNEL_OK")
</pallas_src>

<mosaic_0001>
module attributes {stable_mosaic.version = 11 : i64} {
  func.func @_embed_kernel(%arg0: memref<2x8x4xf32, #tpu.memory_space<vmem>>, %arg1: memref<4x32xbf16, #tpu.memory_space<vmem>>, %arg2: memref<1x32xf32, #tpu.memory_space<vmem>>, %arg3: memref<8x32xf32, #tpu.memory_space<vmem>>, %arg4: memref<1x32xf32, #tpu.memory_space<vmem>>, %arg5: memref<1x32xf32, #tpu.memory_space<vmem>>, %arg6: memref<2x8x32xf32, #tpu.memory_space<vmem>>) attributes {dimension_semantics = [], scalar_prefetch = 0 : i64, scratch_operands = 0 : i64, tpu.core_type = #tpu.core_type<tc>} {
    %c0 = arith.constant 0 : index
    %c0_0 = arith.constant 0 : index
    %c0_1 = arith.constant 0 : index
    %0 = vector.load %arg0[%c0, %c0_0, %c0_1] : memref<2x8x4xf32, #tpu.memory_space<vmem>>, vector<2x8x4xf32>
    %1 = vector.shape_cast %0 : vector<2x8x4xf32> to vector<16x4xf32>
    %c0_2 = arith.constant 0 : index
    %c0_3 = arith.constant 0 : index
    %2 = vector.load %arg1[%c0_2, %c0_3] : memref<4x32xbf16, #tpu.memory_space<vmem>>, vector<4x32xbf16>
    %3 = arith.truncf %1 : vector<16x4xf32> to vector<16x4xbf16>
    %cst = arith.constant dense<0.000000e+00> : vector<16x32xf32>
    %4 = tpu.matmul %3, %2, %cst {dimension_numbers = #tpu.dot_dimension_numbers<[1], [0], [0], [1], [0, 0, 1, 1], [], []>} : vector<16x4xbf16>, vector<4x32xbf16>, vector<16x32xf32> -> vector<16x32xf32>
    %5 = vector.shape_cast %4 : vector<16x32xf32> to vector<2x8x32xf32>
    %c0_4 = arith.constant 0 : index
    %c0_5 = arith.constant 0 : index
    %6 = vector.load %arg2[%c0_4, %c0_5] : memref<1x32xf32, #tpu.memory_space<vmem>>, vector<1x32xf32>
    %7 = vector.shape_cast %6 : vector<1x32xf32> to vector<1x1x32xf32>
    %8 = vector.broadcast %7 : vector<1x1x32xf32> to vector<2x8x32xf32>
    %9 = arith.addf %5, %8 : vector<2x8x32xf32>
    %c0_6 = arith.constant 0 : index
    %c0_7 = arith.constant 0 : index
    %10 = vector.load %arg3[%c0_6, %c0_7] : memref<8x32xf32, #tpu.memory_space<vmem>>, vector<8x32xf32>
    %11 = vector.shape_cast %10 : vector<8x32xf32> to vector<1x8x32xf32>
    %12 = vector.broadcast %11 : vector<1x8x32xf32> to vector<2x8x32xf32>
    %13 = arith.addf %9, %12 : vector<2x8x32xf32>
    %c0_8 = arith.constant 0 : index
    %c0_9 = arith.constant 0 : index
    %14 = vector.load %arg4[%c0_8, %c0_9] : memref<1x32xf32, #tpu.memory_space<vmem>>, vector<1x32xf32>
    %c0_10 = arith.constant 0 : index
    %c0_11 = arith.constant 0 : index
    %15 = vector.load %arg5[%c0_10, %c0_11] : memref<1x32xf32, #tpu.memory_space<vmem>>, vector<1x32xf32>
    %cst_12 = arith.constant dense<0.000000e+00> : vector<2x8xf32>
    %16 = vector.multi_reduction <add>, %13, %cst_12 [2] : vector<2x8x32xf32> to vector<2x8xf32>
    %17 = vector.shape_cast %16 : vector<2x8xf32> to vector<2x8x1xf32>
    %cst_13 = arith.constant 3.200000e+01 : f32
    %18 = vector.broadcast %cst_13 : f32 to vector<2x8x1xf32>
    %19 = arith.divf %17, %18 : vector<2x8x1xf32>
    %20 = vector.broadcast %19 : vector<2x8x1xf32> to vector<2x8x32xf32>
    %21 = arith.subf %13, %20 : vector<2x8x32xf32>
    %22 = arith.mulf %21, %21 : vector<2x8x32xf32>
    %cst_14 = arith.constant dense<0.000000e+00> : vector<2x8xf32>
    %23 = vector.multi_reduction <add>, %22, %cst_14 [2] : vector<2x8x32xf32> to vector<2x8xf32>
    %24 = vector.shape_cast %23 : vector<2x8xf32> to vector<2x8x1xf32>
    %cst_15 = arith.constant 3.200000e+01 : f32
    %25 = vector.broadcast %cst_15 : f32 to vector<2x8x1xf32>
    %26 = arith.divf %24, %25 : vector<2x8x1xf32>
    %cst_16 = arith.constant 9.99999974E-6 : f32
    %27 = vector.broadcast %cst_16 : f32 to vector<2x8x1xf32>
    %28 = arith.addf %26, %27 : vector<2x8x1xf32>
    %29 = math.rsqrt %28 : vector<2x8x1xf32>
    %30 = vector.broadcast %29 : vector<2x8x1xf32> to vector<2x8x32xf32>
    %31 = arith.mulf %21, %30 : vector<2x8x32xf32>
    %32 = vector.shape_cast %14 : vector<1x32xf32> to vector<1x1x32xf32>
    %33 = vector.broadcast %32 : vector<1x1x32xf32> to vector<2x8x32xf32>
    %34 = arith.mulf %31, %33 : vector<2x8x32xf32>
    %35 = vector.shape_cast %15 : vector<1x32xf32> to vector<1x1x32xf32>
    %36 = vector.broadcast %35 : vector<1x1x32xf32> to vector<2x8x32xf32>
    %37 = arith.addf %34, %36 : vector<2x8x32xf32>
    %c0_17 = arith.constant 0 : index
    %c0_18 = arith.constant 0 : index
    %c0_19 = arith.constant 0 : index
    %38 = vector.load %arg6[%c0_17, %c0_18, %c0_19] : memref<2x8x32xf32, #tpu.memory_space<vmem>>, vector<2x8x32xf32>
    tpu.vector_store %arg6[%c0_17, %c0_18, %c0_19], %37 {strides = array<i32>} : memref<2x8x32xf32, #tpu.memory_space<vmem>>, vector<2x8x32xf32>,
    return
  }
}

module attributes {stable_mosaic.version = 11 : i64} {
  func.func @_embed_kernel(%arg0: memref<8x8x1xf32, #tpu.memory_space<vmem>>, %arg1: memref<1x32xf32, #tpu.memory_space<vmem>>, %arg2: memref<1x32xf32, #tpu.memory_space<vmem>>, %arg3: memref<8x32xf32, #tpu.memory_space<vmem>>, %arg4: memref<1x32xf32, #tpu.memory_space<vmem>>, %arg5: memref<1x32xf32, #tpu.memory_space<vmem>>, %arg6: memref<8x8x32xf32, #tpu.memory_space<vmem>>) attributes {dimension_semantics = [], scalar_prefetch = 0 : i64, scratch_operands = 0 : i64, tpu.core_type = #tpu.core_type<tc>} {
    %c0 = arith.constant 0 : index
    %c0_0 = arith.constant 0 : index
    %c0_1 = arith.constant 0 : index
    %0 = vector.load %arg0[%c0, %c0_0, %c0_1] : memref<8x8x1xf32, #tpu.memory_space<vmem>>, vector<8x8x1xf32>
    %c0_2 = arith.constant 0 : index
    %c0_3 = arith.constant 0 : index
    %1 = vector.load %arg1[%c0_2, %c0_3] : memref<1x32xf32, #tpu.memory_space<vmem>>, vector<1x32xf32>
    %2 = vector.shape_cast %1 : vector<1x32xf32> to vector<1x1x32xf32>
    %3 = vector.broadcast %0 : vector<8x8x1xf32> to vector<8x8x32xf32>
    %4 = vector.broadcast %2 : vector<1x1x32xf32> to vector<8x8x32xf32>
    %5 = arith.mulf %3, %4 : vector<8x8x32xf32>
    %c0_4 = arith.constant 0 : index
    %c0_5 = arith.constant 0 : index
    %6 = vector.load %arg2[%c0_4, %c0_5] : memref<1x32xf32, #tpu.memory_space<vmem>>, vector<1x32xf32>
    %7 = vector.shape_cast %6 : vector<1x32xf32> to vector<1x1x32xf32>
    %8 = vector.broadcast %7 : vector<1x1x32xf32> to vector<8x8x32xf32>
    %9 = arith.addf %5, %8 : vector<8x8x32xf32>
    %c0_6 = arith.constant 0 : index
    %c0_7 = arith.constant 0 : index
    %10 = vector.load %arg3[%c0_6, %c0_7] : memref<8x32xf32, #tpu.memory_space<vmem>>, vector<8x32xf32>
    %11 = vector.shape_cast %10 : vector<8x32xf32> to vector<1x8x32xf32>
    %12 = vector.broadcast %11 : vector<1x8x32xf32> to vector<8x8x32xf32>
    %13 = arith.addf %9, %12 : vector<8x8x32xf32>
    %c0_8 = arith.constant 0 : index
    %c0_9 = arith.constant 0 : index
    %14 = vector.load %arg4[%c0_8, %c0_9] : memref<1x32xf32, #tpu.memory_space<vmem>>, vector<1x32xf32>
    %c0_10 = arith.constant 0 : index
    %c0_11 = arith.constant 0 : index
    %15 = vector.load %arg5[%c0_10, %c0_11] : memref<1x32xf32, #tpu.memory_space<vmem>>, vector<1x32xf32>
    %cst = arith.constant dense<0.000000e+00> : vector<8x8xf32>
    %16 = vector.multi_reduction <add>, %13, %cst [2] : vector<8x8x32xf32> to vector<8x8xf32>
    %17 = vector.shape_cast %16 : vector<8x8xf32> to vector<8x8x1xf32>
    %cst_12 = arith.constant 3.200000e+01 : f32
    %18 = vector.broadcast %cst_12 : f32 to vector<8x8x1xf32>
    %19 = arith.divf %17, %18 : vector<8x8x1xf32>
    %20 = vector.broadcast %19 : vector<8x8x1xf32> to vector<8x8x32xf32>
    %21 = arith.subf %13, %20 : vector<8x8x32xf32>
    %22 = arith.mulf %21, %21 : vector<8x8x32xf32>
    %cst_13 = arith.constant dense<0.000000e+00> : vector<8x8xf32>
    %23 = vector.multi_reduction <add>, %22, %cst_13 [2] : vector<8x8x32xf32> to vector<8x8xf32>
    %24 = vector.shape_cast %23 : vector<8x8xf32> to vector<8x8x1xf32>
    %cst_14 = arith.constant 3.200000e+01 : f32
    %25 = vector.broadcast %cst_14 : f32 to vector<8x8x1xf32>
    %26 = arith.divf %24, %25 : vector<8x8x1xf32>
    %cst_15 = arith.constant 9.99999974E-6 : f32
    %27 = vector.broadcast %cst_15 : f32 to vector<8x8x1xf32>
    %28 = arith.addf %26, %27 : vector<8x8x1xf32>
    %29 = math.rsqrt %28 : vector<8x8x1xf32>
    %30 = vector.broadcast %29 : vector<8x8x1xf32> to vector<8x8x32xf32>
    %31 = arith.mulf %21, %30 : vector<8x8x32xf32>
    %32 = vector.shape_cast %14 : vector<1x32xf32> to vector<1x1x32xf32>
    %33 = vector.broadcast %32 : vector<1x1x32xf32> to vector<8x8x32xf32>
    %34 = arith.mulf %31, %33 : vector<8x8x32xf32>
    %35 = vector.shape_cast %15 : vector<1x32xf32> to vector<1x1x32xf32>
    %36 = vector.broadcast %35 : vector<1x1x32xf32> to vector<8x8x32xf32>
    %37 = arith.addf %34, %36 : vector<8x8x32xf32>
    %c0_16 = arith.constant 0 : index
    %c0_17 = arith.constant 0 : index
    %c0_18 = arith.constant 0 : index
    %38 = vector.load %arg6[%c0_16, %c0_17, %c0_18] : memref<8x8x32xf32, #tpu.memory_space<vmem>>, vector<8x8x32xf32>
    tpu.vector_store %arg6[%c0_16, %c0_17, %c0_18], %37 {strides = array<i32>} : memref<8x8x32xf32, #tpu.memory_space<vmem>>, vector<8x8x32xf32>,
    return
  }
}

module attributes {stable_mosaic.version = 11 : i64} {
  func.func @_encoder_stack_kernel(%arg0: i32, %arg1: i32, %arg2: memref<8x8x32xf32, #tpu.memory_space<vmem>>, %arg3: memref<1x32x96xbf16, #tpu.memory_space<vmem>>, %arg4: memref<1x1x96xf32, #tpu.memory_space<vmem>>, %arg5: memref<1x32x32xbf16, #tpu.memory_space<vmem>>, %arg6: memref<1x1x32xf32, #tpu.memory_space<vmem>>, %arg7: memref<1x1x32xf32, #tpu.memory_space<vmem>>, %arg8: memref<1x1x32xf32, #tpu.memory_space<vmem>>, %arg9: memref<1x32x128xbf16, #tpu.memory_space<vmem>>, %arg10: memref<1x1x128xf32, #tpu.memory_space<vmem>>, %arg11: memref<1x128x32xbf16, #tpu.memory_space<vmem>>, %arg12: memref<1x1x32xf32, #tpu.memory_space<vmem>>, %arg13: memref<1x1x32xf32, #tpu.memory_space<vmem>>, %arg14: memref<1x1x32xf32, #tpu.memory_space<vmem>>, %arg15: memref<8x8x32xf32, #tpu.memory_space<vmem>>) attributes {dimension_semantics = [#tpu.dimension_semantics<parallel>, #tpu.dimension_semantics<arbitrary>], iteration_bounds = array<i64: 1, 2>, scalar_prefetch = 0 : i64, scratch_operands = 0 : i64, tpu.core_type = #tpu.core_type<tc>, window_params = [{transform_indices = @transform_0, window_bounds = array<i64: 8, 8, 32>}, {transform_indices = @transform_1, window_bounds = array<i64: 1, 32, 96>}, {transform_indices = @transform_2, window_bounds = array<i64: 1, 1, 96>}, {transform_indices = @transform_3, window_bounds = array<i64: 1, 32, 32>}, {transform_indices = @transform_4, window_bounds = array<i64: 1, 1, 32>}, {transform_indices = @transform_5, window_bounds = array<i64: 1, 1, 32>}, {transform_indices = @transform_6, window_bounds = array<i64: 1, 1, 32>}, {transform_indices = @transform_7, window_bounds = array<i64: 1, 32, 128>}, {transform_indices = @transform_8, window_bounds = array<i64: 1, 1, 128>}, {transform_indices = @transform_9, window_bounds = array<i64: 1, 128, 32>}, {transform_indices = @transform_10, window_bounds = array<i64: 1, 1, 32>}, {transform_indices = @transform_11, window_bounds = array<i64: 1, 1, 32>}, {transform_indices = @transform_12, window_bounds = array<i64: 1, 1, 32>}, {transform_indices = @transform_13, window_bounds = array<i64: 8, 8, 32>}]} {
    %c0_i32 = arith.constant 0 : i32
    %0 = arith.cmpi eq, %arg1, %c0_i32 : i32
    %1 = arith.extui %0 : i1 to i32
    %c0_i32_0 = arith.constant 0 : i32
    %2 = arith.cmpi ne, %1, %c0_i32_0 : i32
    scf.if %2 {
      %c0_81 = arith.constant 0 : index
      %c0_82 = arith.constant 0 : index
      %c0_83 = arith.constant 0 : index
      %215 = vector.load %arg2[%c0_81, %c0_82, %c0_83] : memref<8x8x32xf32, #tpu.memory_space<vmem>>, vector<8x8x32xf32>
      %c0_84 = arith.constant 0 : index
      %c0_85 = arith.constant 0 : index
      %c0_86 = arith.constant 0 : index
      %216 = vector.load %arg15[%c0_84, %c0_85, %c0_86] : memref<8x8x32xf32, #tpu.memory_space<vmem>>, vector<8x8x32xf32>
      tpu.vector_store %arg15[%c0_84, %c0_85, %c0_86], %215 {strides = array<i32>} : memref<8x8x32xf32, #tpu.memory_space<vmem>>, vector<8x8x32xf32>,
    } else {
    }
    %c0 = arith.constant 0 : index
    %c0_1 = arith.constant 0 : index
    %c0_2 = arith.constant 0 : index
    %3 = vector.load %arg15[%c0, %c0_1, %c0_2] : memref<8x8x32xf32, #tpu.memory_space<vmem>>, vector<8x8x32xf32>
    %4 = vector.shape_cast %3 : vector<8x8x32xf32> to vector<64x32xf32>
    %c0_3 = arith.constant 0 : index
    %c0_4 = arith.constant 0 : index
    %c0_5 = arith.constant 0 : index
    %5 = vector.load %arg3[%c0_3, %c0_4, %c0_5] : memref<1x32x96xbf16, #tpu.memory_space<vmem>>, vector<1x32x96xbf16>
    %6 = vector.shape_cast %5 : vector<1x32x96xbf16> to vector<32x96xbf16>
    %7 = arith.truncf %4 : vector<64x32xf32> to vector<64x32xbf16>
    %cst = arith.constant dense<0.000000e+00> : vector<64x96xf32>
    %8 = tpu.matmul %7, %6, %cst {dimension_numbers = #tpu.dot_dimension_numbers<[1], [0], [0], [1], [0, 0, 1, 1], [], []>} : vector<64x32xbf16>, vector<32x96xbf16>, vector<64x96xf32> -> vector<64x96xf32>
    %c0_6 = arith.constant 0 : index
    %c0_7 = arith.constant 0 : index
    %c0_8 = arith.constant 0 : index
    %9 = vector.load %arg4[%c0_6, %c0_7, %c0_8] : memref<1x1x96xf32, #tpu.memory_space<vmem>>, vector<1x1x96xf32>
    %10 = vector.shape_cast %9 : vector<1x1x96xf32> to vector<1x96xf32>
    %11 = vector.broadcast %10 : vector<1x96xf32> to vector<64x96xf32>
    %12 = arith.addf %8, %11 : vector<64x96xf32>
    %13 = vector.extract_strided_slice %12 {offsets = [0, 0], sizes = [64, 32], strides = [1, 1]} : vector<64x96xf32> to vector<64x32xf32>
    %14 = vector.shape_cast %13 : vector<64x32xf32> to vector<8x8x32xf32>
    %15 = arith.truncf %14 : vector<8x8x32xf32> to vector<8x8x32xbf16>
    %16 = vector.extract_strided_slice %12 {offsets = [0, 32], sizes = [64, 32], strides = [1, 1]} : vector<64x96xf32> to vector<64x32xf32>
    %17 = vector.shape_cast %16 : vector<64x32xf32> to vector<8x8x32xf32>
    %18 = arith.truncf %17 : vector<8x8x32xf32> to vector<8x8x32xbf16>
    %19 = vector.extract_strided_slice %12 {offsets = [0, 64], sizes = [64, 32], strides = [1, 1]} : vector<64x96xf32> to vector<64x32xf32>
    %20 = vector.shape_cast %19 : vector<64x32xf32> to vector<8x8x32xf32>
    %21 = arith.truncf %20 : vector<8x8x32xf32> to vector<8x8x32xbf16>
    %22 = tpu.iota {dimensions = array<i32: 2>} : vector<1x1x32xi32>
    %cst_9 = arith.constant 0.000000e+00 : f32
    %23 = vector.broadcast %cst_9 : f32 to vector<8x8x32xf32>
    %c0_i32_10 = arith.constant 0 : i32
    %24 = vector.broadcast %c0_i32_10 : i32 to vector<1x1x32xi32>
    %25 = arith.cmpi sge, %22, %24 : vector<1x1x32xi32>
    %c8_i32 = arith.constant 8 : i32
    %26 = vector.broadcast %c8_i32 : i32 to vector<1x1x32xi32>
    %27 = arith.cmpi slt, %22, %26 : vector<1x1x32xi32>
    %28 = arith.andi %25, %27 : vector<1x1x32xi1>
    %29 = arith.extui %28 : vector<1x1x32xi1> to vector<1x1x32xi32>
    %30 = arith.sitofp %29 : vector<1x1x32xi32> to vector<1x1x32xf32>
    %31 = arith.truncf %30 : vector<1x1x32xf32> to vector<1x1x32xbf16>
    %32 = vector.broadcast %31 : vector<1x1x32xbf16> to vector<8x8x32xbf16>
    %33 = arith.mulf %15, %32 : vector<8x8x32xbf16>
    "tpu.trace_start"() <{level = 10 : i32, message = "bte,bse->bts"}> : () -> ()
    %cst_11 = arith.constant dense<0.000000e+00> : vector<8x8x8xf32>
    %34 = tpu.matmul %33, %18, %cst_11 {dimension_numbers = #tpu.dot_dimension_numbers<[2], [2], [1], [1], [0, 0, 0, 1, 1, 1], [0], [0]>} : vector<8x8x32xbf16>, vector<8x8x32xbf16>, vector<8x8x8xf32> -> vector<8x8x8xf32>
    "tpu.trace_stop"() : () -> ()
    %cst_12 = arith.constant 0.353553385 : f32
    %35 = vector.broadcast %cst_12 : f32 to vector<8x8x8xf32>
    %36 = arith.mulf %34, %35 : vector<8x8x8xf32>
    %cst_13 = arith.constant dense<0xFF800000> : vector<8x8xf32>
    %37 = vector.multi_reduction <maximumf>, %36, %cst_13 [2] : vector<8x8x8xf32> to vector<8x8xf32>
    %38 = vector.shape_cast %37 : vector<8x8xf32> to vector<8x8x1xf32>
    %39 = vector.broadcast %38 : vector<8x8x1xf32> to vector<8x8x8xf32>
    %40 = arith.subf %36, %39 : vector<8x8x8xf32>
    %41 = math.exp %40 : vector<8x8x8xf32>
    %cst_14 = arith.constant dense<0.000000e+00> : vector<8x8xf32>
    %42 = vector.multi_reduction <add>, %41, %cst_14 [2] : vector<8x8x8xf32> to vector<8x8xf32>
    %43 = vector.shape_cast %42 : vector<8x8xf32> to vector<8x8x1xf32>
    %44 = tpu.reciprocal %43 {approx = true} : vector<8x8x1xf32> -> vector<8x8x1xf32>
    %45 = vector.broadcast %44 : vector<8x8x1xf32> to vector<8x8x8xf32>
    %46 = arith.mulf %41, %45 : vector<8x8x8xf32>
    %47 = arith.truncf %46 : vector<8x8x8xf32> to vector<8x8x8xbf16>
    %48 = vector.broadcast %31 : vector<1x1x32xbf16> to vector<8x8x32xbf16>
    %49 = arith.mulf %21, %48 : vector<8x8x32xbf16>
    "tpu.trace_start"() <{level = 10 : i32, message = "bts,bse->bte"}> : () -> ()
    %cst_15 = arith.constant dense<0.000000e+00> : vector<8x8x32xf32>
    %50 = tpu.matmul %47, %49, %cst_15 {dimension_numbers = #tpu.dot_dimension_numbers<[2], [1], [1], [2], [0, 0, 0, 1, 1, 2], [0], [0]>} : vector<8x8x8xbf16>, vector<8x8x32xbf16>, vector<8x8x32xf32> -> vector<8x8x32xf32>
    "tpu.trace_stop"() : () -> ()
    %51 = arith.addf %23, %50 : vector<8x8x32xf32>
    %c8_i32_16 = arith.constant 8 : i32
    %52 = vector.broadcast %c8_i32_16 : i32 to vector<1x1x32xi32>
    %53 = arith.cmpi sge, %22, %52 : vector<1x1x32xi32>
    %c16_i32 = arith.constant 16 : i32
    %54 = vector.broadcast %c16_i32 : i32 to vector<1x1x32xi32>
    %55 = arith.cmpi slt, %22, %54 : vector<1x1x32xi32>
    %56 = arith.andi %53, %55 : vector<1x1x32xi1>
    %57 = arith.extui %56 : vector<1x1x32xi1> to vector<1x1x32xi32>
    %58 = arith.sitofp %57 : vector<1x1x32xi32> to vector<1x1x32xf32>
    %59 = arith.truncf %58 : vector<1x1x32xf32> to vector<1x1x32xbf16>
    %60 = vector.broadcast %59 : vector<1x1x32xbf16> to vector<8x8x32xbf16>
    %61 = arith.mulf %15, %60 : vector<8x8x32xbf16>
    "tpu.trace_start"() <{level = 10 : i32, message = "bte,bse->bts"}> : () -> ()
    %cst_17 = arith.constant dense<0.000000e+00> : vector<8x8x8xf32>
    %62 = tpu.matmul %61, %18, %cst_17 {dimension_numbers = #tpu.dot_dimension_numbers<[2], [2], [1], [1], [0, 0, 0, 1, 1, 1], [0], [0]>} : vector<8x8x32xbf16>, vector<8x8x32xbf16>, vector<8x8x8xf32> -> vector<8x8x8xf32>
    "tpu.trace_stop"() : () -> ()
    %cst_18 = arith.constant 0.353553385 : f32
    %63 = vector.broadcast %cst_18 : f32 to vector<8x8x8xf32>
    %64 = arith.mulf %62, %63 : vector<8x8x8xf32>
    %cst_19 = arith.constant dense<0xFF800000> : vector<8x8xf32>
    %65 = vector.multi_reduction <maximumf>, %64, %cst_19 [2] : vector<8x8x8xf32> to vector<8x8xf32>
    %66 = vector.shape_cast %65 : vector<8x8xf32> to vector<8x8x1xf32>
    %67 = vector.broadcast %66 : vector<8x8x1xf32> to vector<8x8x8xf32>
    %68 = arith.subf %64, %67 : vector<8x8x8xf32>
    %69 = math.exp %68 : vector<8x8x8xf32>
    %cst_20 = arith.constant dense<0.000000e+00> : vector<8x8xf32>
    %70 = vector.multi_reduction <add>, %69, %cst_20 [2] : vector<8x8x8xf32> to vector<8x8xf32>
    %71 = vector.shape_cast %70 : vector<8x8xf32> to vector<8x8x1xf32>
    %72 = tpu.reciprocal %71 {approx = true} : vector<8x8x1xf32> -> vector<8x8x1xf32>
    %73 = vector.broadcast %72 : vector<8x8x1xf32> to vector<8x8x8xf32>
    %74 = arith.mulf %69, %73 : vector<8x8x8xf32>
    %75 = arith.truncf %74 : vector<8x8x8xf32> to vector<8x8x8xbf16>
    %76 = vector.broadcast %59 : vector<1x1x32xbf16> to vector<8x8x32xbf16>
    %77 = arith.mulf %21, %76 : vector<8x8x32xbf16>
    "tpu.trace_start"() <{level = 10 : i32, message = "bts,bse->bte"}> : () -> ()
    %cst_21 = arith.constant dense<0.000000e+00> : vector<8x8x32xf32>
    %78 = tpu.matmul %75, %77, %cst_21 {dimension_numbers = #tpu.dot_dimension_numbers<[2], [1], [1], [2], [0, 0, 0, 1, 1, 2], [0], [0]>} : vector<8x8x8xbf16>, vector<8x8x32xbf16>, vector<8x8x32xf32> -> vector<8x8x32xf32>
    "tpu.trace_stop"() : () -> ()
    %79 = arith.addf %51, %78 : vector<8x8x32xf32>
    %c16_i32_22 = arith.constant 16 : i32
    %80 = vector.broadcast %c16_i32_22 : i32 to vector<1x1x32xi32>
    %81 = arith.cmpi sge, %22, %80 : vector<1x1x32xi32>
    %c24_i32 = arith.constant 24 : i32
    %82 = vector.broadcast %c24_i32 : i32 to vector<1x1x32xi32>
    %83 = arith.cmpi slt, %22, %82 : vector<1x1x32xi32>
    %84 = arith.andi %81, %83 : vector<1x1x32xi1>
    %85 = arith.extui %84 : vector<1x1x32xi1> to vector<1x1x32xi32>
    %86 = arith.sitofp %85 : vector<1x1x32xi32> to vector<1x1x32xf32>
    %87 = arith.truncf %86 : vector<1x1x32xf32> to vector<1x1x32xbf16>
    %88 = vector.broadcast %87 : vector<1x1x32xbf16> to vector<8x8x32xbf16>
    %89 = arith.mulf %15, %88 : vector<8x8x32xbf16>
    "tpu.trace_start"() <{level = 10 : i32, message = "bte,bse->bts"}> : () -> ()
    %cst_23 = arith.constant dense<0.000000e+00> : vector<8x8x8xf32>
    %90 = tpu.matmul %89, %18, %cst_23 {dimension_numbers = #tpu.dot_dimension_numbers<[2], [2], [1], [1], [0, 0, 0, 1, 1, 1], [0], [0]>} : vector<8x8x32xbf16>, vector<8x8x32xbf16>, vector<8x8x8xf32> -> vector<8x8x8xf32>
    "tpu.trace_stop"() : () -> ()
    %cst_24 = arith.constant 0.353553385 : f32
    %91 = vector.broadcast %cst_24 : f32 to vector<8x8x8xf32>
    %92 = arith.mulf %90, %91 : vector<8x8x8xf32>
    %cst_25 = arith.constant dense<0xFF800000> : vector<8x8xf32>
    %93 = vector.multi_reduction <maximumf>, %92, %cst_25 [2] : vector<8x8x8xf32> to vector<8x8xf32>
    %94 = vector.shape_cast %93 : vector<8x8xf32> to vector<8x8x1xf32>
    %95 = vector.broadcast %94 : vector<8x8x1xf32> to vector<8x8x8xf32>
    %96 = arith.subf %92, %95 : vector<8x8x8xf32>
    %97 = math.exp %96 : vector<8x8x8xf32>
    %cst_26 = arith.constant dense<0.000000e+00> : vector<8x8xf32>
    %98 = vector.multi_reduction <add>, %97, %cst_26 [2] : vector<8x8x8xf32> to vector<8x8xf32>
    %99 = vector.shape_cast %98 : vector<8x8xf32> to vector<8x8x1xf32>
    %100 = tpu.reciprocal %99 {approx = true} : vector<8x8x1xf32> -> vector<8x8x1xf32>
    %101 = vector.broadcast %100 : vector<8x8x1xf32> to vector<8x8x8xf32>
    %102 = arith.mulf %97, %101 : vector<8x8x8xf32>
    %103 = arith.truncf %102 : vector<8x8x8xf32> to vector<8x8x8xbf16>
    %104 = vector.broadcast %87 : vector<1x1x32xbf16> to vector<8x8x32xbf16>
    %105 = arith.mulf %21, %104 : vector<8x8x32xbf16>
    "tpu.trace_start"() <{level = 10 : i32, message = "bts,bse->bte"}> : () -> ()
    %cst_27 = arith.constant dense<0.000000e+00> : vector<8x8x32xf32>
    %106 = tpu.matmul %103, %105, %cst_27 {dimension_numbers = #tpu.dot_dimension_numbers<[2], [1], [1], [2], [0, 0, 0, 1, 1, 2], [0], [0]>} : vector<8x8x8xbf16>, vector<8x8x32xbf16>, vector<8x8x32xf32> -> vector<8x8x32xf32>
    "tpu.trace_stop"() : () -> ()
    %107 = arith.addf %79, %106 : vector<8x8x32xf32>
    %c24_i32_28 = arith.constant 24 : i32
    %108 = vector.broadcast %c24_i32_28 : i32 to vector<1x1x32xi32>
    %109 = arith.cmpi sge, %22, %108 : vector<1x1x32xi32>
    %c32_i32 = arith.constant 32 : i32
    %110 = vector.broadcast %c32_i32 : i32 to vector<1x1x32xi32>
    %111 = arith.cmpi slt, %22, %110 : vector<1x1x32xi32>
    %112 = arith.andi %109, %111 : vector<1x1x32xi1>
    %113 = arith.extui %112 : vector<1x1x32xi1> to vector<1x1x32xi32>
    %114 = arith.sitofp %113 : vector<1x1x32xi32> to vector<1x1x32xf32>
    %115 = arith.truncf %114 : vector<1x1x32xf32> to vector<1x1x32xbf16>
    %116 = vector.broadcast %115 : vector<1x1x32xbf16> to vector<8x8x32xbf16>
    %117 = arith.mulf %15, %116 : vector<8x8x32xbf16>
    "tpu.trace_start"() <{level = 10 : i32, message = "bte,bse->bts"}> : () -> ()
    %cst_29 = arith.constant dense<0.000000e+00> : vector<8x8x8xf32>
    %118 = tpu.matmul %117, %18, %cst_29 {dimension_numbers = #tpu.dot_dimension_numbers<[2], [2], [1], [1], [0, 0, 0, 1, 1, 1], [0], [0]>} : vector<8x8x32xbf16>, vector<8x8x32xbf16>, vector<8x8x8xf32> -> vector<8x8x8xf32>
    "tpu.trace_stop"() : () -> ()
    %cst_30 = arith.constant 0.353553385 : f32
    %119 = vector.broadcast %cst_30 : f32 to vector<8x8x8xf32>
    %120 = arith.mulf %118, %119 : vector<8x8x8xf32>
    %cst_31 = arith.constant dense<0xFF800000> : vector<8x8xf32>
    %121 = vector.multi_reduction <maximumf>, %120, %cst_31 [2] : vector<8x8x8xf32> to vector<8x8xf32>
    %122 = vector.shape_cast %121 : vector<8x8xf32> to vector<8x8x1xf32>
    %123 = vector.broadcast %122 : vector<8x8x1xf32> to vector<8x8x8xf32>
    %124 = arith.subf %120, %123 : vector<8x8x8xf32>
    %125 = math.exp %124 : vector<8x8x8xf32>
    %cst_32 = arith.constant dense<0.000000e+00> : vector<8x8xf32>
    %126 = vector.multi_reduction <add>, %125, %cst_32 [2] : vector<8x8x8xf32> to vector<8x8xf32>
    %127 = vector.shape_cast %126 : vector<8x8xf32> to vector<8x8x1xf32>
    %128 = tpu.reciprocal %127 {approx = true} : vector<8x8x1xf32> -> vector<8x8x1xf32>
    %129 = vector.broadcast %128 : vector<8x8x1xf32> to vector<8x8x8xf32>
    %130 = arith.mulf %125, %129 : vector<8x8x8xf32>
    %131 = arith.truncf %130 : vector<8x8x8xf32> to vector<8x8x8xbf16>
    %132 = vector.broadcast %115 : vector<1x1x32xbf16> to vector<8x8x32xbf16>
    %133 = arith.mulf %21, %132 : vector<8x8x32xbf16>
    "tpu.trace_start"() <{level = 10 : i32, message = "bts,bse->bte"}> : () -> ()
    %cst_33 = arith.constant dense<0.000000e+00> : vector<8x8x32xf32>
    %134 = tpu.matmul %131, %133, %cst_33 {dimension_numbers = #tpu.dot_dimension_numbers<[2], [1], [1], [2], [0, 0, 0, 1, 1, 2], [0], [0]>} : vector<8x8x8xbf16>, vector<8x8x32xbf16>, vector<8x8x32xf32> -> vector<8x8x32xf32>
    "tpu.trace_stop"() : () -> ()
    %135 = arith.addf %107, %134 : vector<8x8x32xf32>
    %136 = vector.shape_cast %135 : vector<8x8x32xf32> to vector<64x32xf32>
    %c0_34 = arith.constant 0 : index
    %c0_35 = arith.constant 0 : index
    %c0_36 = arith.constant 0 : index
    %137 = vector.load %arg5[%c0_34, %c0_35, %c0_36] : memref<1x32x32xbf16, #tpu.memory_space<vmem>>, vector<1x32x32xbf16>
    %138 = vector.shape_cast %137 : vector<1x32x32xbf16> to vector<32x32xbf16>
    %139 = arith.truncf %136 : vector<64x32xf32> to vector<64x32xbf16>
    %cst_37 = arith.constant dense<0.000000e+00> : vector<64x32xf32>
    %140 = tpu.matmul %139, %138, %cst_37 {dimension_numbers = #tpu.dot_dimension_numbers<[1], [0], [0], [1], [0, 0, 1, 1], [], []>} : vector<64x32xbf16>, vector<32x32xbf16>, vector<64x32xf32> -> vector<64x32xf32>
    %c0_38 = arith.constant 0 : index
    %c0_39 = arith.constant 0 : index
    %c0_40 = arith.constant 0 : index
    %141 = vector.load %arg6[%c0_38, %c0_39, %c0_40] : memref<1x1x32xf32, #tpu.memory_space<vmem>>, vector<1x1x32xf32>
    %142 = vector.shape_cast %141 : vector<1x1x32xf32> to vector<1x32xf32>
    %143 = vector.broadcast %142 : vector<1x32xf32> to vector<64x32xf32>
    %144 = arith.addf %140, %143 : vector<64x32xf32>
    %145 = arith.addf %4, %144 : vector<64x32xf32>
    %c0_41 = arith.constant 0 : index
    %c0_42 = arith.constant 0 : index
    %c0_43 = arith.constant 0 : index
    %146 = vector.load %arg7[%c0_41, %c0_42, %c0_43] : memref<1x1x32xf32, #tpu.memory_space<vmem>>, vector<1x1x32xf32>
    %147 = vector.shape_cast %146 : vector<1x1x32xf32> to vector<1x32xf32>
    %c0_44 = arith.constant 0 : index
    %c0_45 = arith.constant 0 : index
    %c0_46 = arith.constant 0 : index
    %148 = vector.load %arg8[%c0_44, %c0_45, %c0_46] : memref<1x1x32xf32, #tpu.memory_space<vmem>>, vector<1x1x32xf32>
    %149 = vector.shape_cast %148 : vector<1x1x32xf32> to vector<1x32xf32>
    %cst_47 = arith.constant dense<0.000000e+00> : vector<64xf32>
    %150 = vector.multi_reduction <add>, %145, %cst_47 [1] : vector<64x32xf32> to vector<64xf32>
    %151 = vector.shape_cast %150 : vector<64xf32> to vector<64x1xf32>
    %cst_48 = arith.constant 3.200000e+01 : f32
    %152 = vector.broadcast %cst_48 : f32 to vector<64x1xf32>
    %153 = arith.divf %151, %152 : vector<64x1xf32>
    %154 = vector.broadcast %153 : vector<64x1xf32> to vector<64x32xf32>
    %155 = arith.subf %145, %154 : vector<64x32xf32>
    %156 = arith.mulf %155, %155 : vector<64x32xf32>
    %cst_49 = arith.constant dense<0.000000e+00> : vector<64xf32>
    %157 = vector.multi_reduction <add>, %156, %cst_49 [1] : vector<64x32xf32> to vector<64xf32>
    %158 = vector.shape_cast %157 : vector<64xf32> to vector<64x1xf32>
    %cst_50 = arith.constant 3.200000e+01 : f32
    %159 = vector.broadcast %cst_50 : f32 to vector<64x1xf32>
    %160 = arith.divf %158, %159 : vector<64x1xf32>
    %cst_51 = arith.constant 9.99999974E-6 : f32
    %161 = vector.broadcast %cst_51 : f32 to vector<64x1xf32>
    %162 = arith.addf %160, %161 : vector<64x1xf32>
    %163 = math.rsqrt %162 : vector<64x1xf32>
    %164 = vector.broadcast %163 : vector<64x1xf32> to vector<64x32xf32>
    %165 = arith.mulf %155, %164 : vector<64x32xf32>
    %166 = vector.broadcast %147 : vector<1x32xf32> to vector<64x32xf32>
    %167 = arith.mulf %165, %166 : vector<64x32xf32>
    %168 = vector.broadcast %149 : vector<1x32xf32> to vector<64x32xf32>
    %169 = arith.addf %167, %168 : vector<64x32xf32>
    %c0_52 = arith.constant 0 : index
    %c0_53 = arith.constant 0 : index
    %c0_54 = arith.constant 0 : index
    %170 = vector.load %arg9[%c0_52, %c0_53, %c0_54] : memref<1x32x128xbf16, #tpu.memory_space<vmem>>, vector<1x32x128xbf16>
    %171 = vector.shape_cast %170 : vector<1x32x128xbf16> to vector<32x128xbf16>
    %172 = arith.truncf %169 : vector<64x32xf32> to vector<64x32xbf16>
    %cst_55 = arith.constant dense<0.000000e+00> : vector<64x128xf32>
    %173 = tpu.matmul %172, %171, %cst_55 {dimension_numbers = #tpu.dot_dimension_numbers<[1], [0], [0], [1], [0, 0, 1, 1], [], []>} : vector<64x32xbf16>, vector<32x128xbf16>, vector<64x128xf32> -> vector<64x128xf32>
    %c0_56 = arith.constant 0 : index
    %c0_57 = arith.constant 0 : index
    %c0_58 = arith.constant 0 : index
    %174 = vector.load %arg10[%c0_56, %c0_57, %c0_58] : memref<1x1x128xf32, #tpu.memory_space<vmem>>, vector<1x1x128xf32>
    %175 = vector.shape_cast %174 : vector<1x1x128xf32> to vector<1x128xf32>
    %176 = vector.broadcast %175 : vector<1x128xf32> to vector<64x128xf32>
    %177 = arith.addf %173, %176 : vector<64x128xf32>
    %cst_59 = arith.constant 0.000000e+00 : f32
    %178 = vector.broadcast %cst_59 : f32 to vector<64x128xf32>
    %179 = arith.maximumf %177, %178 : vector<64x128xf32>
    %c0_60 = arith.constant 0 : index
    %c0_61 = arith.constant 0 : index
    %c0_62 = arith.constant 0 : index
    %180 = vector.load %arg11[%c0_60, %c0_61, %c0_62] : memref<1x128x32xbf16, #tpu.memory_space<vmem>>, vector<1x128x32xbf16>
    %181 = vector.shape_cast %180 : vector<1x128x32xbf16> to vector<128x32xbf16>
    %182 = arith.truncf %179 : vector<64x128xf32> to vector<64x128xbf16>
    %cst_63 = arith.constant dense<0.000000e+00> : vector<64x32xf32>
    %183 = tpu.matmul %182, %181, %cst_63 {dimension_numbers = #tpu.dot_dimension_numbers<[1], [0], [0], [1], [0, 0, 1, 1], [], []>} : vector<64x128xbf16>, vector<128x32xbf16>, vector<64x32xf32> -> vector<64x32xf32>
    %c0_64 = arith.constant 0 : index
    %c0_65 = arith.constant 0 : index
    %c0_66 = arith.constant 0 : index
    %184 = vector.load %arg12[%c0_64, %c0_65, %c0_66] : memref<1x1x32xf32, #tpu.memory_space<vmem>>, vector<1x1x32xf32>
    %185 = vector.shape_cast %184 : vector<1x1x32xf32> to vector<1x32xf32>
    %186 = vector.broadcast %185 : vector<1x32xf32> to vector<64x32xf32>
    %187 = arith.addf %183, %186 : vector<64x32xf32>
    %188 = arith.addf %169, %187 : vector<64x32xf32>
    %c0_67 = arith.constant 0 : index
    %c0_68 = arith.constant 0 : index
    %c0_69 = arith.constant 0 : index
    %189 = vector.load %arg13[%c0_67, %c0_68, %c0_69] : memref<1x1x32xf32, #tpu.memory_space<vmem>>, vector<1x1x32xf32>
    %190 = vector.shape_cast %189 : vector<1x1x32xf32> to vector<1x32xf32>
    %c0_70 = arith.constant 0 : index
    %c0_71 = arith.constant 0 : index
    %c0_72 = arith.constant 0 : index
    %191 = vector.load %arg14[%c0_70, %c0_71, %c0_72] : memref<1x1x32xf32, #tpu.memory_space<vmem>>, vector<1x1x32xf32>
    %192 = vector.shape_cast %191 : vector<1x1x32xf32> to vector<1x32xf32>
    %cst_73 = arith.constant dense<0.000000e+00> : vector<64xf32>
    %193 = vector.multi_reduction <add>, %188, %cst_73 [1] : vector<64x32xf32> to vector<64xf32>
    %194 = vector.shape_cast %193 : vector<64xf32> to vector<64x1xf32>
    %cst_74 = arith.constant 3.200000e+01 : f32
    %195 = vector.broadcast %cst_74 : f32 to vector<64x1xf32>
    %196 = arith.divf %194, %195 : vector<64x1xf32>
    %197 = vector.broadcast %196 : vector<64x1xf32> to vector<64x32xf32>
    %198 = arith.subf %188, %197 : vector<64x32xf32>
    %199 = arith.mulf %198, %198 : vector<64x32xf32>
    %cst_75 = arith.constant dense<0.000000e+00> : vector<64xf32>
    %200 = vector.multi_reduction <add>, %199, %cst_75 [1] : vector<64x32xf32> to vector<64xf32>
    %201 = vector.shape_cast %200 : vector<64xf32> to vector<64x1xf32>
    %cst_76 = arith.constant 3.200000e+01 : f32
    %202 = vector.broadcast %cst_76 : f32 to vector<64x1xf32>
    %203 = arith.divf %201, %202 : vector<64x1xf32>
    %cst_77 = arith.constant 9.99999974E-6 : f32
    %204 = vector.broadcast %cst_77 : f32 to vector<64x1xf32>
    %205 = arith.addf %203, %204 : vector<64x1xf32>
    %206 = math.rsqrt %205 : vector<64x1xf32>
    %207 = vector.broadcast %206 : vector<64x1xf32> to vector<64x32xf32>
    %208 = arith.mulf %198, %207 : vector<64x32xf32>
    %209 = vector.broadcast %190 : vector<1x32xf32> to vector<64x32xf32>
    %210 = arith.mulf %208, %209 : vector<64x32xf32>
    %211 = vector.broadcast %192 : vector<1x32xf32> to vector<64x32xf32>
    %212 = arith.addf %210, %211 : vector<64x32xf32>
    %213 = vector.shape_cast %212 : vector<64x32xf32> to vector<8x8x32xf32>
    %c0_78 = arith.constant 0 : index
    %c0_79 = arith.constant 0 : index
    %c0_80 = arith.constant 0 : index
    %214 = vector.load %arg15[%c0_78, %c0_79, %c0_80] : memref<8x8x32xf32, #tpu.memory_space<vmem>>, vector<8x8x32xf32>
    tpu.vector_store %arg15[%c0_78, %c0_79, %c0_80], %213 {strides = array<i32>} : memref<8x8x32xf32, #tpu.memory_space<vmem>>, vector<8x8x32xf32>,
    return
  }
  func.func @transform_0(%arg0: i32, %arg1: i32) -> (i32, i32, i32) {
    %c0_i32 = arith.constant 0 : i32
    %c0_i32_0 = arith.constant 0 : i32
    %c0_i32_1 = arith.constant 0 : i32
    return %arg0, %c0_i32, %c0_i32_0 : i32, i32, i32
  }
  func.func @transform_1(%arg0: i32, %arg1: i32) -> (i32, i32, i32) {
    %c0_i32 = arith.constant 0 : i32
    %c0_i32_0 = arith.constant 0 : i32
    %c0_i32_1 = arith.constant 0 : i32
    return %arg1, %c0_i32, %c0_i32_0 : i32, i32, i32
  }
  func.func @transform_2(%arg0: i32, %arg1: i32) -> (i32, i32, i32) {
    %c0_i32 = arith.constant 0 : i32
    %c0_i32_0 = arith.constant 0 : i32
    %c0_i32_1 = arith.constant 0 : i32
    return %arg1, %c0_i32, %c0_i32_0 : i32, i32, i32
  }
  func.func @transform_3(%arg0: i32, %arg1: i32) -> (i32, i32, i32) {
    %c0_i32 = arith.constant 0 : i32
    %c0_i32_0 = arith.constant 0 : i32
    %c0_i32_1 = arith.constant 0 : i32
    return %arg1, %c0_i32, %c0_i32_0 : i32, i32, i32
  }
  func.func @transform_4(%arg0: i32, %arg1: i32) -> (i32, i32, i32) {
    %c0_i32 = arith.constant 0 : i32
    %c0_i32_0 = arith.constant 0 : i32
    %c0_i32_1 = arith.constant 0 : i32
    return %arg1, %c0_i32, %c0_i32_0 : i32, i32, i32
  }
  func.func @transform_5(%arg0: i32, %arg1: i32) -> (i32, i32, i32) {
    %c0_i32 = arith.constant 0 : i32
    %c0_i32_0 = arith.constant 0 : i32
    %c0_i32_1 = arith.constant 0 : i32
    return %arg1, %c0_i32, %c0_i32_0 : i32, i32, i32
  }
  func.func @transform_6(%arg0: i32, %arg1: i32) -> (i32, i32, i32) {
    %c0_i32 = arith.constant 0 : i32
    %c0_i32_0 = arith.constant 0 : i32
    %c0_i32_1 = arith.constant 0 : i32
    return %arg1, %c0_i32, %c0_i32_0 : i32, i32, i32
  }
  func.func @transform_7(%arg0: i32, %arg1: i32) -> (i32, i32, i32) {
    %c0_i32 = arith.constant 0 : i32
    %c0_i32_0 = arith.constant 0 : i32
    %c0_i32_1 = arith.constant 0 : i32
    return %arg1, %c0_i32, %c0_i32_0 : i32, i32, i32
  }
  func.func @transform_8(%arg0: i32, %arg1: i32) -> (i32, i32, i32) {
    %c0_i32 = arith.constant 0 : i32
    %c0_i32_0 = arith.constant 0 : i32
    %c0_i32_1 = arith.constant 0 : i32
    return %arg1, %c0_i32, %c0_i32_0 : i32, i32, i32
  }
  func.func @transform_9(%arg0: i32, %arg1: i32) -> (i32, i32, i32) {
    %c0_i32 = arith.constant 0 : i32
    %c0_i32_0 = arith.constant 0 : i32
    %c0_i32_1 = arith.constant 0 : i32
    return %arg1, %c0_i32, %c0_i32_0 : i32, i32, i32
  }
  func.func @transform_10(%arg0: i32, %arg1: i32) -> (i32, i32, i32) {
    %c0_i32 = arith.constant 0 : i32
    %c0_i32_0 = arith.constant 0 : i32
    %c0_i32_1 = arith.constant 0 : i32
    return %arg1, %c0_i32, %c0_i32_0 : i32, i32, i32
  }
  func.func @transform_11(%arg0: i32, %arg1: i32) -> (i32, i32, i32) {
    %c0_i32 = arith.constant 0 : i32
    %c0_i32_0 = arith.constant 0 : i32
    %c0_i32_1 = arith.constant 0 : i32
    return %arg1, %c0_i32, %c0_i32_0 : i32, i32, i32
  }
  func.func @transform_12(%arg0: i32, %arg1: i32) -> (i32, i32, i32) {
    %c0_i32 = arith.constant 0 : i32
    %c0_i32_0 = arith.constant 0 : i32
    %c0_i32_1 = arith.constant 0 : i32
    return %arg1, %c0_i32, %c0_i32_0 : i32, i32, i32
  }
  func.func @transform_13(%arg0: i32, %arg1: i32) -> (i32, i32, i32) {
    %c0_i32 = arith.constant 0 : i32
    %c0_i32_0 = arith.constant 0 : i32
    %c0_i32_1 = arith.constant 0 : i32
    return %arg0, %c0_i32, %c0_i32_0 : i32, i32, i32
  }
}

module attributes {stable_mosaic.version = 11 : i64} {
  func.func @_encoder_stack_kernel(%arg0: i32, %arg1: i32, %arg2: memref<2x8x32xf32, #tpu.memory_space<vmem>>, %arg3: memref<1x32x96xbf16, #tpu.memory_space<vmem>>, %arg4: memref<1x1x96xf32, #tpu.memory_space<vmem>>, %arg5: memref<1x32x32xbf16, #tpu.memory_space<vmem>>, %arg6: memref<1x1x32xf32, #tpu.memory_space<vmem>>, %arg7: memref<1x1x32xf32, #tpu.memory_space<vmem>>, %arg8: memref<1x1x32xf32, #tpu.memory_space<vmem>>, %arg9: memref<1x32x128xbf16, #tpu.memory_space<vmem>>, %arg10: memref<1x1x128xf32, #tpu.memory_space<vmem>>, %arg11: memref<1x128x32xbf16, #tpu.memory_space<vmem>>, %arg12: memref<1x1x32xf32, #tpu.memory_space<vmem>>, %arg13: memref<1x1x32xf32, #tpu.memory_space<vmem>>, %arg14: memref<1x1x32xf32, #tpu.memory_space<vmem>>, %arg15: memref<2x8x32xf32, #tpu.memory_space<vmem>>) attributes {dimension_semantics = [#tpu.dimension_semantics<parallel>, #tpu.dimension_semantics<arbitrary>], iteration_bounds = array<i64: 1, 2>, scalar_prefetch = 0 : i64, scratch_operands = 0 : i64, tpu.core_type = #tpu.core_type<tc>, window_params = [{transform_indices = @transform_0, window_bounds = array<i64: 2, 8, 32>}, {transform_indices = @transform_1, window_bounds = array<i64: 1, 32, 96>}, {transform_indices = @transform_2, window_bounds = array<i64: 1, 1, 96>}, {transform_indices = @transform_3, window_bounds = array<i64: 1, 32, 32>}, {transform_indices = @transform_4, window_bounds = array<i64: 1, 1, 32>}, {transform_indices = @transform_5, window_bounds = array<i64: 1, 1, 32>}, {transform_indices = @transform_6, window_bounds = array<i64: 1, 1, 32>}, {transform_indices = @transform_7, window_bounds = array<i64: 1, 32, 128>}, {transform_indices = @transform_8, window_bounds = array<i64: 1, 1, 128>}, {transform_indices = @transform_9, window_bounds = array<i64: 1, 128, 32>}, {transform_indices = @transform_10, window_bounds = array<i64: 1, 1, 32>}, {transform_indices = @transform_11, window_bounds = array<i64: 1, 1, 32>}, {transform_indices = @transform_12, window_bounds = array<i64: 1, 1, 32>}, {transform_indices = @transform_13, window_bounds = array<i64: 2, 8, 32>}]} {
    %c0_i32 = arith.constant 0 : i32
    %0 = arith.cmpi eq, %arg1, %c0_i32 : i32
    %1 = arith.extui %0 : i1 to i32
    %c0_i32_0 = arith.constant 0 : i32
    %2 = arith.cmpi ne, %1, %c0_i32_0 : i32
    scf.if %2 {
      %c0_81 = arith.constant 0 : index
      %c0_82 = arith.constant 0 : index
      %c0_83 = arith.constant 0 : index
      %215 = vector.load %arg2[%c0_81, %c0_82, %c0_83] : memref<2x8x32xf32, #tpu.memory_space<vmem>>, vector<2x8x32xf32>
      %c0_84 = arith.constant 0 : index
      %c0_85 = arith.constant 0 : index
      %c0_86 = arith.constant 0 : index
      %216 = vector.load %arg15[%c0_84, %c0_85, %c0_86] : memref<2x8x32xf32, #tpu.memory_space<vmem>>, vector<2x8x32xf32>
      tpu.vector_store %arg15[%c0_84, %c0_85, %c0_86], %215 {strides = array<i32>} : memref<2x8x32xf32, #tpu.memory_space<vmem>>, vector<2x8x32xf32>,
    } else {
    }
    %c0 = arith.constant 0 : index
    %c0_1 = arith.constant 0 : index
    %c0_2 = arith.constant 0 : index
    %3 = vector.load %arg15[%c0, %c0_1, %c0_2] : memref<2x8x32xf32, #tpu.memory_space<vmem>>, vector<2x8x32xf32>
    %4 = vector.shape_cast %3 : vector<2x8x32xf32> to vector<16x32xf32>
    %c0_3 = arith.constant 0 : index
    %c0_4 = arith.constant 0 : index
    %c0_5 = arith.constant 0 : index
    %5 = vector.load %arg3[%c0_3, %c0_4, %c0_5] : memref<1x32x96xbf16, #tpu.memory_space<vmem>>, vector<1x32x96xbf16>
    %6 = vector.shape_cast %5 : vector<1x32x96xbf16> to vector<32x96xbf16>
    %7 = arith.truncf %4 : vector<16x32xf32> to vector<16x32xbf16>
    %cst = arith.constant dense<0.000000e+00> : vector<16x96xf32>
    %8 = tpu.matmul %7, %6, %cst {dimension_numbers = #tpu.dot_dimension_numbers<[1], [0], [0], [1], [0, 0, 1, 1], [], []>} : vector<16x32xbf16>, vector<32x96xbf16>, vector<16x96xf32> -> vector<16x96xf32>
    %c0_6 = arith.constant 0 : index
    %c0_7 = arith.constant 0 : index
    %c0_8 = arith.constant 0 : index
    %9 = vector.load %arg4[%c0_6, %c0_7, %c0_8] : memref<1x1x96xf32, #tpu.memory_space<vmem>>, vector<1x1x96xf32>
    %10 = vector.shape_cast %9 : vector<1x1x96xf32> to vector<1x96xf32>
    %11 = vector.broadcast %10 : vector<1x96xf32> to vector<16x96xf32>
    %12 = arith.addf %8, %11 : vector<16x96xf32>
    %13 = vector.extract_strided_slice %12 {offsets = [0, 0], sizes = [16, 32], strides = [1, 1]} : vector<16x96xf32> to vector<16x32xf32>
    %14 = vector.shape_cast %13 : vector<16x32xf32> to vector<2x8x32xf32>
    %15 = arith.truncf %14 : vector<2x8x32xf32> to vector<2x8x32xbf16>
    %16 = vector.extract_strided_slice %12 {offsets = [0, 32], sizes = [16, 32], strides = [1, 1]} : vector<16x96xf32> to vector<16x32xf32>
    %17 = vector.shape_cast %16 : vector<16x32xf32> to vector<2x8x32xf32>
    %18 = arith.truncf %17 : vector<2x8x32xf32> to vector<2x8x32xbf16>
    %19 = vector.extract_strided_slice %12 {offsets = [0, 64], sizes = [16, 32], strides = [1, 1]} : vector<16x96xf32> to vector<16x32xf32>
    %20 = vector.shape_cast %19 : vector<16x32xf32> to vector<2x8x32xf32>
    %21 = arith.truncf %20 : vector<2x8x32xf32> to vector<2x8x32xbf16>
    %22 = tpu.iota {dimensions = array<i32: 2>} : vector<1x1x32xi32>
    %cst_9 = arith.constant 0.000000e+00 : f32
    %23 = vector.broadcast %cst_9 : f32 to vector<2x8x32xf32>
    %c0_i32_10 = arith.constant 0 : i32
    %24 = vector.broadcast %c0_i32_10 : i32 to vector<1x1x32xi32>
    %25 = arith.cmpi sge, %22, %24 : vector<1x1x32xi32>
    %c8_i32 = arith.constant 8 : i32
    %26 = vector.broadcast %c8_i32 : i32 to vector<1x1x32xi32>
    %27 = arith.cmpi slt, %22, %26 : vector<1x1x32xi32>
    %28 = arith.andi %25, %27 : vector<1x1x32xi1>
    %29 = arith.extui %28 : vector<1x1x32xi1> to vector<1x1x32xi32>
    %30 = arith.sitofp %29 : vector<1x1x32xi32> to vector<1x1x32xf32>
    %31 = arith.truncf %30 : vector<1x1x32xf32> to vector<1x1x32xbf16>
    %32 = vector.broadcast %31 : vector<1x1x32xbf16> to vector<2x8x32xbf16>
    %33 = arith.mulf %15, %32 : vector<2x8x32xbf16>
    "tpu.trace_start"() <{level = 10 : i32, message = "bte,bse->bts"}> : () -> ()
    %cst_11 = arith.constant dense<0.000000e+00> : vector<2x8x8xf32>
    %34 = tpu.matmul %33, %18, %cst_11 {dimension_numbers = #tpu.dot_dimension_numbers<[2], [2], [1], [1], [0, 0, 0, 1, 1, 1], [0], [0]>} : vector<2x8x32xbf16>, vector<2x8x32xbf16>, vector<2x8x8xf32> -> vector<2x8x8xf32>
    "tpu.trace_stop"() : () -> ()
    %cst_12 = arith.constant 0.353553385 : f32
    %35 = vector.broadcast %cst_12 : f32 to vector<2x8x8xf32>
    %36 = arith.mulf %34, %35 : vector<2x8x8xf32>
    %cst_13 = arith.constant dense<0xFF800000> : vector<2x8xf32>
    %37 = vector.multi_reduction <maximumf>, %36, %cst_13 [2] : vector<2x8x8xf32> to vector<2x8xf32>
    %38 = vector.shape_cast %37 : vector<2x8xf32> to vector<2x8x1xf32>
    %39 = vector.broadcast %38 : vector<2x8x1xf32> to vector<2x8x8xf32>
    %40 = arith.subf %36, %39 : vector<2x8x8xf32>
    %41 = math.exp %40 : vector<2x8x8xf32>
    %cst_14 = arith.constant dense<0.000000e+00> : vector<2x8xf32>
    %42 = vector.multi_reduction <add>, %41, %cst_14 [2] : vector<2x8x8xf32> to vector<2x8xf32>
    %43 = vector.shape_cast %42 : vector<2x8xf32> to vector<2x8x1xf32>
    %44 = tpu.reciprocal %43 {approx = true} : vector<2x8x1xf32> -> vector<2x8x1xf32>
    %45 = vector.broadcast %44 : vector<2x8x1xf32> to vector<2x8x8xf32>
    %46 = arith.mulf %41, %45 : vector<2x8x8xf32>
    %47 = arith.truncf %46 : vector<2x8x8xf32> to vector<2x8x8xbf16>
    %48 = vector.broadcast %31 : vector<1x1x32xbf16> to vector<2x8x32xbf16>
    %49 = arith.mulf %21, %48 : vector<2x8x32xbf16>
    "tpu.trace_start"() <{level = 10 : i32, message = "bts,bse->bte"}> : () -> ()
    %cst_15 = arith.constant dense<0.000000e+00> : vector<2x8x32xf32>
    %50 = tpu.matmul %47, %49, %cst_15 {dimension_numbers = #tpu.dot_dimension_numbers<[2], [1], [1], [2], [0, 0, 0, 1, 1, 2], [0], [0]>} : vector<2x8x8xbf16>, vector<2x8x32xbf16>, vector<2x8x32xf32> -> vector<2x8x32xf32>
    "tpu.trace_stop"() : () -> ()
    %51 = arith.addf %23, %50 : vector<2x8x32xf32>
    %c8_i32_16 = arith.constant 8 : i32
    %52 = vector.broadcast %c8_i32_16 : i32 to vector<1x1x32xi32>
    %53 = arith.cmpi sge, %22, %52 : vector<1x1x32xi32>
    %c16_i32 = arith.constant 16 : i32
    %54 = vector.broadcast %c16_i32 : i32 to vector<1x1x32xi32>
    %55 = arith.cmpi slt, %22, %54 : vector<1x1x32xi32>
    %56 = arith.andi %53, %55 : vector<1x1x32xi1>
    %57 = arith.extui %56 : vector<1x1x32xi1> to vector<1x1x32xi32>
    %58 = arith.sitofp %57 : vector<1x1x32xi32> to vector<1x1x32xf32>
    %59 = arith.truncf %58 : vector<1x1x32xf32> to vector<1x1x32xbf16>
    %60 = vector.broadcast %59 : vector<1x1x32xbf16> to vector<2x8x32xbf16>
    %61 = arith.mulf %15, %60 : vector<2x8x32xbf16>
    "tpu.trace_start"() <{level = 10 : i32, message = "bte,bse->bts"}> : () -> ()
    %cst_17 = arith.constant dense<0.000000e+00> : vector<2x8x8xf32>
    %62 = tpu.matmul %61, %18, %cst_17 {dimension_numbers = #tpu.dot_dimension_numbers<[2], [2], [1], [1], [0, 0, 0, 1, 1, 1], [0], [0]>} : vector<2x8x32xbf16>, vector<2x8x32xbf16>, vector<2x8x8xf32> -> vector<2x8x8xf32>
    "tpu.trace_stop"() : () -> ()
    %cst_18 = arith.constant 0.353553385 : f32
    %63 = vector.broadcast %cst_18 : f32 to vector<2x8x8xf32>
    %64 = arith.mulf %62, %63 : vector<2x8x8xf32>
    %cst_19 = arith.constant dense<0xFF800000> : vector<2x8xf32>
    %65 = vector.multi_reduction <maximumf>, %64, %cst_19 [2] : vector<2x8x8xf32> to vector<2x8xf32>
    %66 = vector.shape_cast %65 : vector<2x8xf32> to vector<2x8x1xf32>
    %67 = vector.broadcast %66 : vector<2x8x1xf32> to vector<2x8x8xf32>
    %68 = arith.subf %64, %67 : vector<2x8x8xf32>
    %69 = math.exp %68 : vector<2x8x8xf32>
    %cst_20 = arith.constant dense<0.000000e+00> : vector<2x8xf32>
    %70 = vector.multi_reduction <add>, %69, %cst_20 [2] : vector<2x8x8xf32> to vector<2x8xf32>
    %71 = vector.shape_cast %70 : vector<2x8xf32> to vector<2x8x1xf32>
    %72 = tpu.reciprocal %71 {approx = true} : vector<2x8x1xf32> -> vector<2x8x1xf32>
    %73 = vector.broadcast %72 : vector<2x8x1xf32> to vector<2x8x8xf32>
    %74 = arith.mulf %69, %73 : vector<2x8x8xf32>
    %75 = arith.truncf %74 : vector<2x8x8xf32> to vector<2x8x8xbf16>
    %76 = vector.broadcast %59 : vector<1x1x32xbf16> to vector<2x8x32xbf16>
    %77 = arith.mulf %21, %76 : vector<2x8x32xbf16>
    "tpu.trace_start"() <{level = 10 : i32, message = "bts,bse->bte"}> : () -> ()
    %cst_21 = arith.constant dense<0.000000e+00> : vector<2x8x32xf32>
    %78 = tpu.matmul %75, %77, %cst_21 {dimension_numbers = #tpu.dot_dimension_numbers<[2], [1], [1], [2], [0, 0, 0, 1, 1, 2], [0], [0]>} : vector<2x8x8xbf16>, vector<2x8x32xbf16>, vector<2x8x32xf32> -> vector<2x8x32xf32>
    "tpu.trace_stop"() : () -> ()
    %79 = arith.addf %51, %78 : vector<2x8x32xf32>
    %c16_i32_22 = arith.constant 16 : i32
    %80 = vector.broadcast %c16_i32_22 : i32 to vector<1x1x32xi32>
    %81 = arith.cmpi sge, %22, %80 : vector<1x1x32xi32>
    %c24_i32 = arith.constant 24 : i32
    %82 = vector.broadcast %c24_i32 : i32 to vector<1x1x32xi32>
    %83 = arith.cmpi slt, %22, %82 : vector<1x1x32xi32>
    %84 = arith.andi %81, %83 : vector<1x1x32xi1>
    %85 = arith.extui %84 : vector<1x1x32xi1> to vector<1x1x32xi32>
    %86 = arith.sitofp %85 : vector<1x1x32xi32> to vector<1x1x32xf32>
    %87 = arith.truncf %86 : vector<1x1x32xf32> to vector<1x1x32xbf16>
    %88 = vector.broadcast %87 : vector<1x1x32xbf16> to vector<2x8x32xbf16>
    %89 = arith.mulf %15, %88 : vector<2x8x32xbf16>
    "tpu.trace_start"() <{level = 10 : i32, message = "bte,bse->bts"}> : () -> ()
    %cst_23 = arith.constant dense<0.000000e+00> : vector<2x8x8xf32>
    %90 = tpu.matmul %89, %18, %cst_23 {dimension_numbers = #tpu.dot_dimension_numbers<[2], [2], [1], [1], [0, 0, 0, 1, 1, 1], [0], [0]>} : vector<2x8x32xbf16>, vector<2x8x32xbf16>, vector<2x8x8xf32> -> vector<2x8x8xf32>
    "tpu.trace_stop"() : () -> ()
    %cst_24 = arith.constant 0.353553385 : f32
    %91 = vector.broadcast %cst_24 : f32 to vector<2x8x8xf32>
    %92 = arith.mulf %90, %91 : vector<2x8x8xf32>
    %cst_25 = arith.constant dense<0xFF800000> : vector<2x8xf32>
    %93 = vector.multi_reduction <maximumf>, %92, %cst_25 [2] : vector<2x8x8xf32> to vector<2x8xf32>
    %94 = vector.shape_cast %93 : vector<2x8xf32> to vector<2x8x1xf32>
    %95 = vector.broadcast %94 : vector<2x8x1xf32> to vector<2x8x8xf32>
    %96 = arith.subf %92, %95 : vector<2x8x8xf32>
    %97 = math.exp %96 : vector<2x8x8xf32>
    %cst_26 = arith.constant dense<0.000000e+00> : vector<2x8xf32>
    %98 = vector.multi_reduction <add>, %97, %cst_26 [2] : vector<2x8x8xf32> to vector<2x8xf32>
    %99 = vector.shape_cast %98 : vector<2x8xf32> to vector<2x8x1xf32>
    %100 = tpu.reciprocal %99 {approx = true} : vector<2x8x1xf32> -> vector<2x8x1xf32>
    %101 = vector.broadcast %100 : vector<2x8x1xf32> to vector<2x8x8xf32>
    %102 = arith.mulf %97, %101 : vector<2x8x8xf32>
    %103 = arith.truncf %102 : vector<2x8x8xf32> to vector<2x8x8xbf16>
    %104 = vector.broadcast %87 : vector<1x1x32xbf16> to vector<2x8x32xbf16>
    %105 = arith.mulf %21, %104 : vector<2x8x32xbf16>
    "tpu.trace_start"() <{level = 10 : i32, message = "bts,bse->bte"}> : () -> ()
    %cst_27 = arith.constant dense<0.000000e+00> : vector<2x8x32xf32>
    %106 = tpu.matmul %103, %105, %cst_27 {dimension_numbers = #tpu.dot_dimension_numbers<[2], [1], [1], [2], [0, 0, 0, 1, 1, 2], [0], [0]>} : vector<2x8x8xbf16>, vector<2x8x32xbf16>, vector<2x8x32xf32> -> vector<2x8x32xf32>
    "tpu.trace_stop"() : () -> ()
    %107 = arith.addf %79, %106 : vector<2x8x32xf32>
    %c24_i32_28 = arith.constant 24 : i32
    %108 = vector.broadcast %c24_i32_28 : i32 to vector<1x1x32xi32>
    %109 = arith.cmpi sge, %22, %108 : vector<1x1x32xi32>
    %c32_i32 = arith.constant 32 : i32
    %110 = vector.broadcast %c32_i32 : i32 to vector<1x1x32xi32>
    %111 = arith.cmpi slt, %22, %110 : vector<1x1x32xi32>
    %112 = arith.andi %109, %111 : vector<1x1x32xi1>
    %113 = arith.extui %112 : vector<1x1x32xi1> to vector<1x1x32xi32>
    %114 = arith.sitofp %113 : vector<1x1x32xi32> to vector<1x1x32xf32>
    %115 = arith.truncf %114 : vector<1x1x32xf32> to vector<1x1x32xbf16>
    %116 = vector.broadcast %115 : vector<1x1x32xbf16> to vector<2x8x32xbf16>
    %117 = arith.mulf %15, %116 : vector<2x8x32xbf16>
    "tpu.trace_start"() <{level = 10 : i32, message = "bte,bse->bts"}> : () -> ()
    %cst_29 = arith.constant dense<0.000000e+00> : vector<2x8x8xf32>
    %118 = tpu.matmul %117, %18, %cst_29 {dimension_numbers = #tpu.dot_dimension_numbers<[2], [2], [1], [1], [0, 0, 0, 1, 1, 1], [0], [0]>} : vector<2x8x32xbf16>, vector<2x8x32xbf16>, vector<2x8x8xf32> -> vector<2x8x8xf32>
    "tpu.trace_stop"() : () -> ()
    %cst_30 = arith.constant 0.353553385 : f32
    %119 = vector.broadcast %cst_30 : f32 to vector<2x8x8xf32>
    %120 = arith.mulf %118, %119 : vector<2x8x8xf32>
    %cst_31 = arith.constant dense<0xFF800000> : vector<2x8xf32>
    %121 = vector.multi_reduction <maximumf>, %120, %cst_31 [2] : vector<2x8x8xf32> to vector<2x8xf32>
    %122 = vector.shape_cast %121 : vector<2x8xf32> to vector<2x8x1xf32>
    %123 = vector.broadcast %122 : vector<2x8x1xf32> to vector<2x8x8xf32>
    %124 = arith.subf %120, %123 : vector<2x8x8xf32>
    %125 = math.exp %124 : vector<2x8x8xf32>
    %cst_32 = arith.constant dense<0.000000e+00> : vector<2x8xf32>
    %126 = vector.multi_reduction <add>, %125, %cst_32 [2] : vector<2x8x8xf32> to vector<2x8xf32>
    %127 = vector.shape_cast %126 : vector<2x8xf32> to vector<2x8x1xf32>
    %128 = tpu.reciprocal %127 {approx = true} : vector<2x8x1xf32> -> vector<2x8x1xf32>
    %129 = vector.broadcast %128 : vector<2x8x1xf32> to vector<2x8x8xf32>
    %130 = arith.mulf %125, %129 : vector<2x8x8xf32>
    %131 = arith.truncf %130 : vector<2x8x8xf32> to vector<2x8x8xbf16>
    %132 = vector.broadcast %115 : vector<1x1x32xbf16> to vector<2x8x32xbf16>
    %133 = arith.mulf %21, %132 : vector<2x8x32xbf16>
    "tpu.trace_start"() <{level = 10 : i32, message = "bts,bse->bte"}> : () -> ()
    %cst_33 = arith.constant dense<0.000000e+00> : vector<2x8x32xf32>
    %134 = tpu.matmul %131, %133, %cst_33 {dimension_numbers = #tpu.dot_dimension_numbers<[2], [1], [1], [2], [0, 0, 0, 1, 1, 2], [0], [0]>} : vector<2x8x8xbf16>, vector<2x8x32xbf16>, vector<2x8x32xf32> -> vector<2x8x32xf32>
    "tpu.trace_stop"() : () -> ()
    %135 = arith.addf %107, %134 : vector<2x8x32xf32>
    %136 = vector.shape_cast %135 : vector<2x8x32xf32> to vector<16x32xf32>
    %c0_34 = arith.constant 0 : index
    %c0_35 = arith.constant 0 : index
    %c0_36 = arith.constant 0 : index
    %137 = vector.load %arg5[%c0_34, %c0_35, %c0_36] : memref<1x32x32xbf16, #tpu.memory_space<vmem>>, vector<1x32x32xbf16>
    %138 = vector.shape_cast %137 : vector<1x32x32xbf16> to vector<32x32xbf16>
    %139 = arith.truncf %136 : vector<16x32xf32> to vector<16x32xbf16>
    %cst_37 = arith.constant dense<0.000000e+00> : vector<16x32xf32>
    %140 = tpu.matmul %139, %138, %cst_37 {dimension_numbers = #tpu.dot_dimension_numbers<[1], [0], [0], [1], [0, 0, 1, 1], [], []>} : vector<16x32xbf16>, vector<32x32xbf16>, vector<16x32xf32> -> vector<16x32xf32>
    %c0_38 = arith.constant 0 : index
    %c0_39 = arith.constant 0 : index
    %c0_40 = arith.constant 0 : index
    %141 = vector.load %arg6[%c0_38, %c0_39, %c0_40] : memref<1x1x32xf32, #tpu.memory_space<vmem>>, vector<1x1x32xf32>
    %142 = vector.shape_cast %141 : vector<1x1x32xf32> to vector<1x32xf32>
    %143 = vector.broadcast %142 : vector<1x32xf32> to vector<16x32xf32>
    %144 = arith.addf %140, %143 : vector<16x32xf32>
    %145 = arith.addf %4, %144 : vector<16x32xf32>
    %c0_41 = arith.constant 0 : index
    %c0_42 = arith.constant 0 : index
    %c0_43 = arith.constant 0 : index
    %146 = vector.load %arg7[%c0_41, %c0_42, %c0_43] : memref<1x1x32xf32, #tpu.memory_space<vmem>>, vector<1x1x32xf32>
    %147 = vector.shape_cast %146 : vector<1x1x32xf32> to vector<1x32xf32>
    %c0_44 = arith.constant 0 : index
    %c0_45 = arith.constant 0 : index
    %c0_46 = arith.constant 0 : index
    %148 = vector.load %arg8[%c0_44, %c0_45, %c0_46] : memref<1x1x32xf32, #tpu.memory_space<vmem>>, vector<1x1x32xf32>
    %149 = vector.shape_cast %148 : vector<1x1x32xf32> to vector<1x32xf32>
    %cst_47 = arith.constant dense<0.000000e+00> : vector<16xf32>
    %150 = vector.multi_reduction <add>, %145, %cst_47 [1] : vector<16x32xf32> to vector<16xf32>
    %151 = vector.shape_cast %150 : vector<16xf32> to vector<16x1xf32>
    %cst_48 = arith.constant 3.200000e+01 : f32
    %152 = vector.broadcast %cst_48 : f32 to vector<16x1xf32>
    %153 = arith.divf %151, %152 : vector<16x1xf32>
    %154 = vector.broadcast %153 : vector<16x1xf32> to vector<16x32xf32>
    %155 = arith.subf %145, %154 : vector<16x32xf32>
    %156 = arith.mulf %155, %155 : vector<16x32xf32>
    %cst_49 = arith.constant dense<0.000000e+00> : vector<16xf32>
    %157 = vector.multi_reduction <add>, %156, %cst_49 [1] : vector<16x32xf32> to vector<16xf32>
    %158 = vector.shape_cast %157 : vector<16xf32> to vector<16x1xf32>
    %cst_50 = arith.constant 3.200000e+01 : f32
    %159 = vector.broadcast %cst_50 : f32 to vector<16x1xf32>
    %160 = arith.divf %158, %159 : vector<16x1xf32>
    %cst_51 = arith.constant 9.99999974E-6 : f32
    %161 = vector.broadcast %cst_51 : f32 to vector<16x1xf32>
    %162 = arith.addf %160, %161 : vector<16x1xf32>
    %163 = math.rsqrt %162 : vector<16x1xf32>
    %164 = vector.broadcast %163 : vector<16x1xf32> to vector<16x32xf32>
    %165 = arith.mulf %155, %164 : vector<16x32xf32>
    %166 = vector.broadcast %147 : vector<1x32xf32> to vector<16x32xf32>
    %167 = arith.mulf %165, %166 : vector<16x32xf32>
    %168 = vector.broadcast %149 : vector<1x32xf32> to vector<16x32xf32>
    %169 = arith.addf %167, %168 : vector<16x32xf32>
    %c0_52 = arith.constant 0 : index
    %c0_53 = arith.constant 0 : index
    %c0_54 = arith.constant 0 : index
    %170 = vector.load %arg9[%c0_52, %c0_53, %c0_54] : memref<1x32x128xbf16, #tpu.memory_space<vmem>>, vector<1x32x128xbf16>
    %171 = vector.shape_cast %170 : vector<1x32x128xbf16> to vector<32x128xbf16>
    %172 = arith.truncf %169 : vector<16x32xf32> to vector<16x32xbf16>
    %cst_55 = arith.constant dense<0.000000e+00> : vector<16x128xf32>
    %173 = tpu.matmul %172, %171, %cst_55 {dimension_numbers = #tpu.dot_dimension_numbers<[1], [0], [0], [1], [0, 0, 1, 1], [], []>} : vector<16x32xbf16>, vector<32x128xbf16>, vector<16x128xf32> -> vector<16x128xf32>
    %c0_56 = arith.constant 0 : index
    %c0_57 = arith.constant 0 : index
    %c0_58 = arith.constant 0 : index
    %174 = vector.load %arg10[%c0_56, %c0_57, %c0_58] : memref<1x1x128xf32, #tpu.memory_space<vmem>>, vector<1x1x128xf32>
    %175 = vector.shape_cast %174 : vector<1x1x128xf32> to vector<1x128xf32>
    %176 = vector.broadcast %175 : vector<1x128xf32> to vector<16x128xf32>
    %177 = arith.addf %173, %176 : vector<16x128xf32>
    %cst_59 = arith.constant 0.000000e+00 : f32
    %178 = vector.broadcast %cst_59 : f32 to vector<16x128xf32>
    %179 = arith.maximumf %177, %178 : vector<16x128xf32>
    %c0_60 = arith.constant 0 : index
    %c0_61 = arith.constant 0 : index
    %c0_62 = arith.constant 0 : index
    %180 = vector.load %arg11[%c0_60, %c0_61, %c0_62] : memref<1x128x32xbf16, #tpu.memory_space<vmem>>, vector<1x128x32xbf16>
    %181 = vector.shape_cast %180 : vector<1x128x32xbf16> to vector<128x32xbf16>
    %182 = arith.truncf %179 : vector<16x128xf32> to vector<16x128xbf16>
    %cst_63 = arith.constant dense<0.000000e+00> : vector<16x32xf32>
    %183 = tpu.matmul %182, %181, %cst_63 {dimension_numbers = #tpu.dot_dimension_numbers<[1], [0], [0], [1], [0, 0, 1, 1], [], []>} : vector<16x128xbf16>, vector<128x32xbf16>, vector<16x32xf32> -> vector<16x32xf32>
    %c0_64 = arith.constant 0 : index
    %c0_65 = arith.constant 0 : index
    %c0_66 = arith.constant 0 : index
    %184 = vector.load %arg12[%c0_64, %c0_65, %c0_66] : memref<1x1x32xf32, #tpu.memory_space<vmem>>, vector<1x1x32xf32>
    %185 = vector.shape_cast %184 : vector<1x1x32xf32> to vector<1x32xf32>
    %186 = vector.broadcast %185 : vector<1x32xf32> to vector<16x32xf32>
    %187 = arith.addf %183, %186 : vector<16x32xf32>
    %188 = arith.addf %169, %187 : vector<16x32xf32>
    %c0_67 = arith.constant 0 : index
    %c0_68 = arith.constant 0 : index
    %c0_69 = arith.constant 0 : index
    %189 = vector.load %arg13[%c0_67, %c0_68, %c0_69] : memref<1x1x32xf32, #tpu.memory_space<vmem>>, vector<1x1x32xf32>
    %190 = vector.shape_cast %189 : vector<1x1x32xf32> to vector<1x32xf32>
    %c0_70 = arith.constant 0 : index
    %c0_71 = arith.constant 0 : index
    %c0_72 = arith.constant 0 : index
    %191 = vector.load %arg14[%c0_70, %c0_71, %c0_72] : memref<1x1x32xf32, #tpu.memory_space<vmem>>, vector<1x1x32xf32>
    %192 = vector.shape_cast %191 : vector<1x1x32xf32> to vector<1x32xf32>
    %cst_73 = arith.constant dense<0.000000e+00> : vector<16xf32>
    %193 = vector.multi_reduction <add>, %188, %cst_73 [1] : vector<16x32xf32> to vector<16xf32>
    %194 = vector.shape_cast %193 : vector<16xf32> to vector<16x1xf32>
    %cst_74 = arith.constant 3.200000e+01 : f32
    %195 = vector.broadcast %cst_74 : f32 to vector<16x1xf32>
    %196 = arith.divf %194, %195 : vector<16x1xf32>
    %197 = vector.broadcast %196 : vector<16x1xf32> to vector<16x32xf32>
    %198 = arith.subf %188, %197 : vector<16x32xf32>
    %199 = arith.mulf %198, %198 : vector<16x32xf32>
    %cst_75 = arith.constant dense<0.000000e+00> : vector<16xf32>
    %200 = vector.multi_reduction <add>, %199, %cst_75 [1] : vector<16x32xf32> to vector<16xf32>
    %201 = vector.shape_cast %200 : vector<16xf32> to vector<16x1xf32>
    %cst_76 = arith.constant 3.200000e+01 : f32
    %202 = vector.broadcast %cst_76 : f32 to vector<16x1xf32>
    %203 = arith.divf %201, %202 : vector<16x1xf32>
    %cst_77 = arith.constant 9.99999974E-6 : f32
    %204 = vector.broadcast %cst_77 : f32 to vector<16x1xf32>
    %205 = arith.addf %203, %204 : vector<16x1xf32>
    %206 = math.rsqrt %205 : vector<16x1xf32>
    %207 = vector.broadcast %206 : vector<16x1xf32> to vector<16x32xf32>
    %208 = arith.mulf %198, %207 : vector<16x32xf32>
    %209 = vector.broadcast %190 : vector<1x32xf32> to vector<16x32xf32>
    %210 = arith.mulf %208, %209 : vector<16x32xf32>
    %211 = vector.broadcast %192 : vector<1x32xf32> to vector<16x32xf32>
    %212 = arith.addf %210, %211 : vector<16x32xf32>
    %213 = vector.shape_cast %212 : vector<16x32xf32> to vector<2x8x32xf32>
    %c0_78 = arith.constant 0 : index
    %c0_79 = arith.constant 0 : index
    %c0_80 = arith.constant 0 : index
    %214 = vector.load %arg15[%c0_78, %c0_79, %c0_80] : memref<2x8x32xf32, #tpu.memory_space<vmem>>, vector<2x8x32xf32>
    tpu.vector_store %arg15[%c0_78, %c0_79, %c0_80], %213 {strides = array<i32>} : memref<2x8x32xf32, #tpu.memory_space<vmem>>, vector<2x8x32xf32>,
    return
  }
  func.func @transform_0(%arg0: i32, %arg1: i32) -> (i32, i32, i32) {
    %c0_i32 = arith.constant 0 : i32
    %c0_i32_0 = arith.constant 0 : i32
    %c0_i32_1 = arith.constant 0 : i32
    return %arg0, %c0_i32, %c0_i32_0 : i32, i32, i32
  }
  func.func @transform_1(%arg0: i32, %arg1: i32) -> (i32, i32, i32) {
    %c0_i32 = arith.constant 0 : i32
    %c0_i32_0 = arith.constant 0 : i32
    %c0_i32_1 = arith.constant 0 : i32
    return %arg1, %c0_i32, %c0_i32_0 : i32, i32, i32
  }
  func.func @transform_2(%arg0: i32, %arg1: i32) -> (i32, i32, i32) {
    %c0_i32 = arith.constant 0 : i32
    %c0_i32_0 = arith.constant 0 : i32
    %c0_i32_1 = arith.constant 0 : i32
    return %arg1, %c0_i32, %c0_i32_0 : i32, i32, i32
  }
  func.func @transform_3(%arg0: i32, %arg1: i32) -> (i32, i32, i32) {
    %c0_i32 = arith.constant 0 : i32
    %c0_i32_0 = arith.constant 0 : i32
    %c0_i32_1 = arith.constant 0 : i32
    return %arg1, %c0_i32, %c0_i32_0 : i32, i32, i32
  }
  func.func @transform_4(%arg0: i32, %arg1: i32) -> (i32, i32, i32) {
    %c0_i32 = arith.constant 0 : i32
    %c0_i32_0 = arith.constant 0 : i32
    %c0_i32_1 = arith.constant 0 : i32
    return %arg1, %c0_i32, %c0_i32_0 : i32, i32, i32
  }
  func.func @transform_5(%arg0: i32, %arg1: i32) -> (i32, i32, i32) {
    %c0_i32 = arith.constant 0 : i32
    %c0_i32_0 = arith.constant 0 : i32
    %c0_i32_1 = arith.constant 0 : i32
    return %arg1, %c0_i32, %c0_i32_0 : i32, i32, i32
  }
  func.func @transform_6(%arg0: i32, %arg1: i32) -> (i32, i32, i32) {
    %c0_i32 = arith.constant 0 : i32
    %c0_i32_0 = arith.constant 0 : i32
    %c0_i32_1 = arith.constant 0 : i32
    return %arg1, %c0_i32, %c0_i32_0 : i32, i32, i32
  }
  func.func @transform_7(%arg0: i32, %arg1: i32) -> (i32, i32, i32) {
    %c0_i32 = arith.constant 0 : i32
    %c0_i32_0 = arith.constant 0 : i32
    %c0_i32_1 = arith.constant 0 : i32
    return %arg1, %c0_i32, %c0_i32_0 : i32, i32, i32
  }
  func.func @transform_8(%arg0: i32, %arg1: i32) -> (i32, i32, i32) {
    %c0_i32 = arith.constant 0 : i32
    %c0_i32_0 = arith.constant 0 : i32
    %c0_i32_1 = arith.constant 0 : i32
    return %arg1, %c0_i32, %c0_i32_0 : i32, i32, i32
  }
  func.func @transform_9(%arg0: i32, %arg1: i32) -> (i32, i32, i32) {
    %c0_i32 = arith.constant 0 : i32
    %c0_i32_0 = arith.constant 0 : i32
    %c0_i32_1 = arith.constant 0 : i32
    return %arg1, %c0_i32, %c0_i32_0 : i32, i32, i32
  }
  func.func @transform_10(%arg0: i32, %arg1: i32) -> (i32, i32, i32) {
    %c0_i32 = arith.constant 0 : i32
    %c0_i32_0 = arith.constant 0 : i32
    %c0_i32_1 = arith.constant 0 : i32
    return %arg1, %c0_i32, %c0_i32_0 : i32, i32, i32
  }
  func.func @transform_11(%arg0: i32, %arg1: i32) -> (i32, i32, i32) {
    %c0_i32 = arith.constant 0 : i32
    %c0_i32_0 = arith.constant 0 : i32
    %c0_i32_1 = arith.constant 0 : i32
    return %arg1, %c0_i32, %c0_i32_0 : i32, i32, i32
  }
  func.func @transform_12(%arg0: i32, %arg1: i32) -> (i32, i32, i32) {
    %c0_i32 = arith.constant 0 : i32
    %c0_i32_0 = arith.constant 0 : i32
    %c0_i32_1 = arith.constant 0 : i32
    return %arg1, %c0_i32, %c0_i32_0 : i32, i32, i32
  }
  func.func @transform_13(%arg0: i32, %arg1: i32) -> (i32, i32, i32) {
    %c0_i32 = arith.constant 0 : i32
    %c0_i32_0 = arith.constant 0 : i32
    %c0_i32_1 = arith.constant 0 : i32
    return %arg0, %c0_i32, %c0_i32_0 : i32, i32, i32
  }
}

module attributes {stable_mosaic.version = 11 : i64} {
  func.func @_head_kernel(%arg0: memref<8x32xf32, #tpu.memory_space<vmem>>, %arg1: memref<8x32xf32, #tpu.memory_space<vmem>>, %arg2: memref<1x32xf32, #tpu.memory_space<vmem>>, %arg3: memref<1x32xf32, #tpu.memory_space<vmem>>, %arg4: memref<64x64xbf16, #tpu.memory_space<vmem>>, %arg5: memref<1x64xf32, #tpu.memory_space<vmem>>, %arg6: memref<1x64xf32, #tpu.memory_space<vmem>>, %arg7: memref<1x64xf32, #tpu.memory_space<vmem>>, %arg8: memref<64x32xbf16, #tpu.memory_space<vmem>>, %arg9: memref<1x32xf32, #tpu.memory_space<vmem>>, %arg10: memref<1x32xf32, #tpu.memory_space<vmem>>, %arg11: memref<1x32xf32, #tpu.memory_space<vmem>>, %arg12: memref<32x1xbf16, #tpu.memory_space<vmem>>, %arg13: memref<1x1xf32, #tpu.memory_space<vmem>>, %arg14: memref<8x1xf32, #tpu.memory_space<vmem>>) attributes {dimension_semantics = [], scalar_prefetch = 0 : i64, scratch_operands = 0 : i64, tpu.core_type = #tpu.core_type<tc>} {
    %c0 = arith.constant 0 : index
    %c0_0 = arith.constant 0 : index
    %0 = vector.load %arg0[%c0, %c0_0] : memref<8x32xf32, #tpu.memory_space<vmem>>, vector<8x32xf32>
    %c0_1 = arith.constant 0 : index
    %c0_2 = arith.constant 0 : index
    %1 = vector.load %arg1[%c0_1, %c0_2] : memref<8x32xf32, #tpu.memory_space<vmem>>, vector<8x32xf32>
    %c0_3 = arith.constant 0 : index
    %c0_4 = arith.constant 0 : index
    %2 = vector.load %arg2[%c0_3, %c0_4] : memref<1x32xf32, #tpu.memory_space<vmem>>, vector<1x32xf32>
    %c0_5 = arith.constant 0 : index
    %c0_6 = arith.constant 0 : index
    %3 = vector.load %arg3[%c0_5, %c0_6] : memref<1x32xf32, #tpu.memory_space<vmem>>, vector<1x32xf32>
    %cst = arith.constant dense<0.000000e+00> : vector<8xf32>
    %4 = vector.multi_reduction <add>, %1, %cst [1] : vector<8x32xf32> to vector<8xf32>
    %5 = vector.shape_cast %4 : vector<8xf32> to vector<8x1xf32>
    %cst_7 = arith.constant 3.200000e+01 : f32
    %6 = vector.broadcast %cst_7 : f32 to vector<8x1xf32>
    %7 = arith.divf %5, %6 : vector<8x1xf32>
    %8 = vector.broadcast %7 : vector<8x1xf32> to vector<8x32xf32>
    %9 = arith.subf %1, %8 : vector<8x32xf32>
    %10 = arith.mulf %9, %9 : vector<8x32xf32>
    %cst_8 = arith.constant dense<0.000000e+00> : vector<8xf32>
    %11 = vector.multi_reduction <add>, %10, %cst_8 [1] : vector<8x32xf32> to vector<8xf32>
    %12 = vector.shape_cast %11 : vector<8xf32> to vector<8x1xf32>
    %cst_9 = arith.constant 3.200000e+01 : f32
    %13 = vector.broadcast %cst_9 : f32 to vector<8x1xf32>
    %14 = arith.divf %12, %13 : vector<8x1xf32>
    %cst_10 = arith.constant 9.99999974E-6 : f32
    %15 = vector.broadcast %cst_10 : f32 to vector<8x1xf32>
    %16 = arith.addf %14, %15 : vector<8x1xf32>
    %17 = math.rsqrt %16 : vector<8x1xf32>
    %18 = vector.broadcast %17 : vector<8x1xf32> to vector<8x32xf32>
    %19 = arith.mulf %9, %18 : vector<8x32xf32>
    %20 = vector.broadcast %2 : vector<1x32xf32> to vector<8x32xf32>
    %21 = arith.mulf %19, %20 : vector<8x32xf32>
    %22 = vector.broadcast %3 : vector<1x32xf32> to vector<8x32xf32>
    %23 = arith.addf %21, %22 : vector<8x32xf32>
    %c0_11 = arith.constant 0 : index
    %c0_12 = arith.constant 0 : index
    %24 = vector.load %arg4[%c0_11, %c0_12] : memref<64x64xbf16, #tpu.memory_space<vmem>>, vector<64x64xbf16>
    %25 = vector.extract_strided_slice %24 {offsets = [0, 0], sizes = [32, 64], strides = [1, 1]} : vector<64x64xbf16> to vector<32x64xbf16>
    %26 = arith.truncf %0 : vector<8x32xf32> to vector<8x32xbf16>
    %cst_13 = arith.constant dense<0.000000e+00> : vector<8x64xf32>
    %27 = tpu.matmul %26, %25, %cst_13 {dimension_numbers = #tpu.dot_dimension_numbers<[1], [0], [0], [1], [0, 0, 1, 1], [], []>} : vector<8x32xbf16>, vector<32x64xbf16>, vector<8x64xf32> -> vector<8x64xf32>
    %28 = vector.extract_strided_slice %24 {offsets = [32, 0], sizes = [32, 64], strides = [1, 1]} : vector<64x64xbf16> to vector<32x64xbf16>
    %29 = arith.truncf %23 : vector<8x32xf32> to vector<8x32xbf16>
    %cst_14 = arith.constant dense<0.000000e+00> : vector<8x64xf32>
    %30 = tpu.matmul %29, %28, %cst_14 {dimension_numbers = #tpu.dot_dimension_numbers<[1], [0], [0], [1], [0, 0, 1, 1], [], []>} : vector<8x32xbf16>, vector<32x64xbf16>, vector<8x64xf32> -> vector<8x64xf32>
    %31 = arith.addf %27, %30 : vector<8x64xf32>
    %c0_15 = arith.constant 0 : index
    %c0_16 = arith.constant 0 : index
    %32 = vector.load %arg5[%c0_15, %c0_16] : memref<1x64xf32, #tpu.memory_space<vmem>>, vector<1x64xf32>
    %33 = vector.broadcast %32 : vector<1x64xf32> to vector<8x64xf32>
    %34 = arith.addf %31, %33 : vector<8x64xf32>
    %c0_17 = arith.constant 0 : index
    %c0_18 = arith.constant 0 : index
    %35 = vector.load %arg6[%c0_17, %c0_18] : memref<1x64xf32, #tpu.memory_space<vmem>>, vector<1x64xf32>
    %c0_19 = arith.constant 0 : index
    %c0_20 = arith.constant 0 : index
    %36 = vector.load %arg7[%c0_19, %c0_20] : memref<1x64xf32, #tpu.memory_space<vmem>>, vector<1x64xf32>
    %cst_21 = arith.constant dense<0.000000e+00> : vector<8xf32>
    %37 = vector.multi_reduction <add>, %34, %cst_21 [1] : vector<8x64xf32> to vector<8xf32>
    %38 = vector.shape_cast %37 : vector<8xf32> to vector<8x1xf32>
    %cst_22 = arith.constant 6.400000e+01 : f32
    %39 = vector.broadcast %cst_22 : f32 to vector<8x1xf32>
    %40 = arith.divf %38, %39 : vector<8x1xf32>
    %41 = vector.broadcast %40 : vector<8x1xf32> to vector<8x64xf32>
    %42 = arith.subf %34, %41 : vector<8x64xf32>
    %43 = arith.mulf %42, %42 : vector<8x64xf32>
    %cst_23 = arith.constant dense<0.000000e+00> : vector<8xf32>
    %44 = vector.multi_reduction <add>, %43, %cst_23 [1] : vector<8x64xf32> to vector<8xf32>
    %45 = vector.shape_cast %44 : vector<8xf32> to vector<8x1xf32>
    %cst_24 = arith.constant 6.400000e+01 : f32
    %46 = vector.broadcast %cst_24 : f32 to vector<8x1xf32>
    %47 = arith.divf %45, %46 : vector<8x1xf32>
    %cst_25 = arith.constant 9.99999974E-6 : f32
    %48 = vector.broadcast %cst_25 : f32 to vector<8x1xf32>
    %49 = arith.addf %47, %48 : vector<8x1xf32>
    %50 = math.rsqrt %49 : vector<8x1xf32>
    %51 = vector.broadcast %50 : vector<8x1xf32> to vector<8x64xf32>
    %52 = arith.mulf %42, %51 : vector<8x64xf32>
    %53 = vector.broadcast %35 : vector<1x64xf32> to vector<8x64xf32>
    %54 = arith.mulf %52, %53 : vector<8x64xf32>
    %55 = vector.broadcast %36 : vector<1x64xf32> to vector<8x64xf32>
    %56 = arith.addf %54, %55 : vector<8x64xf32>
    %cst_26 = arith.constant 0.000000e+00 : f32
    %57 = vector.broadcast %cst_26 : f32 to vector<8x64xf32>
    %58 = arith.maximumf %56, %57 : vector<8x64xf32>
    %c0_27 = arith.constant 0 : index
    %c0_28 = arith.constant 0 : index
    %59 = vector.load %arg8[%c0_27, %c0_28] : memref<64x32xbf16, #tpu.memory_space<vmem>>, vector<64x32xbf16>
    %60 = arith.truncf %58 : vector<8x64xf32> to vector<8x64xbf16>
    %cst_29 = arith.constant dense<0.000000e+00> : vector<8x32xf32>
    %61 = tpu.matmul %60, %59, %cst_29 {dimension_numbers = #tpu.dot_dimension_numbers<[1], [0], [0], [1], [0, 0, 1, 1], [], []>} : vector<8x64xbf16>, vector<64x32xbf16>, vector<8x32xf32> -> vector<8x32xf32>
    %c0_30 = arith.constant 0 : index
    %c0_31 = arith.constant 0 : index
    %62 = vector.load %arg9[%c0_30, %c0_31] : memref<1x32xf32, #tpu.memory_space<vmem>>, vector<1x32xf32>
    %63 = vector.broadcast %62 : vector<1x32xf32> to vector<8x32xf32>
    %64 = arith.addf %61, %63 : vector<8x32xf32>
    %c0_32 = arith.constant 0 : index
    %c0_33 = arith.constant 0 : index
    %65 = vector.load %arg10[%c0_32, %c0_33] : memref<1x32xf32, #tpu.memory_space<vmem>>, vector<1x32xf32>
    %c0_34 = arith.constant 0 : index
    %c0_35 = arith.constant 0 : index
    %66 = vector.load %arg11[%c0_34, %c0_35] : memref<1x32xf32, #tpu.memory_space<vmem>>, vector<1x32xf32>
    %cst_36 = arith.constant dense<0.000000e+00> : vector<8xf32>
    %67 = vector.multi_reduction <add>, %64, %cst_36 [1] : vector<8x32xf32> to vector<8xf32>
    %68 = vector.shape_cast %67 : vector<8xf32> to vector<8x1xf32>
    %cst_37 = arith.constant 3.200000e+01 : f32
    %69 = vector.broadcast %cst_37 : f32 to vector<8x1xf32>
    %70 = arith.divf %68, %69 : vector<8x1xf32>
    %71 = vector.broadcast %70 : vector<8x1xf32> to vector<8x32xf32>
    %72 = arith.subf %64, %71 : vector<8x32xf32>
    %73 = arith.mulf %72, %72 : vector<8x32xf32>
    %cst_38 = arith.constant dense<0.000000e+00> : vector<8xf32>
    %74 = vector.multi_reduction <add>, %73, %cst_38 [1] : vector<8x32xf32> to vector<8xf32>
    %75 = vector.shape_cast %74 : vector<8xf32> to vector<8x1xf32>
    %cst_39 = arith.constant 3.200000e+01 : f32
    %76 = vector.broadcast %cst_39 : f32 to vector<8x1xf32>
    %77 = arith.divf %75, %76 : vector<8x1xf32>
    %cst_40 = arith.constant 9.99999974E-6 : f32
    %78 = vector.broadcast %cst_40 : f32 to vector<8x1xf32>
    %79 = arith.addf %77, %78 : vector<8x1xf32>
    %80 = math.rsqrt %79 : vector<8x1xf32>
    %81 = vector.broadcast %80 : vector<8x1xf32> to vector<8x32xf32>
    %82 = arith.mulf %72, %81 : vector<8x32xf32>
    %83 = vector.broadcast %65 : vector<1x32xf32> to vector<8x32xf32>
    %84 = arith.mulf %82, %83 : vector<8x32xf32>
    %85 = vector.broadcast %66 : vector<1x32xf32> to vector<8x32xf32>
    %86 = arith.addf %84, %85 : vector<8x32xf32>
    %cst_41 = arith.constant 0.000000e+00 : f32
    %87 = vector.broadcast %cst_41 : f32 to vector<8x32xf32>
    %88 = arith.maximumf %86, %87 : vector<8x32xf32>
    %c0_42 = arith.constant 0 : index
    %c0_43 = arith.constant 0 : index
    %89 = vector.load %arg12[%c0_42, %c0_43] : memref<32x1xbf16, #tpu.memory_space<vmem>>, vector<32x1xbf16>
    %90 = arith.truncf %88 : vector<8x32xf32> to vector<8x32xbf16>
    %cst_44 = arith.constant dense<0.000000e+00> : vector<8x1xf32>
    %91 = tpu.matmul %90, %89, %cst_44 {dimension_numbers = #tpu.dot_dimension_numbers<[1], [0], [0], [1], [0, 0, 1, 1], [], []>} : vector<8x32xbf16>, vector<32x1xbf16>, vector<8x1xf32> -> vector<8x1xf32>
    %c0_45 = arith.constant 0 : index
    %c0_46 = arith.constant 0 : index
    %92 = vector.load %arg13[%c0_45, %c0_46] : memref<1x1xf32, #tpu.memory_space<vmem>>, vector<1x1xf32>
    %93 = vector.broadcast %92 : vector<1x1xf32> to vector<8x1xf32>
    %94 = arith.addf %91, %93 : vector<8x1xf32>
    %c0_47 = arith.constant 0 : index
    %c0_48 = arith.constant 0 : index
    %95 = vector.load %arg14[%c0_47, %c0_48] : memref<8x1xf32, #tpu.memory_space<vmem>>, vector<8x1xf32>
    tpu.vector_store %arg14[%c0_47, %c0_48], %94 {strides = array<i32>} : memref<8x1xf32, #tpu.memory_space<vmem>>, vector<8x1xf32>,
    return
  }
}

</mosaic_0001>

<llo_original>
// kernel: forward.7
$region0: #{forward.7}
  #allocation0 [shape = 'u32[]', space=smem, size = 0x4, offset = 0x4, fixed_abs, tag = 'smem constant byte address 0x4 - core index']
  #allocation1 [shape = 'u32[72,128]{1,0:T(1,128)}', space=vmem, size = 0x9000, scoped, tag = 'internal scratch']
  %s0 = inlined_call_operand.vmem [shape: f32[8,8,1], index: 0, kind: input, shape index: {}]
  %s1 = inlined_call_operand.vmem [shape: f32[1,32], index: 1, kind: input, shape index: {}]
  %s2 = inlined_call_operand.vmem [shape: f32[1,32], index: 2, kind: input, shape index: {}]
  %s3 = inlined_call_operand.vmem [shape: f32[8,32], index: 3, kind: input, shape index: {}]
  %s4 = inlined_call_operand.vmem [shape: f32[1,32], index: 4, kind: input, shape index: {}]
  %s5 = inlined_call_operand.vmem [shape: f32[1,32], index: 5, kind: input, shape index: {}]
  %s6 = inlined_call_operand.vmem [shape: f32[8,8,32], index: 6, kind: output, shape index: {}]
  %s7 = sld [smem:[#allocation0]]
  $region34: #{forward.7} parent=0
    _
  %s9 = ssub.s32 1, %s7
  %s10 = scalar_select 0, %s9, %s7
  // Predicated region
  $region2: #{forward.7} parent=0 // pred_check
    _
  $region3: #{forward.7} parent=0 // pred_check_branch
    %12 = sbr.rel (0) target = $region5
  $region4: #{forward.7} parent=0 // pred_region
    _
  $region5: #{forward.7} parent=0 // pred_fallthru
    _
  // Predicated region
  $region6: #{forward.7} parent=0 // pred_check
    _
  $region7: #{forward.7} parent=0 // pred_check_branch
    %14 = sbr.rel (0) target = $region9
  $region8: #{forward.7} parent=0 // pred_region
    _
  $region9: #{forward.7} parent=0 // pred_fallthru
    _
  // Predicated region
  $region10: #{forward.7} parent=0 // pred_check
    _
  $region11: #{forward.7} parent=0 // pred_check_branch
    %16 = sbr.rel (0) target = $region13
  $region12: #{forward.7} parent=0 // pred_region
    _
  $region13: #{forward.7} parent=0 // pred_fallthru
    _
  // Predicated region
  $region14: #{forward.7} parent=0 // pred_check
    _
  $region15: #{forward.7} parent=0 // pred_check_branch
    %18 = sbr.rel (0) target = $region17
  $region16: #{forward.7} parent=0 // pred_region
    _
  $region17: #{forward.7} parent=0 // pred_fallthru
    _
  // Predicated region
  $region18: #{forward.7} parent=0 // pred_check
    _
  $region19: #{forward.7} parent=0 // pred_check_branch
    %20 = sbr.rel (0) target = $region21
  $region20: #{forward.7} parent=0 // pred_region
    _
  $region21: #{forward.7} parent=0 // pred_fallthru
    _
  // Predicated region
  $region22: #{forward.7} parent=0 // pred_check
    _
  $region23: #{forward.7} parent=0 // pred_check_branch
    %22 = sbr.rel (0) target = $region25
  $region24: #{forward.7} parent=0 // pred_region
    _
  $region25: #{forward.7} parent=0 // pred_fallthru
    _
  %v23 = vld [vmem:[%s0] sm:$0xff]
  %v24 = vld [vmem:[%s0 + $0x8] sm:$0xff]
  %v25 = vld [vmem:[%s0 + $0x10] sm:$0xff]
  %v26 = vld [vmem:[%s0 + $0x18] sm:$0xff]
  %v27 = vld [vmem:[%s0 + $0x20] sm:$0xff]
  %v28 = vld [vmem:[%s0 + $0x28] sm:$0xff]
  %v29 = vld [vmem:[%s0 + $0x30] sm:$0xff]
  %v30 = vld [vmem:[%s0 + $0x38] sm:$0xff]
  %v31 = vld [vmem:[%s1] sm:$0x1]
  %33 = vset.pattern.permute.xlu0 0
  %34 = vperm.xlu0 %33, %v23
  %v35 = vpop.permute.xlu0 %34
  %38 = vset.pattern.permute.xlu0 0
  %39 = vperm.xlu0 %38, %v24
  %v40 = vpop.permute.xlu0 %39
  %43 = vset.pattern.permute.xlu0 0
  %44 = vperm.xlu0 %43, %v25
  %v45 = vpop.permute.xlu0 %44
  %48 = vset.pattern.permute.xlu0 0
  %49 = vperm.xlu0 %48, %v26
  %v50 = vpop.permute.xlu0 %49
  %53 = vset.pattern.permute.xlu0 0
  %54 = vperm.xlu0 %53, %v27
  %v55 = vpop.permute.xlu0 %54
  %58 = vset.pattern.permute.xlu0 0
  %59 = vperm.xlu0 %58, %v28
  %v60 = vpop.permute.xlu0 %59
  %63 = vset.pattern.permute.xlu0 0
  %64 = vperm.xlu0 %63, %v29
  %v65 = vpop.permute.xlu0 %64
  %68 = vset.pattern.permute.xlu0 0
  %69 = vperm.xlu0 %68, %v30
  %v70 = vpop.permute.xlu0 %69
  %v73 = vperm.slane %v31, 0
  %v75 = vmul.f32 %v35, %v73
  %v76 = vmul.f32 %v40, %v73
  %v77 = vmul.f32 %v45, %v73
  %v78 = vmul.f32 %v50, %v73
  %v79 = vmul.f32 %v55, %v73
  %v80 = vmul.f32 %v60, %v73
  %v81 = vmul.f32 %v65, %v73
  %v82 = vmul.f32 %v70, %v73
  %v83 = vld [vmem:[%s2] sm:$0x1]
  %v85 = vperm.slane %v83, 0
  %v87 = vadd.f32 %v75, %v85
  %v88 = vadd.f32 %v76, %v85
  %v89 = vadd.f32 %v77, %v85
  %v90 = vadd.f32 %v78, %v85
  %v91 = vadd.f32 %v79, %v85
  %v92 = vadd.f32 %v80, %v85
  %v93 = vadd.f32 %v81, %v85
  %v94 = vadd.f32 %v82, %v85
  %v95 = vld [vmem:[%s3] sm:$0xff]
  %v96 = vadd.f32 %v87, %v95
  %v97 = vadd.f32 %v88, %v95
  %v98 = vadd.f32 %v89, %v95
  %v99 = vadd.f32 %v90, %v95
  %v100 = vadd.f32 %v91, %v95
  %v101 = vadd.f32 %v92, %v95
  %v102 = vadd.f32 %v93, %v95
  %v103 = vadd.f32 %v94, %v95
  %v104 = vld [vmem:[%s4] sm:$0x1]
  %v105 = vld [vmem:[%s5] sm:$0x1]
  %vm106 = vcmask 261120
  %v107 = vsel %vm106, %v96, 0.0
  %108 = vadd.xlane.f32.xlu0 %v107
  %v109 = vpop.xlane.xlu0 %108
  %v110 = vsel %vm106, %v97, 0.0
  %111 = vadd.xlane.f32.xlu0 %v110
  %v112 = vpop.xlane.xlu0 %111
  %v113 = vsel %vm106, %v98, 0.0
  %114 = vadd.xlane.f32.xlu0 %v113
  %v115 = vpop.xlane.xlu0 %114
  %v116 = vsel %vm106, %v99, 0.0
  %117 = vadd.xlane.f32.xlu0 %v116
  %v118 = vpop.xlane.xlu0 %117
  %v119 = vsel %vm106, %v100, 0.0
  %120 = vadd.xlane.f32.xlu0 %v119
  %v121 = vpop.xlane.xlu0 %120
  %v122 = vsel %vm106, %v101, 0.0
  %123 = vadd.xlane.f32.xlu0 %v122
  %v124 = vpop.xlane.xlu0 %123
  %v125 = vsel %vm106, %v102, 0.0
  %126 = vadd.xlane.f32.xlu0 %v125
  %v127 = vpop.xlane.xlu0 %126
  %v128 = vsel %vm106, %v103, 0.0
  %129 = vadd.xlane.f32.xlu0 %v128
  %v130 = vpop.xlane.xlu0 %129
  %v131 = vrcp.pop 32.0
  %v132 = vmul.f32 32.0, %v131
  %v133 = vsub.f32 1.0, %v132
  %v134 = vmul.f32 %v131, %v133
  %v135 = vadd.f32 %v131, %v134
  %vm136 = vweird.f32 %v131
  %v137 = vsel %vm136, %v131, %v135
  %v138 = vmul.f32 %v109, %v137
  %v139 = vmul.f32 %v112, %v137
  %v140 = vmul.f32 %v115, %v137
  %v141 = vmul.f32 %v118, %v137
  %v142 = vmul.f32 %v121, %v137
  %v143 = vmul.f32 %v124, %v137
  %v144 = vmul.f32 %v127, %v137
  %v145 = vmul.f32 %v130, %v137
  %v146 = vsub.f32 %v96, %v138
  %v147 = vsub.f32 %v97, %v139
  %v148 = vsub.f32 %v98, %v140
  %v149 = vsub.f32 %v99, %v141
  %v150 = vsub.f32 %v100, %v142
  %v151 = vsub.f32 %v101, %v143
  %v152 = vsub.f32 %v102, %v144
  %v153 = vsub.f32 %v103, %v145
  %v154 = vmul.f32 %v146, %v146
  %v155 = vmul.f32 %v147, %v147
  %v156 = vmul.f32 %v148, %v148
  %v157 = vmul.f32 %v149, %v149
  %v158 = vmul.f32 %v150, %v150
  %v159 = vmul.f32 %v151, %v151
  %v160 = vmul.f32 %v152, %v152
  %v161 = vmul.f32 %v153, %v153
  %v162 = vsel %vm106, %v154, 0.0
  %163 = vadd.xlane.f32.xlu0 %v162
  %v164 = vpop.xlane.xlu0 %163
  %v165 = vsel %vm106, %v155, 0.0
  %166 = vadd.xlane.f32.xlu0 %v165
  %v167 = vpop.xlane.xlu0 %166
  %v168 = vsel %vm106, %v156, 0.0
  %169 = vadd.xlane.f32.xlu0 %v168
  %v170 = vpop.xlane.xlu0 %169
  %v171 = vsel %vm106, %v157, 0.0
  %172 = vadd.xlane.f32.xlu0 %v171
  %v173 = vpop.xlane.xlu0 %172
  %v174 = vsel %vm106, %v158, 0.0
  %175 = vadd.xlane.f32.xlu0 %v174
  %v176 = vpop.xlane.xlu0 %175
  %v177 = vsel %vm106, %v159, 0.0
  %178 = vadd.xlane.f32.xlu0 %v177
  %v179 = vpop.xlane.xlu0 %178
  %v180 = vsel %vm106, %v160, 0.0
  %181 = vadd.xlane.f32.xlu0 %v180
  %v182 = vpop.xlane.xlu0 %181
  %v183 = vsel %vm106, %v161, 0.0
  %184 = vadd.xlane.f32.xlu0 %v183
  %v185 = vpop.xlane.xlu0 %184
  %v186 = vmul.f32 %v164, %v137
  %v187 = vmul.f32 %v167, %v137
  %v188 = vmul.f32 %v170, %v137
  %v189 = vmul.f32 %v173, %v137
  %v190 = vmul.f32 %v176, %v137
  %v191 = vmul.f32 %v179, %v137
  %v192 = vmul.f32 %v182, %v137
  %v193 = vmul.f32 %v185, %v137
  %v194 = vadd.f32 %v186, 1e-05
  %v195 = vadd.f32 %v187, 1e-05
  %v196 = vadd.f32 %v188, 1e-05
  %v197 = vadd.f32 %v189, 1e-05
  %v198 = vadd.f32 %v190, 1e-05
  %v199 = vadd.f32 %v191, 1e-05
  %v200 = vadd.f32 %v192, 1e-05
  %v201 = vadd.f32 %v193, 1e-05
  %v202 = vrsqrt.pop %v194
  %v203 = vmul.f32 %v202, %v194
  %v204 = vmul.f32 %v203, %v202
  %v205 = vmul.f32 0.5, %v204
  %v206 = vsub.f32 1.5, %v205
  %v207 = vmul.f32 %v202, %v206
  %vm208 = vweird.f32 %v194
  %vm209 = vweird.f32 %v202
  %vm210 = vmor %vm208, %vm209
  %v211 = vsel %vm210, %v202, %v207
  %v212 = vrsqrt.pop %v195
  %v213 = vmul.f32 %v212, %v195
  %v214 = vmul.f32 %v213, %v212
  %v215 = vmul.f32 0.5, %v214
  %v216 = vsub.f32 1.5, %v215
  %v217 = vmul.f32 %v212, %v216
  %vm218 = vweird.f32 %v195
  %vm219 = vweird.f32 %v212
  %vm220 = vmor %vm218, %vm219
  %v221 = vsel %vm220, %v212, %v217
  %v222 = vrsqrt.pop %v196
  %v223 = vmul.f32 %v222, %v196
  %v224 = vmul.f32 %v223, %v222
  %v225 = vmul.f32 0.5, %v224
  %v226 = vsub.f32 1.5, %v225
  %v227 = vmul.f32 %v222, %v226
  %vm228 = vweird.f32 %v196
  %vm229 = vweird.f32 %v222
  %vm230 = vmor %vm228, %vm229
  %v231 = vsel %vm230, %v222, %v227
  %v232 = vrsqrt.pop %v197
  %v233 = vmul.f32 %v232, %v197
  %v234 = vmul.f32 %v233, %v232
  %v235 = vmul.f32 0.5, %v234
  %v236 = vsub.f32 1.5, %v235
  %v237 = vmul.f32 %v232, %v236
  %vm238 = vweird.f32 %v197
  %vm239 = vweird.f32 %v232
  %vm240 = vmor %vm238, %vm239
  %v241 = vsel %vm240, %v232, %v237
  %v242 = vrsqrt.pop %v198
  %v243 = vmul.f32 %v242, %v198
  %v244 = vmul.f32 %v243, %v242
  %v245 = vmul.f32 0.5, %v244
  %v246 = vsub.f32 1.5, %v245
  %v247 = vmul.f32 %v242, %v246
  %vm248 = vweird.f32 %v198
  %vm249 = vweird.f32 %v242
  %vm250 = vmor %vm248, %vm249
  %v251 = vsel %vm250, %v242, %v247
  %v252 = vrsqrt.pop %v199
  %v253 = vmul.f32 %v252, %v199
  %v254 = vmul.f32 %v253, %v252
  %v255 = vmul.f32 0.5, %v254
  %v256 = vsub.f32 1.5, %v255
  %v257 = vmul.f32 %v252, %v256
  %vm258 = vweird.f32 %v199
  %vm259 = vweird.f32 %v252
  %vm260 = vmor %vm258, %vm259
  %v261 = vsel %vm260, %v252, %v257
  %v262 = vrsqrt.pop %v200
  %v263 = vmul.f32 %v262, %v200
  %v264 = vmul.f32 %v263, %v262
  %v265 = vmul.f32 0.5, %v264
  %v266 = vsub.f32 1.5, %v265
  %v267 = vmul.f32 %v262, %v266
  %vm268 = vweird.f32 %v200
  %vm269 = vweird.f32 %v262
  %vm270 = vmor %vm268, %vm269
  %v271 = vsel %vm270, %v262, %v267
  %v272 = vrsqrt.pop %v201
  %v273 = vmul.f32 %v272, %v201
  %v274 = vmul.f32 %v273, %v272
  %v275 = vmul.f32 0.5, %v274
  %v276 = vsub.f32 1.5, %v275
  %v277 = vmul.f32 %v272, %v276
  %vm278 = vweird.f32 %v201
  %vm279 = vweird.f32 %v272
  %vm280 = vmor %vm278, %vm279
  %v281 = vsel %vm280, %v272, %v277
  %v282 = vmul.f32 %v146, %v211
  %v283 = vmul.f32 %v147, %v221
  %v284 = vmul.f32 %v148, %v231
  %v285 = vmul.f32 %v149, %v241
  %v286 = vmul.f32 %v150, %v251
  %v287 = vmul.f32 %v151, %v261
  %v288 = vmul.f32 %v152, %v271
  %v289 = vmul.f32 %v153, %v281
  %v291 = vperm.slane %v104, 0
  %v293 = vmul.f32 %v282, %v291
  %v294 = vmul.f32 %v283, %v291
  %v295 = vmul.f32 %v284, %v291
  %v296 = vmul.f32 %v285, %v291
  %v297 = vmul.f32 %v286, %v291
  %v298 = vmul.f32 %v287, %v291
  %v299 = vmul.f32 %v288, %v291
  %v300 = vmul.f32 %v289, %v291
  %v302 = vperm.slane %v105, 0
  %v304 = vadd.f32 %v293, %v302
  %v305 = vadd.f32 %v294, %v302
  %v306 = vadd.f32 %v295, %v302
  %v307 = vadd.f32 %v296, %v302
  %v308 = vadd.f32 %v297, %v302
  %v309 = vadd.f32 %v298, %v302
  %v310 = vadd.f32 %v299, %v302
  %v311 = vadd.f32 %v300, %v302
  %312 = vst.msk [vmem:[%s6] sm:$0xff] %vm106, %v304
  %313 = vst.msk [vmem:[%s6 + $0x8] sm:$0xff] %vm106, %v305
  %314 = vst.msk [vmem:[%s6 + $0x10] sm:$0xff] %vm106, %v306
  %315 = vst.msk [vmem:[%s6 + $0x18] sm:$0xff] %vm106, %v307
  %316 = vst.msk [vmem:[%s6 + $0x20] sm:$0xff] %vm106, %v308
  %317 = vst.msk [vmem:[%s6 + $0x28] sm:$0xff] %vm106, %v309
  %318 = vst.msk [vmem:[%s6 + $0x30] sm:$0xff] %vm106, %v310
  %319 = vst.msk [vmem:[%s6 + $0x38] sm:$0xff] %vm106, %v311
  // Predicated region
  $region26: #{forward.7} parent=0 // pred_check
    _
  $region27: #{forward.7} parent=0 // pred_check_branch
    %321 = sbr.rel (0) target = $region29
  $region28: #{forward.7} parent=0 // pred_region
    _
  $region29: #{forward.7} parent=0 // pred_fallthru
    _
  // Predicated region
  $region30: #{forward.7} parent=0 // pred_check
    _
  $region31: #{forward.7} parent=0 // pred_check_branch
    %323 = sbr.rel (0) target = $region33
  $region32: #{forward.7} parent=0 // pred_region
    _
  $region33: #{forward.7} parent=0 // pred_fallthru
    _

// kernel: forward.5
$region0: #{forward.5}
  #allocation0 [shape = 'u32[]', space=smem, size = 0x4, offset = 0x4, fixed_abs, tag = 'smem constant byte address 0x4 - core index']
  #allocation1 [shape = 'u32[72,128]{1,0:T(1,128)}', space=vmem, size = 0x9000, scoped, tag = 'internal scratch']
  %s0 = inlined_call_operand.vmem [shape: f32[2,8,4], index: 0, kind: input, shape index: {}]
  %s1 = inlined_call_operand.vmem [shape: bf16[4,32], index: 1, kind: input, shape index: {}]
  %s2 = inlined_call_operand.vmem [shape: f32[1,32], index: 2, kind: input, shape index: {}]
  %s3 = inlined_call_operand.vmem [shape: f32[8,32], index: 3, kind: input, shape index: {}]
  %s4 = inlined_call_operand.vmem [shape: f32[1,32], index: 4, kind: input, shape index: {}]
  %s5 = inlined_call_operand.vmem [shape: f32[1,32], index: 5, kind: input, shape index: {}]
  %s6 = inlined_call_operand.vmem [shape: f32[2,8,32], index: 6, kind: output, shape index: {}]
  %s7 = sld [smem:[#allocation0]]
  $region34: #{forward.5} parent=0
    _
  %s9 = ssub.s32 1, %s7
  %s10 = scalar_select 0, %s9, %s7
  // Predicated region
  $region2: #{forward.5} parent=0 // pred_check
    _
  $region3: #{forward.5} parent=0 // pred_check_branch
    %12 = sbr.rel (0) target = $region5
  $region4: #{forward.5} parent=0 // pred_region
    _
  $region5: #{forward.5} parent=0 // pred_fallthru
    _
  // Predicated region
  $region6: #{forward.5} parent=0 // pred_check
    _
  $region7: #{forward.5} parent=0 // pred_check_branch
    %14 = sbr.rel (0) target = $region9
  $region8: #{forward.5} parent=0 // pred_region
    _
  $region9: #{forward.5} parent=0 // pred_fallthru
    _
  // Predicated region
  $region10: #{forward.5} parent=0 // pred_check
    _
  $region11: #{forward.5} parent=0 // pred_check_branch
    %16 = sbr.rel (0) target = $region13
  $region12: #{forward.5} parent=0 // pred_region
    _
  $region13: #{forward.5} parent=0 // pred_fallthru
    _
  // Predicated region
  $region14: #{forward.5} parent=0 // pred_check
    _
  $region15: #{forward.5} parent=0 // pred_check_branch
    %18 = sbr.rel (0) target = $region17
  $region16: #{forward.5} parent=0 // pred_region
    _
  $region17: #{forward.5} parent=0 // pred_fallthru
    _
  // Predicated region
  $region18: #{forward.5} parent=0 // pred_check
    _
  $region19: #{forward.5} parent=0 // pred_check_branch
    %20 = sbr.rel (0) target = $region21
  $region20: #{forward.5} parent=0 // pred_region
    _
  $region21: #{forward.5} parent=0 // pred_fallthru
    _
  // Predicated region
  $region22: #{forward.5} parent=0 // pred_check
    _
  $region23: #{forward.5} parent=0 // pred_check_branch
    %22 = sbr.rel (0) target = $region25
  $region24: #{forward.5} parent=0 // pred_region
    _
  $region25: #{forward.5} parent=0 // pred_fallthru
    _
  %v24 = vld [vmem:[%s0] sm:$0xff]
  %v25 = vld [vmem:[%s0 + $0x8] sm:$0xff]
  %v26 = vld [vmem:[%s1] sm:$0x3]
  %v27 = vpack.c.bf16 %v25, %v24
  %vm28 = vcmask 31744
  %v30 = vsel %vm28, %v27, 0
  %vm32 = vcmask 1041408
  %v34 = vsel %vm32, %v26, 0
  %36 = vmatpush.bf16.msra.mxu0 0
  %37 = vmatpush.bf16.msra.mxu0 0
  %38 = vmatpush.bf16.msra.mxu0 0
  %39 = vmatpush.bf16.msra.mxu0 0
  %40 = vmatpush.bf16.msra.mxu0 0
  %41 = vmatpush.bf16.msra.mxu0 0
  %42 = vmatpush.bf16.msra.mxu0 0
  %43 = vmatpush.bf16.msra.mxu0 %v34
  %44 = vmatmul.bf16.gmra.mxu0 %v30
  %v45 = vpop.f32.mrf.mxu0
  %v46 = vadd.f32 0.0, %v45
  %v47 = vpop.f32.mrf.mxu0
  %v48 = vadd.f32 0.0, %v47
  %49 = vdwg.mxu0
  %v50 = vld [vmem:[%s2] sm:$0x1]
  %v52 = vperm.slane %v50, 0
  %v54 = vadd.f32 %v46, %v52
  %v55 = vadd.f32 %v48, %v52
  %v56 = vld [vmem:[%s3] sm:$0xff]
  %v57 = vadd.f32 %v54, %v56
  %v58 = vadd.f32 %v55, %v56
  %v59 = vld [vmem:[%s4] sm:$0x1]
  %v60 = vld [vmem:[%s5] sm:$0x1]
  %vm61 = vcmask 261120
  %v62 = vsel %vm61, %v57, 0.0
  %63 = vadd.xlane.f32.xlu0 %v62
  %v64 = vpop.xlane.xlu0 %63
  %v65 = vsel %vm61, %v58, 0.0
  %66 = vadd.xlane.f32.xlu0 %v65
  %v67 = vpop.xlane.xlu0 %66
  %v68 = vrcp.pop 32.0
  %v69 = vmul.f32 32.0, %v68
  %v70 = vsub.f32 1.0, %v69
  %v71 = vmul.f32 %v68, %v70
  %v72 = vadd.f32 %v68, %v71
  %vm73 = vweird.f32 %v68
  %v74 = vsel %vm73, %v68, %v72
  %v75 = vmul.f32 %v64, %v74
  %v76 = vmul.f32 %v67, %v74
  %v77 = vsub.f32 %v57, %v75
  %v78 = vsub.f32 %v58, %v76
  %v79 = vmul.f32 %v77, %v77
  %v80 = vmul.f32 %v78, %v78
  %v81 = vsel %vm61, %v79, 0.0
  %82 = vadd.xlane.f32.xlu0 %v81
  %v83 = vpop.xlane.xlu0 %82
  %v84 = vsel %vm61, %v80, 0.0
  %85 = vadd.xlane.f32.xlu0 %v84
  %v86 = vpop.xlane.xlu0 %85
  %v87 = vmul.f32 %v83, %v74
  %v88 = vmul.f32 %v86, %v74
  %v89 = vadd.f32 %v87, 1e-05
  %v90 = vadd.f32 %v88, 1e-05
  %v91 = vrsqrt.pop %v89
  %v92 = vmul.f32 %v91, %v89
  %v93 = vmul.f32 %v92, %v91
  %v94 = vmul.f32 0.5, %v93
  %v95 = vsub.f32 1.5, %v94
  %v96 = vmul.f32 %v91, %v95
  %vm97 = vweird.f32 %v89
  %vm98 = vweird.f32 %v91
  %vm99 = vmor %vm97, %vm98
  %v100 = vsel %vm99, %v91, %v96
  %v101 = vrsqrt.pop %v90
  %v102 = vmul.f32 %v101, %v90
  %v103 = vmul.f32 %v102, %v101
  %v104 = vmul.f32 0.5, %v103
  %v105 = vsub.f32 1.5, %v104
  %v106 = vmul.f32 %v101, %v105
  %vm107 = vweird.f32 %v90
  %vm108 = vweird.f32 %v101
  %vm109 = vmor %vm107, %vm108
  %v110 = vsel %vm109, %v101, %v106
  %v111 = vmul.f32 %v77, %v100
  %v112 = vmul.f32 %v78, %v110
  %v114 = vperm.slane %v59, 0
  %v116 = vmul.f32 %v111, %v114
  %v117 = vmul.f32 %v112, %v114
  %v119 = vperm.slane %v60, 0
  %v121 = vadd.f32 %v116, %v119
  %v122 = vadd.f32 %v117, %v119
  %123 = vst.msk [vmem:[%s6] sm:$0xff] %vm61, %v121
  %124 = vst.msk [vmem:[%s6 + $0x8] sm:$0xff] %vm61, %v122
  // Predicated region
  $region26: #{forward.5} parent=0 // pred_check
    _
  $region27: #{forward.5} parent=0 // pred_check_branch
    %126 = sbr.rel (0) target = $region29
  $region28: #{forward.5} parent=0 // pred_region
    _
  $region29: #{forward.5} parent=0 // pred_fallthru
    _
  // Predicated region
  $region30: #{forward.5} parent=0 // pred_check
    _
  $region31: #{forward.5} parent=0 // pred_check_branch
    %128 = sbr.rel (0) target = $region33
  $region32: #{forward.5} parent=0 // pred_region
    _
  $region33: #{forward.5} parent=0 // pred_fallthru
    _

// kernel: forward.9
$region0: #{forward.9}
  #allocation0 [shape = 'u32[]', space=smem, size = 0x4, offset = 0x4, fixed_abs, tag = 'smem constant byte address 0x4 - core index']
  #allocation1 [shape = 'u32[72,128]{1,0:T(1,128)}', space=vmem, size = 0x9000, scoped, tag = 'internal scratch']
  #allocation2 [shape = 'f32[1,1]{1,0:T(1,128)S(1)}', space=vmem, size = 0x200, scoped, tag = 'scoped memory for forward.9']
  %s0 = inlined_call_operand.vmem [shape: f32[8,32], index: 0, kind: input, shape index: {}]
  %s1 = inlined_call_operand.vmem [shape: f32[8,32], index: 1, kind: input, shape index: {}]
  %s2 = inlined_call_operand.vmem [shape: f32[1,32], index: 2, kind: input, shape index: {}]
  %s3 = inlined_call_operand.vmem [shape: f32[1,32], index: 3, kind: input, shape index: {}]
  %s4 = inlined_call_operand.vmem [shape: bf16[64,64], index: 4, kind: input, shape index: {}]
  %s5 = inlined_call_operand.vmem [shape: f32[1,64], index: 5, kind: input, shape index: {}]
  %s6 = inlined_call_operand.vmem [shape: f32[1,64], index: 6, kind: input, shape index: {}]
  %s7 = inlined_call_operand.vmem [shape: f32[1,64], index: 7, kind: input, shape index: {}]
  %s8 = inlined_call_operand.vmem [shape: bf16[64,32], index: 8, kind: input, shape index: {}]
  %s9 = inlined_call_operand.vmem [shape: f32[1,32], index: 9, kind: input, shape index: {}]
  %s10 = inlined_call_operand.vmem [shape: f32[1,32], index: 10, kind: input, shape index: {}]
  %s11 = inlined_call_operand.vmem [shape: f32[1,32], index: 11, kind: input, shape index: {}]
  %s12 = inlined_call_operand.vmem [shape: bf16[32,1], index: 12, kind: input, shape index: {}]
  %s13 = inlined_call_operand.<no memory space> [shape: f32[1,1], index: 13, kind: input, shape index: {}]
  %s14 = inlined_call_operand.vmem [shape: f32[8,1], index: 14, kind: output, shape index: {}]
  %s15 = sld [smem:[#allocation0]]
  $region66: #{forward.9} parent=0
    _
  %s17 = ssub.s32 1, %s15
  %s18 = scalar_select 0, %s17, %s15
  %v19 = vstv %s13
  %20 = vst [vmem:[#allocation2] sm:$0x1] %v19
  // Predicated region
  $region2: #{forward.9} parent=0 // pred_check
    _
  $region3: #{forward.9} parent=0 // pred_check_branch
    %22 = sbr.rel (0) target = $region5
  $region4: #{forward.9} parent=0 // pred_region
    _
  $region5: #{forward.9} parent=0 // pred_fallthru
    _
  // Predicated region
  $region6: #{forward.9} parent=0 // pred_check
    _
  $region7: #{forward.9} parent=0 // pred_check_branch
    %24 = sbr.rel (0) target = $region9
  $region8: #{forward.9} parent=0 // pred_region
    _
  $region9: #{forward.9} parent=0 // pred_fallthru
    _
  // Predicated region
  $region10: #{forward.9} parent=0 // pred_check
    _
  $region11: #{forward.9} parent=0 // pred_check_branch
    %26 = sbr.rel (0) target = $region13
  $region12: #{forward.9} parent=0 // pred_region
    _
  $region13: #{forward.9} parent=0 // pred_fallthru
    _
  // Predicated region
  $region14: #{forward.9} parent=0 // pred_check
    _
  $region15: #{forward.9} parent=0 // pred_check_branch
    %28 = sbr.rel (0) target = $region17
  $region16: #{forward.9} parent=0 // pred_region
    _
  $region17: #{forward.9} parent=0 // pred_fallthru
    _
  // Predicated region
  $region18: #{forward.9} parent=0 // pred_check
    _
  $region19: #{forward.9} parent=0 // pred_check_branch
    %30 = sbr.rel (0) target = $region21
  $region20: #{forward.9} parent=0 // pred_region
    _
  $region21: #{forward.9} parent=0 // pred_fallthru
    _
  // Predicated region
  $region22: #{forward.9} parent=0 // pred_check
    _
  $region23: #{forward.9} parent=0 // pred_check_branch
    %32 = sbr.rel (0) target = $region25
  $region24: #{forward.9} parent=0 // pred_region
    _
  $region25: #{forward.9} parent=0 // pred_fallthru
    _
  // Predicated region
  $region26: #{forward.9} parent=0 // pred_check
    _
  $region27: #{forward.9} parent=0 // pred_check_branch
    %34 = sbr.rel (0) target = $region29
  $region28: #{forward.9} parent=0 // pred_region
    _
  $region29: #{forward.9} parent=0 // pred_fallthru
    _
  // Predicated region
  $region30: #{forward.9} parent=0 // pred_check
    _
  $region31: #{forward.9} parent=0 // pred_check_branch
    %36 = sbr.rel (0) target = $region33
  $region32: #{forward.9} parent=0 // pred_region
    _
  $region33: #{forward.9} parent=0 // pred_fallthru
    _
  // Predicated region
  $region34: #{forward.9} parent=0 // pred_check
    _
  $region35: #{forward.9} parent=0 // pred_check_branch
    %38 = sbr.rel (0) target = $region37
  $region36: #{forward.9} parent=0 // pred_region
    _
  $region37: #{forward.9} parent=0 // pred_fallthru
    _
  // Predicated region
  $region38: #{forward.9} parent=0 // pred_check
    _
  $region39: #{forward.9} parent=0 // pred_check_branch
    %40 = sbr.rel (0) target = $region41
  $region40: #{forward.9} parent=0 // pred_region
    _
  $region41: #{forward.9} parent=0 // pred_fallthru
    _
  // Predicated region
  $region42: #{forward.9} parent=0 // pred_check
    _
  $region43: #{forward.9} parent=0 // pred_check_branch
    %42 = sbr.rel (0) target = $region45
  $region44: #{forward.9} parent=0 // pred_region
    _
  $region45: #{forward.9} parent=0 // pred_fallthru
    _
  // Predicated region
  $region46: #{forward.9} parent=0 // pred_check
    _
  $region47: #{forward.9} parent=0 // pred_check_branch
    %44 = sbr.rel (0) target = $region49
  $region48: #{forward.9} parent=0 // pred_region
    _
  $region49: #{forward.9} parent=0 // pred_fallthru
    _
  // Predicated region
  $region50: #{forward.9} parent=0 // pred_check
    _
  $region51: #{forward.9} parent=0 // pred_check_branch
    %46 = sbr.rel (0) target = $region53
  $region52: #{forward.9} parent=0 // pred_region
    _
  $region53: #{forward.9} parent=0 // pred_fallthru
    _
  // Predicated region
  $region54: #{forward.9} parent=0 // pred_check
    _
  $region55: #{forward.9} parent=0 // pred_check_branch
    %48 = sbr.rel (0) target = $region57
  $region56: #{forward.9} parent=0 // pred_region
    _
  $region57: #{forward.9} parent=0 // pred_fallthru
    _
  %v50 = vld [vmem:[%s0] sm:$0xff]
  %v51 = vld [vmem:[%s1] sm:$0xff]
  %v52 = vld [vmem:[%s2] sm:$0x1]
  %v53 = vld [vmem:[%s3] sm:$0x1]
  %vm54 = vcmask 261120
  %v55 = vsel %vm54, %v51, 0.0
  %56 = vadd.xlane.f32.xlu0 %v55
  %v57 = vpop.xlane.xlu0 %56
  %v58 = vrcp.pop 32.0
  %v59 = vmul.f32 32.0, %v58
  %v60 = vsub.f32 1.0, %v59
  %v61 = vmul.f32 %v58, %v60
  %v62 = vadd.f32 %v58, %v61
  %vm63 = vweird.f32 %v58
  %v64 = vsel %vm63, %v58, %v62
  %v65 = vmul.f32 %v57, %v64
  %v66 = vsub.f32 %v51, %v65
  %v67 = vmul.f32 %v66, %v66
  %v68 = vsel %vm54, %v67, 0.0
  %69 = vadd.xlane.f32.xlu0 %v68
  %v70 = vpop.xlane.xlu0 %69
  %v71 = vmul.f32 %v70, %v64
  %v72 = vadd.f32 %v71, 1e-05
  %v73 = vrsqrt.pop %v72
  %v74 = vmul.f32 %v73, %v72
  %v75 = vmul.f32 %v74, %v73
  %v76 = vmul.f32 0.5, %v75
  %v77 = vsub.f32 1.5, %v76
  %v78 = vmul.f32 %v73, %v77
  %vm79 = vweird.f32 %v72
  %vm80 = vweird.f32 %v73
  %vm81 = vmor %vm79, %vm80
  %v82 = vsel %vm81, %v73, %v78
  %v83 = vmul.f32 %v66, %v82
  %v85 = vperm.slane %v52, 0
  %v87 = vmul.f32 %v83, %v85
  %v89 = vperm.slane %v53, 0
  %v91 = vadd.f32 %v87, %v89
  %v92 = vld [vmem:[%s4] sm:$0xf]
  %v93 = vld [vmem:[%s4 + $0x4] sm:$0xf]
  %v94 = vld [vmem:[%s4 + $0x8] sm:$0xf]
  %v95 = vld [vmem:[%s4 + $0xc] sm:$0xf]
  %v96 = vld [vmem:[%s4 + $0x10] sm:$0xf]
  %v97 = vld [vmem:[%s4 + $0x14] sm:$0xf]
  %v98 = vld [vmem:[%s4 + $0x18] sm:$0xf]
  %v99 = vld [vmem:[%s4 + $0x1c] sm:$0xf]
  %v100 = vpack.c.bf16 %v50, %v50
  %v101 = vpack.c.bf16 %v91, %v91
  %v106 = vunpack.c.l.b16 %v96
  %v107 = vunpack.c.l.b16 %v97
  %v108 = vunpack.c.l.b16 %v98
  %v109 = vunpack.c.l.b16 %v99
  %v110 = vpack.c.b16 %v107, %v106
  %v111 = vpack.c.b16 %v109, %v108
  %v115 = vsel %vm54, %v101, 0
  %117 = vmatpush.bf16.msra.mxu0 0
  %118 = vmatpush.bf16.msra.mxu0 0
  %119 = vmatpush.bf16.msra.mxu0 0
  %120 = vmatpush.bf16.msra.mxu0 0
  %121 = vmatpush.bf16.msra.mxu0 0
  %122 = vmatpush.bf16.msra.mxu0 0
  %123 = vmatpush.bf16.msra.mxu0 %v111
  %124 = vmatpush.bf16.msra.mxu0 %v110
  %125 = vmatmul.bf16.gmra.mxu0 %v115
  %v126 = vpop.f32.mrf.mxu0
  %v127 = vadd.f32 0.0, %v126
  %v128 = vpop.f32.mrf.mxu0
  %129 = vdwg.mxu0
  %v134 = vunpack.c.l.b16 %v92
  %v135 = vunpack.c.l.b16 %v93
  %v136 = vunpack.c.l.b16 %v94
  %v137 = vunpack.c.l.b16 %v95
  %v138 = vpack.c.b16 %v135, %v134
  %v139 = vpack.c.b16 %v137, %v136
  %v143 = vsel %vm54, %v100, 0
  %145 = vmatpush.bf16.msra.mxu0 0
  %146 = vmatpush.bf16.msra.mxu0 0
  %147 = vmatpush.bf16.msra.mxu0 0
  %148 = vmatpush.bf16.msra.mxu0 0
  %149 = vmatpush.bf16.msra.mxu0 0
  %150 = vmatpush.bf16.msra.mxu0 0
  %151 = vmatpush.bf16.msra.mxu0 %v139
  %152 = vmatpush.bf16.msra.mxu0 %v138
  %153 = vmatmul.bf16.gmra.mxu0 %v143
  %v154 = vpop.f32.mrf.mxu0
  %v155 = vadd.f32 %v127, %v154
  %v156 = vpop.f32.mrf.mxu0
  %157 = vdwg.mxu0
  %v158 = vld [vmem:[%s5] sm:$0x1]
  %v160 = vperm.slane %v158, 0
  %v162 = vadd.f32 %v155, %v160
  %v163 = vld [vmem:[%s6] sm:$0x1]
  %v164 = vld [vmem:[%s7] sm:$0x1]
  %vm165 = vcmask 523264
  %v166 = vsel %vm165, %v162, 0.0
  %167 = vadd.xlane.f32.xlu0 %v166
  %v168 = vpop.xlane.xlu0 %167
  %v169 = vrcp.pop 64.0
  %v170 = vmul.f32 64.0, %v169
  %v171 = vsub.f32 1.0, %v170
  %v172 = vmul.f32 %v169, %v171
  %v173 = vadd.f32 %v169, %v172
  %vm174 = vweird.f32 %v169
  %v175 = vsel %vm174, %v169, %v173
  %v176 = vmul.f32 %v168, %v175
  %v177 = vsub.f32 %v162, %v176
  %v178 = vmul.f32 %v177, %v177
  %v179 = vsel %vm165, %v178, 0.0
  %180 = vadd.xlane.f32.xlu0 %v179
  %v181 = vpop.xlane.xlu0 %180
  %v182 = vmul.f32 %v181, %v175
  %v183 = vadd.f32 %v182, 1e-05
  %v184 = vrsqrt.pop %v183
  %v185 = vmul.f32 %v184, %v183
  %v186 = vmul.f32 %v185, %v184
  %v187 = vmul.f32 0.5, %v186
  %v188 = vsub.f32 1.5, %v187
  %v189 = vmul.f32 %v184, %v188
  %vm190 = vweird.f32 %v183
  %vm191 = vweird.f32 %v184
  %vm192 = vmor %vm190, %vm191
  %v193 = vsel %vm192, %v184, %v189
  %v194 = vmul.f32 %v177, %v193
  %v196 = vperm.slane %v163, 0
  %v198 = vmul.f32 %v194, %v196
  %v200 = vperm.slane %v164, 0
  %v202 = vadd.f32 %v198, %v200
  %v203 = vmax.f32 %v202, 0.0
  %v204 = vld [vmem:[%s8] sm:$0xf]
  %v205 = vld [vmem:[%s8 + $0x4] sm:$0xf]
  %v206 = vld [vmem:[%s8 + $0x8] sm:$0xf]
  %v207 = vld [vmem:[%s8 + $0xc] sm:$0xf]
  %v208 = vld [vmem:[%s8 + $0x10] sm:$0xf]
  %v209 = vld [vmem:[%s8 + $0x14] sm:$0xf]
  %v210 = vld [vmem:[%s8 + $0x18] sm:$0xf]
  %v211 = vld [vmem:[%s8 + $0x1c] sm:$0xf]
  %v212 = vpack.c.bf16 %v203, %v203
  %v213 = vld [vmem:[%s9] sm:$0x1]
  %v215 = vperm.slane %v213, 0
  %v225 = vunpack.c.l.b16 %v204
  %v226 = vunpack.c.l.b16 %v205
  %v227 = vunpack.c.l.b16 %v206
  %v228 = vunpack.c.l.b16 %v207
  %v229 = vunpack.c.l.b16 %v208
  %v230 = vunpack.c.l.b16 %v209
  %v231 = vunpack.c.l.b16 %v210
  %v232 = vunpack.c.l.b16 %v211
  %v233 = vpack.c.b16 %v226, %v225
  %v234 = vpack.c.b16 %v228, %v227
  %v235 = vpack.c.b16 %v230, %v229
  %v236 = vpack.c.b16 %v232, %v231
  %v242 = vsel %vm165, %v212, 0
  %244 = vmatpush.bf16.msra.mxu0 0
  %245 = vmatpush.bf16.msra.mxu0 0
  %246 = vmatpush.bf16.msra.mxu0 0
  %247 = vmatpush.bf16.msra.mxu0 0
  %248 = vmatpush.bf16.msra.mxu0 %v236
  %249 = vmatpush.bf16.msra.mxu0 %v235
  %250 = vmatpush.bf16.msra.mxu0 %v234
  %251 = vmatpush.bf16.msra.mxu0 %v233
  %252 = vmatmul.bf16.gmra.mxu0 %v242
  %v253 = vpop.f32.mrf.mxu0
  %v254 = vadd.f32 %v215, %v253
  %v255 = vpop.f32.mrf.mxu0
  %256 = vdwg.mxu0
  %v257 = vld [vmem:[%s10] sm:$0x1]
  %v258 = vld [vmem:[%s11] sm:$0x1]
  %v259 = vsel %vm54, %v254, 0.0
  %260 = vadd.xlane.f32.xlu0 %v259
  %v261 = vpop.xlane.xlu0 %260
  %v262 = vmul.f32 %v261, %v64
  %v263 = vsub.f32 %v254, %v262
  %v264 = vmul.f32 %v263, %v263
  %v265 = vsel %vm54, %v264, 0.0
  %266 = vadd.xlane.f32.xlu0 %v265
  %v267 = vpop.xlane.xlu0 %266
  %v268 = vmul.f32 %v267, %v64
  %v269 = vadd.f32 %v268, 1e-05
  %v270 = vrsqrt.pop %v269
  %v271 = vmul.f32 %v270, %v269
  %v272 = vmul.f32 %v271, %v270
  %v273 = vmul.f32 0.5, %v272
  %v274 = vsub.f32 1.5, %v273
  %v275 = vmul.f32 %v270, %v274
  %vm276 = vweird.f32 %v269
  %vm277 = vweird.f32 %v270
  %vm278 = vmor %vm276, %vm277
  %v279 = vsel %vm278, %v270, %v275
  %v280 = vmul.f32 %v263, %v279
  %v282 = vperm.slane %v257, 0
  %v284 = vmul.f32 %v280, %v282
  %v286 = vperm.slane %v258, 0
  %v288 = vadd.f32 %v284, %v286
  %v289 = vmax.f32 %v288, 0.0
  %v290 = vld [vmem:[%s12] sm:$0xf]
  %v291 = vld [vmem:[%s12 + $0x4] sm:$0xf]
  %v292 = vld [vmem:[%s12 + $0x8] sm:$0xf]
  %v293 = vld [vmem:[%s12 + $0xc] sm:$0xf]
  %v294 = vpack.c.bf16 %v289, %v289
  %v295 = vld [vmem:[#allocation2] sm:$0x1]
  %v297 = vperm.slane %v295, 0
  %v303 = vunpack.c.l.b16 %v290
  %v304 = vunpack.c.l.b16 %v291
  %v305 = vunpack.c.l.b16 %v292
  %v306 = vunpack.c.l.b16 %v293
  %v307 = vpack.c.b16 %v304, %v303
  %v308 = vpack.c.b16 %v306, %v305
  %v312 = vsel %vm54, %v294, 0
  %314 = vmatpush.bf16.msra.mxu0 0
  %315 = vmatpush.bf16.msra.mxu0 0
  %316 = vmatpush.bf16.msra.mxu0 0
  %317 = vmatpush.bf16.msra.mxu0 0
  %318 = vmatpush.bf16.msra.mxu0 0
  %319 = vmatpush.bf16.msra.mxu0 0
  %320 = vmatpush.bf16.msra.mxu0 %v308
  %321 = vmatpush.bf16.msra.mxu0 %v307
  %322 = vmatmul.bf16.gmra.mxu0 %v312
  %v323 = vpop.f32.mrf.mxu0
  %v324 = vadd.f32 %v297, %v323
  %v325 = vpop.f32.mrf.mxu0
  %326 = vdwg.mxu0
  %vm327 = vcmask 7168
  %328 = vst.msk [vmem:[%s14] sm:$0xff] %vm327, %v324
  // Predicated region
  $region58: #{forward.9} parent=0 // pred_check
    _
  $region59: #{forward.9} parent=0 // pred_check_branch
    %330 = sbr.rel (0) target = $region61
  $region60: #{forward.9} parent=0 // pred_region
    _
  $region61: #{forward.9} parent=0 // pred_fallthru
    _
  // Predicated region
  $region62: #{forward.9} parent=0 // pred_check
    _
  $region63: #{forward.9} parent=0 // pred_check_branch
    %332 = sbr.rel (0) target = $region65
  $region64: #{forward.9} parent=0 // pred_region
    _
  $region65: #{forward.9} parent=0 // pred_fallthru
    _

// kernel: forward.6
$region0: #{forward.6}
  #allocation0 [shape = 'u32[]', space=smem, size = 0x4, offset = 0x4, fixed_abs, tag = 'smem constant byte address 0x4 - core index']
  #allocation1 [shape = 'u32[72,128]{1,0:T(1,128)}', space=vmem, size = 0x9000, scoped, tag = 'internal scratch']
  %s0 = inlined_call_operand.vmem [shape: f32[2,8,32], index: 0, kind: input, shape index: {}]
  %s1 = inlined_call_operand.vmem [shape: bf16[2,32,96], index: 1, kind: input, shape index: {}]
  %s2 = inlined_call_operand.vmem [shape: f32[2,1,96], index: 2, kind: input, shape index: {}]
  %s3 = inlined_call_operand.vmem [shape: bf16[2,32,32], index: 3, kind: input, shape index: {}]
  %s4 = inlined_call_operand.vmem [shape: f32[2,1,32], index: 4, kind: input, shape index: {}]
  %s5 = inlined_call_operand.vmem [shape: f32[2,1,32], index: 5, kind: input, shape index: {}]
  %s6 = inlined_call_operand.vmem [shape: f32[2,1,32], index: 6, kind: input, shape index: {}]
  %s7 = inlined_call_operand.vmem [shape: bf16[2,32,128], index: 7, kind: input, shape index: {}]
  %s8 = inlined_call_operand.vmem [shape: f32[2,1,128], index: 8, kind: input, shape index: {}]
  %s9 = inlined_call_operand.vmem [shape: bf16[2,128,32], index: 9, kind: input, shape index: {}]
  %s10 = inlined_call_operand.vmem [shape: f32[2,1,32], index: 10, kind: input, shape index: {}]
  %s11 = inlined_call_operand.vmem [shape: f32[2,1,32], index: 11, kind: input, shape index: {}]
  %s12 = inlined_call_operand.vmem [shape: f32[2,1,32], index: 12, kind: input, shape index: {}]
  %s13 = inlined_call_operand.vmem [shape: f32[2,8,32], index: 13, kind: output, shape index: {}]
  %s14 = sld [smem:[#allocation0]]
  $region89: #{forward.6} parent=0
    _
  %s16 = ssub.s32 1, %s14
  %s17 = scalar_select 0, %s16, %s14
  loop: start=0, step=1, limit=4
  $region2: #{forward.6} parent=0 // loop_pre_header
    _
  $region3: #{forward.6} parent=0 // loop_header
    %s19 = sphi 0, %s23
    %p20 = scmp.ge.s32.totalorder %s19, 4
    %s26 = sphi 0, %s38
    %s27 = sphi 0, %s34
    %s28 = sphi 0, %s26
    %s29 = sphi 0, %s27
    %s30 = sphi 0, %s28
    %s31 = sphi 0, %s29
    %s41 = sphi 0, %s43
    %s44 = sphi 0, %s41
    %s45 = sphi 0, %s44
    %s61 = sphi 0, %s45
    %s67 = sphi 0, %s69
    %s70 = sphi 0, %s67
    %s71 = sphi 0, %s70
    %s87 = sphi 0, %s71
    %s93 = sphi 0, %s95
    %s96 = sphi 0, %s93
    %s97 = sphi 0, %s96
    %s113 = sphi 0, %s97
    %s119 = sphi 0, %s121
    %s122 = sphi 0, %s119
    %s123 = sphi 0, %s122
    %s139 = sphi 0, %s123
    %s145 = sphi 0, %s147
    %s148 = sphi 0, %s145
    %s149 = sphi 0, %s148
    %s165 = sphi 0, %s149
    %s171 = sphi 0, %s173
    %s174 = sphi 0, %s171
    %s175 = sphi 0, %s174
    %s191 = sphi 0, %s175
    %s197 = sphi 0, %s199
    %s200 = sphi 0, %s197
    %s201 = sphi 0, %s200
    %s217 = sphi 0, %s201
    %s223 = sphi 0, %s225
    %s226 = sphi 0, %s223
    %s227 = sphi 0, %s226
    %s243 = sphi 0, %s227
    %s249 = sphi 0, %s251
    %s252 = sphi 0, %s249
    %s253 = sphi 0, %s252
    %s269 = sphi 0, %s253
    %s275 = sphi 0, %s277
    %s278 = sphi 0, %s275
    %s279 = sphi 0, %s278
    %s295 = sphi 0, %s279
    %s301 = sphi 0, %s303
    %s304 = sphi 0, %s301
    %s305 = sphi 0, %s304
    %s321 = sphi 0, %s305
    %s327 = sphi 0, %s329
    %s330 = sphi 0, %s327
    %s331 = sphi 0, %s330
    %s347 = sphi 0, %s331
    %s353 = sphi 0, %s355
    %s356 = sphi 0, %s353
    %s357 = sphi 0, %s356
    %s373 = sphi 0, %s357
    %s379 = sphi 0, %s381
    %s382 = sphi 0, %s379
    %s383 = sphi 0, %s382
    %s399 = sphi 0, %s383
  $region4: #{forward.6} parent=0 // loop_header_branch
    %22 = sbr.rel (%p20) target = $region8
  $region5: #{forward.6} parent=0 // loop_body
    %s24 = ssub.s32 %s19, 1
    %s25 = ssub.s32 %s19, 2
    %s32 = sadd.s32 1, %s27
    %p33 = scmp.ge.s32.totalorder %s32, 2
    %s34 = scalar_select %p33, 0, %s32
    %s35 = sadd.s32 1, %s26
    %s36 = scalar_select %p33, %s35, %s26
    %p37 = scmp.ge.s32.totalorder %s36, 1
    %s38 = scalar_select %p37, 0, %s36
    %s39 = ssub.s32 %s26, %s38
    %p40 = scmp.eq.s32.totalorder %s39, 0
    %s42 = sadd.s32 %s41, 1
    %s43 = scalar_select %p40, %s41, %s42
    %p46 = pneg %p40
    %p47 = scmp.eq.s32.totalorder %s19, 1
    %p48 = por %p46, %p47
    %p49 = scmp.ne.s32.totalorder %s41, %s44
    %p50 = scmp.eq.s32.totalorder %s19, 0
    %p51 = por %p49, %p50
    %p52 = scmp.ne.s32.totalorder %s41, %s44
    %p53 = scmp.eq.s32.totalorder %s24, 1
    %p54 = por %p52, %p53
    %p55 = scmp.ne.s32.totalorder %s44, %s45
    %p56 = scmp.eq.s32.totalorder %s24, 0
    %p57 = por %p55, %p56
    %p58 = scmp.ne.s32.totalorder %s44, %s45
    %p59 = scmp.eq.s32.totalorder %s25, 1
    %p60 = por %p58, %p59
    %p62 = scmp.ne.s32.totalorder %s45, %s61
    %p63 = scmp.eq.s32.totalorder %s25, 0
    %p64 = por %p62, %p63
    %s65 = ssub.s32 %s27, %s34
    %p66 = scmp.eq.s32.totalorder %s65, 0
    %s68 = sadd.s32 %s67, 1
    %s69 = scalar_select %p66, %s67, %s68
    %p72 = pneg %p66
    %p73 = scmp.eq.s32.totalorder %s19, 1
    %p74 = por %p72, %p73
    %p75 = scmp.ne.s32.totalorder %s67, %s70
    %p76 = scmp.eq.s32.totalorder %s19, 0
    %p77 = por %p75, %p76
    %p78 = scmp.ne.s32.totalorder %s67, %s70
    %p79 = scmp.eq.s32.totalorder %s24, 1
    %p80 = por %p78, %p79
    %p81 = scmp.ne.s32.totalorder %s70, %s71
    %p82 = scmp.eq.s32.totalorder %s24, 0
    %p83 = por %p81, %p82
    %p84 = scmp.ne.s32.totalorder %s70, %s71
    %p85 = scmp.eq.s32.totalorder %s25, 1
    %p86 = por %p84, %p85
    %p88 = scmp.ne.s32.totalorder %s71, %s87
    %p89 = scmp.eq.s32.totalorder %s25, 0
    %p90 = por %p88, %p89
    %s91 = ssub.s32 %s27, %s34
    %p92 = scmp.eq.s32.totalorder %s91, 0
    %s94 = sadd.s32 %s93, 1
    %s95 = scalar_select %p92, %s93, %s94
    %p98 = pneg %p92
    %p99 = scmp.eq.s32.totalorder %s19, 1
    %p100 = por %p98, %p99
    %p101 = scmp.ne.s32.totalorder %s93, %s96
    %p102 = scmp.eq.s32.totalorder %s19, 0
    %p103 = por %p101, %p102
    %p104 = scmp.ne.s32.totalorder %s93, %s96
    %p105 = scmp.eq.s32.totalorder %s24, 1
    %p106 = por %p104, %p105
    %p107 = scmp.ne.s32.totalorder %s96, %s97
    %p108 = scmp.eq.s32.totalorder %s24, 0
    %p109 = por %p107, %p108
    %p110 = scmp.ne.s32.totalorder %s96, %s97
    %p111 = scmp.eq.s32.totalorder %s25, 1
    %p112 = por %p110, %p111
    %p114 = scmp.ne.s32.totalorder %s97, %s113
    %p115 = scmp.eq.s32.totalorder %s25, 0
    %p116 = por %p114, %p115
    %s117 = ssub.s32 %s27, %s34
    %p118 = scmp.eq.s32.totalorder %s117, 0
    %s120 = sadd.s32 %s119, 1
    %s121 = scalar_select %p118, %s119, %s120
    %p124 = pneg %p118
    %p125 = scmp.eq.s32.totalorder %s19, 1
    %p126 = por %p124, %p125
    %p127 = scmp.ne.s32.totalorder %s119, %s122
    %p128 = scmp.eq.s32.totalorder %s19, 0
    %p129 = por %p127, %p128
    %p130 = scmp.ne.s32.totalorder %s119, %s122
    %p131 = scmp.eq.s32.totalorder %s24, 1
    %p132 = por %p130, %p131
    %p133 = scmp.ne.s32.totalorder %s122, %s123
    %p134 = scmp.eq.s32.totalorder %s24, 0
    %p135 = por %p133, %p134
    %p136 = scmp.ne.s32.totalorder %s122, %s123
    %p137 = scmp.eq.s32.totalorder %s25, 1
    %p138 = por %p136, %p137
    %p140 = scmp.ne.s32.totalorder %s123, %s139
    %p141 = scmp.eq.s32.totalorder %s25, 0
    %p142 = por %p140, %p141
    %s143 = ssub.s32 %s27, %s34
    %p144 = scmp.eq.s32.totalorder %s143, 0
    %s146 = sadd.s32 %s145, 1
    %s147 = scalar_select %p144, %s145, %s146
    %p150 = pneg %p144
    %p151 = scmp.eq.s32.totalorder %s19, 1
    %p152 = por %p150, %p151
    %p153 = scmp.ne.s32.totalorder %s145, %s148
    %p154 = scmp.eq.s32.totalorder %s19, 0
    %p155 = por %p153, %p154
    %p156 = scmp.ne.s32.totalorder %s145, %s148
    %p157 = scmp.eq.s32.totalorder %s24, 1
    %p158 = por %p156, %p157
    %p159 = scmp.ne.s32.totalorder %s148, %s149
    %p160 = scmp.eq.s32.totalorder %s24, 0
    %p161 = por %p159, %p160
    %p162 = scmp.ne.s32.totalorder %s148, %s149
    %p163 = scmp.eq.s32.totalorder %s25, 1
    %p164 = por %p162, %p163
    %p166 = scmp.ne.s32.totalorder %s149, %s165
    %p167 = scmp.eq.s32.totalorder %s25, 0
    %p168 = por %p166, %p167
    %s169 = ssub.s32 %s27, %s34
    %p170 = scmp.eq.s32.totalorder %s169, 0
    %s172 = sadd.s32 %s171, 1
    %s173 = scalar_select %p170, %s171, %s172
    %p176 = pneg %p170
    %p177 = scmp.eq.s32.totalorder %s19, 1
    %p178 = por %p176, %p177
    %p179 = scmp.ne.s32.totalorder %s171, %s174
    %p180 = scmp.eq.s32.totalorder %s19, 0
    %p181 = por %p179, %p180
    %p182 = scmp.ne.s32.totalorder %s171, %s174
    %p183 = scmp.eq.s32.totalorder %s24, 1
    %p184 = por %p182, %p183
    %p185 = scmp.ne.s32.totalorder %s174, %s175
    %p186 = scmp.eq.s32.totalorder %s24, 0
    %p187 = por %p185, %p186
    %p188 = scmp.ne.s32.totalorder %s174, %s175
    %p189 = scmp.eq.s32.totalorder %s25, 1
    %p190 = por %p188, %p189
    %p192 = scmp.ne.s32.totalorder %s175, %s191
    %p193 = scmp.eq.s32.totalorder %s25, 0
    %p194 = por %p192, %p193
    %s195 = ssub.s32 %s27, %s34
    %p196 = scmp.eq.s32.totalorder %s195, 0
    %s198 = sadd.s32 %s197, 1
    %s199 = scalar_select %p196, %s197, %s198
    %p202 = pneg %p196
    %p203 = scmp.eq.s32.totalorder %s19, 1
    %p204 = por %p202, %p203
    %p205 = scmp.ne.s32.totalorder %s197, %s200
    %p206 = scmp.eq.s32.totalorder %s19, 0
    %p207 = por %p205, %p206
    %p208 = scmp.ne.s32.totalorder %s197, %s200
    %p209 = scmp.eq.s32.totalorder %s24, 1
    %p210 = por %p208, %p209
    %p211 = scmp.ne.s32.totalorder %s200, %s201
    %p212 = scmp.eq.s32.totalorder %s24, 0
    %p213 = por %p211, %p212
    %p214 = scmp.ne.s32.totalorder %s200, %s201
    %p215 = scmp.eq.s32.totalorder %s25, 1
    %p216 = por %p214, %p215
    %p218 = scmp.ne.s32.totalorder %s201, %s217
    %p219 = scmp.eq.s32.totalorder %s25, 0
    %p220 = por %p218, %p219
    %s221 = ssub.s32 %s27, %s34
    %p222 = scmp.eq.s32.totalorder %s221, 0
    %s224 = sadd.s32 %s223, 1
    %s225 = scalar_select %p222, %s223, %s224
    %p228 = pneg %p222
    %p229 = scmp.eq.s32.totalorder %s19, 1
    %p230 = por %p228, %p229
    %p231 = scmp.ne.s32.totalorder %s223, %s226
    %p232 = scmp.eq.s32.totalorder %s19, 0
    %p233 = por %p231, %p232
    %p234 = scmp.ne.s32.totalorder %s223, %s226
    %p235 = scmp.eq.s32.totalorder %s24, 1
    %p236 = por %p234, %p235
    %p237 = scmp.ne.s32.totalorder %s226, %s227
    %p238 = scmp.eq.s32.totalorder %s24, 0
    %p239 = por %p237, %p238
    %p240 = scmp.ne.s32.totalorder %s226, %s227
    %p241 = scmp.eq.s32.totalorder %s25, 1
    %p242 = por %p240, %p241
    %p244 = scmp.ne.s32.totalorder %s227, %s243
    %p245 = scmp.eq.s32.totalorder %s25, 0
    %p246 = por %p244, %p245
    %s247 = ssub.s32 %s27, %s34
    %p248 = scmp.eq.s32.totalorder %s247, 0
    %s250 = sadd.s32 %s249, 1
    %s251 = scalar_select %p248, %s249, %s250
    %p254 = pneg %p248
    %p255 = scmp.eq.s32.totalorder %s19, 1
    %p256 = por %p254, %p255
    %p257 = scmp.ne.s32.totalorder %s249, %s252
    %p258 = scmp.eq.s32.totalorder %s19, 0
    %p259 = por %p257, %p258
    %p260 = scmp.ne.s32.totalorder %s249, %s252
    %p261 = scmp.eq.s32.totalorder %s24, 1
    %p262 = por %p260, %p261
    %p263 = scmp.ne.s32.totalorder %s252, %s253
    %p264 = scmp.eq.s32.totalorder %s24, 0
    %p265 = por %p263, %p264
    %p266 = scmp.ne.s32.totalorder %s252, %s253
    %p267 = scmp.eq.s32.totalorder %s25, 1
    %p268 = por %p266, %p267
    %p270 = scmp.ne.s32.totalorder %s253, %s269
    %p271 = scmp.eq.s32.totalorder %s25, 0
    %p272 = por %p270, %p271
    %s273 = ssub.s32 %s27, %s34
    %p274 = scmp.eq.s32.totalorder %s273, 0
    %s276 = sadd.s32 %s275, 1
    %s277 = scalar_select %p274, %s275, %s276
    %p280 = pneg %p274
    %p281 = scmp.eq.s32.totalorder %s19, 1
    %p282 = por %p280, %p281
    %p283 = scmp.ne.s32.totalorder %s275, %s278
    %p284 = scmp.eq.s32.totalorder %s19, 0
    %p285 = por %p283, %p284
    %p286 = scmp.ne.s32.totalorder %s275, %s278
    %p287 = scmp.eq.s32.totalorder %s24, 1
    %p288 = por %p286, %p287
    %p289 = scmp.ne.s32.totalorder %s278, %s279
    %p290 = scmp.eq.s32.totalorder %s24, 0
    %p291 = por %p289, %p290
    %p292 = scmp.ne.s32.totalorder %s278, %s279
    %p293 = scmp.eq.s32.totalorder %s25, 1
    %p294 = por %p292, %p293
    %p296 = scmp.ne.s32.totalorder %s279, %s295
    %p297 = scmp.eq.s32.totalorder %s25, 0
    %p298 = por %p296, %p297
    %s299 = ssub.s32 %s27, %s34
    %p300 = scmp.eq.s32.totalorder %s299, 0
    %s302 = sadd.s32 %s301, 1
    %s303 = scalar_select %p300, %s301, %s302
    %p306 = pneg %p300
    %p307 = scmp.eq.s32.totalorder %s19, 1
    %p308 = por %p306, %p307
    %p309 = scmp.ne.s32.totalorder %s301, %s304
    %p310 = scmp.eq.s32.totalorder %s19, 0
    %p311 = por %p309, %p310
    %p312 = scmp.ne.s32.totalorder %s301, %s304
    %p313 = scmp.eq.s32.totalorder %s24, 1
    %p314 = por %p312, %p313
    %p315 = scmp.ne.s32.totalorder %s304, %s305
    %p316 = scmp.eq.s32.totalorder %s24, 0
    %p317 = por %p315, %p316
    %p318 = scmp.ne.s32.totalorder %s304, %s305
    %p319 = scmp.eq.s32.totalorder %s25, 1
    %p320 = por %p318, %p319
    %p322 = scmp.ne.s32.totalorder %s305, %s321
    %p323 = scmp.eq.s32.totalorder %s25, 0
    %p324 = por %p322, %p323
    %s325 = ssub.s32 %s27, %s34
    %p326 = scmp.eq.s32.totalorder %s325, 0
    %s328 = sadd.s32 %s327, 1
    %s329 = scalar_select %p326, %s327, %s328
    %p332 = pneg %p326
    %p333 = scmp.eq.s32.totalorder %s19, 1
    %p334 = por %p332, %p333
    %p335 = scmp.ne.s32.totalorder %s327, %s330
    %p336 = scmp.eq.s32.totalorder %s19, 0
    %p337 = por %p335, %p336
    %p338 = scmp.ne.s32.totalorder %s327, %s330
    %p339 = scmp.eq.s32.totalorder %s24, 1
    %p340 = por %p338, %p339
    %p341 = scmp.ne.s32.totalorder %s330, %s331
    %p342 = scmp.eq.s32.totalorder %s24, 0
    %p343 = por %p341, %p342
    %p344 = scmp.ne.s32.totalorder %s330, %s331
    %p345 = scmp.eq.s32.totalorder %s25, 1
    %p346 = por %p344, %p345
    %p348 = scmp.ne.s32.totalorder %s331, %s347
    %p349 = scmp.eq.s32.totalorder %s25, 0
    %p350 = por %p348, %p349
    %s351 = ssub.s32 %s27, %s34
    %p352 = scmp.eq.s32.totalorder %s351, 0
    %s354 = sadd.s32 %s353, 1
    %s355 = scalar_select %p352, %s353, %s354
    %p358 = pneg %p352
    %p359 = scmp.eq.s32.totalorder %s19, 1
    %p360 = por %p358, %p359
    %p361 = scmp.ne.s32.totalorder %s353, %s356
    %p362 = scmp.eq.s32.totalorder %s19, 0
    %p363 = por %p361, %p362
    %p364 = scmp.ne.s32.totalorder %s353, %s356
    %p365 = scmp.eq.s32.totalorder %s24, 1
    %p366 = por %p364, %p365
    %p367 = scmp.ne.s32.totalorder %s356, %s357
    %p368 = scmp.eq.s32.totalorder %s24, 0
    %p369 = por %p367, %p368
    %p370 = scmp.ne.s32.totalorder %s356, %s357
    %p371 = scmp.eq.s32.totalorder %s25, 1
    %p372 = por %p370, %p371
    %p374 = scmp.ne.s32.totalorder %s357, %s373
    %p375 = scmp.eq.s32.totalorder %s25, 0
    %p376 = por %p374, %p375
    %s377 = ssub.s32 %s26, %s38
    %p378 = scmp.eq.s32.totalorder %s377, 0
    %s380 = sadd.s32 %s379, 1
    %s381 = scalar_select %p378, %s379, %s380
    %p384 = pneg %p378
    %p385 = scmp.eq.s32.totalorder %s19, 1
    %p386 = por %p384, %p385
    %p387 = scmp.ne.s32.totalorder %s379, %s382
    %p388 = scmp.eq.s32.totalorder %s19, 0
    %p389 = por %p387, %p388
    %p390 = scmp.ne.s32.totalorder %s379, %s382
    %p391 = scmp.eq.s32.totalorder %s24, 1
    %p392 = por %p390, %p391
    %p393 = scmp.ne.s32.totalorder %s382, %s383
    %p394 = scmp.eq.s32.totalorder %s24, 0
    %p395 = por %p393, %p394
    %p396 = scmp.ne.s32.totalorder %s382, %s383
    %p397 = scmp.eq.s32.totalorder %s25, 1
    %p398 = por %p396, %p397
    %p400 = scmp.ne.s32.totalorder %s383, %s399
    %p401 = scmp.eq.s32.totalorder %s25, 0
    %p402 = por %p400, %p401
    %p403 = scmp.le.s32.totalorder 1, %s19
    %p404 = scmp.lt.s32.totalorder %s19, 3
    %p405 = pnand %p403, %p404
    %p406 = pneg %p405
    // Predicated region
    $region9: #{forward.6} parent=5 // pred_check
      _
    $region10: #{forward.6} parent=5 // pred_check_branch
      %408 = sbr.rel (%p405) target = $region12
    $region11: #{forward.6} parent=5 // pred_region
      %s409 = ssub.s32 %s19, 1
      // Predicated region
      $region13: #{forward.6} parent=11 // pred_check
        %p410 = pneg %p57
      $region14: #{forward.6} parent=11 // pred_check_branch
        %412 = sbr.rel (%p410) target = $region16
      $region15: #{forward.6} parent=11 // pred_region
        %s413 = smul.u32 2, %s28
        %p414 = scmp.lt.s32.totalorder %s413, 1
        %s415 = scalar_select %p414, %s413, 1
        %s416 = smul.addr %s415, 8
        %s417 = scalar_lea.vmem %s0, %s416
        %s418 = smul.u32 2, %s28
      $region16: #{forward.6} parent=11 // pred_fallthru
        _
    $region12: #{forward.6} parent=5 // pred_fallthru
      _
    %p419 = scmp.lt.s32.totalorder %s19, 2
    // Predicated region
    $region17: #{forward.6} parent=5 // pred_check
      %p420 = pneg %p419
    $region18: #{forward.6} parent=5 // pred_check_branch
      %422 = sbr.rel (%p420) target = $region20
    $region19: #{forward.6} parent=5 // pred_region
      // Predicated region
      $region21: #{forward.6} parent=19 // pred_check
        %p423 = pneg %p77
      $region22: #{forward.6} parent=19 // pred_check_branch
        %425 = sbr.rel (%p423) target = $region24
      $region23: #{forward.6} parent=19 // pred_region
        %p426 = scmp.lt.s32.totalorder %s27, 1
        %s427 = scalar_select %p426, %s27, 1
        %s428 = smul.addr %s427, 4
        %s429 = smul.addr %s428, 4
        %s430 = scalar_lea.vmem %s1, %s429
      $region24: #{forward.6} parent=19 // pred_fallthru
        _
      // Predicated region
      $region25: #{forward.6} parent=19 // pred_check
        %p431 = pneg %p103
      $region26: #{forward.6} parent=19 // pred_check_branch
        %433 = sbr.rel (%p431) target = $region28
      $region27: #{forward.6} parent=19 // pred_region
        %p434 = scmp.lt.s32.totalorder %s27, 1
        %s435 = scalar_select %p434, %s27, 1
        %s436 = scalar_lea.vmem %s2, %s435
      $region28: #{forward.6} parent=19 // pred_fallthru
        _
      // Predicated region
      $region29: #{forward.6} parent=19 // pred_check
        %p437 = pneg %p129
      $region30: #{forward.6} parent=19 // pred_check_branch
        %439 = sbr.rel (%p437) target = $region32
      $region31: #{forward.6} parent=19 // pred_region
        %p440 = scmp.lt.s32.totalorder %s27, 1
        %s441 = scalar_select %p440, %s27, 1
        %s442 = smul.addr %s441, 4
        %s443 = smul.addr %s442, 4
        %s444 = scalar_lea.vmem %s3, %s443
      $region32: #{forward.6} parent=19 // pred_fallthru
        _
      // Predicated region
      $region33: #{forward.6} parent=19 // pred_check
        %p445 = pneg %p155
      $region34: #{forward.6} parent=19 // pred_check_branch
        %447 = sbr.rel (%p445) target = $region36
      $region35: #{forward.6} parent=19 // pred_region
        %p448 = scmp.lt.s32.totalorder %s27, 1
        %s449 = scalar_select %p448, %s27, 1
        %s450 = scalar_lea.vmem %s4, %s449
      $region36: #{forward.6} parent=19 // pred_fallthru
        _
      // Predicated region
      $region37: #{forward.6} parent=19 // pred_check
        %p451 = pneg %p181
      $region38: #{forward.6} parent=19 // pred_check_branch
        %453 = sbr.rel (%p451) target = $region40
      $region39: #{forward.6} parent=19 // pred_region
        %p454 = scmp.lt.s32.totalorder %s27, 1
        %s455 = scalar_select %p454, %s27, 1
        %s456 = scalar_lea.vmem %s5, %s455
      $region40: #{forward.6} parent=19 // pred_fallthru
        _
      // Predicated region
      $region41: #{forward.6} parent=19 // pred_check
        %p457 = pneg %p207
      $region42: #{forward.6} parent=19 // pred_check_branch
        %459 = sbr.rel (%p457) target = $region44
      $region43: #{forward.6} parent=19 // pred_region
        %p460 = scmp.lt.s32.totalorder %s27, 1
        %s461 = scalar_select %p460, %s27, 1
        %s462 = scalar_lea.vmem %s6, %s461
      $region44: #{forward.6} parent=19 // pred_fallthru
        _
      // Predicated region
      $region45: #{forward.6} parent=19 // pred_check
        %p463 = pneg %p233
      $region46: #{forward.6} parent=19 // pred_check_branch
        %465 = sbr.rel (%p463) target = $region48
      $region47: #{forward.6} parent=19 // pred_region
        %p466 = scmp.lt.s32.totalorder %s27, 1
        %s467 = scalar_select %p466, %s27, 1
        %s468 = smul.addr %s467, 4
        %s469 = smul.addr %s468, 4
        %s470 = scalar_lea.vmem %s7, %s469
      $region48: #{forward.6} parent=19 // pred_fallthru
        _
      // Predicated region
      $region49: #{forward.6} parent=19 // pred_check
        %p471 = pneg %p259
      $region50: #{forward.6} parent=19 // pred_check_branch
        %473 = sbr.rel (%p471) target = $region52
      $region51: #{forward.6} parent=19 // pred_region
        %p474 = scmp.lt.s32.totalorder %s27, 1
        %s475 = scalar_select %p474, %s27, 1
        %s476 = scalar_lea.vmem %s8, %s475
      $region52: #{forward.6} parent=19 // pred_fallthru
        _
      // Predicated region
      $region53: #{forward.6} parent=19 // pred_check
        %p477 = pneg %p285
      $region54: #{forward.6} parent=19 // pred_check_branch
        %479 = sbr.rel (%p477) target = $region56
      $region55: #{forward.6} parent=19 // pred_region
        %p480 = scmp.lt.s32.totalorder %s27, 1
        %s481 = scalar_select %p480, %s27, 1
        %s482 = smul.addr %s481, 16
        %s483 = smul.addr %s482, 4
        %s484 = scalar_lea.vmem %s9, %s483
      $region56: #{forward.6} parent=19 // pred_fallthru
        _
      // Predicated region
      $region57: #{forward.6} parent=19 // pred_check
        %p485 = pneg %p311
      $region58: #{forward.6} parent=19 // pred_check_branch
        %487 = sbr.rel (%p485) target = $region60
      $region59: #{forward.6} parent=19 // pred_region
        %p488 = scmp.lt.s32.totalorder %s27, 1
        %s489 = scalar_select %p488, %s27, 1
        %s490 = scalar_lea.vmem %s10, %s489
      $region60: #{forward.6} parent=19 // pred_fallthru
        _
      // Predicated region
      $region61: #{forward.6} parent=19 // pred_check
        %p491 = pneg %p337
      $region62: #{forward.6} parent=19 // pred_check_branch
        %493 = sbr.rel (%p491) target = $region64
      $region63: #{forward.6} parent=19 // pred_region
        %p494 = scmp.lt.s32.totalorder %s27, 1
        %s495 = scalar_select %p494, %s27, 1
        %s496 = scalar_lea.vmem %s11, %s495
      $region64: #{forward.6} parent=19 // pred_fallthru
        _
      // Predicated region
      $region65: #{forward.6} parent=19 // pred_check
        %p497 = pneg %p363
      $region66: #{forward.6} parent=19 // pred_check_branch
        %499 = sbr.rel (%p497) target = $region68
      $region67: #{forward.6} parent=19 // pred_region
        %p500 = scmp.lt.s32.totalorder %s27, 1
        %s501 = scalar_select %p500, %s27, 1
        %s502 = scalar_lea.vmem %s12, %s501
      $region68: #{forward.6} parent=19 // pred_fallthru
        _
    $region20: #{forward.6} parent=5 // pred_fallthru
      _
    %p503 = scmp.le.s32.totalorder 1, %s19
    %p504 = scmp.lt.s32.totalorder %s19, 3
    %p505 = pnand %p503, %p504
    %p506 = pneg %p505
    // Predicated region
    $region69: #{forward.6} parent=5 // pred_check
      _
    $region70: #{forward.6} parent=5 // pred_check_branch
      %508 = sbr.rel (%p505) target = $region72
    $region71: #{forward.6} parent=5 // pred_region
      %s509 = ssub.s32 %s19, 1
      %s510 = smul.u32 2, %s28
      %p511 = scmp.lt.s32.totalorder %s510, 1
      %s512 = scalar_select %p511, %s510, 1
      %s513 = smul.addr %s512, 8
      %s514 = scalar_lea.vmem %s0, %s513
      %p515 = pneg %p57
      %p516 = pneg %p54
      %p517 = scmp.lt.s32.totalorder %s29, 1
      %s518 = scalar_select %p517, %s29, 1
      %s519 = smul.addr %s518, 4
      %s520 = smul.addr %s519, 4
      %s521 = scalar_lea.vmem %s1, %s520
      %p522 = pneg %p83
      %p523 = pneg %p80
      %p524 = scmp.lt.s32.totalorder %s29, 1
      %s525 = scalar_select %p524, %s29, 1
      %s526 = scalar_lea.vmem %s2, %s525
      %p527 = pneg %p109
      %p528 = pneg %p106
      %p529 = scmp.lt.s32.totalorder %s29, 1
      %s530 = scalar_select %p529, %s29, 1
      %s531 = smul.addr %s530, 4
      %s532 = smul.addr %s531, 4
      %s533 = scalar_lea.vmem %s3, %s532
      %p534 = pneg %p135
      %p535 = pneg %p132
      %p536 = scmp.lt.s32.totalorder %s29, 1
      %s537 = scalar_select %p536, %s29, 1
      %s538 = scalar_lea.vmem %s4, %s537
      %p539 = pneg %p161
      %p540 = pneg %p158
      %p541 = scmp.lt.s32.totalorder %s29, 1
      %s542 = scalar_select %p541, %s29, 1
      %s543 = scalar_lea.vmem %s5, %s542
      %p544 = pneg %p187
      %p545 = pneg %p184
      %p546 = scmp.lt.s32.totalorder %s29, 1
      %s547 = scalar_select %p546, %s29, 1
      %s548 = scalar_lea.vmem %s6, %s547
      %p549 = pneg %p213
      %p550 = pneg %p210
      %p551 = scmp.lt.s32.totalorder %s29, 1
      %s552 = scalar_select %p551, %s29, 1
      %s553 = smul.addr %s552, 4
      %s554 = smul.addr %s553, 4
      %s555 = scalar_lea.vmem %s7, %s554
      %p556 = pneg %p239
      %p557 = pneg %p236
      %p558 = scmp.lt.s32.totalorder %s29, 1
      %s559 = scalar_select %p558, %s29, 1
      %s560 = scalar_lea.vmem %s8, %s559
      %p561 = pneg %p265
      %p562 = pneg %p262
      %p563 = scmp.lt.s32.totalorder %s29, 1
      %s564 = scalar_select %p563, %s29, 1
      %s565 = smul.addr %s564, 16
      %s566 = smul.addr %s565, 4
      %s567 = scalar_lea.vmem %s9, %s566
      %p568 = pneg %p291
      %p569 = pneg %p288
      %p570 = scmp.lt.s32.totalorder %s29, 1
      %s571 = scalar_select %p570, %s29, 1
      %s572 = scalar_lea.vmem %s10, %s571
      %p573 = pneg %p317
      %p574 = pneg %p314
      %p575 = scmp.lt.s32.totalorder %s29, 1
      %s576 = scalar_select %p575, %s29, 1
      %s577 = scalar_lea.vmem %s11, %s576
      %p578 = pneg %p343
      %p579 = pneg %p340
      %p580 = scmp.lt.s32.totalorder %s29, 1
      %s581 = scalar_select %p580, %s29, 1
      %s582 = scalar_lea.vmem %s12, %s581
      %p583 = pneg %p369
      %p584 = pneg %p366
      %p585 = pneg %p395
      %p586 = pneg %p392
      %s587 = smul.u32 2, %s28
      %p588 = scmp.lt.s32.totalorder %s587, 1
      %s589 = scalar_select %p588, %s587, 1
      %s590 = smul.addr %s589, 8
      %s591 = scalar_lea.vmem %s13, %s590
      %s592 = smul.u32 2, %s28
      %p593 = scmp.lt.s32.totalorder %s592, 1
      %s594 = scalar_select %p593, %s592, 1
      %s595 = smul.addr %s594, 8
      %s596 = scalar_lea.vmem %s0, %s595
      %s597 = smul.u32 2, %s28
      %p598 = scmp.lt.s32.totalorder %s29, 1
      %s599 = scalar_select %p598, %s29, 1
      %s600 = smul.addr %s599, 4
      %s601 = smul.addr %s600, 4
      %s602 = scalar_lea.vmem %s1, %s601
      %p603 = scmp.lt.s32.totalorder %s29, 1
      %s604 = scalar_select %p603, %s29, 1
      %s605 = scalar_lea.vmem %s2, %s604
      %p606 = scmp.lt.s32.totalorder %s29, 1
      %s607 = scalar_select %p606, %s29, 1
      %s608 = smul.addr %s607, 4
      %s609 = smul.addr %s608, 4
      %s610 = scalar_lea.vmem %s3, %s609
      %p611 = scmp.lt.s32.totalorder %s29, 1
      %s612 = scalar_select %p611, %s29, 1
      %s613 = scalar_lea.vmem %s4, %s612
      %p614 = scmp.lt.s32.totalorder %s29, 1
      %s615 = scalar_select %p614, %s29, 1
      %s616 = scalar_lea.vmem %s5, %s615
      %p617 = scmp.lt.s32.totalorder %s29, 1
      %s618 = scalar_select %p617, %s29, 1
      %s619 = scalar_lea.vmem %s6, %s618
      %p620 = scmp.lt.s32.totalorder %s29, 1
      %s621 = scalar_select %p620, %s29, 1
      %s622 = smul.addr %s621, 4
      %s623 = smul.addr %s622, 4
      %s624 = scalar_lea.vmem %s7, %s623
      %p625 = scmp.lt.s32.totalorder %s29, 1
      %s626 = scalar_select %p625, %s29, 1
      %s627 = scalar_lea.vmem %s8, %s626
      %p628 = scmp.lt.s32.totalorder %s29, 1
      %s629 = scalar_select %p628, %s29, 1
      %s630 = smul.addr %s629, 16
      %s631 = smul.addr %s630, 4
      %s632 = scalar_lea.vmem %s9, %s631
      %p633 = scmp.lt.s32.totalorder %s29, 1
      %s634 = scalar_select %p633, %s29, 1
      %s635 = scalar_lea.vmem %s10, %s634
      %p636 = scmp.lt.s32.totalorder %s29, 1
      %s637 = scalar_select %p636, %s29, 1
      %s638 = scalar_lea.vmem %s11, %s637
      %p639 = scmp.lt.s32.totalorder %s29, 1
      %s640 = scalar_select %p639, %s29, 1
      %s641 = scalar_lea.vmem %s12, %s640
      %s642 = smul.u32 2, %s28
      %p643 = scmp.lt.s32.totalorder %s642, 1
      %s644 = scalar_select %p643, %s642, 1
      %s645 = smul.addr %s644, 8
      %s646 = scalar_lea.vmem %s13, %s645
      %s647 = smul.u32 2, %s28
      %p649 = scmp.eq.s32.totalorder %s29, 0
      // Predicated region
      $region73: #{forward.6} parent=71 // pred_check
        %p650 = pneg %p649
      $region74: #{forward.6} parent=71 // pred_check_branch
        %652 = sbr.rel (%p650) target = $region76
      $region75: #{forward.6} parent=71 // pred_region
        %v653 = vld [vmem:[%s596] sm:$0xff]
        %v654 = vld [vmem:[%s596 + $0x8] sm:$0xff]
        %vm655 = vcmask 261120
        %656 = vst.msk [vmem:[%s646] sm:$0xff] %vm655, %v653
        %657 = vst.msk [vmem:[%s646 + $0x8] sm:$0xff] %vm655, %v654
      $region76: #{forward.6} parent=71 // pred_fallthru
        _
      %v658 = vld [vmem:[%s646] sm:$0xff]
      %v659 = vld [vmem:[%s646 + $0x8] sm:$0xff]
      %v660 = vld [vmem:[%s602] sm:$0xf]
      %v661 = vld [vmem:[%s602 + $0x4] sm:$0xf]
      %v662 = vld [vmem:[%s602 + $0x8] sm:$0xf]
      %v663 = vld [vmem:[%s602 + $0xc] sm:$0xf]
      %v664 = vpack.c.bf16 %v659, %v658
      %v665 = vld [vmem:[%s605] sm:$0x1]
      %v667 = vperm.slane %v665, 0
      %v673 = vunpack.c.l.b16 %v660
      %v674 = vunpack.c.l.b16 %v661
      %v675 = vunpack.c.l.b16 %v662
      %v676 = vunpack.c.l.b16 %v663
      %v677 = vpack.c.b16 %v674, %v673
      %v678 = vpack.c.b16 %v676, %v675
      %vm681 = vcmask 261120
      %v683 = vsel %vm681, %v664, 0
      %685 = vmatpush.bf16.msra.mxu0 0
      %686 = vmatpush.bf16.msra.mxu0 0
      %687 = vmatpush.bf16.msra.mxu0 0
      %688 = vmatpush.bf16.msra.mxu0 0
      %689 = vmatpush.bf16.msra.mxu0 0
      %690 = vmatpush.bf16.msra.mxu0 0
      %691 = vmatpush.bf16.msra.mxu0 %v678
      %692 = vmatpush.bf16.msra.mxu0 %v677
      %693 = vmatmul.bf16.gmra.mxu0 %v683
      %v694 = vpop.f32.mrf.mxu0
      %v695 = vadd.f32 %v667, %v694
      %v696 = vpop.f32.mrf.mxu0
      %v697 = vadd.f32 %v667, %v696
      %698 = vdwg.mxu0
      %v699 = vpack.c.bf16 %v695, %v695
      %v700 = vpack.c.bf16 %v697, %v697
      %v701 = vlaneseq
      %v702 = vand.u32 %v701, 127
      %vm703 = vcmp.ge.s32.totalorder %v702, 0
      %vm704 = vcmp.lt.s32.totalorder %v702, 8
      %vm705 = vmand %vm703, %vm704
      %v706 = vsel %vm705, 1, 0
      %v707 = vcvt.s32.f32 %v706
      %v708 = vpack.c.bf16 %v707, %v707
      %v709 = vunpack.c.l.bf16 %v699
      %v710 = vunpack.c.l.bf16 %v700
      %v711 = vunpack.c.l.bf16 %v708
      %v712 = vmul.f32 %v709, %v711
      %v713 = vmul.f32 %v710, %v711
      %v714 = vpack.c.bf16 %v712, %v712
      %v715 = vpack.c.bf16 %v713, %v713
      %v717 = vunpack.c.l.b16 %v699
      %v718 = vpack.c.b16 %v717, %v717
      %719 = vrot.lane.b32.xlu0 %v718, 96
      %v720 = vpop.permute.xlu0 %719
      %v722 = vsel %vm681, %v714, 0
      %v725 = vsel %vm681, %v720, 0
      %727 = vmatpush.bf16.xpose.msra.mxu0 0
      %728 = vmatpush.bf16.xpose.msra.mxu0 0
      %729 = vmatpush.bf16.xpose.msra.mxu0 0
      %730 = vmatpush.bf16.xpose.msra.mxu0 0
      %731 = vmatpush.bf16.xpose.msra.mxu0 0
      %732 = vmatpush.bf16.xpose.msra.mxu0 0
      %733 = vmatpush.bf16.xpose.msra.mxu0 0
      %734 = vmatpush.bf16.xpose.msra.mxu0 %v725
      %735 = vmatmul.bf16.gmra.mxu0 %v722
      %v736 = vpop.f32.mrf.mxu0
      %v737 = vadd.f32 0.0, %v736
      %v738 = vpop.f32.mrf.mxu0
      %739 = vdwg.mxu0
      %v741 = vunpack.c.l.b16 %v700
      %v742 = vpack.c.b16 %v741, %v741
      %743 = vrot.lane.b32.xlu0 %v742, 96
      %v744 = vpop.permute.xlu0 %743
      %v746 = vsel %vm681, %v715, 0
      %v749 = vsel %vm681, %v744, 0
      %751 = vmatpush.bf16.xpose.msra.mxu0 0
      %752 = vmatpush.bf16.xpose.msra.mxu0 0
      %753 = vmatpush.bf16.xpose.msra.mxu0 0
      %754 = vmatpush.bf16.xpose.msra.mxu0 0
      %755 = vmatpush.bf16.xpose.msra.mxu0 0
      %756 = vmatpush.bf16.xpose.msra.mxu0 0
      %757 = vmatpush.bf16.xpose.msra.mxu0 0
      %758 = vmatpush.bf16.xpose.msra.mxu0 %v749
      %759 = vmatmul.bf16.gmra.mxu0 %v746
      %v760 = vpop.f32.mrf.mxu0
      %v761 = vadd.f32 0.0, %v760
      %v762 = vpop.f32.mrf.mxu0
      %763 = vdwg.mxu0
      %v764 = vmul.f32 %v737, 0.35355338
      %v765 = vmul.f32 %v761, 0.35355338
      %vm766 = vcmask 64512
      %v767 = vsel %vm766, %v764, -inf
      %768 = vmax.xlane.f32.xlu0 %v767
      %v769 = vpop.xlane.xlu0 %768
      %v770 = vsel %vm766, %v765, -inf
      %771 = vmax.xlane.f32.xlu0 %v770
      %v772 = vpop.xlane.xlu0 %771
      %v773 = vsub.f32 %v764, %v769
      %v774 = vsub.f32 %v765, %v772
      %v775 = vmul.f32 %v773, 1.442695
      %v776 = vpow.pop %v775
      %v777 = vmul.f32 %v774, 1.442695
      %v778 = vpow.pop %v777
      %v779 = vsel %vm766, %v776, 0.0
      %780 = vadd.xlane.f32.xlu0 %v779
      %v781 = vpop.xlane.xlu0 %780
      %v782 = vsel %vm766, %v778, 0.0
      %783 = vadd.xlane.f32.xlu0 %v782
      %v784 = vpop.xlane.xlu0 %783
      %v785 = vrcp.pop %v781
      %v786 = vrcp.pop %v784
      %v787 = vmul.f32 %v776, %v785
      %v788 = vmul.f32 %v778, %v786
      %v789 = vpack.c.bf16 %v787, %v787
      %v790 = vpack.c.bf16 %v788, %v788
      %792 = vrot.lane.b32.xlu0 %v711, 64
      %v793 = vpop.permute.xlu0 %792
      %v795 = vmul.f32 %v709, %v793
      %v796 = vmul.f32 %v710, %v793
      %v797 = vpack.c.bf16 %v795, %v795
      %v798 = vpack.c.bf16 %v796, %v796
      %vm799 = vcmp.ge.s32.totalorder %v702, 8
      %vm800 = vcmp.lt.s32.totalorder %v702, 16
      %vm801 = vmand %vm799, %vm800
      %v802 = vsel %vm801, 1, 0
      %v803 = vcvt.s32.f32 %v802
      %v804 = vpack.c.bf16 %v803, %v803
      %v805 = vunpack.c.l.bf16 %v804
      %v806 = vmul.f32 %v709, %v805
      %v807 = vmul.f32 %v710, %v805
      %v808 = vpack.c.bf16 %v806, %v806
      %v809 = vpack.c.bf16 %v807, %v807
      %v811 = vsel %vm681, %v808, 0
      %813 = vmatpush.bf16.xpose.msra.mxu0 0
      %814 = vmatpush.bf16.xpose.msra.mxu0 0
      %815 = vmatpush.bf16.xpose.msra.mxu0 0
      %816 = vmatpush.bf16.xpose.msra.mxu0 0
      %817 = vmatpush.bf16.xpose.msra.mxu0 0
      %818 = vmatpush.bf16.xpose.msra.mxu0 0
      %819 = vmatpush.bf16.xpose.msra.mxu0 0
      %820 = vmatpush.bf16.xpose.msra.mxu0 %v725
      %821 = vmatmul.bf16.gmra.mxu0 %v811
      %v822 = vpop.f32.mrf.mxu0
      %v823 = vadd.f32 0.0, %v822
      %v824 = vpop.f32.mrf.mxu0
      %825 = vdwg.mxu0
      %v827 = vsel %vm681, %v809, 0
      %829 = vmatpush.bf16.xpose.msra.mxu0 0
      %830 = vmatpush.bf16.xpose.msra.mxu0 0
      %831 = vmatpush.bf16.xpose.msra.mxu0 0
      %832 = vmatpush.bf16.xpose.msra.mxu0 0
      %833 = vmatpush.bf16.xpose.msra.mxu0 0
      %834 = vmatpush.bf16.xpose.msra.mxu0 0
      %835 = vmatpush.bf16.xpose.msra.mxu0 0
      %836 = vmatpush.bf16.xpose.msra.mxu0 %v749
      %837 = vmatmul.bf16.gmra.mxu0 %v827
      %v838 = vpop.f32.mrf.mxu0
      %v839 = vadd.f32 0.0, %v838
      %v840 = vpop.f32.mrf.mxu0
      %841 = vdwg.mxu0
      %v842 = vmul.f32 %v823, 0.35355338
      %v843 = vmul.f32 %v839, 0.35355338
      %v844 = vsel %vm766, %v842, -inf
      %845 = vmax.xlane.f32.xlu0 %v844
      %v846 = vpop.xlane.xlu0 %845
      %v847 = vsel %vm766, %v843, -inf
      %848 = vmax.xlane.f32.xlu0 %v847
      %v849 = vpop.xlane.xlu0 %848
      %v850 = vsub.f32 %v842, %v846
      %v851 = vsub.f32 %v843, %v849
      %v852 = vmul.f32 %v850, 1.442695
      %v853 = vpow.pop %v852
      %v854 = vmul.f32 %v851, 1.442695
      %v855 = vpow.pop %v854
      %v856 = vsel %vm766, %v853, 0.0
      %857 = vadd.xlane.f32.xlu0 %v856
      %v858 = vpop.xlane.xlu0 %857
      %v859 = vsel %vm766, %v855, 0.0
      %860 = vadd.xlane.f32.xlu0 %v859
      %v861 = vpop.xlane.xlu0 %860
      %v862 = vrcp.pop %v858
      %v863 = vrcp.pop %v861
      %v864 = vmul.f32 %v853, %v862
      %v865 = vmul.f32 %v855, %v863
      %v866 = vpack.c.bf16 %v864, %v864
      %v867 = vpack.c.bf16 %v865, %v865
      %869 = vrot.lane.b32.xlu0 %v805, 64
      %v870 = vpop.permute.xlu0 %869
      %v872 = vmul.f32 %v709, %v870
      %v873 = vmul.f32 %v710, %v870
      %v874 = vpack.c.bf16 %v872, %v872
      %v875 = vpack.c.bf16 %v873, %v873
      %v877 = vunpack.c.l.b16 %v874
      %v878 = vpack.c.b16 %v877, %v877
      %879 = vrot.lane.b32.xlu0 %v878, 64
      %v880 = vpop.permute.xlu0 %879
      %v882 = vsel %vm766, %v866, 0
      %vm884 = vcmask 1043456
      %v886 = vsel %vm884, %v880, 0
      %888 = vmatpush.bf16.msra.mxu0 0
      %889 = vmatpush.bf16.msra.mxu0 0
      %890 = vmatpush.bf16.msra.mxu0 0
      %891 = vmatpush.bf16.msra.mxu0 0
      %892 = vmatpush.bf16.msra.mxu0 0
      %893 = vmatpush.bf16.msra.mxu0 0
      %894 = vmatpush.bf16.msra.mxu0 0
      %895 = vmatpush.bf16.msra.mxu0 %v886
      %896 = vmatmul.bf16.gmra.mxu0 %v882
      %v897 = vpop.f32.mrf.mxu0
      %v898 = vadd.f32 0.0, %v897
      %v899 = vpop.f32.mrf.mxu0
      %900 = vdwg.mxu0
      %v902 = vunpack.c.l.b16 %v875
      %v903 = vpack.c.b16 %v902, %v902
      %904 = vrot.lane.b32.xlu0 %v903, 64
      %v905 = vpop.permute.xlu0 %904
      %v907 = vsel %vm766, %v867, 0
      %v910 = vsel %vm884, %v905, 0
      %912 = vmatpush.bf16.msra.mxu0 0
      %913 = vmatpush.bf16.msra.mxu0 0
      %914 = vmatpush.bf16.msra.mxu0 0
      %915 = vmatpush.bf16.msra.mxu0 0
      %916 = vmatpush.bf16.msra.mxu0 0
      %917 = vmatpush.bf16.msra.mxu0 0
      %918 = vmatpush.bf16.msra.mxu0 0
      %919 = vmatpush.bf16.msra.mxu0 %v910
      %920 = vmatmul.bf16.gmra.mxu0 %v907
      %v921 = vpop.f32.mrf.mxu0
      %v922 = vadd.f32 0.0, %v921
      %v923 = vpop.f32.mrf.mxu0
      %924 = vdwg.mxu0
      %v926 = vunpack.c.l.b16 %v797
      %v927 = vpack.c.b16 %v926, %v926
      %928 = vrot.lane.b32.xlu0 %v927, 64
      %v929 = vpop.permute.xlu0 %928
      %v931 = vsel %vm766, %v789, 0
      %v934 = vsel %vm884, %v929, 0
      %936 = vmatpush.bf16.msra.mxu0 0
      %937 = vmatpush.bf16.msra.mxu0 0
      %938 = vmatpush.bf16.msra.mxu0 0
      %939 = vmatpush.bf16.msra.mxu0 0
      %940 = vmatpush.bf16.msra.mxu0 0
      %941 = vmatpush.bf16.msra.mxu0 0
      %942 = vmatpush.bf16.msra.mxu0 0
      %943 = vmatpush.bf16.msra.mxu0 %v934
      %944 = vmatmul.bf16.gmra.mxu0 %v931
      %v945 = vpop.f32.mrf.mxu0
      %v946 = vadd.f32 %v898, %v945
      %v947 = vpop.f32.mrf.mxu0
      %948 = vdwg.mxu0
      %v950 = vunpack.c.l.b16 %v798
      %v951 = vpack.c.b16 %v950, %v950
      %952 = vrot.lane.b32.xlu0 %v951, 64
      %v953 = vpop.permute.xlu0 %952
      %v955 = vsel %vm766, %v790, 0
      %v958 = vsel %vm884, %v953, 0
      %960 = vmatpush.bf16.msra.mxu0 0
      %961 = vmatpush.bf16.msra.mxu0 0
      %962 = vmatpush.bf16.msra.mxu0 0
      %963 = vmatpush.bf16.msra.mxu0 0
      %964 = vmatpush.bf16.msra.mxu0 0
      %965 = vmatpush.bf16.msra.mxu0 0
      %966 = vmatpush.bf16.msra.mxu0 0
      %967 = vmatpush.bf16.msra.mxu0 %v958
      %968 = vmatmul.bf16.gmra.mxu0 %v955
      %v969 = vpop.f32.mrf.mxu0
      %v970 = vadd.f32 %v922, %v969
      %v971 = vpop.f32.mrf.mxu0
      %972 = vdwg.mxu0
      %vm973 = vcmp.ge.s32.totalorder %v702, 16
      %vm974 = vcmp.lt.s32.totalorder %v702, 24
      %vm975 = vmand %vm973, %vm974
      %v976 = vsel %vm975, 1, 0
      %v977 = vcvt.s32.f32 %v976
      %v978 = vpack.c.bf16 %v977, %v977
      %v979 = vunpack.c.l.bf16 %v978
      %v980 = vmul.f32 %v709, %v979
      %v981 = vmul.f32 %v710, %v979
      %v982 = vpack.c.bf16 %v980, %v980
      %v983 = vpack.c.bf16 %v981, %v981
      %v985 = vsel %vm681, %v982, 0
      %987 = vmatpush.bf16.xpose.msra.mxu0 0
      %988 = vmatpush.bf16.xpose.msra.mxu0 0
      %989 = vmatpush.bf16.xpose.msra.mxu0 0
      %990 = vmatpush.bf16.xpose.msra.mxu0 0
      %991 = vmatpush.bf16.xpose.msra.mxu0 0
      %992 = vmatpush.bf16.xpose.msra.mxu0 0
      %993 = vmatpush.bf16.xpose.msra.mxu0 0
      %994 = vmatpush.bf16.xpose.msra.mxu0 %v725
      %995 = vmatmul.bf16.gmra.mxu0 %v985
      %v996 = vpop.f32.mrf.mxu0
      %v997 = vadd.f32 0.0, %v996
      %v998 = vpop.f32.mrf.mxu0
      %999 = vdwg.mxu0
      %v1001 = vsel %vm681, %v983, 0
      %1003 = vmatpush.bf16.xpose.msra.mxu0 0
      %1004 = vmatpush.bf16.xpose.msra.mxu0 0
      %1005 = vmatpush.bf16.xpose.msra.mxu0 0
      %1006 = vmatpush.bf16.xpose.msra.mxu0 0
      %1007 = vmatpush.bf16.xpose.msra.mxu0 0
      %1008 = vmatpush.bf16.xpose.msra.mxu0 0
      %1009 = vmatpush.bf16.xpose.msra.mxu0 0
      %1010 = vmatpush.bf16.xpose.msra.mxu0 %v749
      %1011 = vmatmul.bf16.gmra.mxu0 %v1001
      %v1012 = vpop.f32.mrf.mxu0
      %v1013 = vadd.f32 0.0, %v1012
      %v1014 = vpop.f32.mrf.mxu0
      %1015 = vdwg.mxu0
      %v1016 = vmul.f32 %v997, 0.35355338
      %v1017 = vmul.f32 %v1013, 0.35355338
      %v1018 = vsel %vm766, %v1016, -inf
      %1019 = vmax.xlane.f32.xlu0 %v1018
      %v1020 = vpop.xlane.xlu0 %1019
      %v1021 = vsel %vm766, %v1017, -inf
      %1022 = vmax.xlane.f32.xlu0 %v1021
      %v1023 = vpop.xlane.xlu0 %1022
      %v1024 = vsub.f32 %v1016, %v1020
      %v1025 = vsub.f32 %v1017, %v1023
      %v1026 = vmul.f32 %v1024, 1.442695
      %v1027 = vpow.pop %v1026
      %v1028 = vmul.f32 %v1025, 1.442695
      %v1029 = vpow.pop %v1028
      %v1030 = vsel %vm766, %v1027, 0.0
      %1031 = vadd.xlane.f32.xlu0 %v1030
      %v1032 = vpop.xlane.xlu0 %1031
      %v1033 = vsel %vm766, %v1029, 0.0
      %1034 = vadd.xlane.f32.xlu0 %v1033
      %v1035 = vpop.xlane.xlu0 %1034
      %v1036 = vrcp.pop %v1032
      %v1037 = vrcp.pop %v1035
      %v1038 = vmul.f32 %v1027, %v1036
      %v1039 = vmul.f32 %v1029, %v1037
      %v1040 = vpack.c.bf16 %v1038, %v1038
      %v1041 = vpack.c.bf16 %v1039, %v1039
      %1043 = vrot.lane.b32.xlu0 %v979, 64
      %v1044 = vpop.permute.xlu0 %1043
      %v1046 = vmul.f32 %v709, %v1044
      %v1047 = vmul.f32 %v710, %v1044
      %v1048 = vpack.c.bf16 %v1046, %v1046
      %v1049 = vpack.c.bf16 %v1047, %v1047
      %v1051 = vunpack.c.l.b16 %v1048
      %v1052 = vpack.c.b16 %v1051, %v1051
      %1053 = vrot.lane.b32.xlu0 %v1052, 64
      %v1054 = vpop.permute.xlu0 %1053
      %v1056 = vsel %vm766, %v1040, 0
      %v1059 = vsel %vm884, %v1054, 0
      %1061 = vmatpush.bf16.msra.mxu0 0
      %1062 = vmatpush.bf16.msra.mxu0 0
      %1063 = vmatpush.bf16.msra.mxu0 0
      %1064 = vmatpush.bf16.msra.mxu0 0
      %1065 = vmatpush.bf16.msra.mxu0 0
      %1066 = vmatpush.bf16.msra.mxu0 0
      %1067 = vmatpush.bf16.msra.mxu0 0
      %1068 = vmatpush.bf16.msra.mxu0 %v1059
      %1069 = vmatmul.bf16.gmra.mxu0 %v1056
      %v1070 = vpop.f32.mrf.mxu0
      %v1071 = vadd.f32 0.0, %v1070
      %v1072 = vpop.f32.mrf.mxu0
      %1073 = vdwg.mxu0
      %v1075 = vunpack.c.l.b16 %v1049
      %v1076 = vpack.c.b16 %v1075, %v1075
      %1077 = vrot.lane.b32.xlu0 %v1076, 64
      %v1078 = vpop.permute.xlu0 %1077
      %v1080 = vsel %vm766, %v1041, 0
      %v1083 = vsel %vm884, %v1078, 0
      %1085 = vmatpush.bf16.msra.mxu0 0
      %1086 = vmatpush.bf16.msra.mxu0 0
      %1087 = vmatpush.bf16.msra.mxu0 0
      %1088 = vmatpush.bf16.msra.mxu0 0
      %1089 = vmatpush.bf16.msra.mxu0 0
      %1090 = vmatpush.bf16.msra.mxu0 0
      %1091 = vmatpush.bf16.msra.mxu0 0
      %1092 = vmatpush.bf16.msra.mxu0 %v1083
      %1093 = vmatmul.bf16.gmra.mxu0 %v1080
      %v1094 = vpop.f32.mrf.mxu0
      %v1095 = vadd.f32 0.0, %v1094
      %v1096 = vpop.f32.mrf.mxu0
      %1097 = vdwg.mxu0
      %v1098 = vadd.f32 %v946, %v1071
      %v1099 = vadd.f32 %v970, %v1095
      %vm1100 = vcmp.ge.s32.totalorder %v702, 24
      %vm1101 = vcmp.lt.s32.totalorder %v702, 32
      %vm1102 = vmand %vm1100, %vm1101
      %v1103 = vsel %vm1102, 1, 0
      %v1104 = vcvt.s32.f32 %v1103
      %v1105 = vpack.c.bf16 %v1104, %v1104
      %v1106 = vunpack.c.l.bf16 %v1105
      %v1107 = vmul.f32 %v709, %v1106
      %v1108 = vmul.f32 %v710, %v1106
      %v1109 = vpack.c.bf16 %v1107, %v1107
      %v1110 = vpack.c.bf16 %v1108, %v1108
      %v1112 = vsel %vm681, %v1109, 0
      %1114 = vmatpush.bf16.xpose.msra.mxu0 0
      %1115 = vmatpush.bf16.xpose.msra.mxu0 0
      %1116 = vmatpush.bf16.xpose.msra.mxu0 0
      %1117 = vmatpush.bf16.xpose.msra.mxu0 0
      %1118 = vmatpush.bf16.xpose.msra.mxu0 0
      %1119 = vmatpush.bf16.xpose.msra.mxu0 0
      %1120 = vmatpush.bf16.xpose.msra.mxu0 0
      %1121 = vmatpush.bf16.xpose.msra.mxu0 %v725
      %1122 = vmatmul.bf16.gmra.mxu0 %v1112
      %v1123 = vpop.f32.mrf.mxu0
      %v1124 = vadd.f32 0.0, %v1123
      %v1125 = vpop.f32.mrf.mxu0
      %1126 = vdwg.mxu0
      %v1128 = vsel %vm681, %v1110, 0
      %1130 = vmatpush.bf16.xpose.msra.mxu0 0
      %1131 = vmatpush.bf16.xpose.msra.mxu0 0
      %1132 = vmatpush.bf16.xpose.msra.mxu0 0
      %1133 = vmatpush.bf16.xpose.msra.mxu0 0
      %1134 = vmatpush.bf16.xpose.msra.mxu0 0
      %1135 = vmatpush.bf16.xpose.msra.mxu0 0
      %1136 = vmatpush.bf16.xpose.msra.mxu0 0
      %1137 = vmatpush.bf16.xpose.msra.mxu0 %v749
      %1138 = vmatmul.bf16.gmra.mxu0 %v1128
      %v1139 = vpop.f32.mrf.mxu0
      %v1140 = vadd.f32 0.0, %v1139
      %v1141 = vpop.f32.mrf.mxu0
      %1142 = vdwg.mxu0
      %v1143 = vmul.f32 %v1124, 0.35355338
      %v1144 = vmul.f32 %v1140, 0.35355338
      %v1145 = vsel %vm766, %v1143, -inf
      %1146 = vmax.xlane.f32.xlu0 %v1145
      %v1147 = vpop.xlane.xlu0 %1146
      %v1148 = vsel %vm766, %v1144, -inf
      %1149 = vmax.xlane.f32.xlu0 %v1148
      %v1150 = vpop.xlane.xlu0 %1149
      %v1151 = vsub.f32 %v1143, %v1147
      %v1152 = vsub.f32 %v1144, %v1150
      %v1153 = vmul.f32 %v1151, 1.442695
      %v1154 = vpow.pop %v1153
      %v1155 = vmul.f32 %v1152, 1.442695
      %v1156 = vpow.pop %v1155
      %v1157 = vsel %vm766, %v1154, 0.0
      %1158 = vadd.xlane.f32.xlu0 %v1157
      %v1159 = vpop.xlane.xlu0 %1158
      %v1160 = vsel %vm766, %v1156, 0.0
      %1161 = vadd.xlane.f32.xlu0 %v1160
      %v1162 = vpop.xlane.xlu0 %1161
      %v1163 = vrcp.pop %v1159
      %v1164 = vrcp.pop %v1162
      %v1165 = vmul.f32 %v1154, %v1163
      %v1166 = vmul.f32 %v1156, %v1164
      %v1167 = vpack.c.bf16 %v1165, %v1165
      %v1168 = vpack.c.bf16 %v1166, %v1166
      %1170 = vrot.lane.b32.xlu0 %v1106, 64
      %v1171 = vpop.permute.xlu0 %1170
      %v1173 = vmul.f32 %v709, %v1171
      %v1174 = vmul.f32 %v710, %v1171
      %v1175 = vpack.c.bf16 %v1173, %v1173
      %v1176 = vpack.c.bf16 %v1174, %v1174
      %v1178 = vunpack.c.l.b16 %v1175
      %v1179 = vpack.c.b16 %v1178, %v1178
      %1180 = vrot.lane.b32.xlu0 %v1179, 64
      %v1181 = vpop.permute.xlu0 %1180
      %v1183 = vsel %vm766, %v1167, 0
      %v1186 = vsel %vm884, %v1181, 0
      %1188 = vmatpush.bf16.msra.mxu0 0
      %1189 = vmatpush.bf16.msra.mxu0 0
      %1190 = vmatpush.bf16.msra.mxu0 0
      %1191 = vmatpush.bf16.msra.mxu0 0
      %1192 = vmatpush.bf16.msra.mxu0 0
      %1193 = vmatpush.bf16.msra.mxu0 0
      %1194 = vmatpush.bf16.msra.mxu0 0
      %1195 = vmatpush.bf16.msra.mxu0 %v1186
      %1196 = vmatmul.bf16.gmra.mxu0 %v1183
      %v1197 = vpop.f32.mrf.mxu0
      %v1198 = vadd.f32 0.0, %v1197
      %v1199 = vpop.f32.mrf.mxu0
      %1200 = vdwg.mxu0
      %v1202 = vunpack.c.l.b16 %v1176
      %v1203 = vpack.c.b16 %v1202, %v1202
      %1204 = vrot.lane.b32.xlu0 %v1203, 64
      %v1205 = vpop.permute.xlu0 %1204
      %v1207 = vsel %vm766, %v1168, 0
      %v1210 = vsel %vm884, %v1205, 0
      %1212 = vmatpush.bf16.msra.mxu0 0
      %1213 = vmatpush.bf16.msra.mxu0 0
      %1214 = vmatpush.bf16.msra.mxu0 0
      %1215 = vmatpush.bf16.msra.mxu0 0
      %1216 = vmatpush.bf16.msra.mxu0 0
      %1217 = vmatpush.bf16.msra.mxu0 0
      %1218 = vmatpush.bf16.msra.mxu0 0
      %1219 = vmatpush.bf16.msra.mxu0 %v1210
      %1220 = vmatmul.bf16.gmra.mxu0 %v1207
      %v1221 = vpop.f32.mrf.mxu0
      %v1222 = vadd.f32 0.0, %v1221
      %v1223 = vpop.f32.mrf.mxu0
      %1224 = vdwg.mxu0
      %v1225 = vadd.f32 %v1098, %v1198
      %v1226 = vadd.f32 %v1099, %v1222
      %v1227 = vld [vmem:[%s610] sm:$0xf]
      %v1228 = vld [vmem:[%s610 + $0x4] sm:$0xf]
      %v1229 = vld [vmem:[%s610 + $0x8] sm:$0xf]
      %v1230 = vld [vmem:[%s610 + $0xc] sm:$0xf]
      %v1231 = vpack.c.bf16 %v1226, %v1225
      %v1232 = vld [vmem:[%s613] sm:$0x1]
      %v1234 = vperm.slane %v1232, 0
      %v1240 = vunpack.c.l.b16 %v1227
      %v1241 = vunpack.c.l.b16 %v1228
      %v1242 = vunpack.c.l.b16 %v1229
      %v1243 = vunpack.c.l.b16 %v1230
      %v1244 = vpack.c.b16 %v1241, %v1240
      %v1245 = vpack.c.b16 %v1243, %v1242
      %v1249 = vsel %vm681, %v1231, 0
      %1251 = vmatpush.bf16.msra.mxu0 0
      %1252 = vmatpush.bf16.msra.mxu0 0
      %1253 = vmatpush.bf16.msra.mxu0 0
      %1254 = vmatpush.bf16.msra.mxu0 0
      %1255 = vmatpush.bf16.msra.mxu0 0
      %1256 = vmatpush.bf16.msra.mxu0 0
      %1257 = vmatpush.bf16.msra.mxu0 %v1245
      %1258 = vmatpush.bf16.msra.mxu0 %v1244
      %1259 = vmatmul.bf16.gmra.mxu0 %v1249
      %v1260 = vpop.f32.mrf.mxu0
      %v1261 = vadd.f32 %v1234, %v1260
      %v1262 = vpop.f32.mrf.mxu0
      %v1263 = vadd.f32 %v1234, %v1262
      %1264 = vdwg.mxu0
      %v1265 = vadd.f32 %v658, %v1261
      %v1266 = vadd.f32 %v659, %v1263
      %v1267 = vld [vmem:[%s616] sm:$0x1]
      %v1268 = vld [vmem:[%s619] sm:$0x1]
      %v1269 = vsel %vm681, %v1265, 0.0
      %1270 = vadd.xlane.f32.xlu0 %v1269
      %v1271 = vpop.xlane.xlu0 %1270
      %v1272 = vsel %vm681, %v1266, 0.0
      %1273 = vadd.xlane.f32.xlu0 %v1272
      %v1274 = vpop.xlane.xlu0 %1273
      %v1275 = vrcp.pop 32.0
      %v1276 = vmul.f32 32.0, %v1275
      %v1277 = vsub.f32 1.0, %v1276
      %v1278 = vmul.f32 %v1275, %v1277
      %v1279 = vadd.f32 %v1275, %v1278
      %vm1280 = vweird.f32 %v1275
      %v1281 = vsel %vm1280, %v1275, %v1279
      %v1282 = vmul.f32 %v1271, %v1281
      %v1283 = vmul.f32 %v1274, %v1281
      %v1284 = vsub.f32 %v1265, %v1282
      %v1285 = vsub.f32 %v1266, %v1283
      %v1286 = vmul.f32 %v1284, %v1284
      %v1287 = vmul.f32 %v1285, %v1285
      %v1288 = vsel %vm681, %v1286, 0.0
      %1289 = vadd.xlane.f32.xlu0 %v1288
      %v1290 = vpop.xlane.xlu0 %1289
      %v1291 = vsel %vm681, %v1287, 0.0
      %1292 = vadd.xlane.f32.xlu0 %v1291
      %v1293 = vpop.xlane.xlu0 %1292
      %v1294 = vmul.f32 %v1290, %v1281
      %v1295 = vmul.f32 %v1293, %v1281
      %v1296 = vadd.f32 %v1294, 1e-05
      %v1297 = vadd.f32 %v1295, 1e-05
      %v1298 = vrsqrt.pop %v1296
      %v1299 = vmul.f32 %v1298, %v1296
      %v1300 = vmul.f32 %v1299, %v1298
      %v1301 = vmul.f32 0.5, %v1300
      %v1302 = vsub.f32 1.5, %v1301
      %v1303 = vmul.f32 %v1298, %v1302
      %vm1304 = vweird.f32 %v1296
      %vm1305 = vweird.f32 %v1298
      %vm1306 = vmor %vm1304, %vm1305
      %v1307 = vsel %vm1306, %v1298, %v1303
      %v1308 = vrsqrt.pop %v1297
      %v1309 = vmul.f32 %v1308, %v1297
      %v1310 = vmul.f32 %v1309, %v1308
      %v1311 = vmul.f32 0.5, %v1310
      %v1312 = vsub.f32 1.5, %v1311
      %v1313 = vmul.f32 %v1308, %v1312
      %vm1314 = vweird.f32 %v1297
      %vm1315 = vweird.f32 %v1308
      %vm1316 = vmor %vm1314, %vm1315
      %v1317 = vsel %vm1316, %v1308, %v1313
      %v1318 = vmul.f32 %v1284, %v1307
      %v1319 = vmul.f32 %v1285, %v1317
      %v1321 = vperm.slane %v1267, 0
      %v1323 = vmul.f32 %v1318, %v1321
      %v1324 = vmul.f32 %v1319, %v1321
      %v1326 = vperm.slane %v1268, 0
      %v1328 = vadd.f32 %v1323, %v1326
      %v1329 = vadd.f32 %v1324, %v1326
      %v1330 = vld [vmem:[%s624] sm:$0xf]
      %v1331 = vld [vmem:[%s624 + $0x4] sm:$0xf]
      %v1332 = vld [vmem:[%s624 + $0x8] sm:$0xf]
      %v1333 = vld [vmem:[%s624 + $0xc] sm:$0xf]
      %v1334 = vpack.c.bf16 %v1329, %v1328
      %v1335 = vld [vmem:[%s627] sm:$0x1]
      %v1337 = vperm.slane %v1335, 0
      %v1343 = vunpack.c.l.b16 %v1330
      %v1344 = vunpack.c.l.b16 %v1331
      %v1345 = vunpack.c.l.b16 %v1332
      %v1346 = vunpack.c.l.b16 %v1333
      %v1347 = vpack.c.b16 %v1344, %v1343
      %v1348 = vpack.c.b16 %v1346, %v1345
      %v1352 = vsel %vm681, %v1334, 0
      %1354 = vmatpush.bf16.msra.mxu0 0
      %1355 = vmatpush.bf16.msra.mxu0 0
      %1356 = vmatpush.bf16.msra.mxu0 0
      %1357 = vmatpush.bf16.msra.mxu0 0
      %1358 = vmatpush.bf16.msra.mxu0 0
      %1359 = vmatpush.bf16.msra.mxu0 0
      %1360 = vmatpush.bf16.msra.mxu0 %v1348
      %1361 = vmatpush.bf16.msra.mxu0 %v1347
      %1362 = vmatmul.bf16.gmra.mxu0 %v1352
      %v1363 = vpop.f32.mrf.mxu0
      %v1364 = vadd.f32 %v1337, %v1363
      %v1365 = vpop.f32.mrf.mxu0
      %v1366 = vadd.f32 %v1337, %v1365
      %1367 = vdwg.mxu0
      %v1368 = vmax.f32 %v1364, 0.0
      %v1369 = vmax.f32 %v1366, 0.0
      %v1370 = vld [vmem:[%s632] sm:$0xf]
      %v1371 = vld [vmem:[%s632 + $0x4] sm:$0xf]
      %v1372 = vld [vmem:[%s632 + $0x8] sm:$0xf]
      %v1373 = vld [vmem:[%s632 + $0xc] sm:$0xf]
      %v1374 = vld [vmem:[%s632 + $0x10] sm:$0xf]
      %v1375 = vld [vmem:[%s632 + $0x14] sm:$0xf]
      %v1376 = vld [vmem:[%s632 + $0x18] sm:$0xf]
      %v1377 = vld [vmem:[%s632 + $0x1c] sm:$0xf]
      %v1378 = vld [vmem:[%s632 + $0x20] sm:$0xf]
      %v1379 = vld [vmem:[%s632 + $0x24] sm:$0xf]
      %v1380 = vld [vmem:[%s632 + $0x28] sm:$0xf]
      %v1381 = vld [vmem:[%s632 + $0x2c] sm:$0xf]
      %v1382 = vld [vmem:[%s632 + $0x30] sm:$0xf]
      %v1383 = vld [vmem:[%s632 + $0x34] sm:$0xf]
      %v1384 = vld [vmem:[%s632 + $0x38] sm:$0xf]
      %v1385 = vld [vmem:[%s632 + $0x3c] sm:$0xf]
      %v1386 = vpack.c.bf16 %v1369, %v1368
      %v1387 = vld [vmem:[%s635] sm:$0x1]
      %v1389 = vperm.slane %v1387, 0
      %v1407 = vunpack.c.l.b16 %v1370
      %v1408 = vunpack.c.l.b16 %v1371
      %v1409 = vunpack.c.l.b16 %v1372
      %v1410 = vunpack.c.l.b16 %v1373
      %v1411 = vunpack.c.l.b16 %v1374
      %v1412 = vunpack.c.l.b16 %v1375
      %v1413 = vunpack.c.l.b16 %v1376
      %v1414 = vunpack.c.l.b16 %v1377
      %v1415 = vunpack.c.l.b16 %v1378
      %v1416 = vunpack.c.l.b16 %v1379
      %v1417 = vunpack.c.l.b16 %v1380
      %v1418 = vunpack.c.l.b16 %v1381
      %v1419 = vunpack.c.l.b16 %v1382
      %v1420 = vunpack.c.l.b16 %v1383
      %v1421 = vunpack.c.l.b16 %v1384
      %v1422 = vunpack.c.l.b16 %v1385
      %v1423 = vpack.c.b16 %v1408, %v1407
      %v1424 = vpack.c.b16 %v1410, %v1409
      %v1425 = vpack.c.b16 %v1412, %v1411
      %v1426 = vpack.c.b16 %v1414, %v1413
      %v1427 = vpack.c.b16 %v1416, %v1415
      %v1428 = vpack.c.b16 %v1418, %v1417
      %v1429 = vpack.c.b16 %v1420, %v1419
      %v1430 = vpack.c.b16 %v1422, %v1421
      %1439 = vmatpush.bf16.msra.mxu0 %v1430
      %1440 = vmatpush.bf16.msra.mxu0 %v1429
      %1441 = vmatpush.bf16.msra.mxu0 %v1428
      %1442 = vmatpush.bf16.msra.mxu0 %v1427
      %1443 = vmatpush.bf16.msra.mxu0 %v1426
      %1444 = vmatpush.bf16.msra.mxu0 %v1425
      %1445 = vmatpush.bf16.msra.mxu0 %v1424
      %1446 = vmatpush.bf16.msra.mxu0 %v1423
      %1447 = vmatmul.bf16.gmra.mxu0 %v1386
      %v1448 = vpop.f32.mrf.mxu0
      %v1449 = vadd.f32 %v1389, %v1448
      %v1450 = vpop.f32.mrf.mxu0
      %v1451 = vadd.f32 %v1389, %v1450
      %1452 = vdwg.mxu0
      %v1453 = vadd.f32 %v1328, %v1449
      %v1454 = vadd.f32 %v1329, %v1451
      %v1455 = vld [vmem:[%s638] sm:$0x1]
      %v1456 = vld [vmem:[%s641] sm:$0x1]
      %v1457 = vsel %vm681, %v1453, 0.0
      %1458 = vadd.xlane.f32.xlu0 %v1457
      %v1459 = vpop.xlane.xlu0 %1458
      %v1460 = vsel %vm681, %v1454, 0.0
      %1461 = vadd.xlane.f32.xlu0 %v1460
      %v1462 = vpop.xlane.xlu0 %1461
      %v1463 = vmul.f32 %v1459, %v1281
      %v1464 = vmul.f32 %v1462, %v1281
      %v1465 = vsub.f32 %v1453, %v1463
      %v1466 = vsub.f32 %v1454, %v1464
      %v1467 = vmul.f32 %v1465, %v1465
      %v1468 = vmul.f32 %v1466, %v1466
      %v1469 = vsel %vm681, %v1467, 0.0
      %1470 = vadd.xlane.f32.xlu0 %v1469
      %v1471 = vpop.xlane.xlu0 %1470
      %v1472 = vsel %vm681, %v1468, 0.0
      %1473 = vadd.xlane.f32.xlu0 %v1472
      %v1474 = vpop.xlane.xlu0 %1473
      %v1475 = vmul.f32 %v1471, %v1281
      %v1476 = vmul.f32 %v1474, %v1281
      %v1477 = vadd.f32 %v1475, 1e-05
      %v1478 = vadd.f32 %v1476, 1e-05
      %v1479 = vrsqrt.pop %v1477
      %v1480 = vmul.f32 %v1479, %v1477
      %v1481 = vmul.f32 %v1480, %v1479
      %v1482 = vmul.f32 0.5, %v1481
      %v1483 = vsub.f32 1.5, %v1482
      %v1484 = vmul.f32 %v1479, %v1483
      %vm1485 = vweird.f32 %v1477
      %vm1486 = vweird.f32 %v1479
      %vm1487 = vmor %vm1485, %vm1486
      %v1488 = vsel %vm1487, %v1479, %v1484
      %v1489 = vrsqrt.pop %v1478
      %v1490 = vmul.f32 %v1489, %v1478
      %v1491 = vmul.f32 %v1490, %v1489
      %v1492 = vmul.f32 0.5, %v1491
      %v1493 = vsub.f32 1.5, %v1492
      %v1494 = vmul.f32 %v1489, %v1493
      %vm1495 = vweird.f32 %v1478
      %vm1496 = vweird.f32 %v1489
      %vm1497 = vmor %vm1495, %vm1496
      %v1498 = vsel %vm1497, %v1489, %v1494
      %v1499 = vmul.f32 %v1465, %v1488
      %v1500 = vmul.f32 %v1466, %v1498
      %v1502 = vperm.slane %v1455, 0
      %v1504 = vmul.f32 %v1499, %v1502
      %v1505 = vmul.f32 %v1500, %v1502
      %v1507 = vperm.slane %v1456, 0
      %v1509 = vadd.f32 %v1504, %v1507
      %v1510 = vadd.f32 %v1505, %v1507
      %1511 = vst.msk [vmem:[%s646] sm:$0xff] %vm681, %v1509
      %1512 = vst.msk [vmem:[%s646 + $0x8] sm:$0xff] %vm681, %v1510
      %s1513 = smul.u32 2, %s28
      %p1514 = scmp.lt.s32.totalorder %s1513, 1
      %s1515 = scalar_select %p1514, %s1513, 1
      %s1516 = smul.addr %s1515, 8
      %s1517 = scalar_lea.vmem %s13, %s1516
      // Predicated region
      $region77: #{forward.6} parent=71 // pred_check
        %p1518 = pneg %p392
      $region78: #{forward.6} parent=71 // pred_check_branch
        %1520 = sbr.rel (%p1518) target = $region80
      $region79: #{forward.6} parent=71 // pred_region
        %s1521 = smul.u32 2, %s28
      $region80: #{forward.6} parent=71 // pred_fallthru
        _
      // Predicated region
      $region81: #{forward.6} parent=71 // pred_check
        %p1522 = pneg %p392
      $region82: #{forward.6} parent=71 // pred_check_branch
        %1524 = sbr.rel (%p1522) target = $region84
      $region83: #{forward.6} parent=71 // pred_region
        %s1525 = smul.u32 2, %s28
        %p1526 = scmp.lt.s32.totalorder %s1525, 1
        %s1527 = scalar_select %p1526, %s1525, 1
        %s1528 = smul.addr %s1527, 8
        %s1529 = scalar_lea.vmem %s13, %s1528
      $region84: #{forward.6} parent=71 // pred_fallthru
        _
    $region72: #{forward.6} parent=5 // pred_fallthru
      _
    %p1530 = scmp.le.s32.totalorder 2, %s19
    // Predicated region
    $region85: #{forward.6} parent=5 // pred_check
      %p1531 = pneg %p1530
    $region86: #{forward.6} parent=5 // pred_check_branch
      %1533 = sbr.rel (%p1531) target = $region88
    $region87: #{forward.6} parent=5 // pred_region
      %s1534 = ssub.s32 %s19, 2
    $region88: #{forward.6} parent=5 // pred_fallthru
      _
  $region6: #{forward.6} parent=0 // loop_footer
    %s23 = sadd.s32 1, %s19
  $region7: #{forward.6} parent=0 // loop_footer_branch
    %18 = sbr.rel target = $region3
  $region8: #{forward.6} parent=0 // loop_exit
    _

// kernel: forward.8
$region0: #{forward.8}
  #allocation0 [shape = 'u32[]', space=smem, size = 0x4, offset = 0x4, fixed_abs, tag = 'smem constant byte address 0x4 - core index']
  #allocation1 [shape = 'u32[72,128]{1,0:T(1,128)}', space=vmem, size = 0x9000, scoped, tag = 'internal scratch']
  %s0 = inlined_call_operand.vmem [shape: f32[8,8,32], index: 0, kind: input, shape index: {}]
  %s1 = inlined_call_operand.vmem [shape: bf16[2,32,96], index: 1, kind: input, shape index: {}]
  %s2 = inlined_call_operand.vmem [shape: f32[2,1,96], index: 2, kind: input, shape index: {}]
  %s3 = inlined_call_operand.vmem [shape: bf16[2,32,32], index: 3, kind: input, shape index: {}]
  %s4 = inlined_call_operand.vmem [shape: f32[2,1,32], index: 4, kind: input, shape index: {}]
  %s5 = inlined_call_operand.vmem [shape: f32[2,1,32], index: 5, kind: input, shape index: {}]
  %s6 = inlined_call_operand.vmem [shape: f32[2,1,32], index: 6, kind: input, shape index: {}]
  %s7 = inlined_call_operand.vmem [shape: bf16[2,32,128], index: 7, kind: input, shape index: {}]
  %s8 = inlined_call_operand.vmem [shape: f32[2,1,128], index: 8, kind: input, shape index: {}]
  %s9 = inlined_call_operand.vmem [shape: bf16[2,128,32], index: 9, kind: input, shape index: {}]
  %s10 = inlined_call_operand.vmem [shape: f32[2,1,32], index: 10, kind: input, shape index: {}]
  %s11 = inlined_call_operand.vmem [shape: f32[2,1,32], index: 11, kind: input, shape index: {}]
  %s12 = inlined_call_operand.vmem [shape: f32[2,1,32], index: 12, kind: input, shape index: {}]
  %s13 = inlined_call_operand.vmem [shape: f32[8,8,32], index: 13, kind: output, shape index: {}]
  %s14 = sld [smem:[#allocation0]]
  $region89: #{forward.8} parent=0
    _
  %s16 = ssub.s32 1, %s14
  %s17 = scalar_select 0, %s16, %s14
  loop: start=0, step=1, limit=4
  $region2: #{forward.8} parent=0 // loop_pre_header
    _
  $region3: #{forward.8} parent=0 // loop_header
    %s19 = sphi 0, %s23
    %p20 = scmp.ge.s32.totalorder %s19, 4
    %s26 = sphi 0, %s38
    %s27 = sphi 0, %s34
    %s28 = sphi 0, %s26
    %s29 = sphi 0, %s27
    %s30 = sphi 0, %s28
    %s31 = sphi 0, %s29
    %s41 = sphi 0, %s43
    %s44 = sphi 0, %s41
    %s45 = sphi 0, %s44
    %s61 = sphi 0, %s45
    %s67 = sphi 0, %s69
    %s70 = sphi 0, %s67
    %s71 = sphi 0, %s70
    %s87 = sphi 0, %s71
    %s93 = sphi 0, %s95
    %s96 = sphi 0, %s93
    %s97 = sphi 0, %s96
    %s113 = sphi 0, %s97
    %s119 = sphi 0, %s121
    %s122 = sphi 0, %s119
    %s123 = sphi 0, %s122
    %s139 = sphi 0, %s123
    %s145 = sphi 0, %s147
    %s148 = sphi 0, %s145
    %s149 = sphi 0, %s148
    %s165 = sphi 0, %s149
    %s171 = sphi 0, %s173
    %s174 = sphi 0, %s171
    %s175 = sphi 0, %s174
    %s191 = sphi 0, %s175
    %s197 = sphi 0, %s199
    %s200 = sphi 0, %s197
    %s201 = sphi 0, %s200
    %s217 = sphi 0, %s201
    %s223 = sphi 0, %s225
    %s226 = sphi 0, %s223
    %s227 = sphi 0, %s226
    %s243 = sphi 0, %s227
    %s249 = sphi 0, %s251
    %s252 = sphi 0, %s249
    %s253 = sphi 0, %s252
    %s269 = sphi 0, %s253
    %s275 = sphi 0, %s277
    %s278 = sphi 0, %s275
    %s279 = sphi 0, %s278
    %s295 = sphi 0, %s279
    %s301 = sphi 0, %s303
    %s304 = sphi 0, %s301
    %s305 = sphi 0, %s304
    %s321 = sphi 0, %s305
    %s327 = sphi 0, %s329
    %s330 = sphi 0, %s327
    %s331 = sphi 0, %s330
    %s347 = sphi 0, %s331
    %s353 = sphi 0, %s355
    %s356 = sphi 0, %s353
    %s357 = sphi 0, %s356
    %s373 = sphi 0, %s357
    %s379 = sphi 0, %s381
    %s382 = sphi 0, %s379
    %s383 = sphi 0, %s382
    %s399 = sphi 0, %s383
  $region4: #{forward.8} parent=0 // loop_header_branch
    %22 = sbr.rel (%p20) target = $region8
  $region5: #{forward.8} parent=0 // loop_body
    %s24 = ssub.s32 %s19, 1
    %s25 = ssub.s32 %s19, 2
    %s32 = sadd.s32 1, %s27
    %p33 = scmp.ge.s32.totalorder %s32, 2
    %s34 = scalar_select %p33, 0, %s32
    %s35 = sadd.s32 1, %s26
    %s36 = scalar_select %p33, %s35, %s26
    %p37 = scmp.ge.s32.totalorder %s36, 1
    %s38 = scalar_select %p37, 0, %s36
    %s39 = ssub.s32 %s26, %s38
    %p40 = scmp.eq.s32.totalorder %s39, 0
    %s42 = sadd.s32 %s41, 1
    %s43 = scalar_select %p40, %s41, %s42
    %p46 = pneg %p40
    %p47 = scmp.eq.s32.totalorder %s19, 1
    %p48 = por %p46, %p47
    %p49 = scmp.ne.s32.totalorder %s41, %s44
    %p50 = scmp.eq.s32.totalorder %s19, 0
    %p51 = por %p49, %p50
    %p52 = scmp.ne.s32.totalorder %s41, %s44
    %p53 = scmp.eq.s32.totalorder %s24, 1
    %p54 = por %p52, %p53
    %p55 = scmp.ne.s32.totalorder %s44, %s45
    %p56 = scmp.eq.s32.totalorder %s24, 0
    %p57 = por %p55, %p56
    %p58 = scmp.ne.s32.totalorder %s44, %s45
    %p59 = scmp.eq.s32.totalorder %s25, 1
    %p60 = por %p58, %p59
    %p62 = scmp.ne.s32.totalorder %s45, %s61
    %p63 = scmp.eq.s32.totalorder %s25, 0
    %p64 = por %p62, %p63
    %s65 = ssub.s32 %s27, %s34
    %p66 = scmp.eq.s32.totalorder %s65, 0
    %s68 = sadd.s32 %s67, 1
    %s69 = scalar_select %p66, %s67, %s68
    %p72 = pneg %p66
    %p73 = scmp.eq.s32.totalorder %s19, 1
    %p74 = por %p72, %p73
    %p75 = scmp.ne.s32.totalorder %s67, %s70
    %p76 = scmp.eq.s32.totalorder %s19, 0
    %p77 = por %p75, %p76
    %p78 = scmp.ne.s32.totalorder %s67, %s70
    %p79 = scmp.eq.s32.totalorder %s24, 1
    %p80 = por %p78, %p79
    %p81 = scmp.ne.s32.totalorder %s70, %s71
    %p82 = scmp.eq.s32.totalorder %s24, 0
    %p83 = por %p81, %p82
    %p84 = scmp.ne.s32.totalorder %s70, %s71
    %p85 = scmp.eq.s32.totalorder %s25, 1
    %p86 = por %p84, %p85
    %p88 = scmp.ne.s32.totalorder %s71, %s87
    %p89 = scmp.eq.s32.totalorder %s25, 0
    %p90 = por %p88, %p89
    %s91 = ssub.s32 %s27, %s34
    %p92 = scmp.eq.s32.totalorder %s91, 0
    %s94 = sadd.s32 %s93, 1
    %s95 = scalar_select %p92, %s93, %s94
    %p98 = pneg %p92
    %p99 = scmp.eq.s32.totalorder %s19, 1
    %p100 = por %p98, %p99
    %p101 = scmp.ne.s32.totalorder %s93, %s96
    %p102 = scmp.eq.s32.totalorder %s19, 0
    %p103 = por %p101, %p102
    %p104 = scmp.ne.s32.totalorder %s93, %s96
    %p105 = scmp.eq.s32.totalorder %s24, 1
    %p106 = por %p104, %p105
    %p107 = scmp.ne.s32.totalorder %s96, %s97
    %p108 = scmp.eq.s32.totalorder %s24, 0
    %p109 = por %p107, %p108
    %p110 = scmp.ne.s32.totalorder %s96, %s97
    %p111 = scmp.eq.s32.totalorder %s25, 1
    %p112 = por %p110, %p111
    %p114 = scmp.ne.s32.totalorder %s97, %s113
    %p115 = scmp.eq.s32.totalorder %s25, 0
    %p116 = por %p114, %p115
    %s117 = ssub.s32 %s27, %s34
    %p118 = scmp.eq.s32.totalorder %s117, 0
    %s120 = sadd.s32 %s119, 1
    %s121 = scalar_select %p118, %s119, %s120
    %p124 = pneg %p118
    %p125 = scmp.eq.s32.totalorder %s19, 1
    %p126 = por %p124, %p125
    %p127 = scmp.ne.s32.totalorder %s119, %s122
    %p128 = scmp.eq.s32.totalorder %s19, 0
    %p129 = por %p127, %p128
    %p130 = scmp.ne.s32.totalorder %s119, %s122
    %p131 = scmp.eq.s32.totalorder %s24, 1
    %p132 = por %p130, %p131
    %p133 = scmp.ne.s32.totalorder %s122, %s123
    %p134 = scmp.eq.s32.totalorder %s24, 0
    %p135 = por %p133, %p134
    %p136 = scmp.ne.s32.totalorder %s122, %s123
    %p137 = scmp.eq.s32.totalorder %s25, 1
    %p138 = por %p136, %p137
    %p140 = scmp.ne.s32.totalorder %s123, %s139
    %p141 = scmp.eq.s32.totalorder %s25, 0
    %p142 = por %p140, %p141
    %s143 = ssub.s32 %s27, %s34
    %p144 = scmp.eq.s32.totalorder %s143, 0
    %s146 = sadd.s32 %s145, 1
    %s147 = scalar_select %p144, %s145, %s146
    %p150 = pneg %p144
    %p151 = scmp.eq.s32.totalorder %s19, 1
    %p152 = por %p150, %p151
    %p153 = scmp.ne.s32.totalorder %s145, %s148
    %p154 = scmp.eq.s32.totalorder %s19, 0
    %p155 = por %p153, %p154
    %p156 = scmp.ne.s32.totalorder %s145, %s148
    %p157 = scmp.eq.s32.totalorder %s24, 1
    %p158 = por %p156, %p157
    %p159 = scmp.ne.s32.totalorder %s148, %s149
    %p160 = scmp.eq.s32.totalorder %s24, 0
    %p161 = por %p159, %p160
    %p162 = scmp.ne.s32.totalorder %s148, %s149
    %p163 = scmp.eq.s32.totalorder %s25, 1
    %p164 = por %p162, %p163
    %p166 = scmp.ne.s32.totalorder %s149, %s165
    %p167 = scmp.eq.s32.totalorder %s25, 0
    %p168 = por %p166, %p167
    %s169 = ssub.s32 %s27, %s34
    %p170 = scmp.eq.s32.totalorder %s169, 0
    %s172 = sadd.s32 %s171, 1
    %s173 = scalar_select %p170, %s171, %s172
    %p176 = pneg %p170
    %p177 = scmp.eq.s32.totalorder %s19, 1
    %p178 = por %p176, %p177
    %p179 = scmp.ne.s32.totalorder %s171, %s174
    %p180 = scmp.eq.s32.totalorder %s19, 0
    %p181 = por %p179, %p180
    %p182 = scmp.ne.s32.totalorder %s171, %s174
    %p183 = scmp.eq.s32.totalorder %s24, 1
    %p184 = por %p182, %p183
    %p185 = scmp.ne.s32.totalorder %s174, %s175
    %p186 = scmp.eq.s32.totalorder %s24, 0
    %p187 = por %p185, %p186
    %p188 = scmp.ne.s32.totalorder %s174, %s175
    %p189 = scmp.eq.s32.totalorder %s25, 1
    %p190 = por %p188, %p189
    %p192 = scmp.ne.s32.totalorder %s175, %s191
    %p193 = scmp.eq.s32.totalorder %s25, 0
    %p194 = por %p192, %p193
    %s195 = ssub.s32 %s27, %s34
    %p196 = scmp.eq.s32.totalorder %s195, 0
    %s198 = sadd.s32 %s197, 1
    %s199 = scalar_select %p196, %s197, %s198
    %p202 = pneg %p196
    %p203 = scmp.eq.s32.totalorder %s19, 1
    %p204 = por %p202, %p203
    %p205 = scmp.ne.s32.totalorder %s197, %s200
    %p206 = scmp.eq.s32.totalorder %s19, 0
    %p207 = por %p205, %p206
    %p208 = scmp.ne.s32.totalorder %s197, %s200
    %p209 = scmp.eq.s32.totalorder %s24, 1
    %p210 = por %p208, %p209
    %p211 = scmp.ne.s32.totalorder %s200, %s201
    %p212 = scmp.eq.s32.totalorder %s24, 0
    %p213 = por %p211, %p212
    %p214 = scmp.ne.s32.totalorder %s200, %s201
    %p215 = scmp.eq.s32.totalorder %s25, 1
    %p216 = por %p214, %p215
    %p218 = scmp.ne.s32.totalorder %s201, %s217
    %p219 = scmp.eq.s32.totalorder %s25, 0
    %p220 = por %p218, %p219
    %s221 = ssub.s32 %s27, %s34
    %p222 = scmp.eq.s32.totalorder %s221, 0
    %s224 = sadd.s32 %s223, 1
    %s225 = scalar_select %p222, %s223, %s224
    %p228 = pneg %p222
    %p229 = scmp.eq.s32.totalorder %s19, 1
    %p230 = por %p228, %p229
    %p231 = scmp.ne.s32.totalorder %s223, %s226
    %p232 = scmp.eq.s32.totalorder %s19, 0
    %p233 = por %p231, %p232
    %p234 = scmp.ne.s32.totalorder %s223, %s226
    %p235 = scmp.eq.s32.totalorder %s24, 1
    %p236 = por %p234, %p235
    %p237 = scmp.ne.s32.totalorder %s226, %s227
    %p238 = scmp.eq.s32.totalorder %s24, 0
    %p239 = por %p237, %p238
    %p240 = scmp.ne.s32.totalorder %s226, %s227
    %p241 = scmp.eq.s32.totalorder %s25, 1
    %p242 = por %p240, %p241
    %p244 = scmp.ne.s32.totalorder %s227, %s243
    %p245 = scmp.eq.s32.totalorder %s25, 0
    %p246 = por %p244, %p245
    %s247 = ssub.s32 %s27, %s34
    %p248 = scmp.eq.s32.totalorder %s247, 0
    %s250 = sadd.s32 %s249, 1
    %s251 = scalar_select %p248, %s249, %s250
    %p254 = pneg %p248
    %p255 = scmp.eq.s32.totalorder %s19, 1
    %p256 = por %p254, %p255
    %p257 = scmp.ne.s32.totalorder %s249, %s252
    %p258 = scmp.eq.s32.totalorder %s19, 0
    %p259 = por %p257, %p258
    %p260 = scmp.ne.s32.totalorder %s249, %s252
    %p261 = scmp.eq.s32.totalorder %s24, 1
    %p262 = por %p260, %p261
    %p263 = scmp.ne.s32.totalorder %s252, %s253
    %p264 = scmp.eq.s32.totalorder %s24, 0
    %p265 = por %p263, %p264
    %p266 = scmp.ne.s32.totalorder %s252, %s253
    %p267 = scmp.eq.s32.totalorder %s25, 1
    %p268 = por %p266, %p267
    %p270 = scmp.ne.s32.totalorder %s253, %s269
    %p271 = scmp.eq.s32.totalorder %s25, 0
    %p272 = por %p270, %p271
    %s273 = ssub.s32 %s27, %s34
    %p274 = scmp.eq.s32.totalorder %s273, 0
    %s276 = sadd.s32 %s275, 1
    %s277 = scalar_select %p274, %s275, %s276
    %p280 = pneg %p274
    %p281 = scmp.eq.s32.totalorder %s19, 1
    %p282 = por %p280, %p281
    %p283 = scmp.ne.s32.totalorder %s275, %s278
    %p284 = scmp.eq.s32.totalorder %s19, 0
    %p285 = por %p283, %p284
    %p286 = scmp.ne.s32.totalorder %s275, %s278
    %p287 = scmp.eq.s32.totalorder %s24, 1
    %p288 = por %p286, %p287
    %p289 = scmp.ne.s32.totalorder %s278, %s279
    %p290 = scmp.eq.s32.totalorder %s24, 0
    %p291 = por %p289, %p290
    %p292 = scmp.ne.s32.totalorder %s278, %s279
    %p293 = scmp.eq.s32.totalorder %s25, 1
    %p294 = por %p292, %p293
    %p296 = scmp.ne.s32.totalorder %s279, %s295
    %p297 = scmp.eq.s32.totalorder %s25, 0
    %p298 = por %p296, %p297
    %s299 = ssub.s32 %s27, %s34
    %p300 = scmp.eq.s32.totalorder %s299, 0
    %s302 = sadd.s32 %s301, 1
    %s303 = scalar_select %p300, %s301, %s302
    %p306 = pneg %p300
    %p307 = scmp.eq.s32.totalorder %s19, 1
    %p308 = por %p306, %p307
    %p309 = scmp.ne.s32.totalorder %s301, %s304
    %p310 = scmp.eq.s32.totalorder %s19, 0
    %p311 = por %p309, %p310
    %p312 = scmp.ne.s32.totalorder %s301, %s304
    %p313 = scmp.eq.s32.totalorder %s24, 1
    %p314 = por %p312, %p313
    %p315 = scmp.ne.s32.totalorder %s304, %s305
    %p316 = scmp.eq.s32.totalorder %s24, 0
    %p317 = por %p315, %p316
    %p318 = scmp.ne.s32.totalorder %s304, %s305
    %p319 = scmp.eq.s32.totalorder %s25, 1
    %p320 = por %p318, %p319
    %p322 = scmp.ne.s32.totalorder %s305, %s321
    %p323 = scmp.eq.s32.totalorder %s25, 0
    %p324 = por %p322, %p323
    %s325 = ssub.s32 %s27, %s34
    %p326 = scmp.eq.s32.totalorder %s325, 0
    %s328 = sadd.s32 %s327, 1
    %s329 = scalar_select %p326, %s327, %s328
    %p332 = pneg %p326
    %p333 = scmp.eq.s32.totalorder %s19, 1
    %p334 = por %p332, %p333
    %p335 = scmp.ne.s32.totalorder %s327, %s330
    %p336 = scmp.eq.s32.totalorder %s19, 0
    %p337 = por %p335, %p336
    %p338 = scmp.ne.s32.totalorder %s327, %s330
    %p339 = scmp.eq.s32.totalorder %s24, 1
    %p340 = por %p338, %p339
    %p341 = scmp.ne.s32.totalorder %s330, %s331
    %p342 = scmp.eq.s32.totalorder %s24, 0
    %p343 = por %p341, %p342
    %p344 = scmp.ne.s32.totalorder %s330, %s331
    %p345 = scmp.eq.s32.totalorder %s25, 1
    %p346 = por %p344, %p345
    %p348 = scmp.ne.s32.totalorder %s331, %s347
    %p349 = scmp.eq.s32.totalorder %s25, 0
    %p350 = por %p348, %p349
    %s351 = ssub.s32 %s27, %s34
    %p352 = scmp.eq.s32.totalorder %s351, 0
    %s354 = sadd.s32 %s353, 1
    %s355 = scalar_select %p352, %s353, %s354
    %p358 = pneg %p352
    %p359 = scmp.eq.s32.totalorder %s19, 1
    %p360 = por %p358, %p359
    %p361 = scmp.ne.s32.totalorder %s353, %s356
    %p362 = scmp.eq.s32.totalorder %s19, 0
    %p363 = por %p361, %p362
    %p364 = scmp.ne.s32.totalorder %s353, %s356
    %p365 = scmp.eq.s32.totalorder %s24, 1
    %p366 = por %p364, %p365
    %p367 = scmp.ne.s32.totalorder %s356, %s357
    %p368 = scmp.eq.s32.totalorder %s24, 0
    %p369 = por %p367, %p368
    %p370 = scmp.ne.s32.totalorder %s356, %s357
    %p371 = scmp.eq.s32.totalorder %s25, 1
    %p372 = por %p370, %p371
    %p374 = scmp.ne.s32.totalorder %s357, %s373
    %p375 = scmp.eq.s32.totalorder %s25, 0
    %p376 = por %p374, %p375
    %s377 = ssub.s32 %s26, %s38
    %p378 = scmp.eq.s32.totalorder %s377, 0
    %s380 = sadd.s32 %s379, 1
    %s381 = scalar_select %p378, %s379, %s380
    %p384 = pneg %p378
    %p385 = scmp.eq.s32.totalorder %s19, 1
    %p386 = por %p384, %p385
    %p387 = scmp.ne.s32.totalorder %s379, %s382
    %p388 = scmp.eq.s32.totalorder %s19, 0
    %p389 = por %p387, %p388
    %p390 = scmp.ne.s32.totalorder %s379, %s382
    %p391 = scmp.eq.s32.totalorder %s24, 1
    %p392 = por %p390, %p391
    %p393 = scmp.ne.s32.totalorder %s382, %s383
    %p394 = scmp.eq.s32.totalorder %s24, 0
    %p395 = por %p393, %p394
    %p396 = scmp.ne.s32.totalorder %s382, %s383
    %p397 = scmp.eq.s32.totalorder %s25, 1
    %p398 = por %p396, %p397
    %p400 = scmp.ne.s32.totalorder %s383, %s399
    %p401 = scmp.eq.s32.totalorder %s25, 0
    %p402 = por %p400, %p401
    %p403 = scmp.le.s32.totalorder 1, %s19
    %p404 = scmp.lt.s32.totalorder %s19, 3
    %p405 = pnand %p403, %p404
    %p406 = pneg %p405
    // Predicated region
    $region9: #{forward.8} parent=5 // pred_check
      _
    $region10: #{forward.8} parent=5 // pred_check_branch
      %408 = sbr.rel (%p405) target = $region12
    $region11: #{forward.8} parent=5 // pred_region
      %s409 = ssub.s32 %s19, 1
      // Predicated region
      $region13: #{forward.8} parent=11 // pred_check
        %p410 = pneg %p57
      $region14: #{forward.8} parent=11 // pred_check_branch
        %412 = sbr.rel (%p410) target = $region16
      $region15: #{forward.8} parent=11 // pred_region
        %s413 = smul.u32 8, %s28
        %p414 = scmp.lt.s32.totalorder %s413, 7
        %s415 = scalar_select %p414, %s413, 7
        %s416 = smul.addr %s415, 8
        %s417 = scalar_lea.vmem %s0, %s416
        %s418 = smul.u32 8, %s28
      $region16: #{forward.8} parent=11 // pred_fallthru
        _
    $region12: #{forward.8} parent=5 // pred_fallthru
      _
    %p419 = scmp.lt.s32.totalorder %s19, 2
    // Predicated region
    $region17: #{forward.8} parent=5 // pred_check
      %p420 = pneg %p419
    $region18: #{forward.8} parent=5 // pred_check_branch
      %422 = sbr.rel (%p420) target = $region20
    $region19: #{forward.8} parent=5 // pred_region
      // Predicated region
      $region21: #{forward.8} parent=19 // pred_check
        %p423 = pneg %p77
      $region22: #{forward.8} parent=19 // pred_check_branch
        %425 = sbr.rel (%p423) target = $region24
      $region23: #{forward.8} parent=19 // pred_region
        %p426 = scmp.lt.s32.totalorder %s27, 1
        %s427 = scalar_select %p426, %s27, 1
        %s428 = smul.addr %s427, 4
        %s429 = smul.addr %s428, 4
        %s430 = scalar_lea.vmem %s1, %s429
      $region24: #{forward.8} parent=19 // pred_fallthru
        _
      // Predicated region
      $region25: #{forward.8} parent=19 // pred_check
        %p431 = pneg %p103
      $region26: #{forward.8} parent=19 // pred_check_branch
        %433 = sbr.rel (%p431) target = $region28
      $region27: #{forward.8} parent=19 // pred_region
        %p434 = scmp.lt.s32.totalorder %s27, 1
        %s435 = scalar_select %p434, %s27, 1
        %s436 = scalar_lea.vmem %s2, %s435
      $region28: #{forward.8} parent=19 // pred_fallthru
        _
      // Predicated region
      $region29: #{forward.8} parent=19 // pred_check
        %p437 = pneg %p129
      $region30: #{forward.8} parent=19 // pred_check_branch
        %439 = sbr.rel (%p437) target = $region32
      $region31: #{forward.8} parent=19 // pred_region
        %p440 = scmp.lt.s32.totalorder %s27, 1
        %s441 = scalar_select %p440, %s27, 1
        %s442 = smul.addr %s441, 4
        %s443 = smul.addr %s442, 4
        %s444 = scalar_lea.vmem %s3, %s443
      $region32: #{forward.8} parent=19 // pred_fallthru
        _
      // Predicated region
      $region33: #{forward.8} parent=19 // pred_check
        %p445 = pneg %p155
      $region34: #{forward.8} parent=19 // pred_check_branch
        %447 = sbr.rel (%p445) target = $region36
      $region35: #{forward.8} parent=19 // pred_region
        %p448 = scmp.lt.s32.totalorder %s27, 1
        %s449 = scalar_select %p448, %s27, 1
        %s450 = scalar_lea.vmem %s4, %s449
      $region36: #{forward.8} parent=19 // pred_fallthru
        _
      // Predicated region
      $region37: #{forward.8} parent=19 // pred_check
        %p451 = pneg %p181
      $region38: #{forward.8} parent=19 // pred_check_branch
        %453 = sbr.rel (%p451) target = $region40
      $region39: #{forward.8} parent=19 // pred_region
        %p454 = scmp.lt.s32.totalorder %s27, 1
        %s455 = scalar_select %p454, %s27, 1
        %s456 = scalar_lea.vmem %s5, %s455
      $region40: #{forward.8} parent=19 // pred_fallthru
        _
      // Predicated region
      $region41: #{forward.8} parent=19 // pred_check
        %p457 = pneg %p207
      $region42: #{forward.8} parent=19 // pred_check_branch
        %459 = sbr.rel (%p457) target = $region44
      $region43: #{forward.8} parent=19 // pred_region
        %p460 = scmp.lt.s32.totalorder %s27, 1
        %s461 = scalar_select %p460, %s27, 1
        %s462 = scalar_lea.vmem %s6, %s461
      $region44: #{forward.8} parent=19 // pred_fallthru
        _
      // Predicated region
      $region45: #{forward.8} parent=19 // pred_check
        %p463 = pneg %p233
      $region46: #{forward.8} parent=19 // pred_check_branch
        %465 = sbr.rel (%p463) target = $region48
      $region47: #{forward.8} parent=19 // pred_region
        %p466 = scmp.lt.s32.totalorder %s27, 1
        %s467 = scalar_select %p466, %s27, 1
        %s468 = smul.addr %s467, 4
        %s469 = smul.addr %s468, 4
        %s470 = scalar_lea.vmem %s7, %s469
      $region48: #{forward.8} parent=19 // pred_fallthru
        _
      // Predicated region
      $region49: #{forward.8} parent=19 // pred_check
        %p471 = pneg %p259
      $region50: #{forward.8} parent=19 // pred_check_branch
        %473 = sbr.rel (%p471) target = $region52
      $region51: #{forward.8} parent=19 // pred_region
        %p474 = scmp.lt.s32.totalorder %s27, 1
        %s475 = scalar_select %p474, %s27, 1
        %s476 = scalar_lea.vmem %s8, %s475
      $region52: #{forward.8} parent=19 // pred_fallthru
        _
      // Predicated region
      $region53: #{forward.8} parent=19 // pred_check
        %p477 = pneg %p285
      $region54: #{forward.8} parent=19 // pred_check_branch
        %479 = sbr.rel (%p477) target = $region56
      $region55: #{forward.8} parent=19 // pred_region
        %p480 = scmp.lt.s32.totalorder %s27, 1
        %s481 = scalar_select %p480, %s27, 1
        %s482 = smul.addr %s481, 16
        %s483 = smul.addr %s482, 4
        %s484 = scalar_lea.vmem %s9, %s483
      $region56: #{forward.8} parent=19 // pred_fallthru
        _
      // Predicated region
      $region57: #{forward.8} parent=19 // pred_check
        %p485 = pneg %p311
      $region58: #{forward.8} parent=19 // pred_check_branch
        %487 = sbr.rel (%p485) target = $region60
      $region59: #{forward.8} parent=19 // pred_region
        %p488 = scmp.lt.s32.totalorder %s27, 1
        %s489 = scalar_select %p488, %s27, 1
        %s490 = scalar_lea.vmem %s10, %s489
      $region60: #{forward.8} parent=19 // pred_fallthru
        _
      // Predicated region
      $region61: #{forward.8} parent=19 // pred_check
        %p491 = pneg %p337
      $region62: #{forward.8} parent=19 // pred_check_branch
        %493 = sbr.rel (%p491) target = $region64
      $region63: #{forward.8} parent=19 // pred_region
        %p494 = scmp.lt.s32.totalorder %s27, 1
        %s495 = scalar_select %p494, %s27, 1
        %s496 = scalar_lea.vmem %s11, %s495
      $region64: #{forward.8} parent=19 // pred_fallthru
        _
      // Predicated region
      $region65: #{forward.8} parent=19 // pred_check
        %p497 = pneg %p363
      $region66: #{forward.8} parent=19 // pred_check_branch
        %499 = sbr.rel (%p497) target = $region68
      $region67: #{forward.8} parent=19 // pred_region
        %p500 = scmp.lt.s32.totalorder %s27, 1
        %s501 = scalar_select %p500, %s27, 1
        %s502 = scalar_lea.vmem %s12, %s501
      $region68: #{forward.8} parent=19 // pred_fallthru
        _
    $region20: #{forward.8} parent=5 // pred_fallthru
      _
    %p503 = scmp.le.s32.totalorder 1, %s19
    %p504 = scmp.lt.s32.totalorder %s19, 3
    %p505 = pnand %p503, %p504
    %p506 = pneg %p505
    // Predicated region
    $region69: #{forward.8} parent=5 // pred_check
      _
    $region70: #{forward.8} parent=5 // pred_check_branch
      %508 = sbr.rel (%p505) target = $region72
    $region71: #{forward.8} parent=5 // pred_region
      %s509 = ssub.s32 %s19, 1
      %s510 = smul.u32 8, %s28
      %p511 = scmp.lt.s32.totalorder %s510, 7
      %s512 = scalar_select %p511, %s510, 7
      %s513 = smul.addr %s512, 8
      %s514 = scalar_lea.vmem %s0, %s513
      %p515 = pneg %p57
      %p516 = pneg %p54
      %p517 = scmp.lt.s32.totalorder %s29, 1
      %s518 = scalar_select %p517, %s29, 1
      %s519 = smul.addr %s518, 4
      %s520 = smul.addr %s519, 4
      %s521 = scalar_lea.vmem %s1, %s520
      %p522 = pneg %p83
      %p523 = pneg %p80
      %p524 = scmp.lt.s32.totalorder %s29, 1
      %s525 = scalar_select %p524, %s29, 1
      %s526 = scalar_lea.vmem %s2, %s525
      %p527 = pneg %p109
      %p528 = pneg %p106
      %p529 = scmp.lt.s32.totalorder %s29, 1
      %s530 = scalar_select %p529, %s29, 1
      %s531 = smul.addr %s530, 4
      %s532 = smul.addr %s531, 4
      %s533 = scalar_lea.vmem %s3, %s532
      %p534 = pneg %p135
      %p535 = pneg %p132
      %p536 = scmp.lt.s32.totalorder %s29, 1
      %s537 = scalar_select %p536, %s29, 1
      %s538 = scalar_lea.vmem %s4, %s537
      %p539 = pneg %p161
      %p540 = pneg %p158
      %p541 = scmp.lt.s32.totalorder %s29, 1
      %s542 = scalar_select %p541, %s29, 1
      %s543 = scalar_lea.vmem %s5, %s542
      %p544 = pneg %p187
      %p545 = pneg %p184
      %p546 = scmp.lt.s32.totalorder %s29, 1
      %s547 = scalar_select %p546, %s29, 1
      %s548 = scalar_lea.vmem %s6, %s547
      %p549 = pneg %p213
      %p550 = pneg %p210
      %p551 = scmp.lt.s32.totalorder %s29, 1
      %s552 = scalar_select %p551, %s29, 1
      %s553 = smul.addr %s552, 4
      %s554 = smul.addr %s553, 4
      %s555 = scalar_lea.vmem %s7, %s554
      %p556 = pneg %p239
      %p557 = pneg %p236
      %p558 = scmp.lt.s32.totalorder %s29, 1
      %s559 = scalar_select %p558, %s29, 1
      %s560 = scalar_lea.vmem %s8, %s559
      %p561 = pneg %p265
      %p562 = pneg %p262
      %p563 = scmp.lt.s32.totalorder %s29, 1
      %s564 = scalar_select %p563, %s29, 1
      %s565 = smul.addr %s564, 16
      %s566 = smul.addr %s565, 4
      %s567 = scalar_lea.vmem %s9, %s566
      %p568 = pneg %p291
      %p569 = pneg %p288
      %p570 = scmp.lt.s32.totalorder %s29, 1
      %s571 = scalar_select %p570, %s29, 1
      %s572 = scalar_lea.vmem %s10, %s571
      %p573 = pneg %p317
      %p574 = pneg %p314
      %p575 = scmp.lt.s32.totalorder %s29, 1
      %s576 = scalar_select %p575, %s29, 1
      %s577 = scalar_lea.vmem %s11, %s576
      %p578 = pneg %p343
      %p579 = pneg %p340
      %p580 = scmp.lt.s32.totalorder %s29, 1
      %s581 = scalar_select %p580, %s29, 1
      %s582 = scalar_lea.vmem %s12, %s581
      %p583 = pneg %p369
      %p584 = pneg %p366
      %p585 = pneg %p395
      %p586 = pneg %p392
      %s587 = smul.u32 8, %s28
      %p588 = scmp.lt.s32.totalorder %s587, 7
      %s589 = scalar_select %p588, %s587, 7
      %s590 = smul.addr %s589, 8
      %s591 = scalar_lea.vmem %s13, %s590
      %s592 = smul.u32 8, %s28
      %p593 = scmp.lt.s32.totalorder %s592, 7
      %s594 = scalar_select %p593, %s592, 7
      %s595 = smul.addr %s594, 8
      %s596 = scalar_lea.vmem %s0, %s595
      %s597 = smul.u32 8, %s28
      %p598 = scmp.lt.s32.totalorder %s29, 1
      %s599 = scalar_select %p598, %s29, 1
      %s600 = smul.addr %s599, 4
      %s601 = smul.addr %s600, 4
      %s602 = scalar_lea.vmem %s1, %s601
      %p603 = scmp.lt.s32.totalorder %s29, 1
      %s604 = scalar_select %p603, %s29, 1
      %s605 = scalar_lea.vmem %s2, %s604
      %p606 = scmp.lt.s32.totalorder %s29, 1
      %s607 = scalar_select %p606, %s29, 1
      %s608 = smul.addr %s607, 4
      %s609 = smul.addr %s608, 4
      %s610 = scalar_lea.vmem %s3, %s609
      %p611 = scmp.lt.s32.totalorder %s29, 1
      %s612 = scalar_select %p611, %s29, 1
      %s613 = scalar_lea.vmem %s4, %s612
      %p614 = scmp.lt.s32.totalorder %s29, 1
      %s615 = scalar_select %p614, %s29, 1
      %s616 = scalar_lea.vmem %s5, %s615
      %p617 = scmp.lt.s32.totalorder %s29, 1
      %s618 = scalar_select %p617, %s29, 1
      %s619 = scalar_lea.vmem %s6, %s618
      %p620 = scmp.lt.s32.totalorder %s29, 1
      %s621 = scalar_select %p620, %s29, 1
      %s622 = smul.addr %s621, 4
      %s623 = smul.addr %s622, 4
      %s624 = scalar_lea.vmem %s7, %s623
      %p625 = scmp.lt.s32.totalorder %s29, 1
      %s626 = scalar_select %p625, %s29, 1
      %s627 = scalar_lea.vmem %s8, %s626
      %p628 = scmp.lt.s32.totalorder %s29, 1
      %s629 = scalar_select %p628, %s29, 1
      %s630 = smul.addr %s629, 16
      %s631 = smul.addr %s630, 4
      %s632 = scalar_lea.vmem %s9, %s631
      %p633 = scmp.lt.s32.totalorder %s29, 1
      %s634 = scalar_select %p633, %s29, 1
      %s635 = scalar_lea.vmem %s10, %s634
      %p636 = scmp.lt.s32.totalorder %s29, 1
      %s637 = scalar_select %p636, %s29, 1
      %s638 = scalar_lea.vmem %s11, %s637
      %p639 = scmp.lt.s32.totalorder %s29, 1
      %s640 = scalar_select %p639, %s29, 1
      %s641 = scalar_lea.vmem %s12, %s640
      %s642 = smul.u32 8, %s28
      %p643 = scmp.lt.s32.totalorder %s642, 7
      %s644 = scalar_select %p643, %s642, 7
      %s645 = smul.addr %s644, 8
      %s646 = scalar_lea.vmem %s13, %s645
      %s647 = smul.u32 8, %s28
      %p649 = scmp.eq.s32.totalorder %s29, 0
      // Predicated region
      $region73: #{forward.8} parent=71 // pred_check
        %p650 = pneg %p649
      $region74: #{forward.8} parent=71 // pred_check_branch
        %652 = sbr.rel (%p650) target = $region76
      $region75: #{forward.8} parent=71 // pred_region
        %v653 = vld [vmem:[%s596] sm:$0xff]
        %v654 = vld [vmem:[%s596 + $0x8] sm:$0xff]
        %v655 = vld [vmem:[%s596 + $0x10] sm:$0xff]
        %v656 = vld [vmem:[%s596 + $0x18] sm:$0xff]
        %v657 = vld [vmem:[%s596 + $0x20] sm:$0xff]
        %v658 = vld [vmem:[%s596 + $0x28] sm:$0xff]
        %v659 = vld [vmem:[%s596 + $0x30] sm:$0xff]
        %v660 = vld [vmem:[%s596 + $0x38] sm:$0xff]
        %vm661 = vcmask 261120
        %662 = vst.msk [vmem:[%s646] sm:$0xff] %vm661, %v653
        %663 = vst.msk [vmem:[%s646 + $0x8] sm:$0xff] %vm661, %v654
        %664 = vst.msk [vmem:[%s646 + $0x10] sm:$0xff] %vm661, %v655
        %665 = vst.msk [vmem:[%s646 + $0x18] sm:$0xff] %vm661, %v656
        %666 = vst.msk [vmem:[%s646 + $0x20] sm:$0xff] %vm661, %v657
        %667 = vst.msk [vmem:[%s646 + $0x28] sm:$0xff] %vm661, %v658
        %668 = vst.msk [vmem:[%s646 + $0x30] sm:$0xff] %vm661, %v659
        %669 = vst.msk [vmem:[%s646 + $0x38] sm:$0xff] %vm661, %v660
      $region76: #{forward.8} parent=71 // pred_fallthru
        _
      %v670 = vld [vmem:[%s646] sm:$0xff]
      %v671 = vld [vmem:[%s646 + $0x8] sm:$0xff]
      %v672 = vld [vmem:[%s646 + $0x10] sm:$0xff]
      %v673 = vld [vmem:[%s646 + $0x18] sm:$0xff]
      %v674 = vld [vmem:[%s646 + $0x20] sm:$0xff]
      %v675 = vld [vmem:[%s646 + $0x28] sm:$0xff]
      %v676 = vld [vmem:[%s646 + $0x30] sm:$0xff]
      %v677 = vld [vmem:[%s646 + $0x38] sm:$0xff]
      %v678 = vld [vmem:[%s602] sm:$0xf]
      %v679 = vld [vmem:[%s602 + $0x4] sm:$0xf]
      %v680 = vld [vmem:[%s602 + $0x8] sm:$0xf]
      %v681 = vld [vmem:[%s602 + $0xc] sm:$0xf]
      %v682 = vpack.c.bf16 %v671, %v670
      %v683 = vpack.c.bf16 %v673, %v672
      %v684 = vpack.c.bf16 %v675, %v674
      %v685 = vpack.c.bf16 %v677, %v676
      %v686 = vld [vmem:[%s605] sm:$0x1]
      %v688 = vperm.slane %v686, 0
      %v694 = vunpack.c.l.b16 %v678
      %v695 = vunpack.c.l.b16 %v679
      %v696 = vunpack.c.l.b16 %v680
      %v697 = vunpack.c.l.b16 %v681
      %v698 = vpack.c.b16 %v695, %v694
      %v699 = vpack.c.b16 %v697, %v696
      %vm702 = vcmask 261120
      %v704 = vsel %vm702, %v682, 0
      %v707 = vsel %vm702, %v683, 0
      %v710 = vsel %vm702, %v684, 0
      %v713 = vsel %vm702, %v685, 0
      %715 = vmatpush.bf16.msra.mxu0 0
      %716 = vmatpush.bf16.msra.mxu0 0
      %717 = vmatpush.bf16.msra.mxu0 0
      %718 = vmatpush.bf16.msra.mxu0 0
      %719 = vmatpush.bf16.msra.mxu0 0
      %720 = vmatpush.bf16.msra.mxu0 0
      %721 = vmatpush.bf16.msra.mxu0 %v699
      %722 = vmatpush.bf16.msra.mxu0 %v698
      %723 = vmatmul.bf16.gmra.mxu0 %v704
      %v724 = vpop.f32.mrf.mxu0
      %v725 = vadd.f32 %v688, %v724
      %v726 = vpop.f32.mrf.mxu0
      %v727 = vadd.f32 %v688, %v726
      %728 = vmatmul.bf16.gmra.mxu0 %v707
      %v729 = vpop.f32.mrf.mxu0
      %v730 = vadd.f32 %v688, %v729
      %v731 = vpop.f32.mrf.mxu0
      %v732 = vadd.f32 %v688, %v731
      %733 = vmatmul.bf16.gmra.mxu0 %v710
      %v734 = vpop.f32.mrf.mxu0
      %v735 = vadd.f32 %v688, %v734
      %v736 = vpop.f32.mrf.mxu0
      %v737 = vadd.f32 %v688, %v736
      %738 = vmatmul.bf16.gmra.mxu0 %v713
      %v739 = vpop.f32.mrf.mxu0
      %v740 = vadd.f32 %v688, %v739
      %v741 = vpop.f32.mrf.mxu0
      %v742 = vadd.f32 %v688, %v741
      %743 = vdwg.mxu0
      %v744 = vpack.c.bf16 %v725, %v725
      %v745 = vpack.c.bf16 %v727, %v727
      %v746 = vpack.c.bf16 %v730, %v730
      %v747 = vpack.c.bf16 %v732, %v732
      %v748 = vpack.c.bf16 %v735, %v735
      %v749 = vpack.c.bf16 %v737, %v737
      %v750 = vpack.c.bf16 %v740, %v740
      %v751 = vpack.c.bf16 %v742, %v742
      %v752 = vlaneseq
      %v753 = vand.u32 %v752, 127
      %vm754 = vcmp.ge.s32.totalorder %v753, 0
      %vm755 = vcmp.lt.s32.totalorder %v753, 8
      %vm756 = vmand %vm754, %vm755
      %v757 = vsel %vm756, 1, 0
      %v758 = vcvt.s32.f32 %v757
      %v759 = vpack.c.bf16 %v758, %v758
      %v760 = vunpack.c.l.bf16 %v744
      %v761 = vunpack.c.l.bf16 %v745
      %v762 = vunpack.c.l.bf16 %v746
      %v763 = vunpack.c.l.bf16 %v747
      %v764 = vunpack.c.l.bf16 %v748
      %v765 = vunpack.c.l.bf16 %v749
      %v766 = vunpack.c.l.bf16 %v750
      %v767 = vunpack.c.l.bf16 %v751
      %v768 = vunpack.c.l.bf16 %v759
      %v769 = vmul.f32 %v760, %v768
      %v770 = vmul.f32 %v761, %v768
      %v771 = vmul.f32 %v762, %v768
      %v772 = vmul.f32 %v763, %v768
      %v773 = vmul.f32 %v764, %v768
      %v774 = vmul.f32 %v765, %v768
      %v775 = vmul.f32 %v766, %v768
      %v776 = vmul.f32 %v767, %v768
      %v777 = vpack.c.bf16 %v769, %v769
      %v778 = vpack.c.bf16 %v770, %v770
      %v779 = vpack.c.bf16 %v771, %v771
      %v780 = vpack.c.bf16 %v772, %v772
      %v781 = vpack.c.bf16 %v773, %v773
      %v782 = vpack.c.bf16 %v774, %v774
      %v783 = vpack.c.bf16 %v775, %v775
      %v784 = vpack.c.bf16 %v776, %v776
      %v786 = vunpack.c.l.b16 %v744
      %v787 = vpack.c.b16 %v786, %v786
      %788 = vrot.lane.b32.xlu0 %v787, 96
      %v789 = vpop.permute.xlu0 %788
      %v791 = vsel %vm702, %v777, 0
      %v794 = vsel %vm702, %v789, 0
      %796 = vmatpush.bf16.xpose.msra.mxu0 0
      %797 = vmatpush.bf16.xpose.msra.mxu0 0
      %798 = vmatpush.bf16.xpose.msra.mxu0 0
      %799 = vmatpush.bf16.xpose.msra.mxu0 0
      %800 = vmatpush.bf16.xpose.msra.mxu0 0
      %801 = vmatpush.bf16.xpose.msra.mxu0 0
      %802 = vmatpush.bf16.xpose.msra.mxu0 0
      %803 = vmatpush.bf16.xpose.msra.mxu0 %v794
      %804 = vmatmul.bf16.gmra.mxu0 %v791
      %v805 = vpop.f32.mrf.mxu0
      %v806 = vadd.f32 0.0, %v805
      %v807 = vpop.f32.mrf.mxu0
      %808 = vdwg.mxu0
      %v810 = vunpack.c.l.b16 %v745
      %v811 = vpack.c.b16 %v810, %v810
      %812 = vrot.lane.b32.xlu0 %v811, 96
      %v813 = vpop.permute.xlu0 %812
      %v815 = vsel %vm702, %v778, 0
      %v818 = vsel %vm702, %v813, 0
      %820 = vmatpush.bf16.xpose.msra.mxu0 0
      %821 = vmatpush.bf16.xpose.msra.mxu0 0
      %822 = vmatpush.bf16.xpose.msra.mxu0 0
      %823 = vmatpush.bf16.xpose.msra.mxu0 0
      %824 = vmatpush.bf16.xpose.msra.mxu0 0
      %825 = vmatpush.bf16.xpose.msra.mxu0 0
      %826 = vmatpush.bf16.xpose.msra.mxu0 0
      %827 = vmatpush.bf16.xpose.msra.mxu0 %v818
      %828 = vmatmul.bf16.gmra.mxu0 %v815
      %v829 = vpop.f32.mrf.mxu0
      %v830 = vadd.f32 0.0, %v829
      %v831 = vpop.f32.mrf.mxu0
      %832 = vdwg.mxu0
      %v834 = vunpack.c.l.b16 %v746
      %v835 = vpack.c.b16 %v834, %v834
      %836 = vrot.lane.b32.xlu0 %v835, 96
      %v837 = vpop.permute.xlu0 %836
      %v839 = vsel %vm702, %v779, 0
      %v842 = vsel %vm702, %v837, 0
      %844 = vmatpush.bf16.xpose.msra.mxu0 0
      %845 = vmatpush.bf16.xpose.msra.mxu0 0
      %846 = vmatpush.bf16.xpose.msra.mxu0 0
      %847 = vmatpush.bf16.xpose.msra.mxu0 0
      %848 = vmatpush.bf16.xpose.msra.mxu0 0
      %849 = vmatpush.bf16.xpose.msra.mxu0 0
      %850 = vmatpush.bf16.xpose.msra.mxu0 0
      %851 = vmatpush.bf16.xpose.msra.mxu0 %v842
      %852 = vmatmul.bf16.gmra.mxu0 %v839
      %v853 = vpop.f32.mrf.mxu0
      %v854 = vadd.f32 0.0, %v853
      %v855 = vpop.f32.mrf.mxu0
      %856 = vdwg.mxu0
      %v858 = vunpack.c.l.b16 %v747
      %v859 = vpack.c.b16 %v858, %v858
      %860 = vrot.lane.b32.xlu0 %v859, 96
      %v861 = vpop.permute.xlu0 %860
      %v863 = vsel %vm702, %v780, 0
      %v866 = vsel %vm702, %v861, 0
      %868 = vmatpush.bf16.xpose.msra.mxu0 0
      %869 = vmatpush.bf16.xpose.msra.mxu0 0
      %870 = vmatpush.bf16.xpose.msra.mxu0 0
      %871 = vmatpush.bf16.xpose.msra.mxu0 0
      %872 = vmatpush.bf16.xpose.msra.mxu0 0
      %873 = vmatpush.bf16.xpose.msra.mxu0 0
      %874 = vmatpush.bf16.xpose.msra.mxu0 0
      %875 = vmatpush.bf16.xpose.msra.mxu0 %v866
      %876 = vmatmul.bf16.gmra.mxu0 %v863
      %v877 = vpop.f32.mrf.mxu0
      %v878 = vadd.f32 0.0, %v877
      %v879 = vpop.f32.mrf.mxu0
      %880 = vdwg.mxu0
      %v882 = vunpack.c.l.b16 %v748
      %v883 = vpack.c.b16 %v882, %v882
      %884 = vrot.lane.b32.xlu0 %v883, 96
      %v885 = vpop.permute.xlu0 %884
      %v887 = vsel %vm702, %v781, 0
      %v890 = vsel %vm702, %v885, 0
      %892 = vmatpush.bf16.xpose.msra.mxu0 0
      %893 = vmatpush.bf16.xpose.msra.mxu0 0
      %894 = vmatpush.bf16.xpose.msra.mxu0 0
      %895 = vmatpush.bf16.xpose.msra.mxu0 0
      %896 = vmatpush.bf16.xpose.msra.mxu0 0
      %897 = vmatpush.bf16.xpose.msra.mxu0 0
      %898 = vmatpush.bf16.xpose.msra.mxu0 0
      %899 = vmatpush.bf16.xpose.msra.mxu0 %v890
      %900 = vmatmul.bf16.gmra.mxu0 %v887
      %v901 = vpop.f32.mrf.mxu0
      %v902 = vadd.f32 0.0, %v901
      %v903 = vpop.f32.mrf.mxu0
      %904 = vdwg.mxu0
      %v906 = vunpack.c.l.b16 %v749
      %v907 = vpack.c.b16 %v906, %v906
      %908 = vrot.lane.b32.xlu0 %v907, 96
      %v909 = vpop.permute.xlu0 %908
      %v911 = vsel %vm702, %v782, 0
      %v914 = vsel %vm702, %v909, 0
      %916 = vmatpush.bf16.xpose.msra.mxu0 0
      %917 = vmatpush.bf16.xpose.msra.mxu0 0
      %918 = vmatpush.bf16.xpose.msra.mxu0 0
      %919 = vmatpush.bf16.xpose.msra.mxu0 0
      %920 = vmatpush.bf16.xpose.msra.mxu0 0
      %921 = vmatpush.bf16.xpose.msra.mxu0 0
      %922 = vmatpush.bf16.xpose.msra.mxu0 0
      %923 = vmatpush.bf16.xpose.msra.mxu0 %v914
      %924 = vmatmul.bf16.gmra.mxu0 %v911
      %v925 = vpop.f32.mrf.mxu0
      %v926 = vadd.f32 0.0, %v925
      %v927 = vpop.f32.mrf.mxu0
      %928 = vdwg.mxu0
      %v930 = vunpack.c.l.b16 %v750
      %v931 = vpack.c.b16 %v930, %v930
      %932 = vrot.lane.b32.xlu0 %v931, 96
      %v933 = vpop.permute.xlu0 %932
      %v935 = vsel %vm702, %v783, 0
      %v938 = vsel %vm702, %v933, 0
      %940 = vmatpush.bf16.xpose.msra.mxu0 0
      %941 = vmatpush.bf16.xpose.msra.mxu0 0
      %942 = vmatpush.bf16.xpose.msra.mxu0 0
      %943 = vmatpush.bf16.xpose.msra.mxu0 0
      %944 = vmatpush.bf16.xpose.msra.mxu0 0
      %945 = vmatpush.bf16.xpose.msra.mxu0 0
      %946 = vmatpush.bf16.xpose.msra.mxu0 0
      %947 = vmatpush.bf16.xpose.msra.mxu0 %v938
      %948 = vmatmul.bf16.gmra.mxu0 %v935
      %v949 = vpop.f32.mrf.mxu0
      %v950 = vadd.f32 0.0, %v949
      %v951 = vpop.f32.mrf.mxu0
      %952 = vdwg.mxu0
      %v954 = vunpack.c.l.b16 %v751
      %v955 = vpack.c.b16 %v954, %v954
      %956 = vrot.lane.b32.xlu0 %v955, 96
      %v957 = vpop.permute.xlu0 %956
      %v959 = vsel %vm702, %v784, 0
      %v962 = vsel %vm702, %v957, 0
      %964 = vmatpush.bf16.xpose.msra.mxu0 0
      %965 = vmatpush.bf16.xpose.msra.mxu0 0
      %966 = vmatpush.bf16.xpose.msra.mxu0 0
      %967 = vmatpush.bf16.xpose.msra.mxu0 0
      %968 = vmatpush.bf16.xpose.msra.mxu0 0
      %969 = vmatpush.bf16.xpose.msra.mxu0 0
      %970 = vmatpush.bf16.xpose.msra.mxu0 0
      %971 = vmatpush.bf16.xpose.msra.mxu0 %v962
      %972 = vmatmul.bf16.gmra.mxu0 %v959
      %v973 = vpop.f32.mrf.mxu0
      %v974 = vadd.f32 0.0, %v973
      %v975 = vpop.f32.mrf.mxu0
      %976 = vdwg.mxu0
      %v977 = vmul.f32 %v806, 0.35355338
      %v978 = vmul.f32 %v830, 0.35355338
      %v979 = vmul.f32 %v854, 0.35355338
      %v980 = vmul.f32 %v878, 0.35355338
      %v981 = vmul.f32 %v902, 0.35355338
      %v982 = vmul.f32 %v926, 0.35355338
      %v983 = vmul.f32 %v950, 0.35355338
      %v984 = vmul.f32 %v974, 0.35355338
      %vm985 = vcmask 64512
      %v986 = vsel %vm985, %v977, -inf
      %987 = vmax.xlane.f32.xlu0 %v986
      %v988 = vpop.xlane.xlu0 %987
      %v989 = vsel %vm985, %v978, -inf
      %990 = vmax.xlane.f32.xlu0 %v989
      %v991 = vpop.xlane.xlu0 %990
      %v992 = vsel %vm985, %v979, -inf
      %993 = vmax.xlane.f32.xlu0 %v992
      %v994 = vpop.xlane.xlu0 %993
      %v995 = vsel %vm985, %v980, -inf
      %996 = vmax.xlane.f32.xlu0 %v995
      %v997 = vpop.xlane.xlu0 %996
      %v998 = vsel %vm985, %v981, -inf
      %999 = vmax.xlane.f32.xlu0 %v998
      %v1000 = vpop.xlane.xlu0 %999
      %v1001 = vsel %vm985, %v982, -inf
      %1002 = vmax.xlane.f32.xlu0 %v1001
      %v1003 = vpop.xlane.xlu0 %1002
      %v1004 = vsel %vm985, %v983, -inf
      %1005 = vmax.xlane.f32.xlu0 %v1004
      %v1006 = vpop.xlane.xlu0 %1005
      %v1007 = vsel %vm985, %v984, -inf
      %1008 = vmax.xlane.f32.xlu0 %v1007
      %v1009 = vpop.xlane.xlu0 %1008
      %v1010 = vsub.f32 %v977, %v988
      %v1011 = vsub.f32 %v978, %v991
      %v1012 = vsub.f32 %v979, %v994
      %v1013 = vsub.f32 %v980, %v997
      %v1014 = vsub.f32 %v981, %v1000
      %v1015 = vsub.f32 %v982, %v1003
      %v1016 = vsub.f32 %v983, %v1006
      %v1017 = vsub.f32 %v984, %v1009
      %v1018 = vmul.f32 %v1010, 1.442695
      %v1019 = vpow.pop %v1018
      %v1020 = vmul.f32 %v1011, 1.442695
      %v1021 = vpow.pop %v1020
      %v1022 = vmul.f32 %v1012, 1.442695
      %v1023 = vpow.pop %v1022
      %v1024 = vmul.f32 %v1013, 1.442695
      %v1025 = vpow.pop %v1024
      %v1026 = vmul.f32 %v1014, 1.442695
      %v1027 = vpow.pop %v1026
      %v1028 = vmul.f32 %v1015, 1.442695
      %v1029 = vpow.pop %v1028
      %v1030 = vmul.f32 %v1016, 1.442695
      %v1031 = vpow.pop %v1030
      %v1032 = vmul.f32 %v1017, 1.442695
      %v1033 = vpow.pop %v1032
      %v1034 = vsel %vm985, %v1019, 0.0
      %1035 = vadd.xlane.f32.xlu0 %v1034
      %v1036 = vpop.xlane.xlu0 %1035
      %v1037 = vsel %vm985, %v1021, 0.0
      %1038 = vadd.xlane.f32.xlu0 %v1037
      %v1039 = vpop.xlane.xlu0 %1038
      %v1040 = vsel %vm985, %v1023, 0.0
      %1041 = vadd.xlane.f32.xlu0 %v1040
      %v1042 = vpop.xlane.xlu0 %1041
      %v1043 = vsel %vm985, %v1025, 0.0
      %1044 = vadd.xlane.f32.xlu0 %v1043
      %v1045 = vpop.xlane.xlu0 %1044
      %v1046 = vsel %vm985, %v1027, 0.0
      %1047 = vadd.xlane.f32.xlu0 %v1046
      %v1048 = vpop.xlane.xlu0 %1047
      %v1049 = vsel %vm985, %v1029, 0.0
      %1050 = vadd.xlane.f32.xlu0 %v1049
      %v1051 = vpop.xlane.xlu0 %1050
      %v1052 = vsel %vm985, %v1031, 0.0
      %1053 = vadd.xlane.f32.xlu0 %v1052
      %v1054 = vpop.xlane.xlu0 %1053
      %v1055 = vsel %vm985, %v1033, 0.0
      %1056 = vadd.xlane.f32.xlu0 %v1055
      %v1057 = vpop.xlane.xlu0 %1056
      %v1058 = vrcp.pop %v1036
      %v1059 = vrcp.pop %v1039
      %v1060 = vrcp.pop %v1042
      %v1061 = vrcp.pop %v1045
      %v1062 = vrcp.pop %v1048
      %v1063 = vrcp.pop %v1051
      %v1064 = vrcp.pop %v1054
      %v1065 = vrcp.pop %v1057
      %v1066 = vmul.f32 %v1019, %v1058
      %v1067 = vmul.f32 %v1021, %v1059
      %v1068 = vmul.f32 %v1023, %v1060
      %v1069 = vmul.f32 %v1025, %v1061
      %v1070 = vmul.f32 %v1027, %v1062
      %v1071 = vmul.f32 %v1029, %v1063
      %v1072 = vmul.f32 %v1031, %v1064
      %v1073 = vmul.f32 %v1033, %v1065
      %v1074 = vpack.c.bf16 %v1066, %v1066
      %v1075 = vpack.c.bf16 %v1067, %v1067
      %v1076 = vpack.c.bf16 %v1068, %v1068
      %v1077 = vpack.c.bf16 %v1069, %v1069
      %v1078 = vpack.c.bf16 %v1070, %v1070
      %v1079 = vpack.c.bf16 %v1071, %v1071
      %v1080 = vpack.c.bf16 %v1072, %v1072
      %v1081 = vpack.c.bf16 %v1073, %v1073
      %1083 = vrot.lane.b32.xlu0 %v768, 64
      %v1084 = vpop.permute.xlu0 %1083
      %v1086 = vmul.f32 %v760, %v1084
      %v1087 = vmul.f32 %v761, %v1084
      %v1088 = vmul.f32 %v762, %v1084
      %v1089 = vmul.f32 %v763, %v1084
      %v1090 = vmul.f32 %v764, %v1084
      %v1091 = vmul.f32 %v765, %v1084
      %v1092 = vmul.f32 %v766, %v1084
      %v1093 = vmul.f32 %v767, %v1084
      %v1094 = vpack.c.bf16 %v1086, %v1086
      %v1095 = vpack.c.bf16 %v1087, %v1087
      %v1096 = vpack.c.bf16 %v1088, %v1088
      %v1097 = vpack.c.bf16 %v1089, %v1089
      %v1098 = vpack.c.bf16 %v1090, %v1090
      %v1099 = vpack.c.bf16 %v1091, %v1091
      %v1100 = vpack.c.bf16 %v1092, %v1092
      %v1101 = vpack.c.bf16 %v1093, %v1093
      %vm1102 = vcmp.ge.s32.totalorder %v753, 8
      %vm1103 = vcmp.lt.s32.totalorder %v753, 16
      %vm1104 = vmand %vm1102, %vm1103
      %v1105 = vsel %vm1104, 1, 0
      %v1106 = vcvt.s32.f32 %v1105
      %v1107 = vpack.c.bf16 %v1106, %v1106
      %v1108 = vunpack.c.l.bf16 %v1107
      %v1109 = vmul.f32 %v760, %v1108
      %v1110 = vmul.f32 %v761, %v1108
      %v1111 = vmul.f32 %v762, %v1108
      %v1112 = vmul.f32 %v763, %v1108
      %v1113 = vmul.f32 %v764, %v1108
      %v1114 = vmul.f32 %v765, %v1108
      %v1115 = vmul.f32 %v766, %v1108
      %v1116 = vmul.f32 %v767, %v1108
      %v1117 = vpack.c.bf16 %v1109, %v1109
      %v1118 = vpack.c.bf16 %v1110, %v1110
      %v1119 = vpack.c.bf16 %v1111, %v1111
      %v1120 = vpack.c.bf16 %v1112, %v1112
      %v1121 = vpack.c.bf16 %v1113, %v1113
      %v1122 = vpack.c.bf16 %v1114, %v1114
      %v1123 = vpack.c.bf16 %v1115, %v1115
      %v1124 = vpack.c.bf16 %v1116, %v1116
      %v1126 = vsel %vm702, %v1117, 0
      %1128 = vmatpush.bf16.xpose.msra.mxu0 0
      %1129 = vmatpush.bf16.xpose.msra.mxu0 0
      %1130 = vmatpush.bf16.xpose.msra.mxu0 0
      %1131 = vmatpush.bf16.xpose.msra.mxu0 0
      %1132 = vmatpush.bf16.xpose.msra.mxu0 0
      %1133 = vmatpush.bf16.xpose.msra.mxu0 0
      %1134 = vmatpush.bf16.xpose.msra.mxu0 0
      %1135 = vmatpush.bf16.xpose.msra.mxu0 %v794
      %1136 = vmatmul.bf16.gmra.mxu0 %v1126
      %v1137 = vpop.f32.mrf.mxu0
      %v1138 = vadd.f32 0.0, %v1137
      %v1139 = vpop.f32.mrf.mxu0
      %1140 = vdwg.mxu0
      %v1142 = vsel %vm702, %v1118, 0
      %1144 = vmatpush.bf16.xpose.msra.mxu0 0
      %1145 = vmatpush.bf16.xpose.msra.mxu0 0
      %1146 = vmatpush.bf16.xpose.msra.mxu0 0
      %1147 = vmatpush.bf16.xpose.msra.mxu0 0
      %1148 = vmatpush.bf16.xpose.msra.mxu0 0
      %1149 = vmatpush.bf16.xpose.msra.mxu0 0
      %1150 = vmatpush.bf16.xpose.msra.mxu0 0
      %1151 = vmatpush.bf16.xpose.msra.mxu0 %v818
      %1152 = vmatmul.bf16.gmra.mxu0 %v1142
      %v1153 = vpop.f32.mrf.mxu0
      %v1154 = vadd.f32 0.0, %v1153
      %v1155 = vpop.f32.mrf.mxu0
      %1156 = vdwg.mxu0
      %v1158 = vsel %vm702, %v1119, 0
      %1160 = vmatpush.bf16.xpose.msra.mxu0 0
      %1161 = vmatpush.bf16.xpose.msra.mxu0 0
      %1162 = vmatpush.bf16.xpose.msra.mxu0 0
      %1163 = vmatpush.bf16.xpose.msra.mxu0 0
      %1164 = vmatpush.bf16.xpose.msra.mxu0 0
      %1165 = vmatpush.bf16.xpose.msra.mxu0 0
      %1166 = vmatpush.bf16.xpose.msra.mxu0 0
      %1167 = vmatpush.bf16.xpose.msra.mxu0 %v842
      %1168 = vmatmul.bf16.gmra.mxu0 %v1158
      %v1169 = vpop.f32.mrf.mxu0
      %v1170 = vadd.f32 0.0, %v1169
      %v1171 = vpop.f32.mrf.mxu0
      %1172 = vdwg.mxu0
      %v1174 = vsel %vm702, %v1120, 0
      %1176 = vmatpush.bf16.xpose.msra.mxu0 0
      %1177 = vmatpush.bf16.xpose.msra.mxu0 0
      %1178 = vmatpush.bf16.xpose.msra.mxu0 0
      %1179 = vmatpush.bf16.xpose.msra.mxu0 0
      %1180 = vmatpush.bf16.xpose.msra.mxu0 0
      %1181 = vmatpush.bf16.xpose.msra.mxu0 0
      %1182 = vmatpush.bf16.xpose.msra.mxu0 0
      %1183 = vmatpush.bf16.xpose.msra.mxu0 %v866
      %1184 = vmatmul.bf16.gmra.mxu0 %v1174
      %v1185 = vpop.f32.mrf.mxu0
      %v1186 = vadd.f32 0.0, %v1185
      %v1187 = vpop.f32.mrf.mxu0
      %1188 = vdwg.mxu0
      %v1190 = vsel %vm702, %v1121, 0
      %1192 = vmatpush.bf16.xpose.msra.mxu0 0
      %1193 = vmatpush.bf16.xpose.msra.mxu0 0
      %1194 = vmatpush.bf16.xpose.msra.mxu0 0
      %1195 = vmatpush.bf16.xpose.msra.mxu0 0
      %1196 = vmatpush.bf16.xpose.msra.mxu0 0
      %1197 = vmatpush.bf16.xpose.msra.mxu0 0
      %1198 = vmatpush.bf16.xpose.msra.mxu0 0
      %1199 = vmatpush.bf16.xpose.msra.mxu0 %v890
      %1200 = vmatmul.bf16.gmra.mxu0 %v1190
      %v1201 = vpop.f32.mrf.mxu0
      %v1202 = vadd.f32 0.0, %v1201
      %v1203 = vpop.f32.mrf.mxu0
      %1204 = vdwg.mxu0
      %v1206 = vsel %vm702, %v1122, 0
      %1208 = vmatpush.bf16.xpose.msra.mxu0 0
      %1209 = vmatpush.bf16.xpose.msra.mxu0 0
      %1210 = vmatpush.bf16.xpose.msra.mxu0 0
      %1211 = vmatpush.bf16.xpose.msra.mxu0 0
      %1212 = vmatpush.bf16.xpose.msra.mxu0 0
      %1213 = vmatpush.bf16.xpose.msra.mxu0 0
      %1214 = vmatpush.bf16.xpose.msra.mxu0 0
      %1215 = vmatpush.bf16.xpose.msra.mxu0 %v914
      %1216 = vmatmul.bf16.gmra.mxu0 %v1206
      %v1217 = vpop.f32.mrf.mxu0
      %v1218 = vadd.f32 0.0, %v1217
      %v1219 = vpop.f32.mrf.mxu0
      %1220 = vdwg.mxu0
      %v1222 = vsel %vm702, %v1123, 0
      %1224 = vmatpush.bf16.xpose.msra.mxu0 0
      %1225 = vmatpush.bf16.xpose.msra.mxu0 0
      %1226 = vmatpush.bf16.xpose.msra.mxu0 0
      %1227 = vmatpush.bf16.xpose.msra.mxu0 0
      %1228 = vmatpush.bf16.xpose.msra.mxu0 0
      %1229 = vmatpush.bf16.xpose.msra.mxu0 0
      %1230 = vmatpush.bf16.xpose.msra.mxu0 0
      %1231 = vmatpush.bf16.xpose.msra.mxu0 %v938
      %1232 = vmatmul.bf16.gmra.mxu0 %v1222
      %v1233 = vpop.f32.mrf.mxu0
      %v1234 = vadd.f32 0.0, %v1233
      %v1235 = vpop.f32.mrf.mxu0
      %1236 = vdwg.mxu0
      %v1238 = vsel %vm702, %v1124, 0
      %1240 = vmatpush.bf16.xpose.msra.mxu0 0
      %1241 = vmatpush.bf16.xpose.msra.mxu0 0
      %1242 = vmatpush.bf16.xpose.msra.mxu0 0
      %1243 = vmatpush.bf16.xpose.msra.mxu0 0
      %1244 = vmatpush.bf16.xpose.msra.mxu0 0
      %1245 = vmatpush.bf16.xpose.msra.mxu0 0
      %1246 = vmatpush.bf16.xpose.msra.mxu0 0
      %1247 = vmatpush.bf16.xpose.msra.mxu0 %v962
      %1248 = vmatmul.bf16.gmra.mxu0 %v1238
      %v1249 = vpop.f32.mrf.mxu0
      %v1250 = vadd.f32 0.0, %v1249
      %v1251 = vpop.f32.mrf.mxu0
      %1252 = vdwg.mxu0
      %v1253 = vmul.f32 %v1138, 0.35355338
      %v1254 = vmul.f32 %v1154, 0.35355338
      %v1255 = vmul.f32 %v1170, 0.35355338
      %v1256 = vmul.f32 %v1186, 0.35355338
      %v1257 = vmul.f32 %v1202, 0.35355338
      %v1258 = vmul.f32 %v1218, 0.35355338
      %v1259 = vmul.f32 %v1234, 0.35355338
      %v1260 = vmul.f32 %v1250, 0.35355338
      %v1261 = vsel %vm985, %v1253, -inf
      %1262 = vmax.xlane.f32.xlu0 %v1261
      %v1263 = vpop.xlane.xlu0 %1262
      %v1264 = vsel %vm985, %v1254, -inf
      %1265 = vmax.xlane.f32.xlu0 %v1264
      %v1266 = vpop.xlane.xlu0 %1265
      %v1267 = vsel %vm985, %v1255, -inf
      %1268 = vmax.xlane.f32.xlu0 %v1267
      %v1269 = vpop.xlane.xlu0 %1268
      %v1270 = vsel %vm985, %v1256, -inf
      %1271 = vmax.xlane.f32.xlu0 %v1270
      %v1272 = vpop.xlane.xlu0 %1271
      %v1273 = vsel %vm985, %v1257, -inf
      %1274 = vmax.xlane.f32.xlu0 %v1273
      %v1275 = vpop.xlane.xlu0 %1274
      %v1276 = vsel %vm985, %v1258, -inf
      %1277 = vmax.xlane.f32.xlu0 %v1276
      %v1278 = vpop.xlane.xlu0 %1277
      %v1279 = vsel %vm985, %v1259, -inf
      %1280 = vmax.xlane.f32.xlu0 %v1279
      %v1281 = vpop.xlane.xlu0 %1280
      %v1282 = vsel %vm985, %v1260, -inf
      %1283 = vmax.xlane.f32.xlu0 %v1282
      %v1284 = vpop.xlane.xlu0 %1283
      %v1285 = vsub.f32 %v1253, %v1263
      %v1286 = vsub.f32 %v1254, %v1266
      %v1287 = vsub.f32 %v1255, %v1269
      %v1288 = vsub.f32 %v1256, %v1272
      %v1289 = vsub.f32 %v1257, %v1275
      %v1290 = vsub.f32 %v1258, %v1278
      %v1291 = vsub.f32 %v1259, %v1281
      %v1292 = vsub.f32 %v1260, %v1284
      %v1293 = vmul.f32 %v1285, 1.442695
      %v1294 = vpow.pop %v1293
      %v1295 = vmul.f32 %v1286, 1.442695
      %v1296 = vpow.pop %v1295
      %v1297 = vmul.f32 %v1287, 1.442695
      %v1298 = vpow.pop %v1297
      %v1299 = vmul.f32 %v1288, 1.442695
      %v1300 = vpow.pop %v1299
      %v1301 = vmul.f32 %v1289, 1.442695
      %v1302 = vpow.pop %v1301
      %v1303 = vmul.f32 %v1290, 1.442695
      %v1304 = vpow.pop %v1303
      %v1305 = vmul.f32 %v1291, 1.442695
      %v1306 = vpow.pop %v1305
      %v1307 = vmul.f32 %v1292, 1.442695
      %v1308 = vpow.pop %v1307
      %v1309 = vsel %vm985, %v1294, 0.0
      %1310 = vadd.xlane.f32.xlu0 %v1309
      %v1311 = vpop.xlane.xlu0 %1310
      %v1312 = vsel %vm985, %v1296, 0.0
      %1313 = vadd.xlane.f32.xlu0 %v1312
      %v1314 = vpop.xlane.xlu0 %1313
      %v1315 = vsel %vm985, %v1298, 0.0
      %1316 = vadd.xlane.f32.xlu0 %v1315
      %v1317 = vpop.xlane.xlu0 %1316
      %v1318 = vsel %vm985, %v1300, 0.0
      %1319 = vadd.xlane.f32.xlu0 %v1318
      %v1320 = vpop.xlane.xlu0 %1319
      %v1321 = vsel %vm985, %v1302, 0.0
      %1322 = vadd.xlane.f32.xlu0 %v1321
      %v1323 = vpop.xlane.xlu0 %1322
      %v1324 = vsel %vm985, %v1304, 0.0
      %1325 = vadd.xlane.f32.xlu0 %v1324
      %v1326 = vpop.xlane.xlu0 %1325
      %v1327 = vsel %vm985, %v1306, 0.0
      %1328 = vadd.xlane.f32.xlu0 %v1327
      %v1329 = vpop.xlane.xlu0 %1328
      %v1330 = vsel %vm985, %v1308, 0.0
      %1331 = vadd.xlane.f32.xlu0 %v1330
      %v1332 = vpop.xlane.xlu0 %1331
      %v1333 = vrcp.pop %v1311
      %v1334 = vrcp.pop %v1314
      %v1335 = vrcp.pop %v1317
      %v1336 = vrcp.pop %v1320
      %v1337 = vrcp.pop %v1323
      %v1338 = vrcp.pop %v1326
      %v1339 = vrcp.pop %v1329
      %v1340 = vrcp.pop %v1332
      %v1341 = vmul.f32 %v1294, %v1333
      %v1342 = vmul.f32 %v1296, %v1334
      %v1343 = vmul.f32 %v1298, %v1335
      %v1344 = vmul.f32 %v1300, %v1336
      %v1345 = vmul.f32 %v1302, %v1337
      %v1346 = vmul.f32 %v1304, %v1338
      %v1347 = vmul.f32 %v1306, %v1339
      %v1348 = vmul.f32 %v1308, %v1340
      %v1349 = vpack.c.bf16 %v1341, %v1341
      %v1350 = vpack.c.bf16 %v1342, %v1342
      %v1351 = vpack.c.bf16 %v1343, %v1343
      %v1352 = vpack.c.bf16 %v1344, %v1344
      %v1353 = vpack.c.bf16 %v1345, %v1345
      %v1354 = vpack.c.bf16 %v1346, %v1346
      %v1355 = vpack.c.bf16 %v1347, %v1347
      %v1356 = vpack.c.bf16 %v1348, %v1348
      %1358 = vrot.lane.b32.xlu0 %v1108, 64
      %v1359 = vpop.permute.xlu0 %1358
      %v1361 = vmul.f32 %v760, %v1359
      %v1362 = vmul.f32 %v761, %v1359
      %v1363 = vmul.f32 %v762, %v1359
      %v1364 = vmul.f32 %v763, %v1359
      %v1365 = vmul.f32 %v764, %v1359
      %v1366 = vmul.f32 %v765, %v1359
      %v1367 = vmul.f32 %v766, %v1359
      %v1368 = vmul.f32 %v767, %v1359
      %v1369 = vpack.c.bf16 %v1361, %v1361
      %v1370 = vpack.c.bf16 %v1362, %v1362
      %v1371 = vpack.c.bf16 %v1363, %v1363
      %v1372 = vpack.c.bf16 %v1364, %v1364
      %v1373 = vpack.c.bf16 %v1365, %v1365
      %v1374 = vpack.c.bf16 %v1366, %v1366
      %v1375 = vpack.c.bf16 %v1367, %v1367
      %v1376 = vpack.c.bf16 %v1368, %v1368
      %v1378 = vunpack.c.l.b16 %v1369
      %v1379 = vpack.c.b16 %v1378, %v1378
      %1380 = vrot.lane.b32.xlu0 %v1379, 64
      %v1381 = vpop.permute.xlu0 %1380
      %v1383 = vsel %vm985, %v1349, 0
      %vm1385 = vcmask 1043456
      %v1387 = vsel %vm1385, %v1381, 0
      %1389 = vmatpush.bf16.msra.mxu0 0
      %1390 = vmatpush.bf16.msra.mxu0 0
      %1391 = vmatpush.bf16.msra.mxu0 0
      %1392 = vmatpush.bf16.msra.mxu0 0
      %1393 = vmatpush.bf16.msra.mxu0 0
      %1394 = vmatpush.bf16.msra.mxu0 0
      %1395 = vmatpush.bf16.msra.mxu0 0
      %1396 = vmatpush.bf16.msra.mxu0 %v1387
      %1397 = vmatmul.bf16.gmra.mxu0 %v1383
      %v1398 = vpop.f32.mrf.mxu0
      %v1399 = vadd.f32 0.0, %v1398
      %v1400 = vpop.f32.mrf.mxu0
      %1401 = vdwg.mxu0
      %v1403 = vunpack.c.l.b16 %v1370
      %v1404 = vpack.c.b16 %v1403, %v1403
      %1405 = vrot.lane.b32.xlu0 %v1404, 64
      %v1406 = vpop.permute.xlu0 %1405
      %v1408 = vsel %vm985, %v1350, 0
      %v1411 = vsel %vm1385, %v1406, 0
      %1413 = vmatpush.bf16.msra.mxu0 0
      %1414 = vmatpush.bf16.msra.mxu0 0
      %1415 = vmatpush.bf16.msra.mxu0 0
      %1416 = vmatpush.bf16.msra.mxu0 0
      %1417 = vmatpush.bf16.msra.mxu0 0
      %1418 = vmatpush.bf16.msra.mxu0 0
      %1419 = vmatpush.bf16.msra.mxu0 0
      %1420 = vmatpush.bf16.msra.mxu0 %v1411
      %1421 = vmatmul.bf16.gmra.mxu0 %v1408
      %v1422 = vpop.f32.mrf.mxu0
      %v1423 = vadd.f32 0.0, %v1422
      %v1424 = vpop.f32.mrf.mxu0
      %1425 = vdwg.mxu0
      %v1427 = vunpack.c.l.b16 %v1371
      %v1428 = vpack.c.b16 %v1427, %v1427
      %1429 = vrot.lane.b32.xlu0 %v1428, 64
      %v1430 = vpop.permute.xlu0 %1429
      %v1432 = vsel %vm985, %v1351, 0
      %v1435 = vsel %vm1385, %v1430, 0
      %1437 = vmatpush.bf16.msra.mxu0 0
      %1438 = vmatpush.bf16.msra.mxu0 0
      %1439 = vmatpush.bf16.msra.mxu0 0
      %1440 = vmatpush.bf16.msra.mxu0 0
      %1441 = vmatpush.bf16.msra.mxu0 0
      %1442 = vmatpush.bf16.msra.mxu0 0
      %1443 = vmatpush.bf16.msra.mxu0 0
      %1444 = vmatpush.bf16.msra.mxu0 %v1435
      %1445 = vmatmul.bf16.gmra.mxu0 %v1432
      %v1446 = vpop.f32.mrf.mxu0
      %v1447 = vadd.f32 0.0, %v1446
      %v1448 = vpop.f32.mrf.mxu0
      %1449 = vdwg.mxu0
      %v1451 = vunpack.c.l.b16 %v1372
      %v1452 = vpack.c.b16 %v1451, %v1451
      %1453 = vrot.lane.b32.xlu0 %v1452, 64
      %v1454 = vpop.permute.xlu0 %1453
      %v1456 = vsel %vm985, %v1352, 0
      %v1459 = vsel %vm1385, %v1454, 0
      %1461 = vmatpush.bf16.msra.mxu0 0
      %1462 = vmatpush.bf16.msra.mxu0 0
      %1463 = vmatpush.bf16.msra.mxu0 0
      %1464 = vmatpush.bf16.msra.mxu0 0
      %1465 = vmatpush.bf16.msra.mxu0 0
      %1466 = vmatpush.bf16.msra.mxu0 0
      %1467 = vmatpush.bf16.msra.mxu0 0
      %1468 = vmatpush.bf16.msra.mxu0 %v1459
      %1469 = vmatmul.bf16.gmra.mxu0 %v1456
      %v1470 = vpop.f32.mrf.mxu0
      %v1471 = vadd.f32 0.0, %v1470
      %v1472 = vpop.f32.mrf.mxu0
      %1473 = vdwg.mxu0
      %v1475 = vunpack.c.l.b16 %v1373
      %v1476 = vpack.c.b16 %v1475, %v1475
      %1477 = vrot.lane.b32.xlu0 %v1476, 64
      %v1478 = vpop.permute.xlu0 %1477
      %v1480 = vsel %vm985, %v1353, 0
      %v1483 = vsel %vm1385, %v1478, 0
      %1485 = vmatpush.bf16.msra.mxu0 0
      %1486 = vmatpush.bf16.msra.mxu0 0
      %1487 = vmatpush.bf16.msra.mxu0 0
      %1488 = vmatpush.bf16.msra.mxu0 0
      %1489 = vmatpush.bf16.msra.mxu0 0
      %1490 = vmatpush.bf16.msra.mxu0 0
      %1491 = vmatpush.bf16.msra.mxu0 0
      %1492 = vmatpush.bf16.msra.mxu0 %v1483
      %1493 = vmatmul.bf16.gmra.mxu0 %v1480
      %v1494 = vpop.f32.mrf.mxu0
      %v1495 = vadd.f32 0.0, %v1494
      %v1496 = vpop.f32.mrf.mxu0
      %1497 = vdwg.mxu0
      %v1499 = vunpack.c.l.b16 %v1374
      %v1500 = vpack.c.b16 %v1499, %v1499
      %1501 = vrot.lane.b32.xlu0 %v1500, 64
      %v1502 = vpop.permute.xlu0 %1501
      %v1504 = vsel %vm985, %v1354, 0
      %v1507 = vsel %vm1385, %v1502, 0
      %1509 = vmatpush.bf16.msra.mxu0 0
      %1510 = vmatpush.bf16.msra.mxu0 0
      %1511 = vmatpush.bf16.msra.mxu0 0
      %1512 = vmatpush.bf16.msra.mxu0 0
      %1513 = vmatpush.bf16.msra.mxu0 0
      %1514 = vmatpush.bf16.msra.mxu0 0
      %1515 = vmatpush.bf16.msra.mxu0 0
      %1516 = vmatpush.bf16.msra.mxu0 %v1507
      %1517 = vmatmul.bf16.gmra.mxu0 %v1504
      %v1518 = vpop.f32.mrf.mxu0
      %v1519 = vadd.f32 0.0, %v1518
      %v1520 = vpop.f32.mrf.mxu0
      %1521 = vdwg.mxu0
      %v1523 = vunpack.c.l.b16 %v1375
      %v1524 = vpack.c.b16 %v1523, %v1523
      %1525 = vrot.lane.b32.xlu0 %v1524, 64
      %v1526 = vpop.permute.xlu0 %1525
      %v1528 = vsel %vm985, %v1355, 0
      %v1531 = vsel %vm1385, %v1526, 0
      %1533 = vmatpush.bf16.msra.mxu0 0
      %1534 = vmatpush.bf16.msra.mxu0 0
      %1535 = vmatpush.bf16.msra.mxu0 0
      %1536 = vmatpush.bf16.msra.mxu0 0
      %1537 = vmatpush.bf16.msra.mxu0 0
      %1538 = vmatpush.bf16.msra.mxu0 0
      %1539 = vmatpush.bf16.msra.mxu0 0
      %1540 = vmatpush.bf16.msra.mxu0 %v1531
      %1541 = vmatmul.bf16.gmra.mxu0 %v1528
      %v1542 = vpop.f32.mrf.mxu0
      %v1543 = vadd.f32 0.0, %v1542
      %v1544 = vpop.f32.mrf.mxu0
      %1545 = vdwg.mxu0
      %v1547 = vunpack.c.l.b16 %v1376
      %v1548 = vpack.c.b16 %v1547, %v1547
      %1549 = vrot.lane.b32.xlu0 %v1548, 64
      %v1550 = vpop.permute.xlu0 %1549
      %v1552 = vsel %vm985, %v1356, 0
      %v1555 = vsel %vm1385, %v1550, 0
      %1557 = vmatpush.bf16.msra.mxu0 0
      %1558 = vmatpush.bf16.msra.mxu0 0
      %1559 = vmatpush.bf16.msra.mxu0 0
      %1560 = vmatpush.bf16.msra.mxu0 0
      %1561 = vmatpush.bf16.msra.mxu0 0
      %1562 = vmatpush.bf16.msra.mxu0 0
      %1563 = vmatpush.bf16.msra.mxu0 0
      %1564 = vmatpush.bf16.msra.mxu0 %v1555
      %1565 = vmatmul.bf16.gmra.mxu0 %v1552
      %v1566 = vpop.f32.mrf.mxu0
      %v1567 = vadd.f32 0.0, %v1566
      %v1568 = vpop.f32.mrf.mxu0
      %1569 = vdwg.mxu0
      %v1571 = vunpack.c.l.b16 %v1094
      %v1572 = vpack.c.b16 %v1571, %v1571
      %1573 = vrot.lane.b32.xlu0 %v1572, 64
      %v1574 = vpop.permute.xlu0 %1573
      %v1576 = vsel %vm985, %v1074, 0
      %v1579 = vsel %vm1385, %v1574, 0
      %1581 = vmatpush.bf16.msra.mxu0 0
      %1582 = vmatpush.bf16.msra.mxu0 0
      %1583 = vmatpush.bf16.msra.mxu0 0
      %1584 = vmatpush.bf16.msra.mxu0 0
      %1585 = vmatpush.bf16.msra.mxu0 0
      %1586 = vmatpush.bf16.msra.mxu0 0
      %1587 = vmatpush.bf16.msra.mxu0 0
      %1588 = vmatpush.bf16.msra.mxu0 %v1579
      %1589 = vmatmul.bf16.gmra.mxu0 %v1576
      %v1590 = vpop.f32.mrf.mxu0
      %v1591 = vadd.f32 %v1399, %v1590
      %v1592 = vpop.f32.mrf.mxu0
      %1593 = vdwg.mxu0
      %v1595 = vunpack.c.l.b16 %v1095
      %v1596 = vpack.c.b16 %v1595, %v1595
      %1597 = vrot.lane.b32.xlu0 %v1596, 64
      %v1598 = vpop.permute.xlu0 %1597
      %v1600 = vsel %vm985, %v1075, 0
      %v1603 = vsel %vm1385, %v1598, 0
      %1605 = vmatpush.bf16.msra.mxu0 0
      %1606 = vmatpush.bf16.msra.mxu0 0
      %1607 = vmatpush.bf16.msra.mxu0 0
      %1608 = vmatpush.bf16.msra.mxu0 0
      %1609 = vmatpush.bf16.msra.mxu0 0
      %1610 = vmatpush.bf16.msra.mxu0 0
      %1611 = vmatpush.bf16.msra.mxu0 0
      %1612 = vmatpush.bf16.msra.mxu0 %v1603
      %1613 = vmatmul.bf16.gmra.mxu0 %v1600
      %v1614 = vpop.f32.mrf.mxu0
      %v1615 = vadd.f32 %v1423, %v1614
      %v1616 = vpop.f32.mrf.mxu0
      %1617 = vdwg.mxu0
      %v1619 = vunpack.c.l.b16 %v1096
      %v1620 = vpack.c.b16 %v1619, %v1619
      %1621 = vrot.lane.b32.xlu0 %v1620, 64
      %v1622 = vpop.permute.xlu0 %1621
      %v1624 = vsel %vm985, %v1076, 0
      %v1627 = vsel %vm1385, %v1622, 0
      %1629 = vmatpush.bf16.msra.mxu0 0
      %1630 = vmatpush.bf16.msra.mxu0 0
      %1631 = vmatpush.bf16.msra.mxu0 0
      %1632 = vmatpush.bf16.msra.mxu0 0
      %1633 = vmatpush.bf16.msra.mxu0 0
      %1634 = vmatpush.bf16.msra.mxu0 0
      %1635 = vmatpush.bf16.msra.mxu0 0
      %1636 = vmatpush.bf16.msra.mxu0 %v1627
      %1637 = vmatmul.bf16.gmra.mxu0 %v1624
      %v1638 = vpop.f32.mrf.mxu0
      %v1639 = vadd.f32 %v1447, %v1638
      %v1640 = vpop.f32.mrf.mxu0
      %1641 = vdwg.mxu0
      %v1643 = vunpack.c.l.b16 %v1097
      %v1644 = vpack.c.b16 %v1643, %v1643
      %1645 = vrot.lane.b32.xlu0 %v1644, 64
      %v1646 = vpop.permute.xlu0 %1645
      %v1648 = vsel %vm985, %v1077, 0
      %v1651 = vsel %vm1385, %v1646, 0
      %1653 = vmatpush.bf16.msra.mxu0 0
      %1654 = vmatpush.bf16.msra.mxu0 0
      %1655 = vmatpush.bf16.msra.mxu0 0
      %1656 = vmatpush.bf16.msra.mxu0 0
      %1657 = vmatpush.bf16.msra.mxu0 0
      %1658 = vmatpush.bf16.msra.mxu0 0
      %1659 = vmatpush.bf16.msra.mxu0 0
      %1660 = vmatpush.bf16.msra.mxu0 %v1651
      %1661 = vmatmul.bf16.gmra.mxu0 %v1648
      %v1662 = vpop.f32.mrf.mxu0
      %v1663 = vadd.f32 %v1471, %v1662
      %v1664 = vpop.f32.mrf.mxu0
      %1665 = vdwg.mxu0
      %v1667 = vunpack.c.l.b16 %v1098
      %v1668 = vpack.c.b16 %v1667, %v1667
      %1669 = vrot.lane.b32.xlu0 %v1668, 64
      %v1670 = vpop.permute.xlu0 %1669
      %v1672 = vsel %vm985, %v1078, 0
      %v1675 = vsel %vm1385, %v1670, 0
      %1677 = vmatpush.bf16.msra.mxu0 0
      %1678 = vmatpush.bf16.msra.mxu0 0
      %1679 = vmatpush.bf16.msra.mxu0 0
      %1680 = vmatpush.bf16.msra.mxu0 0
      %1681 = vmatpush.bf16.msra.mxu0 0
      %1682 = vmatpush.bf16.msra.mxu0 0
      %1683 = vmatpush.bf16.msra.mxu0 0
      %1684 = vmatpush.bf16.msra.mxu0 %v1675
      %1685 = vmatmul.bf16.gmra.mxu0 %v1672
      %v1686 = vpop.f32.mrf.mxu0
      %v1687 = vadd.f32 %v1495, %v1686
      %v1688 = vpop.f32.mrf.mxu0
      %1689 = vdwg.mxu0
      %v1691 = vunpack.c.l.b16 %v1099
      %v1692 = vpack.c.b16 %v1691, %v1691
      %1693 = vrot.lane.b32.xlu0 %v1692, 64
      %v1694 = vpop.permute.xlu0 %1693
      %v1696 = vsel %vm985, %v1079, 0
      %v1699 = vsel %vm1385, %v1694, 0
      %1701 = vmatpush.bf16.msra.mxu0 0
      %1702 = vmatpush.bf16.msra.mxu0 0
      %1703 = vmatpush.bf16.msra.mxu0 0
      %1704 = vmatpush.bf16.msra.mxu0 0
      %1705 = vmatpush.bf16.msra.mxu0 0
      %1706 = vmatpush.bf16.msra.mxu0 0
      %1707 = vmatpush.bf16.msra.mxu0 0
      %1708 = vmatpush.bf16.msra.mxu0 %v1699
      %1709 = vmatmul.bf16.gmra.mxu0 %v1696
      %v1710 = vpop.f32.mrf.mxu0
      %v1711 = vadd.f32 %v1519, %v1710
      %v1712 = vpop.f32.mrf.mxu0
      %1713 = vdwg.mxu0
      %v1715 = vunpack.c.l.b16 %v1100
      %v1716 = vpack.c.b16 %v1715, %v1715
      %1717 = vrot.lane.b32.xlu0 %v1716, 64
      %v1718 = vpop.permute.xlu0 %1717
      %v1720 = vsel %vm985, %v1080, 0
      %v1723 = vsel %vm1385, %v1718, 0
      %1725 = vmatpush.bf16.msra.mxu0 0
      %1726 = vmatpush.bf16.msra.mxu0 0
      %1727 = vmatpush.bf16.msra.mxu0 0
      %1728 = vmatpush.bf16.msra.mxu0 0
      %1729 = vmatpush.bf16.msra.mxu0 0
      %1730 = vmatpush.bf16.msra.mxu0 0
      %1731 = vmatpush.bf16.msra.mxu0 0
      %1732 = vmatpush.bf16.msra.mxu0 %v1723
      %1733 = vmatmul.bf16.gmra.mxu0 %v1720
      %v1734 = vpop.f32.mrf.mxu0
      %v1735 = vadd.f32 %v1543, %v1734
      %v1736 = vpop.f32.mrf.mxu0
      %1737 = vdwg.mxu0
      %v1739 = vunpack.c.l.b16 %v1101
      %v1740 = vpack.c.b16 %v1739, %v1739
      %1741 = vrot.lane.b32.xlu0 %v1740, 64
      %v1742 = vpop.permute.xlu0 %1741
      %v1744 = vsel %vm985, %v1081, 0
      %v1747 = vsel %vm1385, %v1742, 0
      %1749 = vmatpush.bf16.msra.mxu0 0
      %1750 = vmatpush.bf16.msra.mxu0 0
      %1751 = vmatpush.bf16.msra.mxu0 0
      %1752 = vmatpush.bf16.msra.mxu0 0
      %1753 = vmatpush.bf16.msra.mxu0 0
      %1754 = vmatpush.bf16.msra.mxu0 0
      %1755 = vmatpush.bf16.msra.mxu0 0
      %1756 = vmatpush.bf16.msra.mxu0 %v1747
      %1757 = vmatmul.bf16.gmra.mxu0 %v1744
      %v1758 = vpop.f32.mrf.mxu0
      %v1759 = vadd.f32 %v1567, %v1758
      %v1760 = vpop.f32.mrf.mxu0
      %1761 = vdwg.mxu0
      %vm1762 = vcmp.ge.s32.totalorder %v753, 16
      %vm1763 = vcmp.lt.s32.totalorder %v753, 24
      %vm1764 = vmand %vm1762, %vm1763
      %v1765 = vsel %vm1764, 1, 0
      %v1766 = vcvt.s32.f32 %v1765
      %v1767 = vpack.c.bf16 %v1766, %v1766
      %v1768 = vunpack.c.l.bf16 %v1767
      %v1769 = vmul.f32 %v760, %v1768
      %v1770 = vmul.f32 %v761, %v1768
      %v1771 = vmul.f32 %v762, %v1768
      %v1772 = vmul.f32 %v763, %v1768
      %v1773 = vmul.f32 %v764, %v1768
      %v1774 = vmul.f32 %v765, %v1768
      %v1775 = vmul.f32 %v766, %v1768
      %v1776 = vmul.f32 %v767, %v1768
      %v1777 = vpack.c.bf16 %v1769, %v1769
      %v1778 = vpack.c.bf16 %v1770, %v1770
      %v1779 = vpack.c.bf16 %v1771, %v1771
      %v1780 = vpack.c.bf16 %v1772, %v1772
      %v1781 = vpack.c.bf16 %v1773, %v1773
      %v1782 = vpack.c.bf16 %v1774, %v1774
      %v1783 = vpack.c.bf16 %v1775, %v1775
      %v1784 = vpack.c.bf16 %v1776, %v1776
      %v1786 = vsel %vm702, %v1777, 0
      %1788 = vmatpush.bf16.xpose.msra.mxu0 0
      %1789 = vmatpush.bf16.xpose.msra.mxu0 0
      %1790 = vmatpush.bf16.xpose.msra.mxu0 0
      %1791 = vmatpush.bf16.xpose.msra.mxu0 0
      %1792 = vmatpush.bf16.xpose.msra.mxu0 0
      %1793 = vmatpush.bf16.xpose.msra.mxu0 0
      %1794 = vmatpush.bf16.xpose.msra.mxu0 0
      %1795 = vmatpush.bf16.xpose.msra.mxu0 %v794
      %1796 = vmatmul.bf16.gmra.mxu0 %v1786
      %v1797 = vpop.f32.mrf.mxu0
      %v1798 = vadd.f32 0.0, %v1797
      %v1799 = vpop.f32.mrf.mxu0
      %1800 = vdwg.mxu0
      %v1802 = vsel %vm702, %v1778, 0
      %1804 = vmatpush.bf16.xpose.msra.mxu0 0
      %1805 = vmatpush.bf16.xpose.msra.mxu0 0
      %1806 = vmatpush.bf16.xpose.msra.mxu0 0
      %1807 = vmatpush.bf16.xpose.msra.mxu0 0
      %1808 = vmatpush.bf16.xpose.msra.mxu0 0
      %1809 = vmatpush.bf16.xpose.msra.mxu0 0
      %1810 = vmatpush.bf16.xpose.msra.mxu0 0
      %1811 = vmatpush.bf16.xpose.msra.mxu0 %v818
      %1812 = vmatmul.bf16.gmra.mxu0 %v1802
      %v1813 = vpop.f32.mrf.mxu0
      %v1814 = vadd.f32 0.0, %v1813
      %v1815 = vpop.f32.mrf.mxu0
      %1816 = vdwg.mxu0
      %v1818 = vsel %vm702, %v1779, 0
      %1820 = vmatpush.bf16.xpose.msra.mxu0 0
      %1821 = vmatpush.bf16.xpose.msra.mxu0 0
      %1822 = vmatpush.bf16.xpose.msra.mxu0 0
      %1823 = vmatpush.bf16.xpose.msra.mxu0 0
      %1824 = vmatpush.bf16.xpose.msra.mxu0 0
      %1825 = vmatpush.bf16.xpose.msra.mxu0 0
      %1826 = vmatpush.bf16.xpose.msra.mxu0 0
      %1827 = vmatpush.bf16.xpose.msra.mxu0 %v842
      %1828 = vmatmul.bf16.gmra.mxu0 %v1818
      %v1829 = vpop.f32.mrf.mxu0
      %v1830 = vadd.f32 0.0, %v1829
      %v1831 = vpop.f32.mrf.mxu0
      %1832 = vdwg.mxu0
      %v1834 = vsel %vm702, %v1780, 0
      %1836 = vmatpush.bf16.xpose.msra.mxu0 0
      %1837 = vmatpush.bf16.xpose.msra.mxu0 0
      %1838 = vmatpush.bf16.xpose.msra.mxu0 0
      %1839 = vmatpush.bf16.xpose.msra.mxu0 0
      %1840 = vmatpush.bf16.xpose.msra.mxu0 0
      %1841 = vmatpush.bf16.xpose.msra.mxu0 0
      %1842 = vmatpush.bf16.xpose.msra.mxu0 0
      %1843 = vmatpush.bf16.xpose.msra.mxu0 %v866
      %1844 = vmatmul.bf16.gmra.mxu0 %v1834
      %v1845 = vpop.f32.mrf.mxu0
      %v1846 = vadd.f32 0.0, %v1845
      %v1847 = vpop.f32.mrf.mxu0
      %1848 = vdwg.mxu0
      %v1850 = vsel %vm702, %v1781, 0
      %1852 = vmatpush.bf16.xpose.msra.mxu0 0
      %1853 = vmatpush.bf16.xpose.msra.mxu0 0
      %1854 = vmatpush.bf16.xpose.msra.mxu0 0
      %1855 = vmatpush.bf16.xpose.msra.mxu0 0
      %1856 = vmatpush.bf16.xpose.msra.mxu0 0
      %1857 = vmatpush.bf16.xpose.msra.mxu0 0
      %1858 = vmatpush.bf16.xpose.msra.mxu0 0
      %1859 = vmatpush.bf16.xpose.msra.mxu0 %v890
      %1860 = vmatmul.bf16.gmra.mxu0 %v1850
      %v1861 = vpop.f32.mrf.mxu0
      %v1862 = vadd.f32 0.0, %v1861
      %v1863 = vpop.f32.mrf.mxu0
      %1864 = vdwg.mxu0
      %v1866 = vsel %vm702, %v1782, 0
      %1868 = vmatpush.bf16.xpose.msra.mxu0 0
      %1869 = vmatpush.bf16.xpose.msra.mxu0 0
      %1870 = vmatpush.bf16.xpose.msra.mxu0 0
      %1871 = vmatpush.bf16.xpose.msra.mxu0 0
      %1872 = vmatpush.bf16.xpose.msra.mxu0 0
      %1873 = vmatpush.bf16.xpose.msra.mxu0 0
      %1874 = vmatpush.bf16.xpose.msra.mxu0 0
      %1875 = vmatpush.bf16.xpose.msra.mxu0 %v914
      %1876 = vmatmul.bf16.gmra.mxu0 %v1866
      %v1877 = vpop.f32.mrf.mxu0
      %v1878 = vadd.f32 0.0, %v1877
      %v1879 = vpop.f32.mrf.mxu0
      %1880 = vdwg.mxu0
      %v1882 = vsel %vm702, %v1783, 0
      %1884 = vmatpush.bf16.xpose.msra.mxu0 0
      %1885 = vmatpush.bf16.xpose.msra.mxu0 0
      %1886 = vmatpush.bf16.xpose.msra.mxu0 0
      %1887 = vmatpush.bf16.xpose.msra.mxu0 0
      %1888 = vmatpush.bf16.xpose.msra.mxu0 0
      %1889 = vmatpush.bf16.xpose.msra.mxu0 0
      %1890 = vmatpush.bf16.xpose.msra.mxu0 0
      %1891 = vmatpush.bf16.xpose.msra.mxu0 %v938
      %1892 = vmatmul.bf16.gmra.mxu0 %v1882
      %v1893 = vpop.f32.mrf.mxu0
      %v1894 = vadd.f32 0.0, %v1893
      %v1895 = vpop.f32.mrf.mxu0
      %1896 = vdwg.mxu0
      %v1898 = vsel %vm702, %v1784, 0
      %1900 = vmatpush.bf16.xpose.msra.mxu0 0
      %1901 = vmatpush.bf16.xpose.msra.mxu0 0
      %1902 = vmatpush.bf16.xpose.msra.mxu0 0
      %1903 = vmatpush.bf16.xpose.msra.mxu0 0
      %1904 = vmatpush.bf16.xpose.msra.mxu0 0
      %1905 = vmatpush.bf16.xpose.msra.mxu0 0
      %1906 = vmatpush.bf16.xpose.msra.mxu0 0
      %1907 = vmatpush.bf16.xpose.msra.mxu0 %v962
      %1908 = vmatmul.bf16.gmra.mxu0 %v1898
      %v1909 = vpop.f32.mrf.mxu0
      %v1910 = vadd.f32 0.0, %v1909
      %v1911 = vpop.f32.mrf.mxu0
      %1912 = vdwg.mxu0
      %v1913 = vmul.f32 %v1798, 0.35355338
      %v1914 = vmul.f32 %v1814, 0.35355338
      %v1915 = vmul.f32 %v1830, 0.35355338
      %v1916 = vmul.f32 %v1846, 0.35355338
      %v1917 = vmul.f32 %v1862, 0.35355338
      %v1918 = vmul.f32 %v1878, 0.35355338
      %v1919 = vmul.f32 %v1894, 0.35355338
      %v1920 = vmul.f32 %v1910, 0.35355338
      %v1921 = vsel %vm985, %v1913, -inf
      %1922 = vmax.xlane.f32.xlu0 %v1921
      %v1923 = vpop.xlane.xlu0 %1922
      %v1924 = vsel %vm985, %v1914, -inf
      %1925 = vmax.xlane.f32.xlu0 %v1924
      %v1926 = vpop.xlane.xlu0 %1925
      %v1927 = vsel %vm985, %v1915, -inf
      %1928 = vmax.xlane.f32.xlu0 %v1927
      %v1929 = vpop.xlane.xlu0 %1928
      %v1930 = vsel %vm985, %v1916, -inf
      %1931 = vmax.xlane.f32.xlu0 %v1930
      %v1932 = vpop.xlane.xlu0 %1931
      %v1933 = vsel %vm985, %v1917, -inf
      %1934 = vmax.xlane.f32.xlu0 %v1933
      %v1935 = vpop.xlane.xlu0 %1934
      %v1936 = vsel %vm985, %v1918, -inf
      %1937 = vmax.xlane.f32.xlu0 %v1936
      %v1938 = vpop.xlane.xlu0 %1937
      %v1939 = vsel %vm985, %v1919, -inf
      %1940 = vmax.xlane.f32.xlu0 %v1939
      %v1941 = vpop.xlane.xlu0 %1940
      %v1942 = vsel %vm985, %v1920, -inf
      %1943 = vmax.xlane.f32.xlu0 %v1942
      %v1944 = vpop.xlane.xlu0 %1943
      %v1945 = vsub.f32 %v1913, %v1923
      %v1946 = vsub.f32 %v1914, %v1926
      %v1947 = vsub.f32 %v1915, %v1929
      %v1948 = vsub.f32 %v1916, %v1932
      %v1949 = vsub.f32 %v1917, %v1935
      %v1950 = vsub.f32 %v1918, %v1938
      %v1951 = vsub.f32 %v1919, %v1941
      %v1952 = vsub.f32 %v1920, %v1944
      %v1953 = vmul.f32 %v1945, 1.442695
      %v1954 = vpow.pop %v1953
      %v1955 = vmul.f32 %v1946, 1.442695
      %v1956 = vpow.pop %v1955
      %v1957 = vmul.f32 %v1947, 1.442695
      %v1958 = vpow.pop %v1957
      %v1959 = vmul.f32 %v1948, 1.442695
      %v1960 = vpow.pop %v1959
      %v1961 = vmul.f32 %v1949, 1.442695
      %v1962 = vpow.pop %v1961
      %v1963 = vmul.f32 %v1950, 1.442695
      %v1964 = vpow.pop %v1963
      %v1965 = vmul.f32 %v1951, 1.442695
      %v1966 = vpow.pop %v1965
      %v1967 = vmul.f32 %v1952, 1.442695
      %v1968 = vpow.pop %v1967
      %v1969 = vsel %vm985, %v1954, 0.0
      %1970 = vadd.xlane.f32.xlu0 %v1969
      %v1971 = vpop.xlane.xlu0 %1970
      %v1972 = vsel %vm985, %v1956, 0.0
      %1973 = vadd.xlane.f32.xlu0 %v1972
      %v1974 = vpop.xlane.xlu0 %1973
      %v1975 = vsel %vm985, %v1958, 0.0
      %1976 = vadd.xlane.f32.xlu0 %v1975
      %v1977 = vpop.xlane.xlu0 %1976
      %v1978 = vsel %vm985, %v1960, 0.0
      %1979 = vadd.xlane.f32.xlu0 %v1978
      %v1980 = vpop.xlane.xlu0 %1979
      %v1981 = vsel %vm985, %v1962, 0.0
      %1982 = vadd.xlane.f32.xlu0 %v1981
      %v1983 = vpop.xlane.xlu0 %1982
      %v1984 = vsel %vm985, %v1964, 0.0
      %1985 = vadd.xlane.f32.xlu0 %v1984
      %v1986 = vpop.xlane.xlu0 %1985
      %v1987 = vsel %vm985, %v1966, 0.0
      %1988 = vadd.xlane.f32.xlu0 %v1987
      %v1989 = vpop.xlane.xlu0 %1988
      %v1990 = vsel %vm985, %v1968, 0.0
      %1991 = vadd.xlane.f32.xlu0 %v1990
      %v1992 = vpop.xlane.xlu0 %1991
      %v1993 = vrcp.pop %v1971
      %v1994 = vrcp.pop %v1974
      %v1995 = vrcp.pop %v1977
      %v1996 = vrcp.pop %v1980
      %v1997 = vrcp.pop %v1983
      %v1998 = vrcp.pop %v1986
      %v1999 = vrcp.pop %v1989
      %v2000 = vrcp.pop %v1992
      %v2001 = vmul.f32 %v1954, %v1993
      %v2002 = vmul.f32 %v1956, %v1994
      %v2003 = vmul.f32 %v1958, %v1995
      %v2004 = vmul.f32 %v1960, %v1996
      %v2005 = vmul.f32 %v1962, %v1997
      %v2006 = vmul.f32 %v1964, %v1998
      %v2007 = vmul.f32 %v1966, %v1999
      %v2008 = vmul.f32 %v1968, %v2000
      %v2009 = vpack.c.bf16 %v2001, %v2001
      %v2010 = vpack.c.bf16 %v2002, %v2002
      %v2011 = vpack.c.bf16 %v2003, %v2003
      %v2012 = vpack.c.bf16 %v2004, %v2004
      %v2013 = vpack.c.bf16 %v2005, %v2005
      %v2014 = vpack.c.bf16 %v2006, %v2006
      %v2015 = vpack.c.bf16 %v2007, %v2007
      %v2016 = vpack.c.bf16 %v2008, %v2008
      %2018 = vrot.lane.b32.xlu0 %v1768, 64
      %v2019 = vpop.permute.xlu0 %2018
      %v2021 = vmul.f32 %v760, %v2019
      %v2022 = vmul.f32 %v761, %v2019
      %v2023 = vmul.f32 %v762, %v2019
      %v2024 = vmul.f32 %v763, %v2019
      %v2025 = vmul.f32 %v764, %v2019
      %v2026 = vmul.f32 %v765, %v2019
      %v2027 = vmul.f32 %v766, %v2019
      %v2028 = vmul.f32 %v767, %v2019
      %v2029 = vpack.c.bf16 %v2021, %v2021
      %v2030 = vpack.c.bf16 %v2022, %v2022
      %v2031 = vpack.c.bf16 %v2023, %v2023
      %v2032 = vpack.c.bf16 %v2024, %v2024
      %v2033 = vpack.c.bf16 %v2025, %v2025
      %v2034 = vpack.c.bf16 %v2026, %v2026
      %v2035 = vpack.c.bf16 %v2027, %v2027
      %v2036 = vpack.c.bf16 %v2028, %v2028
      %v2038 = vunpack.c.l.b16 %v2029
      %v2039 = vpack.c.b16 %v2038, %v2038
      %2040 = vrot.lane.b32.xlu0 %v2039, 64
      %v2041 = vpop.permute.xlu0 %2040
      %v2043 = vsel %vm985, %v2009, 0
      %v2046 = vsel %vm1385, %v2041, 0
      %2048 = vmatpush.bf16.msra.mxu0 0
      %2049 = vmatpush.bf16.msra.mxu0 0
      %2050 = vmatpush.bf16.msra.mxu0 0
      %2051 = vmatpush.bf16.msra.mxu0 0
      %2052 = vmatpush.bf16.msra.mxu0 0
      %2053 = vmatpush.bf16.msra.mxu0 0
      %2054 = vmatpush.bf16.msra.mxu0 0
      %2055 = vmatpush.bf16.msra.mxu0 %v2046
      %2056 = vmatmul.bf16.gmra.mxu0 %v2043
      %v2057 = vpop.f32.mrf.mxu0
      %v2058 = vadd.f32 0.0, %v2057
      %v2059 = vpop.f32.mrf.mxu0
      %2060 = vdwg.mxu0
      %v2062 = vunpack.c.l.b16 %v2030
      %v2063 = vpack.c.b16 %v2062, %v2062
      %2064 = vrot.lane.b32.xlu0 %v2063, 64
      %v2065 = vpop.permute.xlu0 %2064
      %v2067 = vsel %vm985, %v2010, 0
      %v2070 = vsel %vm1385, %v2065, 0
      %2072 = vmatpush.bf16.msra.mxu0 0
      %2073 = vmatpush.bf16.msra.mxu0 0
      %2074 = vmatpush.bf16.msra.mxu0 0
      %2075 = vmatpush.bf16.msra.mxu0 0
      %2076 = vmatpush.bf16.msra.mxu0 0
      %2077 = vmatpush.bf16.msra.mxu0 0
      %2078 = vmatpush.bf16.msra.mxu0 0
      %2079 = vmatpush.bf16.msra.mxu0 %v2070
      %2080 = vmatmul.bf16.gmra.mxu0 %v2067
      %v2081 = vpop.f32.mrf.mxu0
      %v2082 = vadd.f32 0.0, %v2081
      %v2083 = vpop.f32.mrf.mxu0
      %2084 = vdwg.mxu0
      %v2086 = vunpack.c.l.b16 %v2031
      %v2087 = vpack.c.b16 %v2086, %v2086
      %2088 = vrot.lane.b32.xlu0 %v2087, 64
      %v2089 = vpop.permute.xlu0 %2088
      %v2091 = vsel %vm985, %v2011, 0
      %v2094 = vsel %vm1385, %v2089, 0
      %2096 = vmatpush.bf16.msra.mxu0 0
      %2097 = vmatpush.bf16.msra.mxu0 0
      %2098 = vmatpush.bf16.msra.mxu0 0
      %2099 = vmatpush.bf16.msra.mxu0 0
      %2100 = vmatpush.bf16.msra.mxu0 0
      %2101 = vmatpush.bf16.msra.mxu0 0
      %2102 = vmatpush.bf16.msra.mxu0 0
      %2103 = vmatpush.bf16.msra.mxu0 %v2094
      %2104 = vmatmul.bf16.gmra.mxu0 %v2091
      %v2105 = vpop.f32.mrf.mxu0
      %v2106 = vadd.f32 0.0, %v2105
      %v2107 = vpop.f32.mrf.mxu0
      %2108 = vdwg.mxu0
      %v2110 = vunpack.c.l.b16 %v2032
      %v2111 = vpack.c.b16 %v2110, %v2110
      %2112 = vrot.lane.b32.xlu0 %v2111, 64
      %v2113 = vpop.permute.xlu0 %2112
      %v2115 = vsel %vm985, %v2012, 0
      %v2118 = vsel %vm1385, %v2113, 0
      %2120 = vmatpush.bf16.msra.mxu0 0
      %2121 = vmatpush.bf16.msra.mxu0 0
      %2122 = vmatpush.bf16.msra.mxu0 0
      %2123 = vmatpush.bf16.msra.mxu0 0
      %2124 = vmatpush.bf16.msra.mxu0 0
      %2125 = vmatpush.bf16.msra.mxu0 0
      %2126 = vmatpush.bf16.msra.mxu0 0
      %2127 = vmatpush.bf16.msra.mxu0 %v2118
      %2128 = vmatmul.bf16.gmra.mxu0 %v2115
      %v2129 = vpop.f32.mrf.mxu0
      %v2130 = vadd.f32 0.0, %v2129
      %v2131 = vpop.f32.mrf.mxu0
      %2132 = vdwg.mxu0
      %v2134 = vunpack.c.l.b16 %v2033
      %v2135 = vpack.c.b16 %v2134, %v2134
      %2136 = vrot.lane.b32.xlu0 %v2135, 64
      %v2137 = vpop.permute.xlu0 %2136
      %v2139 = vsel %vm985, %v2013, 0
      %v2142 = vsel %vm1385, %v2137, 0
      %2144 = vmatpush.bf16.msra.mxu0 0
      %2145 = vmatpush.bf16.msra.mxu0 0
      %2146 = vmatpush.bf16.msra.mxu0 0
      %2147 = vmatpush.bf16.msra.mxu0 0
      %2148 = vmatpush.bf16.msra.mxu0 0
      %2149 = vmatpush.bf16.msra.mxu0 0
      %2150 = vmatpush.bf16.msra.mxu0 0
      %2151 = vmatpush.bf16.msra.mxu0 %v2142
      %2152 = vmatmul.bf16.gmra.mxu0 %v2139
      %v2153 = vpop.f32.mrf.mxu0
      %v2154 = vadd.f32 0.0, %v2153
      %v2155 = vpop.f32.mrf.mxu0
      %2156 = vdwg.mxu0
      %v2158 = vunpack.c.l.b16 %v2034
      %v2159 = vpack.c.b16 %v2158, %v2158
      %2160 = vrot.lane.b32.xlu0 %v2159, 64
      %v2161 = vpop.permute.xlu0 %2160
      %v2163 = vsel %vm985, %v2014, 0
      %v2166 = vsel %vm1385, %v2161, 0
      %2168 = vmatpush.bf16.msra.mxu0 0
      %2169 = vmatpush.bf16.msra.mxu0 0
      %2170 = vmatpush.bf16.msra.mxu0 0
      %2171 = vmatpush.bf16.msra.mxu0 0
      %2172 = vmatpush.bf16.msra.mxu0 0
      %2173 = vmatpush.bf16.msra.mxu0 0
      %2174 = vmatpush.bf16.msra.mxu0 0
      %2175 = vmatpush.bf16.msra.mxu0 %v2166
      %2176 = vmatmul.bf16.gmra.mxu0 %v2163
      %v2177 = vpop.f32.mrf.mxu0
      %v2178 = vadd.f32 0.0, %v2177
      %v2179 = vpop.f32.mrf.mxu0
      %2180 = vdwg.mxu0
      %v2182 = vunpack.c.l.b16 %v2035
      %v2183 = vpack.c.b16 %v2182, %v2182
      %2184 = vrot.lane.b32.xlu0 %v2183, 64
      %v2185 = vpop.permute.xlu0 %2184
      %v2187 = vsel %vm985, %v2015, 0
      %v2190 = vsel %vm1385, %v2185, 0
      %2192 = vmatpush.bf16.msra.mxu0 0
      %2193 = vmatpush.bf16.msra.mxu0 0
      %2194 = vmatpush.bf16.msra.mxu0 0
      %2195 = vmatpush.bf16.msra.mxu0 0
      %2196 = vmatpush.bf16.msra.mxu0 0
      %2197 = vmatpush.bf16.msra.mxu0 0
      %2198 = vmatpush.bf16.msra.mxu0 0
      %2199 = vmatpush.bf16.msra.mxu0 %v2190
      %2200 = vmatmul.bf16.gmra.mxu0 %v2187
      %v2201 = vpop.f32.mrf.mxu0
      %v2202 = vadd.f32 0.0, %v2201
      %v2203 = vpop.f32.mrf.mxu0
      %2204 = vdwg.mxu0
      %v2206 = vunpack.c.l.b16 %v2036
      %v2207 = vpack.c.b16 %v2206, %v2206
      %2208 = vrot.lane.b32.xlu0 %v2207, 64
      %v2209 = vpop.permute.xlu0 %2208
      %v2211 = vsel %vm985, %v2016, 0
      %v2214 = vsel %vm1385, %v2209, 0
      %2216 = vmatpush.bf16.msra.mxu0 0
      %2217 = vmatpush.bf16.msra.mxu0 0
      %2218 = vmatpush.bf16.msra.mxu0 0
      %2219 = vmatpush.bf16.msra.mxu0 0
      %2220 = vmatpush.bf16.msra.mxu0 0
      %2221 = vmatpush.bf16.msra.mxu0 0
      %2222 = vmatpush.bf16.msra.mxu0 0
      %2223 = vmatpush.bf16.msra.mxu0 %v2214
      %2224 = vmatmul.bf16.gmra.mxu0 %v2211
      %v2225 = vpop.f32.mrf.mxu0
      %v2226 = vadd.f32 0.0, %v2225
      %v2227 = vpop.f32.mrf.mxu0
      %2228 = vdwg.mxu0
      %v2229 = vadd.f32 %v1591, %v2058
      %v2230 = vadd.f32 %v1615, %v2082
      %v2231 = vadd.f32 %v1639, %v2106
      %v2232 = vadd.f32 %v1663, %v2130
      %v2233 = vadd.f32 %v1687, %v2154
      %v2234 = vadd.f32 %v1711, %v2178
      %v2235 = vadd.f32 %v1735, %v2202
      %v2236 = vadd.f32 %v1759, %v2226
      %vm2237 = vcmp.ge.s32.totalorder %v753, 24
      %vm2238 = vcmp.lt.s32.totalorder %v753, 32
      %vm2239 = vmand %vm2237, %vm2238
      %v2240 = vsel %vm2239, 1, 0
      %v2241 = vcvt.s32.f32 %v2240
      %v2242 = vpack.c.bf16 %v2241, %v2241
      %v2243 = vunpack.c.l.bf16 %v2242
      %v2244 = vmul.f32 %v760, %v2243
      %v2245 = vmul.f32 %v761, %v2243
      %v2246 = vmul.f32 %v762, %v2243
      %v2247 = vmul.f32 %v763, %v2243
      %v2248 = vmul.f32 %v764, %v2243
      %v2249 = vmul.f32 %v765, %v2243
      %v2250 = vmul.f32 %v766, %v2243
      %v2251 = vmul.f32 %v767, %v2243
      %v2252 = vpack.c.bf16 %v2244, %v2244
      %v2253 = vpack.c.bf16 %v2245, %v2245
      %v2254 = vpack.c.bf16 %v2246, %v2246
      %v2255 = vpack.c.bf16 %v2247, %v2247
      %v2256 = vpack.c.bf16 %v2248, %v2248
      %v2257 = vpack.c.bf16 %v2249, %v2249
      %v2258 = vpack.c.bf16 %v2250, %v2250
      %v2259 = vpack.c.bf16 %v2251, %v2251
      %v2261 = vsel %vm702, %v2252, 0
      %2263 = vmatpush.bf16.xpose.msra.mxu0 0
      %2264 = vmatpush.bf16.xpose.msra.mxu0 0
      %2265 = vmatpush.bf16.xpose.msra.mxu0 0
      %2266 = vmatpush.bf16.xpose.msra.mxu0 0
      %2267 = vmatpush.bf16.xpose.msra.mxu0 0
      %2268 = vmatpush.bf16.xpose.msra.mxu0 0
      %2269 = vmatpush.bf16.xpose.msra.mxu0 0
      %2270 = vmatpush.bf16.xpose.msra.mxu0 %v794
      %2271 = vmatmul.bf16.gmra.mxu0 %v2261
      %v2272 = vpop.f32.mrf.mxu0
      %v2273 = vadd.f32 0.0, %v2272
      %v2274 = vpop.f32.mrf.mxu0
      %2275 = vdwg.mxu0
      %v2277 = vsel %vm702, %v2253, 0
      %2279 = vmatpush.bf16.xpose.msra.mxu0 0
      %2280 = vmatpush.bf16.xpose.msra.mxu0 0
      %2281 = vmatpush.bf16.xpose.msra.mxu0 0
      %2282 = vmatpush.bf16.xpose.msra.mxu0 0
      %2283 = vmatpush.bf16.xpose.msra.mxu0 0
      %2284 = vmatpush.bf16.xpose.msra.mxu0 0
      %2285 = vmatpush.bf16.xpose.msra.mxu0 0
      %2286 = vmatpush.bf16.xpose.msra.mxu0 %v818
      %2287 = vmatmul.bf16.gmra.mxu0 %v2277
      %v2288 = vpop.f32.mrf.mxu0
      %v2289 = vadd.f32 0.0, %v2288
      %v2290 = vpop.f32.mrf.mxu0
      %2291 = vdwg.mxu0
      %v2293 = vsel %vm702, %v2254, 0
      %2295 = vmatpush.bf16.xpose.msra.mxu0 0
      %2296 = vmatpush.bf16.xpose.msra.mxu0 0
      %2297 = vmatpush.bf16.xpose.msra.mxu0 0
      %2298 = vmatpush.bf16.xpose.msra.mxu0 0
      %2299 = vmatpush.bf16.xpose.msra.mxu0 0
      %2300 = vmatpush.bf16.xpose.msra.mxu0 0
      %2301 = vmatpush.bf16.xpose.msra.mxu0 0
      %2302 = vmatpush.bf16.xpose.msra.mxu0 %v842
      %2303 = vmatmul.bf16.gmra.mxu0 %v2293
      %v2304 = vpop.f32.mrf.mxu0
      %v2305 = vadd.f32 0.0, %v2304
      %v2306 = vpop.f32.mrf.mxu0
      %2307 = vdwg.mxu0
      %v2309 = vsel %vm702, %v2255, 0
      %2311 = vmatpush.bf16.xpose.msra.mxu0 0
      %2312 = vmatpush.bf16.xpose.msra.mxu0 0
      %2313 = vmatpush.bf16.xpose.msra.mxu0 0
      %2314 = vmatpush.bf16.xpose.msra.mxu0 0
      %2315 = vmatpush.bf16.xpose.msra.mxu0 0
      %2316 = vmatpush.bf16.xpose.msra.mxu0 0
      %2317 = vmatpush.bf16.xpose.msra.mxu0 0
      %2318 = vmatpush.bf16.xpose.msra.mxu0 %v866
      %2319 = vmatmul.bf16.gmra.mxu0 %v2309
      %v2320 = vpop.f32.mrf.mxu0
      %v2321 = vadd.f32 0.0, %v2320
      %v2322 = vpop.f32.mrf.mxu0
      %2323 = vdwg.mxu0
      %v2325 = vsel %vm702, %v2256, 0
      %2327 = vmatpush.bf16.xpose.msra.mxu0 0
      %2328 = vmatpush.bf16.xpose.msra.mxu0 0
      %2329 = vmatpush.bf16.xpose.msra.mxu0 0
      %2330 = vmatpush.bf16.xpose.msra.mxu0 0
      %2331 = vmatpush.bf16.xpose.msra.mxu0 0
      %2332 = vmatpush.bf16.xpose.msra.mxu0 0
      %2333 = vmatpush.bf16.xpose.msra.mxu0 0
      %2334 = vmatpush.bf16.xpose.msra.mxu0 %v890
      %2335 = vmatmul.bf16.gmra.mxu0 %v2325
      %v2336 = vpop.f32.mrf.mxu0
      %v2337 = vadd.f32 0.0, %v2336
      %v2338 = vpop.f32.mrf.mxu0
      %2339 = vdwg.mxu0
      %v2341 = vsel %vm702, %v2257, 0
      %2343 = vmatpush.bf16.xpose.msra.mxu0 0
      %2344 = vmatpush.bf16.xpose.msra.mxu0 0
      %2345 = vmatpush.bf16.xpose.msra.mxu0 0
      %2346 = vmatpush.bf16.xpose.msra.mxu0 0
      %2347 = vmatpush.bf16.xpose.msra.mxu0 0
      %2348 = vmatpush.bf16.xpose.msra.mxu0 0
      %2349 = vmatpush.bf16.xpose.msra.mxu0 0
      %2350 = vmatpush.bf16.xpose.msra.mxu0 %v914
      %2351 = vmatmul.bf16.gmra.mxu0 %v2341
      %v2352 = vpop.f32.mrf.mxu0
      %v2353 = vadd.f32 0.0, %v2352
      %v2354 = vpop.f32.mrf.mxu0
      %2355 = vdwg.mxu0
      %v2357 = vsel %vm702, %v2258, 0
      %2359 = vmatpush.bf16.xpose.msra.mxu0 0
      %2360 = vmatpush.bf16.xpose.msra.mxu0 0
      %2361 = vmatpush.bf16.xpose.msra.mxu0 0
      %2362 = vmatpush.bf16.xpose.msra.mxu0 0
      %2363 = vmatpush.bf16.xpose.msra.mxu0 0
      %2364 = vmatpush.bf16.xpose.msra.mxu0 0
      %2365 = vmatpush.bf16.xpose.msra.mxu0 0
      %2366 = vmatpush.bf16.xpose.msra.mxu0 %v938
      %2367 = vmatmul.bf16.gmra.mxu0 %v2357
      %v2368 = vpop.f32.mrf.mxu0
      %v2369 = vadd.f32 0.0, %v2368
      %v2370 = vpop.f32.mrf.mxu0
      %2371 = vdwg.mxu0
      %v2373 = vsel %vm702, %v2259, 0
      %2375 = vmatpush.bf16.xpose.msra.mxu0 0
      %2376 = vmatpush.bf16.xpose.msra.mxu0 0
      %2377 = vmatpush.bf16.xpose.msra.mxu0 0
      %2378 = vmatpush.bf16.xpose.msra.mxu0 0
      %2379 = vmatpush.bf16.xpose.msra.mxu0 0
      %2380 = vmatpush.bf16.xpose.msra.mxu0 0
      %2381 = vmatpush.bf16.xpose.msra.mxu0 0
      %2382 = vmatpush.bf16.xpose.msra.mxu0 %v962
      %2383 = vmatmul.bf16.gmra.mxu0 %v2373
      %v2384 = vpop.f32.mrf.mxu0
      %v2385 = vadd.f32 0.0, %v2384
      %v2386 = vpop.f32.mrf.mxu0
      %2387 = vdwg.mxu0
      %v2388 = vmul.f32 %v2273, 0.35355338
      %v2389 = vmul.f32 %v2289, 0.35355338
      %v2390 = vmul.f32 %v2305, 0.35355338
      %v2391 = vmul.f32 %v2321, 0.35355338
      %v2392 = vmul.f32 %v2337, 0.35355338
      %v2393 = vmul.f32 %v2353, 0.35355338
      %v2394 = vmul.f32 %v2369, 0.35355338
      %v2395 = vmul.f32 %v2385, 0.35355338
      %v2396 = vsel %vm985, %v2388, -inf
      %2397 = vmax.xlane.f32.xlu0 %v2396
      %v2398 = vpop.xlane.xlu0 %2397
      %v2399 = vsel %vm985, %v2389, -inf
      %2400 = vmax.xlane.f32.xlu0 %v2399
      %v2401 = vpop.xlane.xlu0 %2400
      %v2402 = vsel %vm985, %v2390, -inf
      %2403 = vmax.xlane.f32.xlu0 %v2402
      %v2404 = vpop.xlane.xlu0 %2403
      %v2405 = vsel %vm985, %v2391, -inf
      %2406 = vmax.xlane.f32.xlu0 %v2405
      %v2407 = vpop.xlane.xlu0 %2406
      %v2408 = vsel %vm985, %v2392, -inf
      %2409 = vmax.xlane.f32.xlu0 %v2408
      %v2410 = vpop.xlane.xlu0 %2409
      %v2411 = vsel %vm985, %v2393, -inf
      %2412 = vmax.xlane.f32.xlu0 %v2411
      %v2413 = vpop.xlane.xlu0 %2412
      %v2414 = vsel %vm985, %v2394, -inf
      %2415 = vmax.xlane.f32.xlu0 %v2414
      %v2416 = vpop.xlane.xlu0 %2415
      %v2417 = vsel %vm985, %v2395, -inf
      %2418 = vmax.xlane.f32.xlu0 %v2417
      %v2419 = vpop.xlane.xlu0 %2418
      %v2420 = vsub.f32 %v2388, %v2398
      %v2421 = vsub.f32 %v2389, %v2401
      %v2422 = vsub.f32 %v2390, %v2404
      %v2423 = vsub.f32 %v2391, %v2407
      %v2424 = vsub.f32 %v2392, %v2410
      %v2425 = vsub.f32 %v2393, %v2413
      %v2426 = vsub.f32 %v2394, %v2416
      %v2427 = vsub.f32 %v2395, %v2419
      %v2428 = vmul.f32 %v2420, 1.442695
      %v2429 = vpow.pop %v2428
      %v2430 = vmul.f32 %v2421, 1.442695
      %v2431 = vpow.pop %v2430
      %v2432 = vmul.f32 %v2422, 1.442695
      %v2433 = vpow.pop %v2432
      %v2434 = vmul.f32 %v2423, 1.442695
      %v2435 = vpow.pop %v2434
      %v2436 = vmul.f32 %v2424, 1.442695
      %v2437 = vpow.pop %v2436
      %v2438 = vmul.f32 %v2425, 1.442695
      %v2439 = vpow.pop %v2438
      %v2440 = vmul.f32 %v2426, 1.442695
      %v2441 = vpow.pop %v2440
      %v2442 = vmul.f32 %v2427, 1.442695
      %v2443 = vpow.pop %v2442
      %v2444 = vsel %vm985, %v2429, 0.0
      %2445 = vadd.xlane.f32.xlu0 %v2444
      %v2446 = vpop.xlane.xlu0 %2445
      %v2447 = vsel %vm985, %v2431, 0.0
      %2448 = vadd.xlane.f32.xlu0 %v2447
      %v2449 = vpop.xlane.xlu0 %2448
      %v2450 = vsel %vm985, %v2433, 0.0
      %2451 = vadd.xlane.f32.xlu0 %v2450
      %v2452 = vpop.xlane.xlu0 %2451
      %v2453 = vsel %vm985, %v2435, 0.0
      %2454 = vadd.xlane.f32.xlu0 %v2453
      %v2455 = vpop.xlane.xlu0 %2454
      %v2456 = vsel %vm985, %v2437, 0.0
      %2457 = vadd.xlane.f32.xlu0 %v2456
      %v2458 = vpop.xlane.xlu0 %2457
      %v2459 = vsel %vm985, %v2439, 0.0
      %2460 = vadd.xlane.f32.xlu0 %v2459
      %v2461 = vpop.xlane.xlu0 %2460
      %v2462 = vsel %vm985, %v2441, 0.0
      %2463 = vadd.xlane.f32.xlu0 %v2462
      %v2464 = vpop.xlane.xlu0 %2463
      %v2465 = vsel %vm985, %v2443, 0.0
      %2466 = vadd.xlane.f32.xlu0 %v2465
      %v2467 = vpop.xlane.xlu0 %2466
      %v2468 = vrcp.pop %v2446
      %v2469 = vrcp.pop %v2449
      %v2470 = vrcp.pop %v2452
      %v2471 = vrcp.pop %v2455
      %v2472 = vrcp.pop %v2458
      %v2473 = vrcp.pop %v2461
      %v2474 = vrcp.pop %v2464
      %v2475 = vrcp.pop %v2467
      %v2476 = vmul.f32 %v2429, %v2468
      %v2477 = vmul.f32 %v2431, %v2469
      %v2478 = vmul.f32 %v2433, %v2470
      %v2479 = vmul.f32 %v2435, %v2471
      %v2480 = vmul.f32 %v2437, %v2472
      %v2481 = vmul.f32 %v2439, %v2473
      %v2482 = vmul.f32 %v2441, %v2474
      %v2483 = vmul.f32 %v2443, %v2475
      %v2484 = vpack.c.bf16 %v2476, %v2476
      %v2485 = vpack.c.bf16 %v2477, %v2477
      %v2486 = vpack.c.bf16 %v2478, %v2478
      %v2487 = vpack.c.bf16 %v2479, %v2479
      %v2488 = vpack.c.bf16 %v2480, %v2480
      %v2489 = vpack.c.bf16 %v2481, %v2481
      %v2490 = vpack.c.bf16 %v2482, %v2482
      %v2491 = vpack.c.bf16 %v2483, %v2483
      %2493 = vrot.lane.b32.xlu0 %v2243, 64
      %v2494 = vpop.permute.xlu0 %2493
      %v2496 = vmul.f32 %v760, %v2494
      %v2497 = vmul.f32 %v761, %v2494
      %v2498 = vmul.f32 %v762, %v2494
      %v2499 = vmul.f32 %v763, %v2494
      %v2500 = vmul.f32 %v764, %v2494
      %v2501 = vmul.f32 %v765, %v2494
      %v2502 = vmul.f32 %v766, %v2494
      %v2503 = vmul.f32 %v767, %v2494
      %v2504 = vpack.c.bf16 %v2496, %v2496
      %v2505 = vpack.c.bf16 %v2497, %v2497
      %v2506 = vpack.c.bf16 %v2498, %v2498
      %v2507 = vpack.c.bf16 %v2499, %v2499
      %v2508 = vpack.c.bf16 %v2500, %v2500
      %v2509 = vpack.c.bf16 %v2501, %v2501
      %v2510 = vpack.c.bf16 %v2502, %v2502
      %v2511 = vpack.c.bf16 %v2503, %v2503
      %v2513 = vunpack.c.l.b16 %v2504
      %v2514 = vpack.c.b16 %v2513, %v2513
      %2515 = vrot.lane.b32.xlu0 %v2514, 64
      %v2516 = vpop.permute.xlu0 %2515
      %v2518 = vsel %vm985, %v2484, 0
      %v2521 = vsel %vm1385, %v2516, 0
      %2523 = vmatpush.bf16.msra.mxu0 0
      %2524 = vmatpush.bf16.msra.mxu0 0
      %2525 = vmatpush.bf16.msra.mxu0 0
      %2526 = vmatpush.bf16.msra.mxu0 0
      %2527 = vmatpush.bf16.msra.mxu0 0
      %2528 = vmatpush.bf16.msra.mxu0 0
      %2529 = vmatpush.bf16.msra.mxu0 0
      %2530 = vmatpush.bf16.msra.mxu0 %v2521
      %2531 = vmatmul.bf16.gmra.mxu0 %v2518
      %v2532 = vpop.f32.mrf.mxu0
      %v2533 = vadd.f32 0.0, %v2532
      %v2534 = vpop.f32.mrf.mxu0
      %2535 = vdwg.mxu0
      %v2537 = vunpack.c.l.b16 %v2505
      %v2538 = vpack.c.b16 %v2537, %v2537
      %2539 = vrot.lane.b32.xlu0 %v2538, 64
      %v2540 = vpop.permute.xlu0 %2539
      %v2542 = vsel %vm985, %v2485, 0
      %v2545 = vsel %vm1385, %v2540, 0
      %2547 = vmatpush.bf16.msra.mxu0 0
      %2548 = vmatpush.bf16.msra.mxu0 0
      %2549 = vmatpush.bf16.msra.mxu0 0
      %2550 = vmatpush.bf16.msra.mxu0 0
      %2551 = vmatpush.bf16.msra.mxu0 0
      %2552 = vmatpush.bf16.msra.mxu0 0
      %2553 = vmatpush.bf16.msra.mxu0 0
      %2554 = vmatpush.bf16.msra.mxu0 %v2545
      %2555 = vmatmul.bf16.gmra.mxu0 %v2542
      %v2556 = vpop.f32.mrf.mxu0
      %v2557 = vadd.f32 0.0, %v2556
      %v2558 = vpop.f32.mrf.mxu0
      %2559 = vdwg.mxu0
      %v2561 = vunpack.c.l.b16 %v2506
      %v2562 = vpack.c.b16 %v2561, %v2561
      %2563 = vrot.lane.b32.xlu0 %v2562, 64
      %v2564 = vpop.permute.xlu0 %2563
      %v2566 = vsel %vm985, %v2486, 0
      %v2569 = vsel %vm1385, %v2564, 0
      %2571 = vmatpush.bf16.msra.mxu0 0
      %2572 = vmatpush.bf16.msra.mxu0 0
      %2573 = vmatpush.bf16.msra.mxu0 0
      %2574 = vmatpush.bf16.msra.mxu0 0
      %2575 = vmatpush.bf16.msra.mxu0 0
      %2576 = vmatpush.bf16.msra.mxu0 0
      %2577 = vmatpush.bf16.msra.mxu0 0
      %2578 = vmatpush.bf16.msra.mxu0 %v2569
      %2579 = vmatmul.bf16.gmra.mxu0 %v2566
      %v2580 = vpop.f32.mrf.mxu0
      %v2581 = vadd.f32 0.0, %v2580
      %v2582 = vpop.f32.mrf.mxu0
      %2583 = vdwg.mxu0
      %v2585 = vunpack.c.l.b16 %v2507
      %v2586 = vpack.c.b16 %v2585, %v2585
      %2587 = vrot.lane.b32.xlu0 %v2586, 64
      %v2588 = vpop.permute.xlu0 %2587
      %v2590 = vsel %vm985, %v2487, 0
      %v2593 = vsel %vm1385, %v2588, 0
      %2595 = vmatpush.bf16.msra.mxu0 0
      %2596 = vmatpush.bf16.msra.mxu0 0
      %2597 = vmatpush.bf16.msra.mxu0 0
      %2598 = vmatpush.bf16.msra.mxu0 0
      %2599 = vmatpush.bf16.msra.mxu0 0
      %2600 = vmatpush.bf16.msra.mxu0 0
      %2601 = vmatpush.bf16.msra.mxu0 0
      %2602 = vmatpush.bf16.msra.mxu0 %v2593
      %2603 = vmatmul.bf16.gmra.mxu0 %v2590
      %v2604 = vpop.f32.mrf.mxu0
      %v2605 = vadd.f32 0.0, %v2604
      %v2606 = vpop.f32.mrf.mxu0
      %2607 = vdwg.mxu0
      %v2609 = vunpack.c.l.b16 %v2508
      %v2610 = vpack.c.b16 %v2609, %v2609
      %2611 = vrot.lane.b32.xlu0 %v2610, 64
      %v2612 = vpop.permute.xlu0 %2611
      %v2614 = vsel %vm985, %v2488, 0
      %v2617 = vsel %vm1385, %v2612, 0
      %2619 = vmatpush.bf16.msra.mxu0 0
      %2620 = vmatpush.bf16.msra.mxu0 0
      %2621 = vmatpush.bf16.msra.mxu0 0
      %2622 = vmatpush.bf16.msra.mxu0 0
      %2623 = vmatpush.bf16.msra.mxu0 0
      %2624 = vmatpush.bf16.msra.mxu0 0
      %2625 = vmatpush.bf16.msra.mxu0 0
      %2626 = vmatpush.bf16.msra.mxu0 %v2617
      %2627 = vmatmul.bf16.gmra.mxu0 %v2614
      %v2628 = vpop.f32.mrf.mxu0
      %v2629 = vadd.f32 0.0, %v2628
      %v2630 = vpop.f32.mrf.mxu0
      %2631 = vdwg.mxu0
      %v2633 = vunpack.c.l.b16 %v2509
      %v2634 = vpack.c.b16 %v2633, %v2633
      %2635 = vrot.lane.b32.xlu0 %v2634, 64
      %v2636 = vpop.permute.xlu0 %2635
      %v2638 = vsel %vm985, %v2489, 0
      %v2641 = vsel %vm1385, %v2636, 0
      %2643 = vmatpush.bf16.msra.mxu0 0
      %2644 = vmatpush.bf16.msra.mxu0 0
      %2645 = vmatpush.bf16.msra.mxu0 0
      %2646 = vmatpush.bf16.msra.mxu0 0
      %2647 = vmatpush.bf16.msra.mxu0 0
      %2648 = vmatpush.bf16.msra.mxu0 0
      %2649 = vmatpush.bf16.msra.mxu0 0
      %2650 = vmatpush.bf16.msra.mxu0 %v2641
      %2651 = vmatmul.bf16.gmra.mxu0 %v2638
      %v2652 = vpop.f32.mrf.mxu0
      %v2653 = vadd.f32 0.0, %v2652
      %v2654 = vpop.f32.mrf.mxu0
      %2655 = vdwg.mxu0
      %v2657 = vunpack.c.l.b16 %v2510
      %v2658 = vpack.c.b16 %v2657, %v2657
      %2659 = vrot.lane.b32.xlu0 %v2658, 64
      %v2660 = vpop.permute.xlu0 %2659
      %v2662 = vsel %vm985, %v2490, 0
      %v2665 = vsel %vm1385, %v2660, 0
      %2667 = vmatpush.bf16.msra.mxu0 0
      %2668 = vmatpush.bf16.msra.mxu0 0
      %2669 = vmatpush.bf16.msra.mxu0 0
      %2670 = vmatpush.bf16.msra.mxu0 0
      %2671 = vmatpush.bf16.msra.mxu0 0
      %2672 = vmatpush.bf16.msra.mxu0 0
      %2673 = vmatpush.bf16.msra.mxu0 0
      %2674 = vmatpush.bf16.msra.mxu0 %v2665
      %2675 = vmatmul.bf16.gmra.mxu0 %v2662
      %v2676 = vpop.f32.mrf.mxu0
      %v2677 = vadd.f32 0.0, %v2676
      %v2678 = vpop.f32.mrf.mxu0
      %2679 = vdwg.mxu0
      %v2681 = vunpack.c.l.b16 %v2511
      %v2682 = vpack.c.b16 %v2681, %v2681
      %2683 = vrot.lane.b32.xlu0 %v2682, 64
      %v2684 = vpop.permute.xlu0 %2683
      %v2686 = vsel %vm985, %v2491, 0
      %v2689 = vsel %vm1385, %v2684, 0
      %2691 = vmatpush.bf16.msra.mxu0 0
      %2692 = vmatpush.bf16.msra.mxu0 0
      %2693 = vmatpush.bf16.msra.mxu0 0
      %2694 = vmatpush.bf16.msra.mxu0 0
      %2695 = vmatpush.bf16.msra.mxu0 0
      %2696 = vmatpush.bf16.msra.mxu0 0
      %2697 = vmatpush.bf16.msra.mxu0 0
      %2698 = vmatpush.bf16.msra.mxu0 %v2689
      %2699 = vmatmul.bf16.gmra.mxu0 %v2686
      %v2700 = vpop.f32.mrf.mxu0
      %v2701 = vadd.f32 0.0, %v2700
      %v2702 = vpop.f32.mrf.mxu0
      %2703 = vdwg.mxu0
      %v2704 = vadd.f32 %v2229, %v2533
      %v2705 = vadd.f32 %v2230, %v2557
      %v2706 = vadd.f32 %v2231, %v2581
      %v2707 = vadd.f32 %v2232, %v2605
      %v2708 = vadd.f32 %v2233, %v2629
      %v2709 = vadd.f32 %v2234, %v2653
      %v2710 = vadd.f32 %v2235, %v2677
      %v2711 = vadd.f32 %v2236, %v2701
      %v2712 = vld [vmem:[%s610] sm:$0xf]
      %v2713 = vld [vmem:[%s610 + $0x4] sm:$0xf]
      %v2714 = vld [vmem:[%s610 + $0x8] sm:$0xf]
      %v2715 = vld [vmem:[%s610 + $0xc] sm:$0xf]
      %v2716 = vpack.c.bf16 %v2705, %v2704
      %v2717 = vpack.c.bf16 %v2707, %v2706
      %v2718 = vpack.c.bf16 %v2709, %v2708
      %v2719 = vpack.c.bf16 %v2711, %v2710
      %v2720 = vld [vmem:[%s613] sm:$0x1]
      %v2722 = vperm.slane %v2720, 0
      %v2728 = vunpack.c.l.b16 %v2712
      %v2729 = vunpack.c.l.b16 %v2713
      %v2730 = vunpack.c.l.b16 %v2714
      %v2731 = vunpack.c.l.b16 %v2715
      %v2732 = vpack.c.b16 %v2729, %v2728
      %v2733 = vpack.c.b16 %v2731, %v2730
      %v2737 = vsel %vm702, %v2716, 0
      %v2740 = vsel %vm702, %v2717, 0
      %v2743 = vsel %vm702, %v2718, 0
      %v2746 = vsel %vm702, %v2719, 0
      %2748 = vmatpush.bf16.msra.mxu0 0
      %2749 = vmatpush.bf16.msra.mxu0 0
      %2750 = vmatpush.bf16.msra.mxu0 0
      %2751 = vmatpush.bf16.msra.mxu0 0
      %2752 = vmatpush.bf16.msra.mxu0 0
      %2753 = vmatpush.bf16.msra.mxu0 0
      %2754 = vmatpush.bf16.msra.mxu0 %v2733
      %2755 = vmatpush.bf16.msra.mxu0 %v2732
      %2756 = vmatmul.bf16.gmra.mxu0 %v2737
      %v2757 = vpop.f32.mrf.mxu0
      %v2758 = vadd.f32 %v2722, %v2757
      %v2759 = vpop.f32.mrf.mxu0
      %v2760 = vadd.f32 %v2722, %v2759
      %2761 = vmatmul.bf16.gmra.mxu0 %v2740
      %v2762 = vpop.f32.mrf.mxu0
      %v2763 = vadd.f32 %v2722, %v2762
      %v2764 = vpop.f32.mrf.mxu0
      %v2765 = vadd.f32 %v2722, %v2764
      %2766 = vmatmul.bf16.gmra.mxu0 %v2743
      %v2767 = vpop.f32.mrf.mxu0
      %v2768 = vadd.f32 %v2722, %v2767
      %v2769 = vpop.f32.mrf.mxu0
      %v2770 = vadd.f32 %v2722, %v2769
      %2771 = vmatmul.bf16.gmra.mxu0 %v2746
      %v2772 = vpop.f32.mrf.mxu0
      %v2773 = vadd.f32 %v2722, %v2772
      %v2774 = vpop.f32.mrf.mxu0
      %v2775 = vadd.f32 %v2722, %v2774
      %2776 = vdwg.mxu0
      %v2777 = vadd.f32 %v670, %v2758
      %v2778 = vadd.f32 %v671, %v2760
      %v2779 = vadd.f32 %v672, %v2763
      %v2780 = vadd.f32 %v673, %v2765
      %v2781 = vadd.f32 %v674, %v2768
      %v2782 = vadd.f32 %v675, %v2770
      %v2783 = vadd.f32 %v676, %v2773
      %v2784 = vadd.f32 %v677, %v2775
      %v2785 = vld [vmem:[%s616] sm:$0x1]
      %v2786 = vld [vmem:[%s619] sm:$0x1]
      %v2787 = vsel %vm702, %v2777, 0.0
      %2788 = vadd.xlane.f32.xlu0 %v2787
      %v2789 = vpop.xlane.xlu0 %2788
      %v2790 = vsel %vm702, %v2778, 0.0
      %2791 = vadd.xlane.f32.xlu0 %v2790
      %v2792 = vpop.xlane.xlu0 %2791
      %v2793 = vsel %vm702, %v2779, 0.0
      %2794 = vadd.xlane.f32.xlu0 %v2793
      %v2795 = vpop.xlane.xlu0 %2794
      %v2796 = vsel %vm702, %v2780, 0.0
      %2797 = vadd.xlane.f32.xlu0 %v2796
      %v2798 = vpop.xlane.xlu0 %2797
      %v2799 = vsel %vm702, %v2781, 0.0
      %2800 = vadd.xlane.f32.xlu0 %v2799
      %v2801 = vpop.xlane.xlu0 %2800
      %v2802 = vsel %vm702, %v2782, 0.0
      %2803 = vadd.xlane.f32.xlu0 %v2802
      %v2804 = vpop.xlane.xlu0 %2803
      %v2805 = vsel %vm702, %v2783, 0.0
      %2806 = vadd.xlane.f32.xlu0 %v2805
      %v2807 = vpop.xlane.xlu0 %2806
      %v2808 = vsel %vm702, %v2784, 0.0
      %2809 = vadd.xlane.f32.xlu0 %v2808
      %v2810 = vpop.xlane.xlu0 %2809
      %v2811 = vrcp.pop 32.0
      %v2812 = vmul.f32 32.0, %v2811
      %v2813 = vsub.f32 1.0, %v2812
      %v2814 = vmul.f32 %v2811, %v2813
      %v2815 = vadd.f32 %v2811, %v2814
      %vm2816 = vweird.f32 %v2811
      %v2817 = vsel %vm2816, %v2811, %v2815
      %v2818 = vmul.f32 %v2789, %v2817
      %v2819 = vmul.f32 %v2792, %v2817
      %v2820 = vmul.f32 %v2795, %v2817
      %v2821 = vmul.f32 %v2798, %v2817
      %v2822 = vmul.f32 %v2801, %v2817
      %v2823 = vmul.f32 %v2804, %v2817
      %v2824 = vmul.f32 %v2807, %v2817
      %v2825 = vmul.f32 %v2810, %v2817
      %v2826 = vsub.f32 %v2777, %v2818
      %v2827 = vsub.f32 %v2778, %v2819
      %v2828 = vsub.f32 %v2779, %v2820
      %v2829 = vsub.f32 %v2780, %v2821
      %v2830 = vsub.f32 %v2781, %v2822
      %v2831 = vsub.f32 %v2782, %v2823
      %v2832 = vsub.f32 %v2783, %v2824
      %v2833 = vsub.f32 %v2784, %v2825
      %v2834 = vmul.f32 %v2826, %v2826
      %v2835 = vmul.f32 %v2827, %v2827
      %v2836 = vmul.f32 %v2828, %v2828
      %v2837 = vmul.f32 %v2829, %v2829
      %v2838 = vmul.f32 %v2830, %v2830
      %v2839 = vmul.f32 %v2831, %v2831
      %v2840 = vmul.f32 %v2832, %v2832
      %v2841 = vmul.f32 %v2833, %v2833
      %v2842 = vsel %vm702, %v2834, 0.0
      %2843 = vadd.xlane.f32.xlu0 %v2842
      %v2844 = vpop.xlane.xlu0 %2843
      %v2845 = vsel %vm702, %v2835, 0.0
      %2846 = vadd.xlane.f32.xlu0 %v2845
      %v2847 = vpop.xlane.xlu0 %2846
      %v2848 = vsel %vm702, %v2836, 0.0
      %2849 = vadd.xlane.f32.xlu0 %v2848
      %v2850 = vpop.xlane.xlu0 %2849
      %v2851 = vsel %vm702, %v2837, 0.0
      %2852 = vadd.xlane.f32.xlu0 %v2851
      %v2853 = vpop.xlane.xlu0 %2852
      %v2854 = vsel %vm702, %v2838, 0.0
      %2855 = vadd.xlane.f32.xlu0 %v2854
      %v2856 = vpop.xlane.xlu0 %2855
      %v2857 = vsel %vm702, %v2839, 0.0
      %2858 = vadd.xlane.f32.xlu0 %v2857
      %v2859 = vpop.xlane.xlu0 %2858
      %v2860 = vsel %vm702, %v2840, 0.0
      %2861 = vadd.xlane.f32.xlu0 %v2860
      %v2862 = vpop.xlane.xlu0 %2861
      %v2863 = vsel %vm702, %v2841, 0.0
      %2864 = vadd.xlane.f32.xlu0 %v2863
      %v2865 = vpop.xlane.xlu0 %2864
      %v2866 = vmul.f32 %v2844, %v2817
      %v2867 = vmul.f32 %v2847, %v2817
      %v2868 = vmul.f32 %v2850, %v2817
      %v2869 = vmul.f32 %v2853, %v2817
      %v2870 = vmul.f32 %v2856, %v2817
      %v2871 = vmul.f32 %v2859, %v2817
      %v2872 = vmul.f32 %v2862, %v2817
      %v2873 = vmul.f32 %v2865, %v2817
      %v2874 = vadd.f32 %v2866, 1e-05
      %v2875 = vadd.f32 %v2867, 1e-05
      %v2876 = vadd.f32 %v2868, 1e-05
      %v2877 = vadd.f32 %v2869, 1e-05
      %v2878 = vadd.f32 %v2870, 1e-05
      %v2879 = vadd.f32 %v2871, 1e-05
      %v2880 = vadd.f32 %v2872, 1e-05
      %v2881 = vadd.f32 %v2873, 1e-05
      %v2882 = vrsqrt.pop %v2874
      %v2883 = vmul.f32 %v2882, %v2874
      %v2884 = vmul.f32 %v2883, %v2882
      %v2885 = vmul.f32 0.5, %v2884
      %v2886 = vsub.f32 1.5, %v2885
      %v2887 = vmul.f32 %v2882, %v2886
      %vm2888 = vweird.f32 %v2874
      %vm2889 = vweird.f32 %v2882
      %vm2890 = vmor %vm2888, %vm2889
      %v2891 = vsel %vm2890, %v2882, %v2887
      %v2892 = vrsqrt.pop %v2875
      %v2893 = vmul.f32 %v2892, %v2875
      %v2894 = vmul.f32 %v2893, %v2892
      %v2895 = vmul.f32 0.5, %v2894
      %v2896 = vsub.f32 1.5, %v2895
      %v2897 = vmul.f32 %v2892, %v2896
      %vm2898 = vweird.f32 %v2875
      %vm2899 = vweird.f32 %v2892
      %vm2900 = vmor %vm2898, %vm2899
      %v2901 = vsel %vm2900, %v2892, %v2897
      %v2902 = vrsqrt.pop %v2876
      %v2903 = vmul.f32 %v2902, %v2876
      %v2904 = vmul.f32 %v2903, %v2902
      %v2905 = vmul.f32 0.5, %v2904
      %v2906 = vsub.f32 1.5, %v2905
      %v2907 = vmul.f32 %v2902, %v2906
      %vm2908 = vweird.f32 %v2876
      %vm2909 = vweird.f32 %v2902
      %vm2910 = vmor %vm2908, %vm2909
      %v2911 = vsel %vm2910, %v2902, %v2907
      %v2912 = vrsqrt.pop %v2877
      %v2913 = vmul.f32 %v2912, %v2877
      %v2914 = vmul.f32 %v2913, %v2912
      %v2915 = vmul.f32 0.5, %v2914
      %v2916 = vsub.f32 1.5, %v2915
      %v2917 = vmul.f32 %v2912, %v2916
      %vm2918 = vweird.f32 %v2877
      %vm2919 = vweird.f32 %v2912
      %vm2920 = vmor %vm2918, %vm2919
      %v2921 = vsel %vm2920, %v2912, %v2917
      %v2922 = vrsqrt.pop %v2878
      %v2923 = vmul.f32 %v2922, %v2878
      %v2924 = vmul.f32 %v2923, %v2922
      %v2925 = vmul.f32 0.5, %v2924
      %v2926 = vsub.f32 1.5, %v2925
      %v2927 = vmul.f32 %v2922, %v2926
      %vm2928 = vweird.f32 %v2878
      %vm2929 = vweird.f32 %v2922
      %vm2930 = vmor %vm2928, %vm2929
      %v2931 = vsel %vm2930, %v2922, %v2927
      %v2932 = vrsqrt.pop %v2879
      %v2933 = vmul.f32 %v2932, %v2879
      %v2934 = vmul.f32 %v2933, %v2932
      %v2935 = vmul.f32 0.5, %v2934
      %v2936 = vsub.f32 1.5, %v2935
      %v2937 = vmul.f32 %v2932, %v2936
      %vm2938 = vweird.f32 %v2879
      %vm2939 = vweird.f32 %v2932
      %vm2940 = vmor %vm2938, %vm2939
      %v2941 = vsel %vm2940, %v2932, %v2937
      %v2942 = vrsqrt.pop %v2880
      %v2943 = vmul.f32 %v2942, %v2880
      %v2944 = vmul.f32 %v2943, %v2942
      %v2945 = vmul.f32 0.5, %v2944
      %v2946 = vsub.f32 1.5, %v2945
      %v2947 = vmul.f32 %v2942, %v2946
      %vm2948 = vweird.f32 %v2880
      %vm2949 = vweird.f32 %v2942
      %vm2950 = vmor %vm2948, %vm2949
      %v2951 = vsel %vm2950, %v2942, %v2947
      %v2952 = vrsqrt.pop %v2881
      %v2953 = vmul.f32 %v2952, %v2881
      %v2954 = vmul.f32 %v2953, %v2952
      %v2955 = vmul.f32 0.5, %v2954
      %v2956 = vsub.f32 1.5, %v2955
      %v2957 = vmul.f32 %v2952, %v2956
      %vm2958 = vweird.f32 %v2881
      %vm2959 = vweird.f32 %v2952
      %vm2960 = vmor %vm2958, %vm2959
      %v2961 = vsel %vm2960, %v2952, %v2957
      %v2962 = vmul.f32 %v2826, %v2891
      %v2963 = vmul.f32 %v2827, %v2901
      %v2964 = vmul.f32 %v2828, %v2911
      %v2965 = vmul.f32 %v2829, %v2921
      %v2966 = vmul.f32 %v2830, %v2931
      %v2967 = vmul.f32 %v2831, %v2941
      %v2968 = vmul.f32 %v2832, %v2951
      %v2969 = vmul.f32 %v2833, %v2961
      %v2971 = vperm.slane %v2785, 0
      %v2973 = vmul.f32 %v2962, %v2971
      %v2974 = vmul.f32 %v2963, %v2971
      %v2975 = vmul.f32 %v2964, %v2971
      %v2976 = vmul.f32 %v2965, %v2971
      %v2977 = vmul.f32 %v2966, %v2971
      %v2978 = vmul.f32 %v2967, %v2971
      %v2979 = vmul.f32 %v2968, %v2971
      %v2980 = vmul.f32 %v2969, %v2971
      %v2982 = vperm.slane %v2786, 0
      %v2984 = vadd.f32 %v2973, %v2982
      %v2985 = vadd.f32 %v2974, %v2982
      %v2986 = vadd.f32 %v2975, %v2982
      %v2987 = vadd.f32 %v2976, %v2982
      %v2988 = vadd.f32 %v2977, %v2982
      %v2989 = vadd.f32 %v2978, %v2982
      %v2990 = vadd.f32 %v2979, %v2982
      %v2991 = vadd.f32 %v2980, %v2982
      %v2992 = vld [vmem:[%s624] sm:$0xf]
      %v2993 = vld [vmem:[%s624 + $0x4] sm:$0xf]
      %v2994 = vld [vmem:[%s624 + $0x8] sm:$0xf]
      %v2995 = vld [vmem:[%s624 + $0xc] sm:$0xf]
      %v2996 = vpack.c.bf16 %v2985, %v2984
      %v2997 = vpack.c.bf16 %v2987, %v2986
      %v2998 = vpack.c.bf16 %v2989, %v2988
      %v2999 = vpack.c.bf16 %v2991, %v2990
      %v3000 = vld [vmem:[%s627] sm:$0x1]
      %v3002 = vperm.slane %v3000, 0
      %v3008 = vunpack.c.l.b16 %v2992
      %v3009 = vunpack.c.l.b16 %v2993
      %v3010 = vunpack.c.l.b16 %v2994
      %v3011 = vunpack.c.l.b16 %v2995
      %v3012 = vpack.c.b16 %v3009, %v3008
      %v3013 = vpack.c.b16 %v3011, %v3010
      %v3017 = vsel %vm702, %v2996, 0
      %v3020 = vsel %vm702, %v2997, 0
      %v3023 = vsel %vm702, %v2998, 0
      %v3026 = vsel %vm702, %v2999, 0
      %3028 = vmatpush.bf16.msra.mxu0 0
      %3029 = vmatpush.bf16.msra.mxu0 0
      %3030 = vmatpush.bf16.msra.mxu0 0
      %3031 = vmatpush.bf16.msra.mxu0 0
      %3032 = vmatpush.bf16.msra.mxu0 0
      %3033 = vmatpush.bf16.msra.mxu0 0
      %3034 = vmatpush.bf16.msra.mxu0 %v3013
      %3035 = vmatpush.bf16.msra.mxu0 %v3012
      %3036 = vmatmul.bf16.gmra.mxu0 %v3017
      %v3037 = vpop.f32.mrf.mxu0
      %v3038 = vadd.f32 %v3002, %v3037
      %v3039 = vpop.f32.mrf.mxu0
      %v3040 = vadd.f32 %v3002, %v3039
      %3041 = vmatmul.bf16.gmra.mxu0 %v3020
      %v3042 = vpop.f32.mrf.mxu0
      %v3043 = vadd.f32 %v3002, %v3042
      %v3044 = vpop.f32.mrf.mxu0
      %v3045 = vadd.f32 %v3002, %v3044
      %3046 = vmatmul.bf16.gmra.mxu0 %v3023
      %v3047 = vpop.f32.mrf.mxu0
      %v3048 = vadd.f32 %v3002, %v3047
      %v3049 = vpop.f32.mrf.mxu0
      %v3050 = vadd.f32 %v3002, %v3049
      %3051 = vmatmul.bf16.gmra.mxu0 %v3026
      %v3052 = vpop.f32.mrf.mxu0
      %v3053 = vadd.f32 %v3002, %v3052
      %v3054 = vpop.f32.mrf.mxu0
      %v3055 = vadd.f32 %v3002, %v3054
      %3056 = vdwg.mxu0
      %v3057 = vmax.f32 %v3038, 0.0
      %v3058 = vmax.f32 %v3040, 0.0
      %v3059 = vmax.f32 %v3043, 0.0
      %v3060 = vmax.f32 %v3045, 0.0
      %v3061 = vmax.f32 %v3048, 0.0
      %v3062 = vmax.f32 %v3050, 0.0
      %v3063 = vmax.f32 %v3053, 0.0
      %v3064 = vmax.f32 %v3055, 0.0
      %v3065 = vld [vmem:[%s632] sm:$0xf]
      %v3066 = vld [vmem:[%s632 + $0x4] sm:$0xf]
      %v3067 = vld [vmem:[%s632 + $0x8] sm:$0xf]
      %v3068 = vld [vmem:[%s632 + $0xc] sm:$0xf]
      %v3069 = vld [vmem:[%s632 + $0x10] sm:$0xf]
      %v3070 = vld [vmem:[%s632 + $0x14] sm:$0xf]
      %v3071 = vld [vmem:[%s632 + $0x18] sm:$0xf]
      %v3072 = vld [vmem:[%s632 + $0x1c] sm:$0xf]
      %v3073 = vld [vmem:[%s632 + $0x20] sm:$0xf]
      %v3074 = vld [vmem:[%s632 + $0x24] sm:$0xf]
      %v3075 = vld [vmem:[%s632 + $0x28] sm:$0xf]
      %v3076 = vld [vmem:[%s632 + $0x2c] sm:$0xf]
      %v3077 = vld [vmem:[%s632 + $0x30] sm:$0xf]
      %v3078 = vld [vmem:[%s632 + $0x34] sm:$0xf]
      %v3079 = vld [vmem:[%s632 + $0x38] sm:$0xf]
      %v3080 = vld [vmem:[%s632 + $0x3c] sm:$0xf]
      %v3081 = vpack.c.bf16 %v3058, %v3057
      %v3082 = vpack.c.bf16 %v3060, %v3059
      %v3083 = vpack.c.bf16 %v3062, %v3061
      %v3084 = vpack.c.bf16 %v3064, %v3063
      %v3085 = vld [vmem:[%s635] sm:$0x1]
      %v3087 = vperm.slane %v3085, 0
      %v3105 = vunpack.c.l.b16 %v3065
      %v3106 = vunpack.c.l.b16 %v3066
      %v3107 = vunpack.c.l.b16 %v3067
      %v3108 = vunpack.c.l.b16 %v3068
      %v3109 = vunpack.c.l.b16 %v3069
      %v3110 = vunpack.c.l.b16 %v3070
      %v3111 = vunpack.c.l.b16 %v3071
      %v3112 = vunpack.c.l.b16 %v3072
      %v3113 = vunpack.c.l.b16 %v3073
      %v3114 = vunpack.c.l.b16 %v3074
      %v3115 = vunpack.c.l.b16 %v3075
      %v3116 = vunpack.c.l.b16 %v3076
      %v3117 = vunpack.c.l.b16 %v3077
      %v3118 = vunpack.c.l.b16 %v3078
      %v3119 = vunpack.c.l.b16 %v3079
      %v3120 = vunpack.c.l.b16 %v3080
      %v3121 = vpack.c.b16 %v3106, %v3105
      %v3122 = vpack.c.b16 %v3108, %v3107
      %v3123 = vpack.c.b16 %v3110, %v3109
      %v3124 = vpack.c.b16 %v3112, %v3111
      %v3125 = vpack.c.b16 %v3114, %v3113
      %v3126 = vpack.c.b16 %v3116, %v3115
      %v3127 = vpack.c.b16 %v3118, %v3117
      %v3128 = vpack.c.b16 %v3120, %v3119
      %3137 = vmatpush.bf16.msra.mxu0 %v3128
      %3138 = vmatpush.bf16.msra.mxu0 %v3127
      %3139 = vmatpush.bf16.msra.mxu0 %v3126
      %3140 = vmatpush.bf16.msra.mxu0 %v3125
      %3141 = vmatpush.bf16.msra.mxu0 %v3124
      %3142 = vmatpush.bf16.msra.mxu0 %v3123
      %3143 = vmatpush.bf16.msra.mxu0 %v3122
      %3144 = vmatpush.bf16.msra.mxu0 %v3121
      %3145 = vmatmul.bf16.gmra.mxu0 %v3081
      %v3146 = vpop.f32.mrf.mxu0
      %v3147 = vadd.f32 %v3087, %v3146
      %v3148 = vpop.f32.mrf.mxu0
      %v3149 = vadd.f32 %v3087, %v3148
      %3150 = vmatmul.bf16.gmra.mxu0 %v3082
      %v3151 = vpop.f32.mrf.mxu0
      %v3152 = vadd.f32 %v3087, %v3151
      %v3153 = vpop.f32.mrf.mxu0
      %v3154 = vadd.f32 %v3087, %v3153
      %3155 = vmatmul.bf16.gmra.mxu0 %v3083
      %v3156 = vpop.f32.mrf.mxu0
      %v3157 = vadd.f32 %v3087, %v3156
      %v3158 = vpop.f32.mrf.mxu0
      %v3159 = vadd.f32 %v3087, %v3158
      %3160 = vmatmul.bf16.gmra.mxu0 %v3084
      %v3161 = vpop.f32.mrf.mxu0
      %v3162 = vadd.f32 %v3087, %v3161
      %v3163 = vpop.f32.mrf.mxu0
      %v3164 = vadd.f32 %v3087, %v3163
      %3165 = vdwg.mxu0
      %v3166 = vadd.f32 %v2984, %v3147
      %v3167 = vadd.f32 %v2985, %v3149
      %v3168 = vadd.f32 %v2986, %v3152
      %v3169 = vadd.f32 %v2987, %v3154
      %v3170 = vadd.f32 %v2988, %v3157
      %v3171 = vadd.f32 %v2989, %v3159
      %v3172 = vadd.f32 %v2990, %v3162
      %v3173 = vadd.f32 %v2991, %v3164
      %v3174 = vld [vmem:[%s638] sm:$0x1]
      %v3175 = vld [vmem:[%s641] sm:$0x1]
      %v3176 = vsel %vm702, %v3166, 0.0
      %3177 = vadd.xlane.f32.xlu0 %v3176
      %v3178 = vpop.xlane.xlu0 %3177
      %v3179 = vsel %vm702, %v3167, 0.0
      %3180 = vadd.xlane.f32.xlu0 %v3179
      %v3181 = vpop.xlane.xlu0 %3180
      %v3182 = vsel %vm702, %v3168, 0.0
      %3183 = vadd.xlane.f32.xlu0 %v3182
      %v3184 = vpop.xlane.xlu0 %3183
      %v3185 = vsel %vm702, %v3169, 0.0
      %3186 = vadd.xlane.f32.xlu0 %v3185
      %v3187 = vpop.xlane.xlu0 %3186
      %v3188 = vsel %vm702, %v3170, 0.0
      %3189 = vadd.xlane.f32.xlu0 %v3188
      %v3190 = vpop.xlane.xlu0 %3189
      %v3191 = vsel %vm702, %v3171, 0.0
      %3192 = vadd.xlane.f32.xlu0 %v3191
      %v3193 = vpop.xlane.xlu0 %3192
      %v3194 = vsel %vm702, %v3172, 0.0
      %3195 = vadd.xlane.f32.xlu0 %v3194
      %v3196 = vpop.xlane.xlu0 %3195
      %v3197 = vsel %vm702, %v3173, 0.0
      %3198 = vadd.xlane.f32.xlu0 %v3197
      %v3199 = vpop.xlane.xlu0 %3198
      %v3200 = vmul.f32 %v3178, %v2817
      %v3201 = vmul.f32 %v3181, %v2817
      %v3202 = vmul.f32 %v3184, %v2817
      %v3203 = vmul.f32 %v3187, %v2817
      %v3204 = vmul.f32 %v3190, %v2817
      %v3205 = vmul.f32 %v3193, %v2817
      %v3206 = vmul.f32 %v3196, %v2817
      %v3207 = vmul.f32 %v3199, %v2817
      %v3208 = vsub.f32 %v3166, %v3200
      %v3209 = vsub.f32 %v3167, %v3201
      %v3210 = vsub.f32 %v3168, %v3202
      %v3211 = vsub.f32 %v3169, %v3203
      %v3212 = vsub.f32 %v3170, %v3204
      %v3213 = vsub.f32 %v3171, %v3205
      %v3214 = vsub.f32 %v3172, %v3206
      %v3215 = vsub.f32 %v3173, %v3207
      %v3216 = vmul.f32 %v3208, %v3208
      %v3217 = vmul.f32 %v3209, %v3209
      %v3218 = vmul.f32 %v3210, %v3210
      %v3219 = vmul.f32 %v3211, %v3211
      %v3220 = vmul.f32 %v3212, %v3212
      %v3221 = vmul.f32 %v3213, %v3213
      %v3222 = vmul.f32 %v3214, %v3214
      %v3223 = vmul.f32 %v3215, %v3215
      %v3224 = vsel %vm702, %v3216, 0.0
      %3225 = vadd.xlane.f32.xlu0 %v3224
      %v3226 = vpop.xlane.xlu0 %3225
      %v3227 = vsel %vm702, %v3217, 0.0
      %3228 = vadd.xlane.f32.xlu0 %v3227
      %v3229 = vpop.xlane.xlu0 %3228
      %v3230 = vsel %vm702, %v3218, 0.0
      %3231 = vadd.xlane.f32.xlu0 %v3230
      %v3232 = vpop.xlane.xlu0 %3231
      %v3233 = vsel %vm702, %v3219, 0.0
      %3234 = vadd.xlane.f32.xlu0 %v3233
      %v3235 = vpop.xlane.xlu0 %3234
      %v3236 = vsel %vm702, %v3220, 0.0
      %3237 = vadd.xlane.f32.xlu0 %v3236
      %v3238 = vpop.xlane.xlu0 %3237
      %v3239 = vsel %vm702, %v3221, 0.0
      %3240 = vadd.xlane.f32.xlu0 %v3239
      %v3241 = vpop.xlane.xlu0 %3240
      %v3242 = vsel %vm702, %v3222, 0.0
      %3243 = vadd.xlane.f32.xlu0 %v3242
      %v3244 = vpop.xlane.xlu0 %3243
      %v3245 = vsel %vm702, %v3223, 0.0
      %3246 = vadd.xlane.f32.xlu0 %v3245
      %v3247 = vpop.xlane.xlu0 %3246
      %v3248 = vmul.f32 %v3226, %v2817
      %v3249 = vmul.f32 %v3229, %v2817
      %v3250 = vmul.f32 %v3232, %v2817
      %v3251 = vmul.f32 %v3235, %v2817
      %v3252 = vmul.f32 %v3238, %v2817
      %v3253 = vmul.f32 %v3241, %v2817
      %v3254 = vmul.f32 %v3244, %v2817
      %v3255 = vmul.f32 %v3247, %v2817
      %v3256 = vadd.f32 %v3248, 1e-05
      %v3257 = vadd.f32 %v3249, 1e-05
      %v3258 = vadd.f32 %v3250, 1e-05
      %v3259 = vadd.f32 %v3251, 1e-05
      %v3260 = vadd.f32 %v3252, 1e-05
      %v3261 = vadd.f32 %v3253, 1e-05
      %v3262 = vadd.f32 %v3254, 1e-05
      %v3263 = vadd.f32 %v3255, 1e-05
      %v3264 = vrsqrt.pop %v3256
      %v3265 = vmul.f32 %v3264, %v3256
      %v3266 = vmul.f32 %v3265, %v3264
      %v3267 = vmul.f32 0.5, %v3266
      %v3268 = vsub.f32 1.5, %v3267
      %v3269 = vmul.f32 %v3264, %v3268
      %vm3270 = vweird.f32 %v3256
      %vm3271 = vweird.f32 %v3264
      %vm3272 = vmor %vm3270, %vm3271
      %v3273 = vsel %vm3272, %v3264, %v3269
      %v3274 = vrsqrt.pop %v3257
      %v3275 = vmul.f32 %v3274, %v3257
      %v3276 = vmul.f32 %v3275, %v3274
      %v3277 = vmul.f32 0.5, %v3276
      %v3278 = vsub.f32 1.5, %v3277
      %v3279 = vmul.f32 %v3274, %v3278
      %vm3280 = vweird.f32 %v3257
      %vm3281 = vweird.f32 %v3274
      %vm3282 = vmor %vm3280, %vm3281
      %v3283 = vsel %vm3282, %v3274, %v3279
      %v3284 = vrsqrt.pop %v3258
      %v3285 = vmul.f32 %v3284, %v3258
      %v3286 = vmul.f32 %v3285, %v3284
      %v3287 = vmul.f32 0.5, %v3286
      %v3288 = vsub.f32 1.5, %v3287
      %v3289 = vmul.f32 %v3284, %v3288
      %vm3290 = vweird.f32 %v3258
      %vm3291 = vweird.f32 %v3284
      %vm3292 = vmor %vm3290, %vm3291
      %v3293 = vsel %vm3292, %v3284, %v3289
      %v3294 = vrsqrt.pop %v3259
      %v3295 = vmul.f32 %v3294, %v3259
      %v3296 = vmul.f32 %v3295, %v3294
      %v3297 = vmul.f32 0.5, %v3296
      %v3298 = vsub.f32 1.5, %v3297
      %v3299 = vmul.f32 %v3294, %v3298
      %vm3300 = vweird.f32 %v3259
      %vm3301 = vweird.f32 %v3294
      %vm3302 = vmor %vm3300, %vm3301
      %v3303 = vsel %vm3302, %v3294, %v3299
      %v3304 = vrsqrt.pop %v3260
      %v3305 = vmul.f32 %v3304, %v3260
      %v3306 = vmul.f32 %v3305, %v3304
      %v3307 = vmul.f32 0.5, %v3306
      %v3308 = vsub.f32 1.5, %v3307
      %v3309 = vmul.f32 %v3304, %v3308
      %vm3310 = vweird.f32 %v3260
      %vm3311 = vweird.f32 %v3304
      %vm3312 = vmor %vm3310, %vm3311
      %v3313 = vsel %vm3312, %v3304, %v3309
      %v3314 = vrsqrt.pop %v3261
      %v3315 = vmul.f32 %v3314, %v3261
      %v3316 = vmul.f32 %v3315, %v3314
      %v3317 = vmul.f32 0.5, %v3316
      %v3318 = vsub.f32 1.5, %v3317
      %v3319 = vmul.f32 %v3314, %v3318
      %vm3320 = vweird.f32 %v3261
      %vm3321 = vweird.f32 %v3314
      %vm3322 = vmor %vm3320, %vm3321
      %v3323 = vsel %vm3322, %v3314, %v3319
      %v3324 = vrsqrt.pop %v3262
      %v3325 = vmul.f32 %v3324, %v3262
      %v3326 = vmul.f32 %v3325, %v3324
      %v3327 = vmul.f32 0.5, %v3326
      %v3328 = vsub.f32 1.5, %v3327
      %v3329 = vmul.f32 %v3324, %v3328
      %vm3330 = vweird.f32 %v3262
      %vm3331 = vweird.f32 %v3324
      %vm3332 = vmor %vm3330, %vm3331
      %v3333 = vsel %vm3332, %v3324, %v3329
      %v3334 = vrsqrt.pop %v3263
      %v3335 = vmul.f32 %v3334, %v3263
      %v3336 = vmul.f32 %v3335, %v3334
      %v3337 = vmul.f32 0.5, %v3336
      %v3338 = vsub.f32 1.5, %v3337
      %v3339 = vmul.f32 %v3334, %v3338
      %vm3340 = vweird.f32 %v3263
      %vm3341 = vweird.f32 %v3334
      %vm3342 = vmor %vm3340, %vm3341
      %v3343 = vsel %vm3342, %v3334, %v3339
      %v3344 = vmul.f32 %v3208, %v3273
      %v3345 = vmul.f32 %v3209, %v3283
      %v3346 = vmul.f32 %v3210, %v3293
      %v3347 = vmul.f32 %v3211, %v3303
      %v3348 = vmul.f32 %v3212, %v3313
      %v3349 = vmul.f32 %v3213, %v3323
      %v3350 = vmul.f32 %v3214, %v3333
      %v3351 = vmul.f32 %v3215, %v3343
      %v3353 = vperm.slane %v3174, 0
      %v3355 = vmul.f32 %v3344, %v3353
      %v3356 = vmul.f32 %v3345, %v3353
      %v3357 = vmul.f32 %v3346, %v3353
      %v3358 = vmul.f32 %v3347, %v3353
      %v3359 = vmul.f32 %v3348, %v3353
      %v3360 = vmul.f32 %v3349, %v3353
      %v3361 = vmul.f32 %v3350, %v3353
      %v3362 = vmul.f32 %v3351, %v3353
      %v3364 = vperm.slane %v3175, 0
      %v3366 = vadd.f32 %v3355, %v3364
      %v3367 = vadd.f32 %v3356, %v3364
      %v3368 = vadd.f32 %v3357, %v3364
      %v3369 = vadd.f32 %v3358, %v3364
      %v3370 = vadd.f32 %v3359, %v3364
      %v3371 = vadd.f32 %v3360, %v3364
      %v3372 = vadd.f32 %v3361, %v3364
      %v3373 = vadd.f32 %v3362, %v3364
      %3374 = vst.msk [vmem:[%s646] sm:$0xff] %vm702, %v3366
      %3375 = vst.msk [vmem:[%s646 + $0x8] sm:$0xff] %vm702, %v3367
      %3376 = vst.msk [vmem:[%s646 + $0x10] sm:$0xff] %vm702, %v3368
      %3377 = vst.msk [vmem:[%s646 + $0x18] sm:$0xff] %vm702, %v3369
      %3378 = vst.msk [vmem:[%s646 + $0x20] sm:$0xff] %vm702, %v3370
      %3379 = vst.msk [vmem:[%s646 + $0x28] sm:$0xff] %vm702, %v3371
      %3380 = vst.msk [vmem:[%s646 + $0x30] sm:$0xff] %vm702, %v3372
      %3381 = vst.msk [vmem:[%s646 + $0x38] sm:$0xff] %vm702, %v3373
      %s3382 = smul.u32 8, %s28
      %p3383 = scmp.lt.s32.totalorder %s3382, 7
      %s3384 = scalar_select %p3383, %s3382, 7
      %s3385 = smul.addr %s3384, 8
      %s3386 = scalar_lea.vmem %s13, %s3385
      // Predicated region
      $region77: #{forward.8} parent=71 // pred_check
        %p3387 = pneg %p392
      $region78: #{forward.8} parent=71 // pred_check_branch
        %3389 = sbr.rel (%p3387) target = $region80
      $region79: #{forward.8} parent=71 // pred_region
        %s3390 = smul.u32 8, %s28
      $region80: #{forward.8} parent=71 // pred_fallthru
        _
      // Predicated region
      $region81: #{forward.8} parent=71 // pred_check
        %p3391 = pneg %p392
      $region82: #{forward.8} parent=71 // pred_check_branch
        %3393 = sbr.rel (%p3391) target = $region84
      $region83: #{forward.8} parent=71 // pred_region
        %s3394 = smul.u32 8, %s28
        %p3395 = scmp.lt.s32.totalorder %s3394, 7
        %s3396 = scalar_select %p3395, %s3394, 7
        %s3397 = smul.addr %s3396, 8
        %s3398 = scalar_lea.vmem %s13, %s3397
      $region84: #{forward.8} parent=71 // pred_fallthru
        _
    $region72: #{forward.8} parent=5 // pred_fallthru
      _
    %p3399 = scmp.le.s32.totalorder 2, %s19
    // Predicated region
    $region85: #{forward.8} parent=5 // pred_check
      %p3400 = pneg %p3399
    $region86: #{forward.8} parent=5 // pred_check_branch
      %3402 = sbr.rel (%p3400) target = $region88
    $region87: #{forward.8} parent=5 // pred_region
      %s3403 = ssub.s32 %s19, 2
    $region88: #{forward.8} parent=5 // pred_fallthru
      _
  $region6: #{forward.8} parent=0 // loop_footer
    %s23 = sadd.s32 1, %s19
  $region7: #{forward.8} parent=0 // loop_footer_branch
    %18 = sbr.rel target = $region3
  $region8: #{forward.8} parent=0 // loop_exit
    _

</llo_original>
